<compile_context>
chip_gen: v5e
topology: v5e:2x2
jax: 0.10.0
libtpu: 0.0.40
codegen_flags: <defaults>
</compile_context>

<pallas_src>
import functools
import math

import numpy as np

import jax
import jax.numpy as jnp
from jax import lax
from jax.experimental import pallas as pl
from jax.experimental.pallas import tpu as pltpu

_EPS = 1e-5


# ----------------------------------------------------------------------------
# Fused encoder kernel
# ----------------------------------------------------------------------------
def _conv_taps(h):
    """[T, C] -> [T, 3C] tap operand for a k=3, pad=1 conv (zero boundary rows)."""
    t, c = h.shape
    z = jnp.zeros((1, c), jnp.float32)
    h_prev = jnp.concatenate([z, h[: t - 1, :]], axis=0)   # row t -> h[t-1]
    h_next = jnp.concatenate([h[1:, :], z], axis=0)        # row t -> h[t+1]
    return jnp.concatenate([h_prev, h, h_next], axis=1)    # lanes: [tap0|tap1|tap2]


def _mel_encoder_kernel(*refs, n_res, eps):
    it = iter(refs)
    x_ref = next(it)
    a_refs = [next(it) for _ in range(3)]        # scaled group-avg matrices (per stage)
    sel_refs = [next(it) for _ in range(2)]      # even-row selection matrices
    w0_ref, b0_ref = next(it), next(it)
    res0 = [[next(it) for _ in range(8)] for _ in range(n_res)]
    red1 = [next(it) for _ in range(4)]
    res1 = [[next(it) for _ in range(8)] for _ in range(n_res)]
    red2 = [next(it) for _ in range(4)]
    res2 = [[next(it) for _ in range(8)] for _ in range(n_res)]
    o_ref = next(it)

    def conv(h, w_ref, b_ref):
        # Single MXU matmul with K = 3*Cin.
        return (jnp.dot(_conv_taps(h), w_ref[...], preferred_element_type=jnp.float32)
                + b_ref[...])

    def gn(h, a_ref, g_ref, bt_ref):
        # A already folds the 1/(T*group_size) scaling and group membership.
        mean = jnp.dot(jnp.sum(h, axis=0, keepdims=True), a_ref[...],
                       preferred_element_type=jnp.float32)
        d = h - mean
        var = jnp.dot(jnp.sum(d * d, axis=0, keepdims=True), a_ref[...],
                      preferred_element_type=jnp.float32)
        return d * lax.rsqrt(var + eps) * g_ref[...] + bt_ref[...]

    def resblock(h, p, a_ref):
        w1, b1, g1, bt1, w2, b2, g2, bt2 = p
        y = jnp.maximum(gn(conv(h, w1, b1), a_ref, g1, bt1), 0.0)
        y = gn(conv(y, w2, b2), a_ref, g2, bt2)
        return jnp.maximum(y + h, 0.0)

    def reduce(h, p, sel_ref, a_ref):
        # stride-2 conv == stride-1 conv evaluated at even output rows:
        # select even rows of the tap operand first, then one K=3*Cin matmul.
        w, b, g, bt = p
        xk = jnp.dot(sel_ref[...], _conv_taps(h), preferred_element_type=jnp.float32)
        y = jnp.dot(xk, w[...], preferred_element_type=jnp.float32) + b[...]
        return jnp.maximum(gn(y, a_ref, g, bt), 0.0)

    h = x_ref[0].astype(jnp.float32)              # [T, mel] (time-major)
    h = conv(h, w0_ref, b0_ref)                   # [T, C/4]
    for p in res0:
        h = resblock(h, p, a_refs[0])
    h = reduce(h, red1, sel_refs[0], a_refs[1])   # [T/2, C/2]
    for p in res1:
        h = resblock(h, p, a_refs[1])
    h = reduce(h, red2, sel_refs[1], a_refs[2])   # [T/4, C]
    for p in res2:
        h = resblock(h, p, a_refs[2])
    o_ref[0] = h.astype(o_ref.dtype)              # already the permute(0,2,1) layout


# ----------------------------------------------------------------------------
# pallas_call wrapper
# ----------------------------------------------------------------------------
def mel_encoder_forward(x_nct, kp, channels, n_res=2):
    """Pallas MelEncoder forward.  x_nct: [N, mel, T] -> [N, T//4, channels]."""
    n, mel, t0 = x_nct.shape
    assert t0 % 4 == 0
    c4, c2 = channels // 4, channels // 2
    t1, t2 = t0 // 2, t0 // 4

    x = jnp.transpose(x_nct, (0, 2, 1))           # single wrapper transpose -> time-major

    flat = [kp["a0"], kp["a1"], kp["a2"], kp["sel1"], kp["sel2"],
            kp["conv0_w"], kp["conv0_b"]]
    for p in kp["res0"]:
        flat += [p["w1"], p["b1"], p["g1"], p["bt1"], p["w2"], p["b2"], p["g2"], p["bt2"]]
    flat += [kp["red1"][k] for k in ("w", "b", "gamma", "beta")]
    for p in kp["res1"]:
        flat += [p["w1"], p["b1"], p["g1"], p["bt1"], p["w2"], p["b2"], p["g2"], p["bt2"]]
    flat += [kp["red2"][k] for k in ("w", "b", "gamma", "beta")]
    for p in kp["res2"]:
        flat += [p["w1"], p["b1"], p["g1"], p["bt1"], p["w2"], p["b2"], p["g2"], p["bt2"]]

    in_specs = [pl.BlockSpec((1, t0, mel), lambda i: (i, 0, 0))]
    in_specs += [pl.BlockSpec(p.shape, lambda i: (0, 0)) for p in flat]

    # Advisory cost estimate (conv MXU flops dominate).
    conv_flops = 2 * t0 * (3 * mel) * c4
    conv_flops += n_res * 2 * (2 * t0 * (3 * c4) * c4)
    conv_flops += 2 * t1 * (3 * c4) * c2
    conv_flops += n_res * 2 * (2 * t1 * (3 * c2) * c2)
    conv_flops += 2 * t2 * (3 * c2) * channels
    conv_flops += n_res * 2 * (2 * t2 * (3 * channels) * channels)
    n_gn = 2 + 4 * n_res
    param_bytes = sum(int(np.prod(p.shape)) * p.dtype.itemsize for p in flat)
    cost = pl.CostEstimate(
        flops=int(n * conv_flops),
        transcendentals=int(n * n_gn * channels),
        bytes_accessed=int(x.size * x.dtype.itemsize + param_bytes
                           + n * t2 * channels * 4),
    )

    kernel = functools.partial(_mel_encoder_kernel, n_res=n_res, eps=_EPS)
    return pl.pallas_call(
        kernel,
        out_shape=jax.ShapeDtypeStruct((n, t2, channels), x.dtype),
        grid=(n,),
        in_specs=in_specs,
        out_specs=pl.BlockSpec((1, t2, channels), lambda i: (i, 0, 0)),
        compiler_params=pltpu.CompilerParams(dimension_semantics=("parallel",)),
        cost_estimate=cost,
    )(x, *flat)


# ----------------------------------------------------------------------------
# Parameters (PyTorch layout), kernel-layout conversion, pure-JAX reference
# ----------------------------------------------------------------------------
def _group_avg_matrix(c, groups, t):
    gs = c // groups
    ci = np.arange(c)
    m = (ci[:, None] // gs == ci[None, :] // gs).astype(np.float32) / float(t * gs)
    return jnp.asarray(m)


def _even_select_matrix(t_out, t_in):
    m = np.zeros((t_out, t_in), np.float32)
    m[np.arange(t_out), 2 * np.arange(t_out)] = 1.0
    return jnp.asarray(m)


def _init_params(key, channels, mel_channels=80, n_res=2):
    c4, c2 = channels // 4, channels // 2
    keys = iter(jax.random.split(key, 96))

    def conv(cin, cout):
        w = jax.random.normal(next(keys), (cout, cin, 3), jnp.float32) / math.sqrt(3.0 * cin)
        b = 0.1 * jax.random.normal(next(keys), (cout,), jnp.float32)
        return w, b

    def gn(c):
        gamma = 1.0 + 0.1 * jax.random.normal(next(keys), (c,), jnp.float32)
        beta = 0.1 * jax.random.normal(next(keys), (c,), jnp.float32)
        return gamma, beta

    def res(c):
        w1, b1 = conv(c, c); g1, bt1 = gn(c)
        w2, b2 = conv(c, c); g2, bt2 = gn(c)
        return dict(w1=w1, b1=b1, g1=g1, bt1=bt1, w2=w2, b2=b2, g2=g2, bt2=bt2)

    def red(cin, cout):
        w, b = conv(cin, cout); gamma, beta = gn(cout)
        return dict(w=w, b=b, gamma=gamma, beta=beta)

    return dict(
        conv0=conv(mel_channels, c4),
        res0=[res(c4) for _ in range(n_res)],
        red1=red(c4, c2),
        res1=[res(c2) for _ in range(n_res)],
        red2=red(c2, channels),
        res2=[res(channels) for _ in range(n_res)],
    )


def _to_kernel_params(params, channels, t0, n_res=2):
    c4, c2 = channels // 4, channels // 2

    def cw(w):  # [Cout, Cin, 3] -> [3*Cin, Cout], tap-major rows
        cout, cin, _ = w.shape
        return jnp.transpose(w, (2, 1, 0)).reshape(3 * cin, cout)

    def row(v):
        return v.reshape(1, -1)

    def rb(p):
        return dict(w1=cw(p["w1"]), b1=row(p["b1"]), g1=row(p["g1"]), bt1=row(p["bt1"]),
                    w2=cw(p["w2"]), b2=row(p["b2"]), g2=row(p["g2"]), bt2=row(p["bt2"]))

    def red(p):
        return dict(w=cw(p["w"]), b=row(p["b"]), gamma=row(p["gamma"]), beta=row(p["beta"]))

    return dict(
        a0=_group_avg_matrix(c4, c4 // 8, t0),
        a1=_group_avg_matrix(c2, channels // 16, t0 // 2),
        a2=_group_avg_matrix(channels, channels // 8, t0 // 4),
        sel1=_even_select_matrix(t0 // 2, t0),
        sel2=_even_select_matrix(t0 // 4, t0 // 2),
        conv0_w=cw(params["conv0"][0]), conv0_b=row(params["conv0"][1]),
        res0=[rb(p) for p in params["res0"]],
        red1=red(params["red1"]),
        res1=[rb(p) for p in params["res1"]],
        red2=red(params["red2"]),
        res2=[rb(p) for p in params["res2"]],
    )


def _conv1d_ref(x, w, b, stride=1):
    y = lax.conv_general_dilated(
        x, w, window_strides=(stride,), padding=((1, 1),),
        dimension_numbers=("NCH", "OIH", "NCH"),
        precision=lax.Precision.HIGHEST)
    return y + b[None, :, None]


def _group_norm_ref(x, gamma, beta, num_groups, eps=_EPS):
    n, c, t = x.shape
    xg = x.reshape(n, num_groups, -1)
    mean = xg.mean(axis=2, keepdims=True)
    var = ((xg - mean) ** 2).mean(axis=2, keepdims=True)
    xn = ((xg - mean) / jnp.sqrt(var + eps)).reshape(n, c, t)
    return xn * gamma[None, :, None] + beta[None, :, None]


def _resblock_ref(x, p, num_groups):
    h = _conv1d_ref(x, p["w1"], p["b1"])
    h = _group_norm_ref(h, p["g1"], p["bt1"], num_groups)
    h = jax.nn.relu(h)
    h = _conv1d_ref(h, p["w2"], p["b2"])
    h = _group_norm_ref(h, p["g2"], p["bt2"], num_groups)
    return jax.nn.relu(h + x)


def mel_encoder_ref(x, params, channels, n_res=2):
    c4, c2 = channels // 4, channels // 2
    w0, b0 = params["conv0"]
    h = _conv1d_ref(x, w0, b0)
    for p in params["res0"]:
        h = _resblock_ref(h, p, c4 // 8)
    h = _conv1d_ref(h, params["red1"]["w"], params["red1"]["b"], stride=2)
    h = _group_norm_ref(h, params["red1"]["gamma"], params["red1"]["beta"], channels // 16)
    h = jax.nn.relu(h)
    for p in params["res1"]:
        h = _resblock_ref(h, p, c2 // 8)
    h = _conv1d_ref(h, params["red2"]["w"], params["red2"]["b"], stride=2)
    h = _group_norm_ref(h, params["red2"]["gamma"], params["red2"]["beta"], channels // 8)
    h = jax.nn.relu(h)
    for p in params["res2"]:
        h = _resblock_ref(h, p, channels // 8)
    return jnp.transpose(h, (0, 2, 1))


if __name__ == "__main__":
    key = jax.random.PRNGKey(0)
    N, channels, mel_channels, T = 2, 64, 80, 32   # channels % 32 == 0, T % 4 == 0

    k_x, k_p = jax.random.split(key)
    x = jax.random.normal(k_x, (N, mel_channels, T), dtype=jnp.float32)
    params = _init_params(k_p, channels, mel_channels)
    kparams = _to_kernel_params(params, channels, T)

    out = mel_encoder_forward(x, kparams, channels)
    out = jax.block_until_ready(out)

    ref = mel_encoder_ref(x, params, channels)
    assert out.shape == (N, T // 4, channels), out.shape
    err = float(jnp.max(jnp.abs(out - ref)))
    assert not math.isnan(err) and err < 5e-2, err

    print("KERNEL_OK")
</pallas_src>

<mosaic_0001>
module attributes {stable_mosaic.version = 11 : i64} {
  func.func @_mel_encoder_kernel(%arg0: i32, %arg1: memref<1x32x80xf32, #tpu.memory_space<vmem>>, %arg2: memref<16x16xf32, #tpu.memory_space<vmem>>, %arg3: memref<32x32xf32, #tpu.memory_space<vmem>>, %arg4: memref<64x64xf32, #tpu.memory_space<vmem>>, %arg5: memref<16x32xf32, #tpu.memory_space<vmem>>, %arg6: memref<8x16xf32, #tpu.memory_space<vmem>>, %arg7: memref<240x16xf32, #tpu.memory_space<vmem>>, %arg8: memref<1x16xf32, #tpu.memory_space<vmem>>, %arg9: memref<48x16xf32, #tpu.memory_space<vmem>>, %arg10: memref<1x16xf32, #tpu.memory_space<vmem>>, %arg11: memref<1x16xf32, #tpu.memory_space<vmem>>, %arg12: memref<1x16xf32, #tpu.memory_space<vmem>>, %arg13: memref<48x16xf32, #tpu.memory_space<vmem>>, %arg14: memref<1x16xf32, #tpu.memory_space<vmem>>, %arg15: memref<1x16xf32, #tpu.memory_space<vmem>>, %arg16: memref<1x16xf32, #tpu.memory_space<vmem>>, %arg17: memref<48x16xf32, #tpu.memory_space<vmem>>, %arg18: memref<1x16xf32, #tpu.memory_space<vmem>>, %arg19: memref<1x16xf32, #tpu.memory_space<vmem>>, %arg20: memref<1x16xf32, #tpu.memory_space<vmem>>, %arg21: memref<48x16xf32, #tpu.memory_space<vmem>>, %arg22: memref<1x16xf32, #tpu.memory_space<vmem>>, %arg23: memref<1x16xf32, #tpu.memory_space<vmem>>, %arg24: memref<1x16xf32, #tpu.memory_space<vmem>>, %arg25: memref<48x32xf32, #tpu.memory_space<vmem>>, %arg26: memref<1x32xf32, #tpu.memory_space<vmem>>, %arg27: memref<1x32xf32, #tpu.memory_space<vmem>>, %arg28: memref<1x32xf32, #tpu.memory_space<vmem>>, %arg29: memref<96x32xf32, #tpu.memory_space<vmem>>, %arg30: memref<1x32xf32, #tpu.memory_space<vmem>>, %arg31: memref<1x32xf32, #tpu.memory_space<vmem>>, %arg32: memref<1x32xf32, #tpu.memory_space<vmem>>, %arg33: memref<96x32xf32, #tpu.memory_space<vmem>>, %arg34: memref<1x32xf32, #tpu.memory_space<vmem>>, %arg35: memref<1x32xf32, #tpu.memory_space<vmem>>, %arg36: memref<1x32xf32, #tpu.memory_space<vmem>>, %arg37: memref<96x32xf32, #tpu.memory_space<vmem>>, %arg38: memref<1x32xf32, #tpu.memory_space<vmem>>, %arg39: memref<1x32xf32, #tpu.memory_space<vmem>>, %arg40: memref<1x32xf32, #tpu.memory_space<vmem>>, %arg41: memref<96x32xf32, #tpu.memory_space<vmem>>, %arg42: memref<1x32xf32, #tpu.memory_space<vmem>>, %arg43: memref<1x32xf32, #tpu.memory_space<vmem>>, %arg44: memref<1x32xf32, #tpu.memory_space<vmem>>, %arg45: memref<96x64xf32, #tpu.memory_space<vmem>>, %arg46: memref<1x64xf32, #tpu.memory_space<vmem>>, %arg47: memref<1x64xf32, #tpu.memory_space<vmem>>, %arg48: memref<1x64xf32, #tpu.memory_space<vmem>>, %arg49: memref<192x64xf32, #tpu.memory_space<vmem>>, %arg50: memref<1x64xf32, #tpu.memory_space<vmem>>, %arg51: memref<1x64xf32, #tpu.memory_space<vmem>>, %arg52: memref<1x64xf32, #tpu.memory_space<vmem>>, %arg53: memref<192x64xf32, #tpu.memory_space<vmem>>, %arg54: memref<1x64xf32, #tpu.memory_space<vmem>>, %arg55: memref<1x64xf32, #tpu.memory_space<vmem>>, %arg56: memref<1x64xf32, #tpu.memory_space<vmem>>, %arg57: memref<192x64xf32, #tpu.memory_space<vmem>>, %arg58: memref<1x64xf32, #tpu.memory_space<vmem>>, %arg59: memref<1x64xf32, #tpu.memory_space<vmem>>, %arg60: memref<1x64xf32, #tpu.memory_space<vmem>>, %arg61: memref<192x64xf32, #tpu.memory_space<vmem>>, %arg62: memref<1x64xf32, #tpu.memory_space<vmem>>, %arg63: memref<1x64xf32, #tpu.memory_space<vmem>>, %arg64: memref<1x64xf32, #tpu.memory_space<vmem>>, %arg65: memref<1x8x64xf32, #tpu.memory_space<vmem>>) attributes {dimension_semantics = [#tpu.dimension_semantics<parallel>], iteration_bounds = array<i64: 2>, scalar_prefetch = 0 : i64, scratch_operands = 0 : i64, tpu.core_type = #tpu.core_type<tc>, window_params = [{transform_indices = @transform_0, window_bounds = array<i64: 1, 32, 80>}, {pipeline_mode = #tpu.pipeline_mode<synchronous>, transform_indices = @transform_1, window_bounds = array<i64: 16, 16>}, {pipeline_mode = #tpu.pipeline_mode<synchronous>, transform_indices = @transform_2, window_bounds = array<i64: 32, 32>}, {pipeline_mode = #tpu.pipeline_mode<synchronous>, transform_indices = @transform_3, window_bounds = array<i64: 64, 64>}, {pipeline_mode = #tpu.pipeline_mode<synchronous>, transform_indices = @transform_4, window_bounds = array<i64: 16, 32>}, {pipeline_mode = #tpu.pipeline_mode<synchronous>, transform_indices = @transform_5, window_bounds = array<i64: 8, 16>}, {pipeline_mode = #tpu.pipeline_mode<synchronous>, transform_indices = @transform_6, window_bounds = array<i64: 240, 16>}, {pipeline_mode = #tpu.pipeline_mode<synchronous>, transform_indices = @transform_7, window_bounds = array<i64: 1, 16>}, {pipeline_mode = #tpu.pipeline_mode<synchronous>, transform_indices = @transform_8, window_bounds = array<i64: 48, 16>}, {pipeline_mode = #tpu.pipeline_mode<synchronous>, transform_indices = @transform_9, window_bounds = array<i64: 1, 16>}, {pipeline_mode = #tpu.pipeline_mode<synchronous>, transform_indices = @transform_10, window_bounds = array<i64: 1, 16>}, {pipeline_mode = #tpu.pipeline_mode<synchronous>, transform_indices = @transform_11, window_bounds = array<i64: 1, 16>}, {pipeline_mode = #tpu.pipeline_mode<synchronous>, transform_indices = @transform_12, window_bounds = array<i64: 48, 16>}, {pipeline_mode = #tpu.pipeline_mode<synchronous>, transform_indices = @transform_13, window_bounds = array<i64: 1, 16>}, {pipeline_mode = #tpu.pipeline_mode<synchronous>, transform_indices = @transform_14, window_bounds = array<i64: 1, 16>}, {pipeline_mode = #tpu.pipeline_mode<synchronous>, transform_indices = @transform_15, window_bounds = array<i64: 1, 16>}, {pipeline_mode = #tpu.pipeline_mode<synchronous>, transform_indices = @transform_16, window_bounds = array<i64: 48, 16>}, {pipeline_mode = #tpu.pipeline_mode<synchronous>, transform_indices = @transform_17, window_bounds = array<i64: 1, 16>}, {pipeline_mode = #tpu.pipeline_mode<synchronous>, transform_indices = @transform_18, window_bounds = array<i64: 1, 16>}, {pipeline_mode = #tpu.pipeline_mode<synchronous>, transform_indices = @transform_19, window_bounds = array<i64: 1, 16>}, {pipeline_mode = #tpu.pipeline_mode<synchronous>, transform_indices = @transform_20, window_bounds = array<i64: 48, 16>}, {pipeline_mode = #tpu.pipeline_mode<synchronous>, transform_indices = @transform_21, window_bounds = array<i64: 1, 16>}, {pipeline_mode = #tpu.pipeline_mode<synchronous>, transform_indices = @transform_22, window_bounds = array<i64: 1, 16>}, {pipeline_mode = #tpu.pipeline_mode<synchronous>, transform_indices = @transform_23, window_bounds = array<i64: 1, 16>}, {pipeline_mode = #tpu.pipeline_mode<synchronous>, transform_indices = @transform_24, window_bounds = array<i64: 48, 32>}, {pipeline_mode = #tpu.pipeline_mode<synchronous>, transform_indices = @transform_25, window_bounds = array<i64: 1, 32>}, {pipeline_mode = #tpu.pipeline_mode<synchronous>, transform_indices = @transform_26, window_bounds = array<i64: 1, 32>}, {pipeline_mode = #tpu.pipeline_mode<synchronous>, transform_indices = @transform_27, window_bounds = array<i64: 1, 32>}, {pipeline_mode = #tpu.pipeline_mode<synchronous>, transform_indices = @transform_28, window_bounds = array<i64: 96, 32>}, {pipeline_mode = #tpu.pipeline_mode<synchronous>, transform_indices = @transform_29, window_bounds = array<i64: 1, 32>}, {pipeline_mode = #tpu.pipeline_mode<synchronous>, transform_indices = @transform_30, window_bounds = array<i64: 1, 32>}, {pipeline_mode = #tpu.pipeline_mode<synchronous>, transform_indices = @transform_31, window_bounds = array<i64: 1, 32>}, {pipeline_mode = #tpu.pipeline_mode<synchronous>, transform_indices = @transform_32, window_bounds = array<i64: 96, 32>}, {pipeline_mode = #tpu.pipeline_mode<synchronous>, transform_indices = @transform_33, window_bounds = array<i64: 1, 32>}, {pipeline_mode = #tpu.pipeline_mode<synchronous>, transform_indices = @transform_34, window_bounds = array<i64: 1, 32>}, {pipeline_mode = #tpu.pipeline_mode<synchronous>, transform_indices = @transform_35, window_bounds = array<i64: 1, 32>}, {pipeline_mode = #tpu.pipeline_mode<synchronous>, transform_indices = @transform_36, window_bounds = array<i64: 96, 32>}, {pipeline_mode = #tpu.pipeline_mode<synchronous>, transform_indices = @transform_37, window_bounds = array<i64: 1, 32>}, {pipeline_mode = #tpu.pipeline_mode<synchronous>, transform_indices = @transform_38, window_bounds = array<i64: 1, 32>}, {pipeline_mode = #tpu.pipeline_mode<synchronous>, transform_indices = @transform_39, window_bounds = array<i64: 1, 32>}, {pipeline_mode = #tpu.pipeline_mode<synchronous>, transform_indices = @transform_40, window_bounds = array<i64: 96, 32>}, {pipeline_mode = #tpu.pipeline_mode<synchronous>, transform_indices = @transform_41, window_bounds = array<i64: 1, 32>}, {pipeline_mode = #tpu.pipeline_mode<synchronous>, transform_indices = @transform_42, window_bounds = array<i64: 1, 32>}, {pipeline_mode = #tpu.pipeline_mode<synchronous>, transform_indices = @transform_43, window_bounds = array<i64: 1, 32>}, {pipeline_mode = #tpu.pipeline_mode<synchronous>, transform_indices = @transform_44, window_bounds = array<i64: 96, 64>}, {pipeline_mode = #tpu.pipeline_mode<synchronous>, transform_indices = @transform_45, window_bounds = array<i64: 1, 64>}, {pipeline_mode = #tpu.pipeline_mode<synchronous>, transform_indices = @transform_46, window_bounds = array<i64: 1, 64>}, {pipeline_mode = #tpu.pipeline_mode<synchronous>, transform_indices = @transform_47, window_bounds = array<i64: 1, 64>}, {pipeline_mode = #tpu.pipeline_mode<synchronous>, transform_indices = @transform_48, window_bounds = array<i64: 192, 64>}, {pipeline_mode = #tpu.pipeline_mode<synchronous>, transform_indices = @transform_49, window_bounds = array<i64: 1, 64>}, {pipeline_mode = #tpu.pipeline_mode<synchronous>, transform_indices = @transform_50, window_bounds = array<i64: 1, 64>}, {pipeline_mode = #tpu.pipeline_mode<synchronous>, transform_indices = @transform_51, window_bounds = array<i64: 1, 64>}, {pipeline_mode = #tpu.pipeline_mode<synchronous>, transform_indices = @transform_52, window_bounds = array<i64: 192, 64>}, {pipeline_mode = #tpu.pipeline_mode<synchronous>, transform_indices = @transform_53, window_bounds = array<i64: 1, 64>}, {pipeline_mode = #tpu.pipeline_mode<synchronous>, transform_indices = @transform_54, window_bounds = array<i64: 1, 64>}, {pipeline_mode = #tpu.pipeline_mode<synchronous>, transform_indices = @transform_55, window_bounds = array<i64: 1, 64>}, {pipeline_mode = #tpu.pipeline_mode<synchronous>, transform_indices = @transform_56, window_bounds = array<i64: 192, 64>}, {pipeline_mode = #tpu.pipeline_mode<synchronous>, transform_indices = @transform_57, window_bounds = array<i64: 1, 64>}, {pipeline_mode = #tpu.pipeline_mode<synchronous>, transform_indices = @transform_58, window_bounds = array<i64: 1, 64>}, {pipeline_mode = #tpu.pipeline_mode<synchronous>, transform_indices = @transform_59, window_bounds = array<i64: 1, 64>}, {pipeline_mode = #tpu.pipeline_mode<synchronous>, transform_indices = @transform_60, window_bounds = array<i64: 192, 64>}, {pipeline_mode = #tpu.pipeline_mode<synchronous>, transform_indices = @transform_61, window_bounds = array<i64: 1, 64>}, {pipeline_mode = #tpu.pipeline_mode<synchronous>, transform_indices = @transform_62, window_bounds = array<i64: 1, 64>}, {pipeline_mode = #tpu.pipeline_mode<synchronous>, transform_indices = @transform_63, window_bounds = array<i64: 1, 64>}, {transform_indices = @transform_64, window_bounds = array<i64: 1, 8, 64>}]} {
    %c0 = arith.constant 0 : index
    %c0_0 = arith.constant 0 : index
    %c0_1 = arith.constant 0 : index
    %0 = vector.load %arg1[%c0, %c0_0, %c0_1] : memref<1x32x80xf32, #tpu.memory_space<vmem>>, vector<1x32x80xf32>
    %1 = vector.shape_cast %0 : vector<1x32x80xf32> to vector<32x80xf32>
    %cst = arith.constant 0.000000e+00 : f32
    %2 = vector.broadcast %cst : f32 to vector<1x80xf32>
    %3 = vector.extract_strided_slice %1 {offsets = [0, 0], sizes = [31, 80], strides = [1, 1]} : vector<32x80xf32> to vector<31x80xf32>
    %4 = tpu.concatenate %2, %3 in 0 : vector<1x80xf32>, vector<31x80xf32> -> vector<32x80xf32>
    %5 = vector.extract_strided_slice %1 {offsets = [1, 0], sizes = [31, 80], strides = [1, 1]} : vector<32x80xf32> to vector<31x80xf32>
    %6 = tpu.concatenate %5, %2 in 0 : vector<31x80xf32>, vector<1x80xf32> -> vector<32x80xf32>
    %7 = tpu.concatenate %4, %1, %6 in 1 : vector<32x80xf32>, vector<32x80xf32>, vector<32x80xf32> -> vector<32x240xf32>
    %c0_2 = arith.constant 0 : index
    %c0_3 = arith.constant 0 : index
    %8 = vector.load %arg7[%c0_2, %c0_3] : memref<240x16xf32, #tpu.memory_space<vmem>>, vector<240x16xf32>
    %cst_4 = arith.constant dense<0.000000e+00> : vector<32x16xf32>
    %9 = tpu.matmul %7, %8, %cst_4 {dimension_numbers = #tpu.dot_dimension_numbers<[1], [0], [0], [1], [0, 0, 1, 1], [], []>} : vector<32x240xf32>, vector<240x16xf32>, vector<32x16xf32> -> vector<32x16xf32>
    %c0_5 = arith.constant 0 : index
    %c0_6 = arith.constant 0 : index
    %10 = vector.load %arg8[%c0_5, %c0_6] : memref<1x16xf32, #tpu.memory_space<vmem>>, vector<1x16xf32>
    %11 = vector.broadcast %10 : vector<1x16xf32> to vector<32x16xf32>
    %12 = arith.addf %9, %11 : vector<32x16xf32>
    %cst_7 = arith.constant 0.000000e+00 : f32
    %13 = vector.broadcast %cst_7 : f32 to vector<1x16xf32>
    %14 = vector.extract_strided_slice %12 {offsets = [0, 0], sizes = [31, 16], strides = [1, 1]} : vector<32x16xf32> to vector<31x16xf32>
    %15 = tpu.concatenate %13, %14 in 0 : vector<1x16xf32>, vector<31x16xf32> -> vector<32x16xf32>
    %16 = vector.extract_strided_slice %12 {offsets = [1, 0], sizes = [31, 16], strides = [1, 1]} : vector<32x16xf32> to vector<31x16xf32>
    %17 = tpu.concatenate %16, %13 in 0 : vector<31x16xf32>, vector<1x16xf32> -> vector<32x16xf32>
    %18 = tpu.concatenate %15, %12, %17 in 1 : vector<32x16xf32>, vector<32x16xf32>, vector<32x16xf32> -> vector<32x48xf32>
    %c0_8 = arith.constant 0 : index
    %c0_9 = arith.constant 0 : index
    %19 = vector.load %arg9[%c0_8, %c0_9] : memref<48x16xf32, #tpu.memory_space<vmem>>, vector<48x16xf32>
    %cst_10 = arith.constant dense<0.000000e+00> : vector<32x16xf32>
    %20 = tpu.matmul %18, %19, %cst_10 {dimension_numbers = #tpu.dot_dimension_numbers<[1], [0], [0], [1], [0, 0, 1, 1], [], []>} : vector<32x48xf32>, vector<48x16xf32>, vector<32x16xf32> -> vector<32x16xf32>
    %c0_11 = arith.constant 0 : index
    %c0_12 = arith.constant 0 : index
    %21 = vector.load %arg10[%c0_11, %c0_12] : memref<1x16xf32, #tpu.memory_space<vmem>>, vector<1x16xf32>
    %22 = vector.broadcast %21 : vector<1x16xf32> to vector<32x16xf32>
    %23 = arith.addf %20, %22 : vector<32x16xf32>
    %cst_13 = arith.constant dense<0.000000e+00> : vector<16xf32>
    %24 = vector.multi_reduction <add>, %23, %cst_13 [0] : vector<32x16xf32> to vector<16xf32>
    %25 = vector.shape_cast %24 : vector<16xf32> to vector<1x16xf32>
    %c0_14 = arith.constant 0 : index
    %c0_15 = arith.constant 0 : index
    %26 = vector.load %arg2[%c0_14, %c0_15] : memref<16x16xf32, #tpu.memory_space<vmem>>, vector<16x16xf32>
    %cst_16 = arith.constant dense<0.000000e+00> : vector<1x16xf32>
    %27 = tpu.matmul %25, %26, %cst_16 {dimension_numbers = #tpu.dot_dimension_numbers<[1], [0], [0], [1], [0, 0, 1, 1], [], []>} : vector<1x16xf32>, vector<16x16xf32>, vector<1x16xf32> -> vector<1x16xf32>
    %28 = vector.broadcast %27 : vector<1x16xf32> to vector<32x16xf32>
    %29 = arith.subf %23, %28 : vector<32x16xf32>
    %30 = arith.mulf %29, %29 : vector<32x16xf32>
    %cst_17 = arith.constant dense<0.000000e+00> : vector<16xf32>
    %31 = vector.multi_reduction <add>, %30, %cst_17 [0] : vector<32x16xf32> to vector<16xf32>
    %32 = vector.shape_cast %31 : vector<16xf32> to vector<1x16xf32>
    %c0_18 = arith.constant 0 : index
    %c0_19 = arith.constant 0 : index
    %33 = vector.load %arg2[%c0_18, %c0_19] : memref<16x16xf32, #tpu.memory_space<vmem>>, vector<16x16xf32>
    %cst_20 = arith.constant dense<0.000000e+00> : vector<1x16xf32>
    %34 = tpu.matmul %32, %33, %cst_20 {dimension_numbers = #tpu.dot_dimension_numbers<[1], [0], [0], [1], [0, 0, 1, 1], [], []>} : vector<1x16xf32>, vector<16x16xf32>, vector<1x16xf32> -> vector<1x16xf32>
    %cst_21 = arith.constant 9.99999974E-6 : f32
    %35 = vector.broadcast %cst_21 : f32 to vector<1x16xf32>
    %36 = arith.addf %34, %35 : vector<1x16xf32>
    %37 = math.rsqrt %36 : vector<1x16xf32>
    %38 = vector.broadcast %37 : vector<1x16xf32> to vector<32x16xf32>
    %39 = arith.mulf %29, %38 : vector<32x16xf32>
    %c0_22 = arith.constant 0 : index
    %c0_23 = arith.constant 0 : index
    %40 = vector.load %arg11[%c0_22, %c0_23] : memref<1x16xf32, #tpu.memory_space<vmem>>, vector<1x16xf32>
    %41 = vector.broadcast %40 : vector<1x16xf32> to vector<32x16xf32>
    %42 = arith.mulf %39, %41 : vector<32x16xf32>
    %c0_24 = arith.constant 0 : index
    %c0_25 = arith.constant 0 : index
    %43 = vector.load %arg12[%c0_24, %c0_25] : memref<1x16xf32, #tpu.memory_space<vmem>>, vector<1x16xf32>
    %44 = vector.broadcast %43 : vector<1x16xf32> to vector<32x16xf32>
    %45 = arith.addf %42, %44 : vector<32x16xf32>
    %cst_26 = arith.constant 0.000000e+00 : f32
    %46 = vector.broadcast %cst_26 : f32 to vector<32x16xf32>
    %47 = arith.maximumf %45, %46 : vector<32x16xf32>
    %cst_27 = arith.constant 0.000000e+00 : f32
    %48 = vector.broadcast %cst_27 : f32 to vector<1x16xf32>
    %49 = vector.extract_strided_slice %47 {offsets = [0, 0], sizes = [31, 16], strides = [1, 1]} : vector<32x16xf32> to vector<31x16xf32>
    %50 = tpu.concatenate %48, %49 in 0 : vector<1x16xf32>, vector<31x16xf32> -> vector<32x16xf32>
    %51 = vector.extract_strided_slice %47 {offsets = [1, 0], sizes = [31, 16], strides = [1, 1]} : vector<32x16xf32> to vector<31x16xf32>
    %52 = tpu.concatenate %51, %48 in 0 : vector<31x16xf32>, vector<1x16xf32> -> vector<32x16xf32>
    %53 = tpu.concatenate %50, %47, %52 in 1 : vector<32x16xf32>, vector<32x16xf32>, vector<32x16xf32> -> vector<32x48xf32>
    %c0_28 = arith.constant 0 : index
    %c0_29 = arith.constant 0 : index
    %54 = vector.load %arg13[%c0_28, %c0_29] : memref<48x16xf32, #tpu.memory_space<vmem>>, vector<48x16xf32>
    %cst_30 = arith.constant dense<0.000000e+00> : vector<32x16xf32>
    %55 = tpu.matmul %53, %54, %cst_30 {dimension_numbers = #tpu.dot_dimension_numbers<[1], [0], [0], [1], [0, 0, 1, 1], [], []>} : vector<32x48xf32>, vector<48x16xf32>, vector<32x16xf32> -> vector<32x16xf32>
    %c0_31 = arith.constant 0 : index
    %c0_32 = arith.constant 0 : index
    %56 = vector.load %arg14[%c0_31, %c0_32] : memref<1x16xf32, #tpu.memory_space<vmem>>, vector<1x16xf32>
    %57 = vector.broadcast %56 : vector<1x16xf32> to vector<32x16xf32>
    %58 = arith.addf %55, %57 : vector<32x16xf32>
    %cst_33 = arith.constant dense<0.000000e+00> : vector<16xf32>
    %59 = vector.multi_reduction <add>, %58, %cst_33 [0] : vector<32x16xf32> to vector<16xf32>
    %60 = vector.shape_cast %59 : vector<16xf32> to vector<1x16xf32>
    %c0_34 = arith.constant 0 : index
    %c0_35 = arith.constant 0 : index
    %61 = vector.load %arg2[%c0_34, %c0_35] : memref<16x16xf32, #tpu.memory_space<vmem>>, vector<16x16xf32>
    %cst_36 = arith.constant dense<0.000000e+00> : vector<1x16xf32>
    %62 = tpu.matmul %60, %61, %cst_36 {dimension_numbers = #tpu.dot_dimension_numbers<[1], [0], [0], [1], [0, 0, 1, 1], [], []>} : vector<1x16xf32>, vector<16x16xf32>, vector<1x16xf32> -> vector<1x16xf32>
    %63 = vector.broadcast %62 : vector<1x16xf32> to vector<32x16xf32>
    %64 = arith.subf %58, %63 : vector<32x16xf32>
    %65 = arith.mulf %64, %64 : vector<32x16xf32>
    %cst_37 = arith.constant dense<0.000000e+00> : vector<16xf32>
    %66 = vector.multi_reduction <add>, %65, %cst_37 [0] : vector<32x16xf32> to vector<16xf32>
    %67 = vector.shape_cast %66 : vector<16xf32> to vector<1x16xf32>
    %c0_38 = arith.constant 0 : index
    %c0_39 = arith.constant 0 : index
    %68 = vector.load %arg2[%c0_38, %c0_39] : memref<16x16xf32, #tpu.memory_space<vmem>>, vector<16x16xf32>
    %cst_40 = arith.constant dense<0.000000e+00> : vector<1x16xf32>
    %69 = tpu.matmul %67, %68, %cst_40 {dimension_numbers = #tpu.dot_dimension_numbers<[1], [0], [0], [1], [0, 0, 1, 1], [], []>} : vector<1x16xf32>, vector<16x16xf32>, vector<1x16xf32> -> vector<1x16xf32>
    %cst_41 = arith.constant 9.99999974E-6 : f32
    %70 = vector.broadcast %cst_41 : f32 to vector<1x16xf32>
    %71 = arith.addf %69, %70 : vector<1x16xf32>
    %72 = math.rsqrt %71 : vector<1x16xf32>
    %73 = vector.broadcast %72 : vector<1x16xf32> to vector<32x16xf32>
    %74 = arith.mulf %64, %73 : vector<32x16xf32>
    %c0_42 = arith.constant 0 : index
    %c0_43 = arith.constant 0 : index
    %75 = vector.load %arg15[%c0_42, %c0_43] : memref<1x16xf32, #tpu.memory_space<vmem>>, vector<1x16xf32>
    %76 = vector.broadcast %75 : vector<1x16xf32> to vector<32x16xf32>
    %77 = arith.mulf %74, %76 : vector<32x16xf32>
    %c0_44 = arith.constant 0 : index
    %c0_45 = arith.constant 0 : index
    %78 = vector.load %arg16[%c0_44, %c0_45] : memref<1x16xf32, #tpu.memory_space<vmem>>, vector<1x16xf32>
    %79 = vector.broadcast %78 : vector<1x16xf32> to vector<32x16xf32>
    %80 = arith.addf %77, %79 : vector<32x16xf32>
    %81 = arith.addf %80, %12 : vector<32x16xf32>
    %cst_46 = arith.constant 0.000000e+00 : f32
    %82 = vector.broadcast %cst_46 : f32 to vector<32x16xf32>
    %83 = arith.maximumf %81, %82 : vector<32x16xf32>
    %cst_47 = arith.constant 0.000000e+00 : f32
    %84 = vector.broadcast %cst_47 : f32 to vector<1x16xf32>
    %85 = vector.extract_strided_slice %83 {offsets = [0, 0], sizes = [31, 16], strides = [1, 1]} : vector<32x16xf32> to vector<31x16xf32>
    %86 = tpu.concatenate %84, %85 in 0 : vector<1x16xf32>, vector<31x16xf32> -> vector<32x16xf32>
    %87 = vector.extract_strided_slice %83 {offsets = [1, 0], sizes = [31, 16], strides = [1, 1]} : vector<32x16xf32> to vector<31x16xf32>
    %88 = tpu.concatenate %87, %84 in 0 : vector<31x16xf32>, vector<1x16xf32> -> vector<32x16xf32>
    %89 = tpu.concatenate %86, %83, %88 in 1 : vector<32x16xf32>, vector<32x16xf32>, vector<32x16xf32> -> vector<32x48xf32>
    %c0_48 = arith.constant 0 : index
    %c0_49 = arith.constant 0 : index
    %90 = vector.load %arg17[%c0_48, %c0_49] : memref<48x16xf32, #tpu.memory_space<vmem>>, vector<48x16xf32>
    %cst_50 = arith.constant dense<0.000000e+00> : vector<32x16xf32>
    %91 = tpu.matmul %89, %90, %cst_50 {dimension_numbers = #tpu.dot_dimension_numbers<[1], [0], [0], [1], [0, 0, 1, 1], [], []>} : vector<32x48xf32>, vector<48x16xf32>, vector<32x16xf32> -> vector<32x16xf32>
    %c0_51 = arith.constant 0 : index
    %c0_52 = arith.constant 0 : index
    %92 = vector.load %arg18[%c0_51, %c0_52] : memref<1x16xf32, #tpu.memory_space<vmem>>, vector<1x16xf32>
    %93 = vector.broadcast %92 : vector<1x16xf32> to vector<32x16xf32>
    %94 = arith.addf %91, %93 : vector<32x16xf32>
    %cst_53 = arith.constant dense<0.000000e+00> : vector<16xf32>
    %95 = vector.multi_reduction <add>, %94, %cst_53 [0] : vector<32x16xf32> to vector<16xf32>
    %96 = vector.shape_cast %95 : vector<16xf32> to vector<1x16xf32>
    %c0_54 = arith.constant 0 : index
    %c0_55 = arith.constant 0 : index
    %97 = vector.load %arg2[%c0_54, %c0_55] : memref<16x16xf32, #tpu.memory_space<vmem>>, vector<16x16xf32>
    %cst_56 = arith.constant dense<0.000000e+00> : vector<1x16xf32>
    %98 = tpu.matmul %96, %97, %cst_56 {dimension_numbers = #tpu.dot_dimension_numbers<[1], [0], [0], [1], [0, 0, 1, 1], [], []>} : vector<1x16xf32>, vector<16x16xf32>, vector<1x16xf32> -> vector<1x16xf32>
    %99 = vector.broadcast %98 : vector<1x16xf32> to vector<32x16xf32>
    %100 = arith.subf %94, %99 : vector<32x16xf32>
    %101 = arith.mulf %100, %100 : vector<32x16xf32>
    %cst_57 = arith.constant dense<0.000000e+00> : vector<16xf32>
    %102 = vector.multi_reduction <add>, %101, %cst_57 [0] : vector<32x16xf32> to vector<16xf32>
    %103 = vector.shape_cast %102 : vector<16xf32> to vector<1x16xf32>
    %c0_58 = arith.constant 0 : index
    %c0_59 = arith.constant 0 : index
    %104 = vector.load %arg2[%c0_58, %c0_59] : memref<16x16xf32, #tpu.memory_space<vmem>>, vector<16x16xf32>
    %cst_60 = arith.constant dense<0.000000e+00> : vector<1x16xf32>
    %105 = tpu.matmul %103, %104, %cst_60 {dimension_numbers = #tpu.dot_dimension_numbers<[1], [0], [0], [1], [0, 0, 1, 1], [], []>} : vector<1x16xf32>, vector<16x16xf32>, vector<1x16xf32> -> vector<1x16xf32>
    %cst_61 = arith.constant 9.99999974E-6 : f32
    %106 = vector.broadcast %cst_61 : f32 to vector<1x16xf32>
    %107 = arith.addf %105, %106 : vector<1x16xf32>
    %108 = math.rsqrt %107 : vector<1x16xf32>
    %109 = vector.broadcast %108 : vector<1x16xf32> to vector<32x16xf32>
    %110 = arith.mulf %100, %109 : vector<32x16xf32>
    %c0_62 = arith.constant 0 : index
    %c0_63 = arith.constant 0 : index
    %111 = vector.load %arg19[%c0_62, %c0_63] : memref<1x16xf32, #tpu.memory_space<vmem>>, vector<1x16xf32>
    %112 = vector.broadcast %111 : vector<1x16xf32> to vector<32x16xf32>
    %113 = arith.mulf %110, %112 : vector<32x16xf32>
    %c0_64 = arith.constant 0 : index
    %c0_65 = arith.constant 0 : index
    %114 = vector.load %arg20[%c0_64, %c0_65] : memref<1x16xf32, #tpu.memory_space<vmem>>, vector<1x16xf32>
    %115 = vector.broadcast %114 : vector<1x16xf32> to vector<32x16xf32>
    %116 = arith.addf %113, %115 : vector<32x16xf32>
    %cst_66 = arith.constant 0.000000e+00 : f32
    %117 = vector.broadcast %cst_66 : f32 to vector<32x16xf32>
    %118 = arith.maximumf %116, %117 : vector<32x16xf32>
    %cst_67 = arith.constant 0.000000e+00 : f32
    %119 = vector.broadcast %cst_67 : f32 to vector<1x16xf32>
    %120 = vector.extract_strided_slice %118 {offsets = [0, 0], sizes = [31, 16], strides = [1, 1]} : vector<32x16xf32> to vector<31x16xf32>
    %121 = tpu.concatenate %119, %120 in 0 : vector<1x16xf32>, vector<31x16xf32> -> vector<32x16xf32>
    %122 = vector.extract_strided_slice %118 {offsets = [1, 0], sizes = [31, 16], strides = [1, 1]} : vector<32x16xf32> to vector<31x16xf32>
    %123 = tpu.concatenate %122, %119 in 0 : vector<31x16xf32>, vector<1x16xf32> -> vector<32x16xf32>
    %124 = tpu.concatenate %121, %118, %123 in 1 : vector<32x16xf32>, vector<32x16xf32>, vector<32x16xf32> -> vector<32x48xf32>
    %c0_68 = arith.constant 0 : index
    %c0_69 = arith.constant 0 : index
    %125 = vector.load %arg21[%c0_68, %c0_69] : memref<48x16xf32, #tpu.memory_space<vmem>>, vector<48x16xf32>
    %cst_70 = arith.constant dense<0.000000e+00> : vector<32x16xf32>
    %126 = tpu.matmul %124, %125, %cst_70 {dimension_numbers = #tpu.dot_dimension_numbers<[1], [0], [0], [1], [0, 0, 1, 1], [], []>} : vector<32x48xf32>, vector<48x16xf32>, vector<32x16xf32> -> vector<32x16xf32>
    %c0_71 = arith.constant 0 : index
    %c0_72 = arith.constant 0 : index
    %127 = vector.load %arg22[%c0_71, %c0_72] : memref<1x16xf32, #tpu.memory_space<vmem>>, vector<1x16xf32>
    %128 = vector.broadcast %127 : vector<1x16xf32> to vector<32x16xf32>
    %129 = arith.addf %126, %128 : vector<32x16xf32>
    %cst_73 = arith.constant dense<0.000000e+00> : vector<16xf32>
    %130 = vector.multi_reduction <add>, %129, %cst_73 [0] : vector<32x16xf32> to vector<16xf32>
    %131 = vector.shape_cast %130 : vector<16xf32> to vector<1x16xf32>
    %c0_74 = arith.constant 0 : index
    %c0_75 = arith.constant 0 : index
    %132 = vector.load %arg2[%c0_74, %c0_75] : memref<16x16xf32, #tpu.memory_space<vmem>>, vector<16x16xf32>
    %cst_76 = arith.constant dense<0.000000e+00> : vector<1x16xf32>
    %133 = tpu.matmul %131, %132, %cst_76 {dimension_numbers = #tpu.dot_dimension_numbers<[1], [0], [0], [1], [0, 0, 1, 1], [], []>} : vector<1x16xf32>, vector<16x16xf32>, vector<1x16xf32> -> vector<1x16xf32>
    %134 = vector.broadcast %133 : vector<1x16xf32> to vector<32x16xf32>
    %135 = arith.subf %129, %134 : vector<32x16xf32>
    %136 = arith.mulf %135, %135 : vector<32x16xf32>
    %cst_77 = arith.constant dense<0.000000e+00> : vector<16xf32>
    %137 = vector.multi_reduction <add>, %136, %cst_77 [0] : vector<32x16xf32> to vector<16xf32>
    %138 = vector.shape_cast %137 : vector<16xf32> to vector<1x16xf32>
    %c0_78 = arith.constant 0 : index
    %c0_79 = arith.constant 0 : index
    %139 = vector.load %arg2[%c0_78, %c0_79] : memref<16x16xf32, #tpu.memory_space<vmem>>, vector<16x16xf32>
    %cst_80 = arith.constant dense<0.000000e+00> : vector<1x16xf32>
    %140 = tpu.matmul %138, %139, %cst_80 {dimension_numbers = #tpu.dot_dimension_numbers<[1], [0], [0], [1], [0, 0, 1, 1], [], []>} : vector<1x16xf32>, vector<16x16xf32>, vector<1x16xf32> -> vector<1x16xf32>
    %cst_81 = arith.constant 9.99999974E-6 : f32
    %141 = vector.broadcast %cst_81 : f32 to vector<1x16xf32>
    %142 = arith.addf %140, %141 : vector<1x16xf32>
    %143 = math.rsqrt %142 : vector<1x16xf32>
    %144 = vector.broadcast %143 : vector<1x16xf32> to vector<32x16xf32>
    %145 = arith.mulf %135, %144 : vector<32x16xf32>
    %c0_82 = arith.constant 0 : index
    %c0_83 = arith.constant 0 : index
    %146 = vector.load %arg23[%c0_82, %c0_83] : memref<1x16xf32, #tpu.memory_space<vmem>>, vector<1x16xf32>
    %147 = vector.broadcast %146 : vector<1x16xf32> to vector<32x16xf32>
    %148 = arith.mulf %145, %147 : vector<32x16xf32>
    %c0_84 = arith.constant 0 : index
    %c0_85 = arith.constant 0 : index
    %149 = vector.load %arg24[%c0_84, %c0_85] : memref<1x16xf32, #tpu.memory_space<vmem>>, vector<1x16xf32>
    %150 = vector.broadcast %149 : vector<1x16xf32> to vector<32x16xf32>
    %151 = arith.addf %148, %150 : vector<32x16xf32>
    %152 = arith.addf %151, %83 : vector<32x16xf32>
    %cst_86 = arith.constant 0.000000e+00 : f32
    %153 = vector.broadcast %cst_86 : f32 to vector<32x16xf32>
    %154 = arith.maximumf %152, %153 : vector<32x16xf32>
    %c0_87 = arith.constant 0 : index
    %c0_88 = arith.constant 0 : index
    %155 = vector.load %arg5[%c0_87, %c0_88] : memref<16x32xf32, #tpu.memory_space<vmem>>, vector<16x32xf32>
    %cst_89 = arith.constant 0.000000e+00 : f32
    %156 = vector.broadcast %cst_89 : f32 to vector<1x16xf32>
    %157 = vector.extract_strided_slice %154 {offsets = [0, 0], sizes = [31, 16], strides = [1, 1]} : vector<32x16xf32> to vector<31x16xf32>
    %158 = tpu.concatenate %156, %157 in 0 : vector<1x16xf32>, vector<31x16xf32> -> vector<32x16xf32>
    %159 = vector.extract_strided_slice %154 {offsets = [1, 0], sizes = [31, 16], strides = [1, 1]} : vector<32x16xf32> to vector<31x16xf32>
    %160 = tpu.concatenate %159, %156 in 0 : vector<31x16xf32>, vector<1x16xf32> -> vector<32x16xf32>
    %161 = tpu.concatenate %158, %154, %160 in 1 : vector<32x16xf32>, vector<32x16xf32>, vector<32x16xf32> -> vector<32x48xf32>
    %cst_90 = arith.constant dense<0.000000e+00> : vector<16x48xf32>
    %162 = tpu.matmul %155, %161, %cst_90 {dimension_numbers = #tpu.dot_dimension_numbers<[1], [0], [0], [1], [0, 0, 1, 1], [], []>} : vector<16x32xf32>, vector<32x48xf32>, vector<16x48xf32> -> vector<16x48xf32>
    %c0_91 = arith.constant 0 : index
    %c0_92 = arith.constant 0 : index
    %163 = vector.load %arg25[%c0_91, %c0_92] : memref<48x32xf32, #tpu.memory_space<vmem>>, vector<48x32xf32>
    %cst_93 = arith.constant dense<0.000000e+00> : vector<16x32xf32>
    %164 = tpu.matmul %162, %163, %cst_93 {dimension_numbers = #tpu.dot_dimension_numbers<[1], [0], [0], [1], [0, 0, 1, 1], [], []>} : vector<16x48xf32>, vector<48x32xf32>, vector<16x32xf32> -> vector<16x32xf32>
    %c0_94 = arith.constant 0 : index
    %c0_95 = arith.constant 0 : index
    %165 = vector.load %arg26[%c0_94, %c0_95] : memref<1x32xf32, #tpu.memory_space<vmem>>, vector<1x32xf32>
    %166 = vector.broadcast %165 : vector<1x32xf32> to vector<16x32xf32>
    %167 = arith.addf %164, %166 : vector<16x32xf32>
    %cst_96 = arith.constant dense<0.000000e+00> : vector<32xf32>
    %168 = vector.multi_reduction <add>, %167, %cst_96 [0] : vector<16x32xf32> to vector<32xf32>
    %169 = vector.shape_cast %168 : vector<32xf32> to vector<1x32xf32>
    %c0_97 = arith.constant 0 : index
    %c0_98 = arith.constant 0 : index
    %170 = vector.load %arg3[%c0_97, %c0_98] : memref<32x32xf32, #tpu.memory_space<vmem>>, vector<32x32xf32>
    %cst_99 = arith.constant dense<0.000000e+00> : vector<1x32xf32>
    %171 = tpu.matmul %169, %170, %cst_99 {dimension_numbers = #tpu.dot_dimension_numbers<[1], [0], [0], [1], [0, 0, 1, 1], [], []>} : vector<1x32xf32>, vector<32x32xf32>, vector<1x32xf32> -> vector<1x32xf32>
    %172 = vector.broadcast %171 : vector<1x32xf32> to vector<16x32xf32>
    %173 = arith.subf %167, %172 : vector<16x32xf32>
    %174 = arith.mulf %173, %173 : vector<16x32xf32>
    %cst_100 = arith.constant dense<0.000000e+00> : vector<32xf32>
    %175 = vector.multi_reduction <add>, %174, %cst_100 [0] : vector<16x32xf32> to vector<32xf32>
    %176 = vector.shape_cast %175 : vector<32xf32> to vector<1x32xf32>
    %c0_101 = arith.constant 0 : index
    %c0_102 = arith.constant 0 : index
    %177 = vector.load %arg3[%c0_101, %c0_102] : memref<32x32xf32, #tpu.memory_space<vmem>>, vector<32x32xf32>
    %cst_103 = arith.constant dense<0.000000e+00> : vector<1x32xf32>
    %178 = tpu.matmul %176, %177, %cst_103 {dimension_numbers = #tpu.dot_dimension_numbers<[1], [0], [0], [1], [0, 0, 1, 1], [], []>} : vector<1x32xf32>, vector<32x32xf32>, vector<1x32xf32> -> vector<1x32xf32>
    %cst_104 = arith.constant 9.99999974E-6 : f32
    %179 = vector.broadcast %cst_104 : f32 to vector<1x32xf32>
    %180 = arith.addf %178, %179 : vector<1x32xf32>
    %181 = math.rsqrt %180 : vector<1x32xf32>
    %182 = vector.broadcast %181 : vector<1x32xf32> to vector<16x32xf32>
    %183 = arith.mulf %173, %182 : vector<16x32xf32>
    %c0_105 = arith.constant 0 : index
    %c0_106 = arith.constant 0 : index
    %184 = vector.load %arg27[%c0_105, %c0_106] : memref<1x32xf32, #tpu.memory_space<vmem>>, vector<1x32xf32>
    %185 = vector.broadcast %184 : vector<1x32xf32> to vector<16x32xf32>
    %186 = arith.mulf %183, %185 : vector<16x32xf32>
    %c0_107 = arith.constant 0 : index
    %c0_108 = arith.constant 0 : index
    %187 = vector.load %arg28[%c0_107, %c0_108] : memref<1x32xf32, #tpu.memory_space<vmem>>, vector<1x32xf32>
    %188 = vector.broadcast %187 : vector<1x32xf32> to vector<16x32xf32>
    %189 = arith.addf %186, %188 : vector<16x32xf32>
    %cst_109 = arith.constant 0.000000e+00 : f32
    %190 = vector.broadcast %cst_109 : f32 to vector<16x32xf32>
    %191 = arith.maximumf %189, %190 : vector<16x32xf32>
    %cst_110 = arith.constant 0.000000e+00 : f32
    %192 = vector.broadcast %cst_110 : f32 to vector<1x32xf32>
    %193 = vector.extract_strided_slice %191 {offsets = [0, 0], sizes = [15, 32], strides = [1, 1]} : vector<16x32xf32> to vector<15x32xf32>
    %194 = tpu.concatenate %192, %193 in 0 : vector<1x32xf32>, vector<15x32xf32> -> vector<16x32xf32>
    %195 = vector.extract_strided_slice %191 {offsets = [1, 0], sizes = [15, 32], strides = [1, 1]} : vector<16x32xf32> to vector<15x32xf32>
    %196 = tpu.concatenate %195, %192 in 0 : vector<15x32xf32>, vector<1x32xf32> -> vector<16x32xf32>
    %197 = tpu.concatenate %194, %191, %196 in 1 : vector<16x32xf32>, vector<16x32xf32>, vector<16x32xf32> -> vector<16x96xf32>
    %c0_111 = arith.constant 0 : index
    %c0_112 = arith.constant 0 : index
    %198 = vector.load %arg29[%c0_111, %c0_112] : memref<96x32xf32, #tpu.memory_space<vmem>>, vector<96x32xf32>
    %cst_113 = arith.constant dense<0.000000e+00> : vector<16x32xf32>
    %199 = tpu.matmul %197, %198, %cst_113 {dimension_numbers = #tpu.dot_dimension_numbers<[1], [0], [0], [1], [0, 0, 1, 1], [], []>} : vector<16x96xf32>, vector<96x32xf32>, vector<16x32xf32> -> vector<16x32xf32>
    %c0_114 = arith.constant 0 : index
    %c0_115 = arith.constant 0 : index
    %200 = vector.load %arg30[%c0_114, %c0_115] : memref<1x32xf32, #tpu.memory_space<vmem>>, vector<1x32xf32>
    %201 = vector.broadcast %200 : vector<1x32xf32> to vector<16x32xf32>
    %202 = arith.addf %199, %201 : vector<16x32xf32>
    %cst_116 = arith.constant dense<0.000000e+00> : vector<32xf32>
    %203 = vector.multi_reduction <add>, %202, %cst_116 [0] : vector<16x32xf32> to vector<32xf32>
    %204 = vector.shape_cast %203 : vector<32xf32> to vector<1x32xf32>
    %c0_117 = arith.constant 0 : index
    %c0_118 = arith.constant 0 : index
    %205 = vector.load %arg3[%c0_117, %c0_118] : memref<32x32xf32, #tpu.memory_space<vmem>>, vector<32x32xf32>
    %cst_119 = arith.constant dense<0.000000e+00> : vector<1x32xf32>
    %206 = tpu.matmul %204, %205, %cst_119 {dimension_numbers = #tpu.dot_dimension_numbers<[1], [0], [0], [1], [0, 0, 1, 1], [], []>} : vector<1x32xf32>, vector<32x32xf32>, vector<1x32xf32> -> vector<1x32xf32>
    %207 = vector.broadcast %206 : vector<1x32xf32> to vector<16x32xf32>
    %208 = arith.subf %202, %207 : vector<16x32xf32>
    %209 = arith.mulf %208, %208 : vector<16x32xf32>
    %cst_120 = arith.constant dense<0.000000e+00> : vector<32xf32>
    %210 = vector.multi_reduction <add>, %209, %cst_120 [0] : vector<16x32xf32> to vector<32xf32>
    %211 = vector.shape_cast %210 : vector<32xf32> to vector<1x32xf32>
    %c0_121 = arith.constant 0 : index
    %c0_122 = arith.constant 0 : index
    %212 = vector.load %arg3[%c0_121, %c0_122] : memref<32x32xf32, #tpu.memory_space<vmem>>, vector<32x32xf32>
    %cst_123 = arith.constant dense<0.000000e+00> : vector<1x32xf32>
    %213 = tpu.matmul %211, %212, %cst_123 {dimension_numbers = #tpu.dot_dimension_numbers<[1], [0], [0], [1], [0, 0, 1, 1], [], []>} : vector<1x32xf32>, vector<32x32xf32>, vector<1x32xf32> -> vector<1x32xf32>
    %cst_124 = arith.constant 9.99999974E-6 : f32
    %214 = vector.broadcast %cst_124 : f32 to vector<1x32xf32>
    %215 = arith.addf %213, %214 : vector<1x32xf32>
    %216 = math.rsqrt %215 : vector<1x32xf32>
    %217 = vector.broadcast %216 : vector<1x32xf32> to vector<16x32xf32>
    %218 = arith.mulf %208, %217 : vector<16x32xf32>
    %c0_125 = arith.constant 0 : index
    %c0_126 = arith.constant 0 : index
    %219 = vector.load %arg31[%c0_125, %c0_126] : memref<1x32xf32, #tpu.memory_space<vmem>>, vector<1x32xf32>
    %220 = vector.broadcast %219 : vector<1x32xf32> to vector<16x32xf32>
    %221 = arith.mulf %218, %220 : vector<16x32xf32>
    %c0_127 = arith.constant 0 : index
    %c0_128 = arith.constant 0 : index
    %222 = vector.load %arg32[%c0_127, %c0_128] : memref<1x32xf32, #tpu.memory_space<vmem>>, vector<1x32xf32>
    %223 = vector.broadcast %222 : vector<1x32xf32> to vector<16x32xf32>
    %224 = arith.addf %221, %223 : vector<16x32xf32>
    %cst_129 = arith.constant 0.000000e+00 : f32
    %225 = vector.broadcast %cst_129 : f32 to vector<16x32xf32>
    %226 = arith.maximumf %224, %225 : vector<16x32xf32>
    %cst_130 = arith.constant 0.000000e+00 : f32
    %227 = vector.broadcast %cst_130 : f32 to vector<1x32xf32>
    %228 = vector.extract_strided_slice %226 {offsets = [0, 0], sizes = [15, 32], strides = [1, 1]} : vector<16x32xf32> to vector<15x32xf32>
    %229 = tpu.concatenate %227, %228 in 0 : vector<1x32xf32>, vector<15x32xf32> -> vector<16x32xf32>
    %230 = vector.extract_strided_slice %226 {offsets = [1, 0], sizes = [15, 32], strides = [1, 1]} : vector<16x32xf32> to vector<15x32xf32>
    %231 = tpu.concatenate %230, %227 in 0 : vector<15x32xf32>, vector<1x32xf32> -> vector<16x32xf32>
    %232 = tpu.concatenate %229, %226, %231 in 1 : vector<16x32xf32>, vector<16x32xf32>, vector<16x32xf32> -> vector<16x96xf32>
    %c0_131 = arith.constant 0 : index
    %c0_132 = arith.constant 0 : index
    %233 = vector.load %arg33[%c0_131, %c0_132] : memref<96x32xf32, #tpu.memory_space<vmem>>, vector<96x32xf32>
    %cst_133 = arith.constant dense<0.000000e+00> : vector<16x32xf32>
    %234 = tpu.matmul %232, %233, %cst_133 {dimension_numbers = #tpu.dot_dimension_numbers<[1], [0], [0], [1], [0, 0, 1, 1], [], []>} : vector<16x96xf32>, vector<96x32xf32>, vector<16x32xf32> -> vector<16x32xf32>
    %c0_134 = arith.constant 0 : index
    %c0_135 = arith.constant 0 : index
    %235 = vector.load %arg34[%c0_134, %c0_135] : memref<1x32xf32, #tpu.memory_space<vmem>>, vector<1x32xf32>
    %236 = vector.broadcast %235 : vector<1x32xf32> to vector<16x32xf32>
    %237 = arith.addf %234, %236 : vector<16x32xf32>
    %cst_136 = arith.constant dense<0.000000e+00> : vector<32xf32>
    %238 = vector.multi_reduction <add>, %237, %cst_136 [0] : vector<16x32xf32> to vector<32xf32>
    %239 = vector.shape_cast %238 : vector<32xf32> to vector<1x32xf32>
    %c0_137 = arith.constant 0 : index
    %c0_138 = arith.constant 0 : index
    %240 = vector.load %arg3[%c0_137, %c0_138] : memref<32x32xf32, #tpu.memory_space<vmem>>, vector<32x32xf32>
    %cst_139 = arith.constant dense<0.000000e+00> : vector<1x32xf32>
    %241 = tpu.matmul %239, %240, %cst_139 {dimension_numbers = #tpu.dot_dimension_numbers<[1], [0], [0], [1], [0, 0, 1, 1], [], []>} : vector<1x32xf32>, vector<32x32xf32>, vector<1x32xf32> -> vector<1x32xf32>
    %242 = vector.broadcast %241 : vector<1x32xf32> to vector<16x32xf32>
    %243 = arith.subf %237, %242 : vector<16x32xf32>
    %244 = arith.mulf %243, %243 : vector<16x32xf32>
    %cst_140 = arith.constant dense<0.000000e+00> : vector<32xf32>
    %245 = vector.multi_reduction <add>, %244, %cst_140 [0] : vector<16x32xf32> to vector<32xf32>
    %246 = vector.shape_cast %245 : vector<32xf32> to vector<1x32xf32>
    %c0_141 = arith.constant 0 : index
    %c0_142 = arith.constant 0 : index
    %247 = vector.load %arg3[%c0_141, %c0_142] : memref<32x32xf32, #tpu.memory_space<vmem>>, vector<32x32xf32>
    %cst_143 = arith.constant dense<0.000000e+00> : vector<1x32xf32>
    %248 = tpu.matmul %246, %247, %cst_143 {dimension_numbers = #tpu.dot_dimension_numbers<[1], [0], [0], [1], [0, 0, 1, 1], [], []>} : vector<1x32xf32>, vector<32x32xf32>, vector<1x32xf32> -> vector<1x32xf32>
    %cst_144 = arith.constant 9.99999974E-6 : f32
    %249 = vector.broadcast %cst_144 : f32 to vector<1x32xf32>
    %250 = arith.addf %248, %249 : vector<1x32xf32>
    %251 = math.rsqrt %250 : vector<1x32xf32>
    %252 = vector.broadcast %251 : vector<1x32xf32> to vector<16x32xf32>
    %253 = arith.mulf %243, %252 : vector<16x32xf32>
    %c0_145 = arith.constant 0 : index
    %c0_146 = arith.constant 0 : index
    %254 = vector.load %arg35[%c0_145, %c0_146] : memref<1x32xf32, #tpu.memory_space<vmem>>, vector<1x32xf32>
    %255 = vector.broadcast %254 : vector<1x32xf32> to vector<16x32xf32>
    %256 = arith.mulf %253, %255 : vector<16x32xf32>
    %c0_147 = arith.constant 0 : index
    %c0_148 = arith.constant 0 : index
    %257 = vector.load %arg36[%c0_147, %c0_148] : memref<1x32xf32, #tpu.memory_space<vmem>>, vector<1x32xf32>
    %258 = vector.broadcast %257 : vector<1x32xf32> to vector<16x32xf32>
    %259 = arith.addf %256, %258 : vector<16x32xf32>
    %260 = arith.addf %259, %191 : vector<16x32xf32>
    %cst_149 = arith.constant 0.000000e+00 : f32
    %261 = vector.broadcast %cst_149 : f32 to vector<16x32xf32>
    %262 = arith.maximumf %260, %261 : vector<16x32xf32>
    %cst_150 = arith.constant 0.000000e+00 : f32
    %263 = vector.broadcast %cst_150 : f32 to vector<1x32xf32>
    %264 = vector.extract_strided_slice %262 {offsets = [0, 0], sizes = [15, 32], strides = [1, 1]} : vector<16x32xf32> to vector<15x32xf32>
    %265 = tpu.concatenate %263, %264 in 0 : vector<1x32xf32>, vector<15x32xf32> -> vector<16x32xf32>
    %266 = vector.extract_strided_slice %262 {offsets = [1, 0], sizes = [15, 32], strides = [1, 1]} : vector<16x32xf32> to vector<15x32xf32>
    %267 = tpu.concatenate %266, %263 in 0 : vector<15x32xf32>, vector<1x32xf32> -> vector<16x32xf32>
    %268 = tpu.concatenate %265, %262, %267 in 1 : vector<16x32xf32>, vector<16x32xf32>, vector<16x32xf32> -> vector<16x96xf32>
    %c0_151 = arith.constant 0 : index
    %c0_152 = arith.constant 0 : index
    %269 = vector.load %arg37[%c0_151, %c0_152] : memref<96x32xf32, #tpu.memory_space<vmem>>, vector<96x32xf32>
    %cst_153 = arith.constant dense<0.000000e+00> : vector<16x32xf32>
    %270 = tpu.matmul %268, %269, %cst_153 {dimension_numbers = #tpu.dot_dimension_numbers<[1], [0], [0], [1], [0, 0, 1, 1], [], []>} : vector<16x96xf32>, vector<96x32xf32>, vector<16x32xf32> -> vector<16x32xf32>
    %c0_154 = arith.constant 0 : index
    %c0_155 = arith.constant 0 : index
    %271 = vector.load %arg38[%c0_154, %c0_155] : memref<1x32xf32, #tpu.memory_space<vmem>>, vector<1x32xf32>
    %272 = vector.broadcast %271 : vector<1x32xf32> to vector<16x32xf32>
    %273 = arith.addf %270, %272 : vector<16x32xf32>
    %cst_156 = arith.constant dense<0.000000e+00> : vector<32xf32>
    %274 = vector.multi_reduction <add>, %273, %cst_156 [0] : vector<16x32xf32> to vector<32xf32>
    %275 = vector.shape_cast %274 : vector<32xf32> to vector<1x32xf32>
    %c0_157 = arith.constant 0 : index
    %c0_158 = arith.constant 0 : index
    %276 = vector.load %arg3[%c0_157, %c0_158] : memref<32x32xf32, #tpu.memory_space<vmem>>, vector<32x32xf32>
    %cst_159 = arith.constant dense<0.000000e+00> : vector<1x32xf32>
    %277 = tpu.matmul %275, %276, %cst_159 {dimension_numbers = #tpu.dot_dimension_numbers<[1], [0], [0], [1], [0, 0, 1, 1], [], []>} : vector<1x32xf32>, vector<32x32xf32>, vector<1x32xf32> -> vector<1x32xf32>
    %278 = vector.broadcast %277 : vector<1x32xf32> to vector<16x32xf32>
    %279 = arith.subf %273, %278 : vector<16x32xf32>
    %280 = arith.mulf %279, %279 : vector<16x32xf32>
    %cst_160 = arith.constant dense<0.000000e+00> : vector<32xf32>
    %281 = vector.multi_reduction <add>, %280, %cst_160 [0] : vector<16x32xf32> to vector<32xf32>
    %282 = vector.shape_cast %281 : vector<32xf32> to vector<1x32xf32>
    %c0_161 = arith.constant 0 : index
    %c0_162 = arith.constant 0 : index
    %283 = vector.load %arg3[%c0_161, %c0_162] : memref<32x32xf32, #tpu.memory_space<vmem>>, vector<32x32xf32>
    %cst_163 = arith.constant dense<0.000000e+00> : vector<1x32xf32>
    %284 = tpu.matmul %282, %283, %cst_163 {dimension_numbers = #tpu.dot_dimension_numbers<[1], [0], [0], [1], [0, 0, 1, 1], [], []>} : vector<1x32xf32>, vector<32x32xf32>, vector<1x32xf32> -> vector<1x32xf32>
    %cst_164 = arith.constant 9.99999974E-6 : f32
    %285 = vector.broadcast %cst_164 : f32 to vector<1x32xf32>
    %286 = arith.addf %284, %285 : vector<1x32xf32>
    %287 = math.rsqrt %286 : vector<1x32xf32>
    %288 = vector.broadcast %287 : vector<1x32xf32> to vector<16x32xf32>
    %289 = arith.mulf %279, %288 : vector<16x32xf32>
    %c0_165 = arith.constant 0 : index
    %c0_166 = arith.constant 0 : index
    %290 = vector.load %arg39[%c0_165, %c0_166] : memref<1x32xf32, #tpu.memory_space<vmem>>, vector<1x32xf32>
    %291 = vector.broadcast %290 : vector<1x32xf32> to vector<16x32xf32>
    %292 = arith.mulf %289, %291 : vector<16x32xf32>
    %c0_167 = arith.constant 0 : index
    %c0_168 = arith.constant 0 : index
    %293 = vector.load %arg40[%c0_167, %c0_168] : memref<1x32xf32, #tpu.memory_space<vmem>>, vector<1x32xf32>
    %294 = vector.broadcast %293 : vector<1x32xf32> to vector<16x32xf32>
    %295 = arith.addf %292, %294 : vector<16x32xf32>
    %cst_169 = arith.constant 0.000000e+00 : f32
    %296 = vector.broadcast %cst_169 : f32 to vector<16x32xf32>
    %297 = arith.maximumf %295, %296 : vector<16x32xf32>
    %cst_170 = arith.constant 0.000000e+00 : f32
    %298 = vector.broadcast %cst_170 : f32 to vector<1x32xf32>
    %299 = vector.extract_strided_slice %297 {offsets = [0, 0], sizes = [15, 32], strides = [1, 1]} : vector<16x32xf32> to vector<15x32xf32>
    %300 = tpu.concatenate %298, %299 in 0 : vector<1x32xf32>, vector<15x32xf32> -> vector<16x32xf32>
    %301 = vector.extract_strided_slice %297 {offsets = [1, 0], sizes = [15, 32], strides = [1, 1]} : vector<16x32xf32> to vector<15x32xf32>
    %302 = tpu.concatenate %301, %298 in 0 : vector<15x32xf32>, vector<1x32xf32> -> vector<16x32xf32>
    %303 = tpu.concatenate %300, %297, %302 in 1 : vector<16x32xf32>, vector<16x32xf32>, vector<16x32xf32> -> vector<16x96xf32>
    %c0_171 = arith.constant 0 : index
    %c0_172 = arith.constant 0 : index
    %304 = vector.load %arg41[%c0_171, %c0_172] : memref<96x32xf32, #tpu.memory_space<vmem>>, vector<96x32xf32>
    %cst_173 = arith.constant dense<0.000000e+00> : vector<16x32xf32>
    %305 = tpu.matmul %303, %304, %cst_173 {dimension_numbers = #tpu.dot_dimension_numbers<[1], [0], [0], [1], [0, 0, 1, 1], [], []>} : vector<16x96xf32>, vector<96x32xf32>, vector<16x32xf32> -> vector<16x32xf32>
    %c0_174 = arith.constant 0 : index
    %c0_175 = arith.constant 0 : index
    %306 = vector.load %arg42[%c0_174, %c0_175] : memref<1x32xf32, #tpu.memory_space<vmem>>, vector<1x32xf32>
    %307 = vector.broadcast %306 : vector<1x32xf32> to vector<16x32xf32>
    %308 = arith.addf %305, %307 : vector<16x32xf32>
    %cst_176 = arith.constant dense<0.000000e+00> : vector<32xf32>
    %309 = vector.multi_reduction <add>, %308, %cst_176 [0] : vector<16x32xf32> to vector<32xf32>
    %310 = vector.shape_cast %309 : vector<32xf32> to vector<1x32xf32>
    %c0_177 = arith.constant 0 : index
    %c0_178 = arith.constant 0 : index
    %311 = vector.load %arg3[%c0_177, %c0_178] : memref<32x32xf32, #tpu.memory_space<vmem>>, vector<32x32xf32>
    %cst_179 = arith.constant dense<0.000000e+00> : vector<1x32xf32>
    %312 = tpu.matmul %310, %311, %cst_179 {dimension_numbers = #tpu.dot_dimension_numbers<[1], [0], [0], [1], [0, 0, 1, 1], [], []>} : vector<1x32xf32>, vector<32x32xf32>, vector<1x32xf32> -> vector<1x32xf32>
    %313 = vector.broadcast %312 : vector<1x32xf32> to vector<16x32xf32>
    %314 = arith.subf %308, %313 : vector<16x32xf32>
    %315 = arith.mulf %314, %314 : vector<16x32xf32>
    %cst_180 = arith.constant dense<0.000000e+00> : vector<32xf32>
    %316 = vector.multi_reduction <add>, %315, %cst_180 [0] : vector<16x32xf32> to vector<32xf32>
    %317 = vector.shape_cast %316 : vector<32xf32> to vector<1x32xf32>
    %c0_181 = arith.constant 0 : index
    %c0_182 = arith.constant 0 : index
    %318 = vector.load %arg3[%c0_181, %c0_182] : memref<32x32xf32, #tpu.memory_space<vmem>>, vector<32x32xf32>
    %cst_183 = arith.constant dense<0.000000e+00> : vector<1x32xf32>
    %319 = tpu.matmul %317, %318, %cst_183 {dimension_numbers = #tpu.dot_dimension_numbers<[1], [0], [0], [1], [0, 0, 1, 1], [], []>} : vector<1x32xf32>, vector<32x32xf32>, vector<1x32xf32> -> vector<1x32xf32>
    %cst_184 = arith.constant 9.99999974E-6 : f32
    %320 = vector.broadcast %cst_184 : f32 to vector<1x32xf32>
    %321 = arith.addf %319, %320 : vector<1x32xf32>
    %322 = math.rsqrt %321 : vector<1x32xf32>
    %323 = vector.broadcast %322 : vector<1x32xf32> to vector<16x32xf32>
    %324 = arith.mulf %314, %323 : vector<16x32xf32>
    %c0_185 = arith.constant 0 : index
    %c0_186 = arith.constant 0 : index
    %325 = vector.load %arg43[%c0_185, %c0_186] : memref<1x32xf32, #tpu.memory_space<vmem>>, vector<1x32xf32>
    %326 = vector.broadcast %325 : vector<1x32xf32> to vector<16x32xf32>
    %327 = arith.mulf %324, %326 : vector<16x32xf32>
    %c0_187 = arith.constant 0 : index
    %c0_188 = arith.constant 0 : index
    %328 = vector.load %arg44[%c0_187, %c0_188] : memref<1x32xf32, #tpu.memory_space<vmem>>, vector<1x32xf32>
    %329 = vector.broadcast %328 : vector<1x32xf32> to vector<16x32xf32>
    %330 = arith.addf %327, %329 : vector<16x32xf32>
    %331 = arith.addf %330, %262 : vector<16x32xf32>
    %cst_189 = arith.constant 0.000000e+00 : f32
    %332 = vector.broadcast %cst_189 : f32 to vector<16x32xf32>
    %333 = arith.maximumf %331, %332 : vector<16x32xf32>
    %c0_190 = arith.constant 0 : index
    %c0_191 = arith.constant 0 : index
    %334 = vector.load %arg6[%c0_190, %c0_191] : memref<8x16xf32, #tpu.memory_space<vmem>>, vector<8x16xf32>
    %cst_192 = arith.constant 0.000000e+00 : f32
    %335 = vector.broadcast %cst_192 : f32 to vector<1x32xf32>
    %336 = vector.extract_strided_slice %333 {offsets = [0, 0], sizes = [15, 32], strides = [1, 1]} : vector<16x32xf32> to vector<15x32xf32>
    %337 = tpu.concatenate %335, %336 in 0 : vector<1x32xf32>, vector<15x32xf32> -> vector<16x32xf32>
    %338 = vector.extract_strided_slice %333 {offsets = [1, 0], sizes = [15, 32], strides = [1, 1]} : vector<16x32xf32> to vector<15x32xf32>
    %339 = tpu.concatenate %338, %335 in 0 : vector<15x32xf32>, vector<1x32xf32> -> vector<16x32xf32>
    %340 = tpu.concatenate %337, %333, %339 in 1 : vector<16x32xf32>, vector<16x32xf32>, vector<16x32xf32> -> vector<16x96xf32>
    %cst_193 = arith.constant dense<0.000000e+00> : vector<8x96xf32>
    %341 = tpu.matmul %334, %340, %cst_193 {dimension_numbers = #tpu.dot_dimension_numbers<[1], [0], [0], [1], [0, 0, 1, 1], [], []>} : vector<8x16xf32>, vector<16x96xf32>, vector<8x96xf32> -> vector<8x96xf32>
    %c0_194 = arith.constant 0 : index
    %c0_195 = arith.constant 0 : index
    %342 = vector.load %arg45[%c0_194, %c0_195] : memref<96x64xf32, #tpu.memory_space<vmem>>, vector<96x64xf32>
    %cst_196 = arith.constant dense<0.000000e+00> : vector<8x64xf32>
    %343 = tpu.matmul %341, %342, %cst_196 {dimension_numbers = #tpu.dot_dimension_numbers<[1], [0], [0], [1], [0, 0, 1, 1], [], []>} : vector<8x96xf32>, vector<96x64xf32>, vector<8x64xf32> -> vector<8x64xf32>
    %c0_197 = arith.constant 0 : index
    %c0_198 = arith.constant 0 : index
    %344 = vector.load %arg46[%c0_197, %c0_198] : memref<1x64xf32, #tpu.memory_space<vmem>>, vector<1x64xf32>
    %345 = vector.broadcast %344 : vector<1x64xf32> to vector<8x64xf32>
    %346 = arith.addf %343, %345 : vector<8x64xf32>
    %cst_199 = arith.constant dense<0.000000e+00> : vector<64xf32>
    %347 = vector.multi_reduction <add>, %346, %cst_199 [0] : vector<8x64xf32> to vector<64xf32>
    %348 = vector.shape_cast %347 : vector<64xf32> to vector<1x64xf32>
    %c0_200 = arith.constant 0 : index
    %c0_201 = arith.constant 0 : index
    %349 = vector.load %arg4[%c0_200, %c0_201] : memref<64x64xf32, #tpu.memory_space<vmem>>, vector<64x64xf32>
    %cst_202 = arith.constant dense<0.000000e+00> : vector<1x64xf32>
    %350 = tpu.matmul %348, %349, %cst_202 {dimension_numbers = #tpu.dot_dimension_numbers<[1], [0], [0], [1], [0, 0, 1, 1], [], []>} : vector<1x64xf32>, vector<64x64xf32>, vector<1x64xf32> -> vector<1x64xf32>
    %351 = vector.broadcast %350 : vector<1x64xf32> to vector<8x64xf32>
    %352 = arith.subf %346, %351 : vector<8x64xf32>
    %353 = arith.mulf %352, %352 : vector<8x64xf32>
    %cst_203 = arith.constant dense<0.000000e+00> : vector<64xf32>
    %354 = vector.multi_reduction <add>, %353, %cst_203 [0] : vector<8x64xf32> to vector<64xf32>
    %355 = vector.shape_cast %354 : vector<64xf32> to vector<1x64xf32>
    %c0_204 = arith.constant 0 : index
    %c0_205 = arith.constant 0 : index
    %356 = vector.load %arg4[%c0_204, %c0_205] : memref<64x64xf32, #tpu.memory_space<vmem>>, vector<64x64xf32>
    %cst_206 = arith.constant dense<0.000000e+00> : vector<1x64xf32>
    %357 = tpu.matmul %355, %356, %cst_206 {dimension_numbers = #tpu.dot_dimension_numbers<[1], [0], [0], [1], [0, 0, 1, 1], [], []>} : vector<1x64xf32>, vector<64x64xf32>, vector<1x64xf32> -> vector<1x64xf32>
    %cst_207 = arith.constant 9.99999974E-6 : f32
    %358 = vector.broadcast %cst_207 : f32 to vector<1x64xf32>
    %359 = arith.addf %357, %358 : vector<1x64xf32>
    %360 = math.rsqrt %359 : vector<1x64xf32>
    %361 = vector.broadcast %360 : vector<1x64xf32> to vector<8x64xf32>
    %362 = arith.mulf %352, %361 : vector<8x64xf32>
    %c0_208 = arith.constant 0 : index
    %c0_209 = arith.constant 0 : index
    %363 = vector.load %arg47[%c0_208, %c0_209] : memref<1x64xf32, #tpu.memory_space<vmem>>, vector<1x64xf32>
    %364 = vector.broadcast %363 : vector<1x64xf32> to vector<8x64xf32>
    %365 = arith.mulf %362, %364 : vector<8x64xf32>
    %c0_210 = arith.constant 0 : index
    %c0_211 = arith.constant 0 : index
    %366 = vector.load %arg48[%c0_210, %c0_211] : memref<1x64xf32, #tpu.memory_space<vmem>>, vector<1x64xf32>
    %367 = vector.broadcast %366 : vector<1x64xf32> to vector<8x64xf32>
    %368 = arith.addf %365, %367 : vector<8x64xf32>
    %cst_212 = arith.constant 0.000000e+00 : f32
    %369 = vector.broadcast %cst_212 : f32 to vector<8x64xf32>
    %370 = arith.maximumf %368, %369 : vector<8x64xf32>
    %cst_213 = arith.constant 0.000000e+00 : f32
    %371 = vector.broadcast %cst_213 : f32 to vector<1x64xf32>
    %372 = vector.extract_strided_slice %370 {offsets = [0, 0], sizes = [7, 64], strides = [1, 1]} : vector<8x64xf32> to vector<7x64xf32>
    %373 = tpu.concatenate %371, %372 in 0 : vector<1x64xf32>, vector<7x64xf32> -> vector<8x64xf32>
    %374 = vector.extract_strided_slice %370 {offsets = [1, 0], sizes = [7, 64], strides = [1, 1]} : vector<8x64xf32> to vector<7x64xf32>
    %375 = tpu.concatenate %374, %371 in 0 : vector<7x64xf32>, vector<1x64xf32> -> vector<8x64xf32>
    %376 = tpu.concatenate %373, %370, %375 in 1 : vector<8x64xf32>, vector<8x64xf32>, vector<8x64xf32> -> vector<8x192xf32>
    %c0_214 = arith.constant 0 : index
    %c0_215 = arith.constant 0 : index
    %377 = vector.load %arg49[%c0_214, %c0_215] : memref<192x64xf32, #tpu.memory_space<vmem>>, vector<192x64xf32>
    %cst_216 = arith.constant dense<0.000000e+00> : vector<8x64xf32>
    %378 = tpu.matmul %376, %377, %cst_216 {dimension_numbers = #tpu.dot_dimension_numbers<[1], [0], [0], [1], [0, 0, 1, 1], [], []>} : vector<8x192xf32>, vector<192x64xf32>, vector<8x64xf32> -> vector<8x64xf32>
    %c0_217 = arith.constant 0 : index
    %c0_218 = arith.constant 0 : index
    %379 = vector.load %arg50[%c0_217, %c0_218] : memref<1x64xf32, #tpu.memory_space<vmem>>, vector<1x64xf32>
    %380 = vector.broadcast %379 : vector<1x64xf32> to vector<8x64xf32>
    %381 = arith.addf %378, %380 : vector<8x64xf32>
    %cst_219 = arith.constant dense<0.000000e+00> : vector<64xf32>
    %382 = vector.multi_reduction <add>, %381, %cst_219 [0] : vector<8x64xf32> to vector<64xf32>
    %383 = vector.shape_cast %382 : vector<64xf32> to vector<1x64xf32>
    %c0_220 = arith.constant 0 : index
    %c0_221 = arith.constant 0 : index
    %384 = vector.load %arg4[%c0_220, %c0_221] : memref<64x64xf32, #tpu.memory_space<vmem>>, vector<64x64xf32>
    %cst_222 = arith.constant dense<0.000000e+00> : vector<1x64xf32>
    %385 = tpu.matmul %383, %384, %cst_222 {dimension_numbers = #tpu.dot_dimension_numbers<[1], [0], [0], [1], [0, 0, 1, 1], [], []>} : vector<1x64xf32>, vector<64x64xf32>, vector<1x64xf32> -> vector<1x64xf32>
    %386 = vector.broadcast %385 : vector<1x64xf32> to vector<8x64xf32>
    %387 = arith.subf %381, %386 : vector<8x64xf32>
    %388 = arith.mulf %387, %387 : vector<8x64xf32>
    %cst_223 = arith.constant dense<0.000000e+00> : vector<64xf32>
    %389 = vector.multi_reduction <add>, %388, %cst_223 [0] : vector<8x64xf32> to vector<64xf32>
    %390 = vector.shape_cast %389 : vector<64xf32> to vector<1x64xf32>
    %c0_224 = arith.constant 0 : index
    %c0_225 = arith.constant 0 : index
    %391 = vector.load %arg4[%c0_224, %c0_225] : memref<64x64xf32, #tpu.memory_space<vmem>>, vector<64x64xf32>
    %cst_226 = arith.constant dense<0.000000e+00> : vector<1x64xf32>
    %392 = tpu.matmul %390, %391, %cst_226 {dimension_numbers = #tpu.dot_dimension_numbers<[1], [0], [0], [1], [0, 0, 1, 1], [], []>} : vector<1x64xf32>, vector<64x64xf32>, vector<1x64xf32> -> vector<1x64xf32>
    %cst_227 = arith.constant 9.99999974E-6 : f32
    %393 = vector.broadcast %cst_227 : f32 to vector<1x64xf32>
    %394 = arith.addf %392, %393 : vector<1x64xf32>
    %395 = math.rsqrt %394 : vector<1x64xf32>
    %396 = vector.broadcast %395 : vector<1x64xf32> to vector<8x64xf32>
    %397 = arith.mulf %387, %396 : vector<8x64xf32>
    %c0_228 = arith.constant 0 : index
    %c0_229 = arith.constant 0 : index
    %398 = vector.load %arg51[%c0_228, %c0_229] : memref<1x64xf32, #tpu.memory_space<vmem>>, vector<1x64xf32>
    %399 = vector.broadcast %398 : vector<1x64xf32> to vector<8x64xf32>
    %400 = arith.mulf %397, %399 : vector<8x64xf32>
    %c0_230 = arith.constant 0 : index
    %c0_231 = arith.constant 0 : index
    %401 = vector.load %arg52[%c0_230, %c0_231] : memref<1x64xf32, #tpu.memory_space<vmem>>, vector<1x64xf32>
    %402 = vector.broadcast %401 : vector<1x64xf32> to vector<8x64xf32>
    %403 = arith.addf %400, %402 : vector<8x64xf32>
    %cst_232 = arith.constant 0.000000e+00 : f32
    %404 = vector.broadcast %cst_232 : f32 to vector<8x64xf32>
    %405 = arith.maximumf %403, %404 : vector<8x64xf32>
    %cst_233 = arith.constant 0.000000e+00 : f32
    %406 = vector.broadcast %cst_233 : f32 to vector<1x64xf32>
    %407 = vector.extract_strided_slice %405 {offsets = [0, 0], sizes = [7, 64], strides = [1, 1]} : vector<8x64xf32> to vector<7x64xf32>
    %408 = tpu.concatenate %406, %407 in 0 : vector<1x64xf32>, vector<7x64xf32> -> vector<8x64xf32>
    %409 = vector.extract_strided_slice %405 {offsets = [1, 0], sizes = [7, 64], strides = [1, 1]} : vector<8x64xf32> to vector<7x64xf32>
    %410 = tpu.concatenate %409, %406 in 0 : vector<7x64xf32>, vector<1x64xf32> -> vector<8x64xf32>
    %411 = tpu.concatenate %408, %405, %410 in 1 : vector<8x64xf32>, vector<8x64xf32>, vector<8x64xf32> -> vector<8x192xf32>
    %c0_234 = arith.constant 0 : index
    %c0_235 = arith.constant 0 : index
    %412 = vector.load %arg53[%c0_234, %c0_235] : memref<192x64xf32, #tpu.memory_space<vmem>>, vector<192x64xf32>
    %cst_236 = arith.constant dense<0.000000e+00> : vector<8x64xf32>
    %413 = tpu.matmul %411, %412, %cst_236 {dimension_numbers = #tpu.dot_dimension_numbers<[1], [0], [0], [1], [0, 0, 1, 1], [], []>} : vector<8x192xf32>, vector<192x64xf32>, vector<8x64xf32> -> vector<8x64xf32>
    %c0_237 = arith.constant 0 : index
    %c0_238 = arith.constant 0 : index
    %414 = vector.load %arg54[%c0_237, %c0_238] : memref<1x64xf32, #tpu.memory_space<vmem>>, vector<1x64xf32>
    %415 = vector.broadcast %414 : vector<1x64xf32> to vector<8x64xf32>
    %416 = arith.addf %413, %415 : vector<8x64xf32>
    %cst_239 = arith.constant dense<0.000000e+00> : vector<64xf32>
    %417 = vector.multi_reduction <add>, %416, %cst_239 [0] : vector<8x64xf32> to vector<64xf32>
    %418 = vector.shape_cast %417 : vector<64xf32> to vector<1x64xf32>
    %c0_240 = arith.constant 0 : index
    %c0_241 = arith.constant 0 : index
    %419 = vector.load %arg4[%c0_240, %c0_241] : memref<64x64xf32, #tpu.memory_space<vmem>>, vector<64x64xf32>
    %cst_242 = arith.constant dense<0.000000e+00> : vector<1x64xf32>
    %420 = tpu.matmul %418, %419, %cst_242 {dimension_numbers = #tpu.dot_dimension_numbers<[1], [0], [0], [1], [0, 0, 1, 1], [], []>} : vector<1x64xf32>, vector<64x64xf32>, vector<1x64xf32> -> vector<1x64xf32>
    %421 = vector.broadcast %420 : vector<1x64xf32> to vector<8x64xf32>
    %422 = arith.subf %416, %421 : vector<8x64xf32>
    %423 = arith.mulf %422, %422 : vector<8x64xf32>
    %cst_243 = arith.constant dense<0.000000e+00> : vector<64xf32>
    %424 = vector.multi_reduction <add>, %423, %cst_243 [0] : vector<8x64xf32> to vector<64xf32>
    %425 = vector.shape_cast %424 : vector<64xf32> to vector<1x64xf32>
    %c0_244 = arith.constant 0 : index
    %c0_245 = arith.constant 0 : index
    %426 = vector.load %arg4[%c0_244, %c0_245] : memref<64x64xf32, #tpu.memory_space<vmem>>, vector<64x64xf32>
    %cst_246 = arith.constant dense<0.000000e+00> : vector<1x64xf32>
    %427 = tpu.matmul %425, %426, %cst_246 {dimension_numbers = #tpu.dot_dimension_numbers<[1], [0], [0], [1], [0, 0, 1, 1], [], []>} : vector<1x64xf32>, vector<64x64xf32>, vector<1x64xf32> -> vector<1x64xf32>
    %cst_247 = arith.constant 9.99999974E-6 : f32
    %428 = vector.broadcast %cst_247 : f32 to vector<1x64xf32>
    %429 = arith.addf %427, %428 : vector<1x64xf32>
    %430 = math.rsqrt %429 : vector<1x64xf32>
    %431 = vector.broadcast %430 : vector<1x64xf32> to vector<8x64xf32>
    %432 = arith.mulf %422, %431 : vector<8x64xf32>
    %c0_248 = arith.constant 0 : index
    %c0_249 = arith.constant 0 : index
    %433 = vector.load %arg55[%c0_248, %c0_249] : memref<1x64xf32, #tpu.memory_space<vmem>>, vector<1x64xf32>
    %434 = vector.broadcast %433 : vector<1x64xf32> to vector<8x64xf32>
    %435 = arith.mulf %432, %434 : vector<8x64xf32>
    %c0_250 = arith.constant 0 : index
    %c0_251 = arith.constant 0 : index
    %436 = vector.load %arg56[%c0_250, %c0_251] : memref<1x64xf32, #tpu.memory_space<vmem>>, vector<1x64xf32>
    %437 = vector.broadcast %436 : vector<1x64xf32> to vector<8x64xf32>
    %438 = arith.addf %435, %437 : vector<8x64xf32>
    %439 = arith.addf %438, %370 : vector<8x64xf32>
    %cst_252 = arith.constant 0.000000e+00 : f32
    %440 = vector.broadcast %cst_252 : f32 to vector<8x64xf32>
    %441 = arith.maximumf %439, %440 : vector<8x64xf32>
    %cst_253 = arith.constant 0.000000e+00 : f32
    %442 = vector.broadcast %cst_253 : f32 to vector<1x64xf32>
    %443 = vector.extract_strided_slice %441 {offsets = [0, 0], sizes = [7, 64], strides = [1, 1]} : vector<8x64xf32> to vector<7x64xf32>
    %444 = tpu.concatenate %442, %443 in 0 : vector<1x64xf32>, vector<7x64xf32> -> vector<8x64xf32>
    %445 = vector.extract_strided_slice %441 {offsets = [1, 0], sizes = [7, 64], strides = [1, 1]} : vector<8x64xf32> to vector<7x64xf32>
    %446 = tpu.concatenate %445, %442 in 0 : vector<7x64xf32>, vector<1x64xf32> -> vector<8x64xf32>
    %447 = tpu.concatenate %444, %441, %446 in 1 : vector<8x64xf32>, vector<8x64xf32>, vector<8x64xf32> -> vector<8x192xf32>
    %c0_254 = arith.constant 0 : index
    %c0_255 = arith.constant 0 : index
    %448 = vector.load %arg57[%c0_254, %c0_255] : memref<192x64xf32, #tpu.memory_space<vmem>>, vector<192x64xf32>
    %cst_256 = arith.constant dense<0.000000e+00> : vector<8x64xf32>
    %449 = tpu.matmul %447, %448, %cst_256 {dimension_numbers = #tpu.dot_dimension_numbers<[1], [0], [0], [1], [0, 0, 1, 1], [], []>} : vector<8x192xf32>, vector<192x64xf32>, vector<8x64xf32> -> vector<8x64xf32>
    %c0_257 = arith.constant 0 : index
    %c0_258 = arith.constant 0 : index
    %450 = vector.load %arg58[%c0_257, %c0_258] : memref<1x64xf32, #tpu.memory_space<vmem>>, vector<1x64xf32>
    %451 = vector.broadcast %450 : vector<1x64xf32> to vector<8x64xf32>
    %452 = arith.addf %449, %451 : vector<8x64xf32>
    %cst_259 = arith.constant dense<0.000000e+00> : vector<64xf32>
    %453 = vector.multi_reduction <add>, %452, %cst_259 [0] : vector<8x64xf32> to vector<64xf32>
    %454 = vector.shape_cast %453 : vector<64xf32> to vector<1x64xf32>
    %c0_260 = arith.constant 0 : index
    %c0_261 = arith.constant 0 : index
    %455 = vector.load %arg4[%c0_260, %c0_261] : memref<64x64xf32, #tpu.memory_space<vmem>>, vector<64x64xf32>
    %cst_262 = arith.constant dense<0.000000e+00> : vector<1x64xf32>
    %456 = tpu.matmul %454, %455, %cst_262 {dimension_numbers = #tpu.dot_dimension_numbers<[1], [0], [0], [1], [0, 0, 1, 1], [], []>} : vector<1x64xf32>, vector<64x64xf32>, vector<1x64xf32> -> vector<1x64xf32>
    %457 = vector.broadcast %456 : vector<1x64xf32> to vector<8x64xf32>
    %458 = arith.subf %452, %457 : vector<8x64xf32>
    %459 = arith.mulf %458, %458 : vector<8x64xf32>
    %cst_263 = arith.constant dense<0.000000e+00> : vector<64xf32>
    %460 = vector.multi_reduction <add>, %459, %cst_263 [0] : vector<8x64xf32> to vector<64xf32>
    %461 = vector.shape_cast %460 : vector<64xf32> to vector<1x64xf32>
    %c0_264 = arith.constant 0 : index
    %c0_265 = arith.constant 0 : index
    %462 = vector.load %arg4[%c0_264, %c0_265] : memref<64x64xf32, #tpu.memory_space<vmem>>, vector<64x64xf32>
    %cst_266 = arith.constant dense<0.000000e+00> : vector<1x64xf32>
    %463 = tpu.matmul %461, %462, %cst_266 {dimension_numbers = #tpu.dot_dimension_numbers<[1], [0], [0], [1], [0, 0, 1, 1], [], []>} : vector<1x64xf32>, vector<64x64xf32>, vector<1x64xf32> -> vector<1x64xf32>
    %cst_267 = arith.constant 9.99999974E-6 : f32
    %464 = vector.broadcast %cst_267 : f32 to vector<1x64xf32>
    %465 = arith.addf %463, %464 : vector<1x64xf32>
    %466 = math.rsqrt %465 : vector<1x64xf32>
    %467 = vector.broadcast %466 : vector<1x64xf32> to vector<8x64xf32>
    %468 = arith.mulf %458, %467 : vector<8x64xf32>
    %c0_268 = arith.constant 0 : index
    %c0_269 = arith.constant 0 : index
    %469 = vector.load %arg59[%c0_268, %c0_269] : memref<1x64xf32, #tpu.memory_space<vmem>>, vector<1x64xf32>
    %470 = vector.broadcast %469 : vector<1x64xf32> to vector<8x64xf32>
    %471 = arith.mulf %468, %470 : vector<8x64xf32>
    %c0_270 = arith.constant 0 : index
    %c0_271 = arith.constant 0 : index
    %472 = vector.load %arg60[%c0_270, %c0_271] : memref<1x64xf32, #tpu.memory_space<vmem>>, vector<1x64xf32>
    %473 = vector.broadcast %472 : vector<1x64xf32> to vector<8x64xf32>
    %474 = arith.addf %471, %473 : vector<8x64xf32>
    %cst_272 = arith.constant 0.000000e+00 : f32
    %475 = vector.broadcast %cst_272 : f32 to vector<8x64xf32>
    %476 = arith.maximumf %474, %475 : vector<8x64xf32>
    %cst_273 = arith.constant 0.000000e+00 : f32
    %477 = vector.broadcast %cst_273 : f32 to vector<1x64xf32>
    %478 = vector.extract_strided_slice %476 {offsets = [0, 0], sizes = [7, 64], strides = [1, 1]} : vector<8x64xf32> to vector<7x64xf32>
    %479 = tpu.concatenate %477, %478 in 0 : vector<1x64xf32>, vector<7x64xf32> -> vector<8x64xf32>
    %480 = vector.extract_strided_slice %476 {offsets = [1, 0], sizes = [7, 64], strides = [1, 1]} : vector<8x64xf32> to vector<7x64xf32>
    %481 = tpu.concatenate %480, %477 in 0 : vector<7x64xf32>, vector<1x64xf32> -> vector<8x64xf32>
    %482 = tpu.concatenate %479, %476, %481 in 1 : vector<8x64xf32>, vector<8x64xf32>, vector<8x64xf32> -> vector<8x192xf32>
    %c0_274 = arith.constant 0 : index
    %c0_275 = arith.constant 0 : index
    %483 = vector.load %arg61[%c0_274, %c0_275] : memref<192x64xf32, #tpu.memory_space<vmem>>, vector<192x64xf32>
    %cst_276 = arith.constant dense<0.000000e+00> : vector<8x64xf32>
    %484 = tpu.matmul %482, %483, %cst_276 {dimension_numbers = #tpu.dot_dimension_numbers<[1], [0], [0], [1], [0, 0, 1, 1], [], []>} : vector<8x192xf32>, vector<192x64xf32>, vector<8x64xf32> -> vector<8x64xf32>
    %c0_277 = arith.constant 0 : index
    %c0_278 = arith.constant 0 : index
    %485 = vector.load %arg62[%c0_277, %c0_278] : memref<1x64xf32, #tpu.memory_space<vmem>>, vector<1x64xf32>
    %486 = vector.broadcast %485 : vector<1x64xf32> to vector<8x64xf32>
    %487 = arith.addf %484, %486 : vector<8x64xf32>
    %cst_279 = arith.constant dense<0.000000e+00> : vector<64xf32>
    %488 = vector.multi_reduction <add>, %487, %cst_279 [0] : vector<8x64xf32> to vector<64xf32>
    %489 = vector.shape_cast %488 : vector<64xf32> to vector<1x64xf32>
    %c0_280 = arith.constant 0 : index
    %c0_281 = arith.constant 0 : index
    %490 = vector.load %arg4[%c0_280, %c0_281] : memref<64x64xf32, #tpu.memory_space<vmem>>, vector<64x64xf32>
    %cst_282 = arith.constant dense<0.000000e+00> : vector<1x64xf32>
    %491 = tpu.matmul %489, %490, %cst_282 {dimension_numbers = #tpu.dot_dimension_numbers<[1], [0], [0], [1], [0, 0, 1, 1], [], []>} : vector<1x64xf32>, vector<64x64xf32>, vector<1x64xf32> -> vector<1x64xf32>
    %492 = vector.broadcast %491 : vector<1x64xf32> to vector<8x64xf32>
    %493 = arith.subf %487, %492 : vector<8x64xf32>
    %494 = arith.mulf %493, %493 : vector<8x64xf32>
    %cst_283 = arith.constant dense<0.000000e+00> : vector<64xf32>
    %495 = vector.multi_reduction <add>, %494, %cst_283 [0] : vector<8x64xf32> to vector<64xf32>
    %496 = vector.shape_cast %495 : vector<64xf32> to vector<1x64xf32>
    %c0_284 = arith.constant 0 : index
    %c0_285 = arith.constant 0 : index
    %497 = vector.load %arg4[%c0_284, %c0_285] : memref<64x64xf32, #tpu.memory_space<vmem>>, vector<64x64xf32>
    %cst_286 = arith.constant dense<0.000000e+00> : vector<1x64xf32>
    %498 = tpu.matmul %496, %497, %cst_286 {dimension_numbers = #tpu.dot_dimension_numbers<[1], [0], [0], [1], [0, 0, 1, 1], [], []>} : vector<1x64xf32>, vector<64x64xf32>, vector<1x64xf32> -> vector<1x64xf32>
    %cst_287 = arith.constant 9.99999974E-6 : f32
    %499 = vector.broadcast %cst_287 : f32 to vector<1x64xf32>
    %500 = arith.addf %498, %499 : vector<1x64xf32>
    %501 = math.rsqrt %500 : vector<1x64xf32>
    %502 = vector.broadcast %501 : vector<1x64xf32> to vector<8x64xf32>
    %503 = arith.mulf %493, %502 : vector<8x64xf32>
    %c0_288 = arith.constant 0 : index
    %c0_289 = arith.constant 0 : index
    %504 = vector.load %arg63[%c0_288, %c0_289] : memref<1x64xf32, #tpu.memory_space<vmem>>, vector<1x64xf32>
    %505 = vector.broadcast %504 : vector<1x64xf32> to vector<8x64xf32>
    %506 = arith.mulf %503, %505 : vector<8x64xf32>
    %c0_290 = arith.constant 0 : index
    %c0_291 = arith.constant 0 : index
    %507 = vector.load %arg64[%c0_290, %c0_291] : memref<1x64xf32, #tpu.memory_space<vmem>>, vector<1x64xf32>
    %508 = vector.broadcast %507 : vector<1x64xf32> to vector<8x64xf32>
    %509 = arith.addf %506, %508 : vector<8x64xf32>
    %510 = arith.addf %509, %441 : vector<8x64xf32>
    %cst_292 = arith.constant 0.000000e+00 : f32
    %511 = vector.broadcast %cst_292 : f32 to vector<8x64xf32>
    %512 = arith.maximumf %510, %511 : vector<8x64xf32>
    %c0_293 = arith.constant 0 : index
    %c0_294 = arith.constant 0 : index
    %c0_295 = arith.constant 0 : index
    %513 = vector.load %arg65[%c0_293, %c0_294, %c0_295] : memref<1x8x64xf32, #tpu.memory_space<vmem>>, vector<1x8x64xf32>
    %514 = vector.shape_cast %513 : vector<1x8x64xf32> to vector<8x64xf32>
    %515 = vector.shape_cast %512 : vector<8x64xf32> to vector<1x8x64xf32>
    tpu.vector_store %arg65[%c0_293, %c0_294, %c0_295], %515 {strides = array<i32>} : memref<1x8x64xf32, #tpu.memory_space<vmem>>, vector<1x8x64xf32>,
    return
  }
  func.func @transform_0(%arg0: i32) -> (i32, i32, i32) {
    %c0_i32 = arith.constant 0 : i32
    %c0_i32_0 = arith.constant 0 : i32
    %c0_i32_1 = arith.constant 0 : i32
    return %arg0, %c0_i32, %c0_i32_0 : i32, i32, i32
  }
  func.func @transform_1(%arg0: i32) -> (i32, i32) {
    %c0_i32 = arith.constant 0 : i32
    %c0_i32_0 = arith.constant 0 : i32
    %c0_i32_1 = arith.constant 0 : i32
    return %c0_i32, %c0_i32_0 : i32, i32
  }
  func.func @transform_2(%arg0: i32) -> (i32, i32) {
    %c0_i32 = arith.constant 0 : i32
    %c0_i32_0 = arith.constant 0 : i32
    %c0_i32_1 = arith.constant 0 : i32
    return %c0_i32, %c0_i32_0 : i32, i32
  }
  func.func @transform_3(%arg0: i32) -> (i32, i32) {
    %c0_i32 = arith.constant 0 : i32
    %c0_i32_0 = arith.constant 0 : i32
    %c0_i32_1 = arith.constant 0 : i32
    return %c0_i32, %c0_i32_0 : i32, i32
  }
  func.func @transform_4(%arg0: i32) -> (i32, i32) {
    %c0_i32 = arith.constant 0 : i32
    %c0_i32_0 = arith.constant 0 : i32
    %c0_i32_1 = arith.constant 0 : i32
    return %c0_i32, %c0_i32_0 : i32, i32
  }
  func.func @transform_5(%arg0: i32) -> (i32, i32) {
    %c0_i32 = arith.constant 0 : i32
    %c0_i32_0 = arith.constant 0 : i32
    %c0_i32_1 = arith.constant 0 : i32
    return %c0_i32, %c0_i32_0 : i32, i32
  }
  func.func @transform_6(%arg0: i32) -> (i32, i32) {
    %c0_i32 = arith.constant 0 : i32
    %c0_i32_0 = arith.constant 0 : i32
    %c0_i32_1 = arith.constant 0 : i32
    return %c0_i32, %c0_i32_0 : i32, i32
  }
  func.func @transform_7(%arg0: i32) -> (i32, i32) {
    %c0_i32 = arith.constant 0 : i32
    %c0_i32_0 = arith.constant 0 : i32
    %c0_i32_1 = arith.constant 0 : i32
    return %c0_i32, %c0_i32_0 : i32, i32
  }
  func.func @transform_8(%arg0: i32) -> (i32, i32) {
    %c0_i32 = arith.constant 0 : i32
    %c0_i32_0 = arith.constant 0 : i32
    %c0_i32_1 = arith.constant 0 : i32
    return %c0_i32, %c0_i32_0 : i32, i32
  }
  func.func @transform_9(%arg0: i32) -> (i32, i32) {
    %c0_i32 = arith.constant 0 : i32
    %c0_i32_0 = arith.constant 0 : i32
    %c0_i32_1 = arith.constant 0 : i32
    return %c0_i32, %c0_i32_0 : i32, i32
  }
  func.func @transform_10(%arg0: i32) -> (i32, i32) {
    %c0_i32 = arith.constant 0 : i32
    %c0_i32_0 = arith.constant 0 : i32
    %c0_i32_1 = arith.constant 0 : i32
    return %c0_i32, %c0_i32_0 : i32, i32
  }
  func.func @transform_11(%arg0: i32) -> (i32, i32) {
    %c0_i32 = arith.constant 0 : i32
    %c0_i32_0 = arith.constant 0 : i32
    %c0_i32_1 = arith.constant 0 : i32
    return %c0_i32, %c0_i32_0 : i32, i32
  }
  func.func @transform_12(%arg0: i32) -> (i32, i32) {
    %c0_i32 = arith.constant 0 : i32
    %c0_i32_0 = arith.constant 0 : i32
    %c0_i32_1 = arith.constant 0 : i32
    return %c0_i32, %c0_i32_0 : i32, i32
  }
  func.func @transform_13(%arg0: i32) -> (i32, i32) {
    %c0_i32 = arith.constant 0 : i32
    %c0_i32_0 = arith.constant 0 : i32
    %c0_i32_1 = arith.constant 0 : i32
    return %c0_i32, %c0_i32_0 : i32, i32
  }
  func.func @transform_14(%arg0: i32) -> (i32, i32) {
    %c0_i32 = arith.constant 0 : i32
    %c0_i32_0 = arith.constant 0 : i32
    %c0_i32_1 = arith.constant 0 : i32
    return %c0_i32, %c0_i32_0 : i32, i32
  }
  func.func @transform_15(%arg0: i32) -> (i32, i32) {
    %c0_i32 = arith.constant 0 : i32
    %c0_i32_0 = arith.constant 0 : i32
    %c0_i32_1 = arith.constant 0 : i32
    return %c0_i32, %c0_i32_0 : i32, i32
  }
  func.func @transform_16(%arg0: i32) -> (i32, i32) {
    %c0_i32 = arith.constant 0 : i32
    %c0_i32_0 = arith.constant 0 : i32
    %c0_i32_1 = arith.constant 0 : i32
    return %c0_i32, %c0_i32_0 : i32, i32
  }
  func.func @transform_17(%arg0: i32) -> (i32, i32) {
    %c0_i32 = arith.constant 0 : i32
    %c0_i32_0 = arith.constant 0 : i32
    %c0_i32_1 = arith.constant 0 : i32
    return %c0_i32, %c0_i32_0 : i32, i32
  }
  func.func @transform_18(%arg0: i32) -> (i32, i32) {
    %c0_i32 = arith.constant 0 : i32
    %c0_i32_0 = arith.constant 0 : i32
    %c0_i32_1 = arith.constant 0 : i32
    return %c0_i32, %c0_i32_0 : i32, i32
  }
  func.func @transform_19(%arg0: i32) -> (i32, i32) {
    %c0_i32 = arith.constant 0 : i32
    %c0_i32_0 = arith.constant 0 : i32
    %c0_i32_1 = arith.constant 0 : i32
    return %c0_i32, %c0_i32_0 : i32, i32
  }
  func.func @transform_20(%arg0: i32) -> (i32, i32) {
    %c0_i32 = arith.constant 0 : i32
    %c0_i32_0 = arith.constant 0 : i32
    %c0_i32_1 = arith.constant 0 : i32
    return %c0_i32, %c0_i32_0 : i32, i32
  }
  func.func @transform_21(%arg0: i32) -> (i32, i32) {
    %c0_i32 = arith.constant 0 : i32
    %c0_i32_0 = arith.constant 0 : i32
    %c0_i32_1 = arith.constant 0 : i32
    return %c0_i32, %c0_i32_0 : i32, i32
  }
  func.func @transform_22(%arg0: i32) -> (i32, i32) {
    %c0_i32 = arith.constant 0 : i32
    %c0_i32_0 = arith.constant 0 : i32
    %c0_i32_1 = arith.constant 0 : i32
    return %c0_i32, %c0_i32_0 : i32, i32
  }
  func.func @transform_23(%arg0: i32) -> (i32, i32) {
    %c0_i32 = arith.constant 0 : i32
    %c0_i32_0 = arith.constant 0 : i32
    %c0_i32_1 = arith.constant 0 : i32
    return %c0_i32, %c0_i32_0 : i32, i32
  }
  func.func @transform_24(%arg0: i32) -> (i32, i32) {
    %c0_i32 = arith.constant 0 : i32
    %c0_i32_0 = arith.constant 0 : i32
    %c0_i32_1 = arith.constant 0 : i32
    return %c0_i32, %c0_i32_0 : i32, i32
  }
  func.func @transform_25(%arg0: i32) -> (i32, i32) {
    %c0_i32 = arith.constant 0 : i32
    %c0_i32_0 = arith.constant 0 : i32
    %c0_i32_1 = arith.constant 0 : i32
    return %c0_i32, %c0_i32_0 : i32, i32
  }
  func.func @transform_26(%arg0: i32) -> (i32, i32) {
    %c0_i32 = arith.constant 0 : i32
    %c0_i32_0 = arith.constant 0 : i32
    %c0_i32_1 = arith.constant 0 : i32
    return %c0_i32, %c0_i32_0 : i32, i32
  }
  func.func @transform_27(%arg0: i32) -> (i32, i32) {
    %c0_i32 = arith.constant 0 : i32
    %c0_i32_0 = arith.constant 0 : i32
    %c0_i32_1 = arith.constant 0 : i32
    return %c0_i32, %c0_i32_0 : i32, i32
  }
  func.func @transform_28(%arg0: i32) -> (i32, i32) {
    %c0_i32 = arith.constant 0 : i32
    %c0_i32_0 = arith.constant 0 : i32
    %c0_i32_1 = arith.constant 0 : i32
    return %c0_i32, %c0_i32_0 : i32, i32
  }
  func.func @transform_29(%arg0: i32) -> (i32, i32) {
    %c0_i32 = arith.constant 0 : i32
    %c0_i32_0 = arith.constant 0 : i32
    %c0_i32_1 = arith.constant 0 : i32
    return %c0_i32, %c0_i32_0 : i32, i32
  }
  func.func @transform_30(%arg0: i32) -> (i32, i32) {
    %c0_i32 = arith.constant 0 : i32
    %c0_i32_0 = arith.constant 0 : i32
    %c0_i32_1 = arith.constant 0 : i32
    return %c0_i32, %c0_i32_0 : i32, i32
  }
  func.func @transform_31(%arg0: i32) -> (i32, i32) {
    %c0_i32 = arith.constant 0 : i32
    %c0_i32_0 = arith.constant 0 : i32
    %c0_i32_1 = arith.constant 0 : i32
    return %c0_i32, %c0_i32_0 : i32, i32
  }
  func.func @transform_32(%arg0: i32) -> (i32, i32) {
    %c0_i32 = arith.constant 0 : i32
    %c0_i32_0 = arith.constant 0 : i32
    %c0_i32_1 = arith.constant 0 : i32
    return %c0_i32, %c0_i32_0 : i32, i32
  }
  func.func @transform_33(%arg0: i32) -> (i32, i32) {
    %c0_i32 = arith.constant 0 : i32
    %c0_i32_0 = arith.constant 0 : i32
    %c0_i32_1 = arith.constant 0 : i32
    return %c0_i32, %c0_i32_0 : i32, i32
  }
  func.func @transform_34(%arg0: i32) -> (i32, i32) {
    %c0_i32 = arith.constant 0 : i32
    %c0_i32_0 = arith.constant 0 : i32
    %c0_i32_1 = arith.constant 0 : i32
    return %c0_i32, %c0_i32_0 : i32, i32
  }
  func.func @transform_35(%arg0: i32) -> (i32, i32) {
    %c0_i32 = arith.constant 0 : i32
    %c0_i32_0 = arith.constant 0 : i32
    %c0_i32_1 = arith.constant 0 : i32
    return %c0_i32, %c0_i32_0 : i32, i32
  }
  func.func @transform_36(%arg0: i32) -> (i32, i32) {
    %c0_i32 = arith.constant 0 : i32
    %c0_i32_0 = arith.constant 0 : i32
    %c0_i32_1 = arith.constant 0 : i32
    return %c0_i32, %c0_i32_0 : i32, i32
  }
  func.func @transform_37(%arg0: i32) -> (i32, i32) {
    %c0_i32 = arith.constant 0 : i32
    %c0_i32_0 = arith.constant 0 : i32
    %c0_i32_1 = arith.constant 0 : i32
    return %c0_i32, %c0_i32_0 : i32, i32
  }
  func.func @transform_38(%arg0: i32) -> (i32, i32) {
    %c0_i32 = arith.constant 0 : i32
    %c0_i32_0 = arith.constant 0 : i32
    %c0_i32_1 = arith.constant 0 : i32
    return %c0_i32, %c0_i32_0 : i32, i32
  }
  func.func @transform_39(%arg0: i32) -> (i32, i32) {
    %c0_i32 = arith.constant 0 : i32
    %c0_i32_0 = arith.constant 0 : i32
    %c0_i32_1 = arith.constant 0 : i32
    return %c0_i32, %c0_i32_0 : i32, i32
  }
  func.func @transform_40(%arg0: i32) -> (i32, i32) {
    %c0_i32 = arith.constant 0 : i32
    %c0_i32_0 = arith.constant 0 : i32
    %c0_i32_1 = arith.constant 0 : i32
    return %c0_i32, %c0_i32_0 : i32, i32
  }
  func.func @transform_41(%arg0: i32) -> (i32, i32) {
    %c0_i32 = arith.constant 0 : i32
    %c0_i32_0 = arith.constant 0 : i32
    %c0_i32_1 = arith.constant 0 : i32
    return %c0_i32, %c0_i32_0 : i32, i32
  }
  func.func @transform_42(%arg0: i32) -> (i32, i32) {
    %c0_i32 = arith.constant 0 : i32
    %c0_i32_0 = arith.constant 0 : i32
    %c0_i32_1 = arith.constant 0 : i32
    return %c0_i32, %c0_i32_0 : i32, i32
  }
  func.func @transform_43(%arg0: i32) -> (i32, i32) {
    %c0_i32 = arith.constant 0 : i32
    %c0_i32_0 = arith.constant 0 : i32
    %c0_i32_1 = arith.constant 0 : i32
    return %c0_i32, %c0_i32_0 : i32, i32
  }
  func.func @transform_44(%arg0: i32) -> (i32, i32) {
    %c0_i32 = arith.constant 0 : i32
    %c0_i32_0 = arith.constant 0 : i32
    %c0_i32_1 = arith.constant 0 : i32
    return %c0_i32, %c0_i32_0 : i32, i32
  }
  func.func @transform_45(%arg0: i32) -> (i32, i32) {
    %c0_i32 = arith.constant 0 : i32
    %c0_i32_0 = arith.constant 0 : i32
    %c0_i32_1 = arith.constant 0 : i32
    return %c0_i32, %c0_i32_0 : i32, i32
  }
  func.func @transform_46(%arg0: i32) -> (i32, i32) {
    %c0_i32 = arith.constant 0 : i32
    %c0_i32_0 = arith.constant 0 : i32
    %c0_i32_1 = arith.constant 0 : i32
    return %c0_i32, %c0_i32_0 : i32, i32
  }
  func.func @transform_47(%arg0: i32) -> (i32, i32) {
    %c0_i32 = arith.constant 0 : i32
    %c0_i32_0 = arith.constant 0 : i32
    %c0_i32_1 = arith.constant 0 : i32
    return %c0_i32, %c0_i32_0 : i32, i32
  }
  func.func @transform_48(%arg0: i32) -> (i32, i32) {
    %c0_i32 = arith.constant 0 : i32
    %c0_i32_0 = arith.constant 0 : i32
    %c0_i32_1 = arith.constant 0 : i32
    return %c0_i32, %c0_i32_0 : i32, i32
  }
  func.func @transform_49(%arg0: i32) -> (i32, i32) {
    %c0_i32 = arith.constant 0 : i32
    %c0_i32_0 = arith.constant 0 : i32
    %c0_i32_1 = arith.constant 0 : i32
    return %c0_i32, %c0_i32_0 : i32, i32
  }
  func.func @transform_50(%arg0: i32) -> (i32, i32) {
    %c0_i32 = arith.constant 0 : i32
    %c0_i32_0 = arith.constant 0 : i32
    %c0_i32_1 = arith.constant 0 : i32
    return %c0_i32, %c0_i32_0 : i32, i32
  }
  func.func @transform_51(%arg0: i32) -> (i32, i32) {
    %c0_i32 = arith.constant 0 : i32
    %c0_i32_0 = arith.constant 0 : i32
    %c0_i32_1 = arith.constant 0 : i32
    return %c0_i32, %c0_i32_0 : i32, i32
  }
  func.func @transform_52(%arg0: i32) -> (i32, i32) {
    %c0_i32 = arith.constant 0 : i32
    %c0_i32_0 = arith.constant 0 : i32
    %c0_i32_1 = arith.constant 0 : i32
    return %c0_i32, %c0_i32_0 : i32, i32
  }
  func.func @transform_53(%arg0: i32) -> (i32, i32) {
    %c0_i32 = arith.constant 0 : i32
    %c0_i32_0 = arith.constant 0 : i32
    %c0_i32_1 = arith.constant 0 : i32
    return %c0_i32, %c0_i32_0 : i32, i32
  }
  func.func @transform_54(%arg0: i32) -> (i32, i32) {
    %c0_i32 = arith.constant 0 : i32
    %c0_i32_0 = arith.constant 0 : i32
    %c0_i32_1 = arith.constant 0 : i32
    return %c0_i32, %c0_i32_0 : i32, i32
  }
  func.func @transform_55(%arg0: i32) -> (i32, i32) {
    %c0_i32 = arith.constant 0 : i32
    %c0_i32_0 = arith.constant 0 : i32
    %c0_i32_1 = arith.constant 0 : i32
    return %c0_i32, %c0_i32_0 : i32, i32
  }
  func.func @transform_56(%arg0: i32) -> (i32, i32) {
    %c0_i32 = arith.constant 0 : i32
    %c0_i32_0 = arith.constant 0 : i32
    %c0_i32_1 = arith.constant 0 : i32
    return %c0_i32, %c0_i32_0 : i32, i32
  }
  func.func @transform_57(%arg0: i32) -> (i32, i32) {
    %c0_i32 = arith.constant 0 : i32
    %c0_i32_0 = arith.constant 0 : i32
    %c0_i32_1 = arith.constant 0 : i32
    return %c0_i32, %c0_i32_0 : i32, i32
  }
  func.func @transform_58(%arg0: i32) -> (i32, i32) {
    %c0_i32 = arith.constant 0 : i32
    %c0_i32_0 = arith.constant 0 : i32
    %c0_i32_1 = arith.constant 0 : i32
    return %c0_i32, %c0_i32_0 : i32, i32
  }
  func.func @transform_59(%arg0: i32) -> (i32, i32) {
    %c0_i32 = arith.constant 0 : i32
    %c0_i32_0 = arith.constant 0 : i32
    %c0_i32_1 = arith.constant 0 : i32
    return %c0_i32, %c0_i32_0 : i32, i32
  }
  func.func @transform_60(%arg0: i32) -> (i32, i32) {
    %c0_i32 = arith.constant 0 : i32
    %c0_i32_0 = arith.constant 0 : i32
    %c0_i32_1 = arith.constant 0 : i32
    return %c0_i32, %c0_i32_0 : i32, i32
  }
  func.func @transform_61(%arg0: i32) -> (i32, i32) {
    %c0_i32 = arith.constant 0 : i32
    %c0_i32_0 = arith.constant 0 : i32
    %c0_i32_1 = arith.constant 0 : i32
    return %c0_i32, %c0_i32_0 : i32, i32
  }
  func.func @transform_62(%arg0: i32) -> (i32, i32) {
    %c0_i32 = arith.constant 0 : i32
    %c0_i32_0 = arith.constant 0 : i32
    %c0_i32_1 = arith.constant 0 : i32
    return %c0_i32, %c0_i32_0 : i32, i32
  }
  func.func @transform_63(%arg0: i32) -> (i32, i32) {
    %c0_i32 = arith.constant 0 : i32
    %c0_i32_0 = arith.constant 0 : i32
    %c0_i32_1 = arith.constant 0 : i32
    return %c0_i32, %c0_i32_0 : i32, i32
  }
  func.func @transform_64(%arg0: i32) -> (i32, i32, i32) {
    %c0_i32 = arith.constant 0 : i32
    %c0_i32_0 = arith.constant 0 : i32
    %c0_i32_1 = arith.constant 0 : i32
    return %arg0, %c0_i32, %c0_i32_0 : i32, i32, i32
  }
}

</mosaic_0001>

<llo_original>
// kernel: tpu_custom_call.1
$region0: #{tpu_custom_call.1}
  #allocation0 [shape = 'u32[]', space=smem, size = 0x4, offset = 0x4, fixed_abs, tag = 'smem constant byte address 0x4 - core index']
  #allocation1 [shape = 'u32[72,128]{1,0:T(1,128)}', space=vmem, size = 0x9000, scoped, tag = 'internal scratch']
  %s0 = inlined_call_operand.smem [shape: u32[65], index: -1, kind: input, shape index: {}]
  %s1 = sld [smem:[%s0]]
  %s2 = scalar_lea.smem %s0, 1
  %s3 = sld [smem:[%s2]]
  %s4 = scalar_lea.smem %s0, 2
  %s5 = sld [smem:[%s4]]
  %s6 = scalar_lea.smem %s0, 3
  %s7 = sld [smem:[%s6]]
  %s8 = scalar_lea.smem %s0, 4
  %s9 = sld [smem:[%s8]]
  %s10 = scalar_lea.smem %s0, 5
  %s11 = sld [smem:[%s10]]
  %s12 = scalar_lea.smem %s0, 6
  %s13 = sld [smem:[%s12]]
  %s14 = scalar_lea.smem %s0, 7
  %s15 = sld [smem:[%s14]]
  %s16 = scalar_lea.smem %s0, 8
  %s17 = sld [smem:[%s16]]
  %s18 = scalar_lea.smem %s0, 9
  %s19 = sld [smem:[%s18]]
  %s20 = scalar_lea.smem %s0, 10
  %s21 = sld [smem:[%s20]]
  %s22 = scalar_lea.smem %s0, 11
  %s23 = sld [smem:[%s22]]
  %s24 = scalar_lea.smem %s0, 12
  %s25 = sld [smem:[%s24]]
  %s26 = scalar_lea.smem %s0, 13
  %s27 = sld [smem:[%s26]]
  %s28 = scalar_lea.smem %s0, 14
  %s29 = sld [smem:[%s28]]
  %s30 = scalar_lea.smem %s0, 15
  %s31 = sld [smem:[%s30]]
  %s32 = scalar_lea.smem %s0, 16
  %s33 = sld [smem:[%s32]]
  %s34 = scalar_lea.smem %s0, 17
  %s35 = sld [smem:[%s34]]
  %s36 = scalar_lea.smem %s0, 18
  %s37 = sld [smem:[%s36]]
  %s38 = scalar_lea.smem %s0, 19
  %s39 = sld [smem:[%s38]]
  %s40 = scalar_lea.smem %s0, 20
  %s41 = sld [smem:[%s40]]
  %s42 = scalar_lea.smem %s0, 21
  %s43 = sld [smem:[%s42]]
  %s44 = scalar_lea.smem %s0, 22
  %s45 = sld [smem:[%s44]]
  %s46 = scalar_lea.smem %s0, 23
  %s47 = sld [smem:[%s46]]
  %s48 = scalar_lea.smem %s0, 24
  %s49 = sld [smem:[%s48]]
  %s50 = scalar_lea.smem %s0, 25
  %s51 = sld [smem:[%s50]]
  %s52 = scalar_lea.smem %s0, 26
  %s53 = sld [smem:[%s52]]
  %s54 = scalar_lea.smem %s0, 27
  %s55 = sld [smem:[%s54]]
  %s56 = scalar_lea.smem %s0, 28
  %s57 = sld [smem:[%s56]]
  %s58 = scalar_lea.smem %s0, 29
  %s59 = sld [smem:[%s58]]
  %s60 = scalar_lea.smem %s0, 30
  %s61 = sld [smem:[%s60]]
  %s62 = scalar_lea.smem %s0, 31
  %s63 = sld [smem:[%s62]]
  %s64 = scalar_lea.smem %s0, 32
  %s65 = sld [smem:[%s64]]
  %s66 = scalar_lea.smem %s0, 33
  %s67 = sld [smem:[%s66]]
  %s68 = scalar_lea.smem %s0, 34
  %s69 = sld [smem:[%s68]]
  %s70 = scalar_lea.smem %s0, 35
  %s71 = sld [smem:[%s70]]
  %s72 = scalar_lea.smem %s0, 36
  %s73 = sld [smem:[%s72]]
  %s74 = scalar_lea.smem %s0, 37
  %s75 = sld [smem:[%s74]]
  %s76 = scalar_lea.smem %s0, 38
  %s77 = sld [smem:[%s76]]
  %s78 = scalar_lea.smem %s0, 39
  %s79 = sld [smem:[%s78]]
  %s80 = scalar_lea.smem %s0, 40
  %s81 = sld [smem:[%s80]]
  %s82 = scalar_lea.smem %s0, 41
  %s83 = sld [smem:[%s82]]
  %s84 = scalar_lea.smem %s0, 42
  %s85 = sld [smem:[%s84]]
  %s86 = scalar_lea.smem %s0, 43
  %s87 = sld [smem:[%s86]]
  %s88 = scalar_lea.smem %s0, 44
  %s89 = sld [smem:[%s88]]
  %s90 = scalar_lea.smem %s0, 45
  %s91 = sld [smem:[%s90]]
  %s92 = scalar_lea.smem %s0, 46
  %s93 = sld [smem:[%s92]]
  %s94 = scalar_lea.smem %s0, 47
  %s95 = sld [smem:[%s94]]
  %s96 = scalar_lea.smem %s0, 48
  %s97 = sld [smem:[%s96]]
  %s98 = scalar_lea.smem %s0, 49
  %s99 = sld [smem:[%s98]]
  %s100 = scalar_lea.smem %s0, 50
  %s101 = sld [smem:[%s100]]
  %s102 = scalar_lea.smem %s0, 51
  %s103 = sld [smem:[%s102]]
  %s104 = scalar_lea.smem %s0, 52
  %s105 = sld [smem:[%s104]]
  %s106 = scalar_lea.smem %s0, 53
  %s107 = sld [smem:[%s106]]
  %s108 = scalar_lea.smem %s0, 54
  %s109 = sld [smem:[%s108]]
  %s110 = scalar_lea.smem %s0, 55
  %s111 = sld [smem:[%s110]]
  %s112 = scalar_lea.smem %s0, 56
  %s113 = sld [smem:[%s112]]
  %s114 = scalar_lea.smem %s0, 57
  %s115 = sld [smem:[%s114]]
  %s116 = scalar_lea.smem %s0, 58
  %s117 = sld [smem:[%s116]]
  %s118 = scalar_lea.smem %s0, 59
  %s119 = sld [smem:[%s118]]
  %s120 = scalar_lea.smem %s0, 60
  %s121 = sld [smem:[%s120]]
  %s122 = scalar_lea.smem %s0, 61
  %s123 = sld [smem:[%s122]]
  %s124 = scalar_lea.smem %s0, 62
  %s125 = sld [smem:[%s124]]
  %s126 = scalar_lea.smem %s0, 63
  %s127 = sld [smem:[%s126]]
  %s128 = scalar_lea.smem %s0, 64
  %s129 = sld [smem:[%s128]]
  %s130 = sld [smem:[#allocation0]]
  $region333: #{tpu_custom_call.1} parent=0
    _
  %s132 = ssub.s32 1, %s130
  %s133 = scalar_select 0, %s132, %s130
  $region1: #{tpu_custom_call.1} parent=0
    #allocation2 [shape = 'u8[512]{0}', space=vmem, size = 0x400, scoped, tag = 'input window, operand 50, single buffered']
    #allocation3 [shape = 's32[2]{0}', space=sflag, size = 0x8, scoped, tag = 'scoped memory for tpu_custom_call.1']
    #allocation4 [shape = 's32[2]{0}', space=sflag, size = 0x8, scoped, tag = 'scoped memory for tpu_custom_call.1']
    #allocation5 [shape = 'u8[512]{0}', space=vmem, size = 0x400, scoped, tag = 'input window, operand 51, single buffered']
    #allocation6 [shape = 's32[1]{0}', space=sflag, size = 0x4, scoped, tag = 'scoped memory for tpu_custom_call.1']
    #allocation7 [shape = 'u8[512]{0}', space=vmem, size = 0x400, scoped, tag = 'input window, operand 53, single buffered']
    #allocation8 [shape = 'u8[512]{0}', space=vmem, size = 0x400, scoped, tag = 'input window, operand 54, single buffered']
    #allocation9 [shape = 's32[1]{0}', space=sflag, size = 0x4, scoped, tag = 'scoped memory for tpu_custom_call.1']
    #allocation10 [shape = 'u8[512]{0}', space=vmem, size = 0x400, scoped, tag = 'input window, operand 55, single buffered']
    #allocation11 [shape = 'u8[512]{0}', space=vmem, size = 0x400, scoped, tag = 'input window, operand 57, single buffered']
    #allocation12 [shape = 's32[1]{0}', space=sflag, size = 0x4, scoped, tag = 'scoped memory for tpu_custom_call.1']
    #allocation13 [shape = 'u8[512]{0}', space=vmem, size = 0x400, scoped, tag = 'input window, operand 58, single buffered']
    #allocation14 [shape = 'u8[512]{0}', space=vmem, size = 0x400, scoped, tag = 'input window, operand 59, single buffered']
    #allocation15 [shape = 's32[1]{0}', space=sflag, size = 0x4, scoped, tag = 'scoped memory for tpu_custom_call.1']
    #allocation16 [shape = 'u8[512]{0}', space=vmem, size = 0x400, scoped, tag = 'input window, operand 61, single buffered']
    #allocation17 [shape = 'u8[512]{0}', space=vmem, size = 0x400, scoped, tag = 'input window, operand 62, single buffered']
    #allocation18 [shape = 's32[1]{0}', space=sflag, size = 0x4, scoped, tag = 'scoped memory for tpu_custom_call.1']
    #allocation19 [shape = 'u8[512]{0}', space=vmem, size = 0x400, scoped, tag = 'input window, operand 63, single buffered']
    #allocation20 [shape = 'u8[8192]{0}', space=vmem, size = 0x2000, scoped, tag = 'output window, operand 0']
    %134 = vsyncpa [#allocation3], 0
    %135 = vsyncpa [#allocation6], 0
    %136 = vsyncpa [#allocation9], 0
    %137 = vsyncpa [#allocation12], 0
    %138 = vsyncpa [#allocation15], 0
    %139 = vsyncpa [#allocation18], 0
    %140 = vsyncpa [#allocation4], 0
    %s141 = scalar_lea.sflag [#allocation4], 1
    %142 = vsyncpa %s141, 0
    loop: start=0, step=1, limit=4
    $region2: #{tpu_custom_call.1} parent=1 // loop_pre_header
      _
    $region3: #{tpu_custom_call.1} parent=1 // loop_header
      %s144 = sphi 0, %s148
      %p145 = scmp.ge.s32.totalorder %s144, 4
      %s154 = sphi 0, %s156
      %s157 = sphi 0, %s154
      %s158 = sphi 0, %s157
      %s174 = sphi 0, %s158
      %s178 = sphi 0, %s178
      %s180 = sphi 0, %s178
      %s181 = sphi 0, %s180
      %s195 = sphi 0, %s181
      %s199 = sphi 0, %s199
      %s201 = sphi 0, %s199
      %s202 = sphi 0, %s201
      %s216 = sphi 0, %s202
      %s220 = sphi 0, %s220
      %s222 = sphi 0, %s220
      %s223 = sphi 0, %s222
      %s237 = sphi 0, %s223
      %s241 = sphi 0, %s241
      %s243 = sphi 0, %s241
      %s244 = sphi 0, %s243
      %s258 = sphi 0, %s244
      %s262 = sphi 0, %s262
      %s264 = sphi 0, %s262
      %s265 = sphi 0, %s264
      %s279 = sphi 0, %s265
      %s283 = sphi 0, %s283
      %s285 = sphi 0, %s283
      %s286 = sphi 0, %s285
      %s300 = sphi 0, %s286
      %s304 = sphi 0, %s304
      %s306 = sphi 0, %s304
      %s307 = sphi 0, %s306
      %s321 = sphi 0, %s307
      %s325 = sphi 0, %s325
      %s327 = sphi 0, %s325
      %s328 = sphi 0, %s327
      %s342 = sphi 0, %s328
      %s346 = sphi 0, %s346
      %s348 = sphi 0, %s346
      %s349 = sphi 0, %s348
      %s363 = sphi 0, %s349
      %s367 = sphi 0, %s367
      %s369 = sphi 0, %s367
      %s370 = sphi 0, %s369
      %s384 = sphi 0, %s370
      %s388 = sphi 0, %s388
      %s390 = sphi 0, %s388
      %s391 = sphi 0, %s390
      %s405 = sphi 0, %s391
      %s409 = sphi 0, %s409
      %s411 = sphi 0, %s409
      %s412 = sphi 0, %s411
      %s426 = sphi 0, %s412
      %s430 = sphi 0, %s430
      %s432 = sphi 0, %s430
      %s433 = sphi 0, %s432
      %s447 = sphi 0, %s433
      %s451 = sphi 0, %s451
      %s453 = sphi 0, %s451
      %s454 = sphi 0, %s453
      %s468 = sphi 0, %s454
      %s472 = sphi 0, %s472
      %s474 = sphi 0, %s472
      %s475 = sphi 0, %s474
      %s489 = sphi 0, %s475
      %s493 = sphi 0, %s493
      %s495 = sphi 0, %s493
      %s496 = sphi 0, %s495
      %s510 = sphi 0, %s496
      %s514 = sphi 0, %s514
      %s516 = sphi 0, %s514
      %s517 = sphi 0, %s516
      %s531 = sphi 0, %s517
      %s535 = sphi 0, %s535
      %s537 = sphi 0, %s535
      %s538 = sphi 0, %s537
      %s552 = sphi 0, %s538
      %s556 = sphi 0, %s556
      %s558 = sphi 0, %s556
      %s559 = sphi 0, %s558
      %s573 = sphi 0, %s559
      %s577 = sphi 0, %s577
      %s579 = sphi 0, %s577
      %s580 = sphi 0, %s579
      %s594 = sphi 0, %s580
      %s598 = sphi 0, %s598
      %s600 = sphi 0, %s598
      %s601 = sphi 0, %s600
      %s615 = sphi 0, %s601
      %s619 = sphi 0, %s619
      %s621 = sphi 0, %s619
      %s622 = sphi 0, %s621
      %s636 = sphi 0, %s622
      %s640 = sphi 0, %s640
      %s642 = sphi 0, %s640
      %s643 = sphi 0, %s642
      %s657 = sphi 0, %s643
      %s661 = sphi 0, %s661
      %s663 = sphi 0, %s661
      %s664 = sphi 0, %s663
      %s678 = sphi 0, %s664
      %s682 = sphi 0, %s682
      %s684 = sphi 0, %s682
      %s685 = sphi 0, %s684
      %s699 = sphi 0, %s685
      %s703 = sphi 0, %s703
      %s705 = sphi 0, %s703
      %s706 = sphi 0, %s705
      %s720 = sphi 0, %s706
      %s724 = sphi 0, %s724
      %s726 = sphi 0, %s724
      %s727 = sphi 0, %s726
      %s741 = sphi 0, %s727
      %s745 = sphi 0, %s745
      %s747 = sphi 0, %s745
      %s748 = sphi 0, %s747
      %s762 = sphi 0, %s748
      %s766 = sphi 0, %s766
      %s768 = sphi 0, %s766
      %s769 = sphi 0, %s768
      %s783 = sphi 0, %s769
      %s787 = sphi 0, %s787
      %s789 = sphi 0, %s787
      %s790 = sphi 0, %s789
      %s804 = sphi 0, %s790
      %s808 = sphi 0, %s808
      %s810 = sphi 0, %s808
      %s811 = sphi 0, %s810
      %s825 = sphi 0, %s811
      %s829 = sphi 0, %s829
      %s831 = sphi 0, %s829
      %s832 = sphi 0, %s831
      %s846 = sphi 0, %s832
      %s850 = sphi 0, %s850
      %s852 = sphi 0, %s850
      %s853 = sphi 0, %s852
      %s867 = sphi 0, %s853
      %s871 = sphi 0, %s871
      %s873 = sphi 0, %s871
      %s874 = sphi 0, %s873
      %s888 = sphi 0, %s874
      %s892 = sphi 0, %s892
      %s894 = sphi 0, %s892
      %s895 = sphi 0, %s894
      %s909 = sphi 0, %s895
      %s913 = sphi 0, %s913
      %s915 = sphi 0, %s913
      %s916 = sphi 0, %s915
      %s930 = sphi 0, %s916
      %s934 = sphi 0, %s934
      %s936 = sphi 0, %s934
      %s937 = sphi 0, %s936
      %s951 = sphi 0, %s937
      %s955 = sphi 0, %s955
      %s957 = sphi 0, %s955
      %s958 = sphi 0, %s957
      %s972 = sphi 0, %s958
      %s976 = sphi 0, %s976
      %s978 = sphi 0, %s976
      %s979 = sphi 0, %s978
      %s993 = sphi 0, %s979
      %s997 = sphi 0, %s997
      %s999 = sphi 0, %s997
      %s1000 = sphi 0, %s999
      %s1014 = sphi 0, %s1000
      %s1018 = sphi 0, %s1018
      %s1020 = sphi 0, %s1018
      %s1021 = sphi 0, %s1020
      %s1035 = sphi 0, %s1021
      %s1039 = sphi 0, %s1039
      %s1041 = sphi 0, %s1039
      %s1042 = sphi 0, %s1041
      %s1056 = sphi 0, %s1042
      %s1060 = sphi 0, %s1060
      %s1062 = sphi 0, %s1060
      %s1063 = sphi 0, %s1062
      %s1077 = sphi 0, %s1063
      %s1081 = sphi 0, %s1081
      %s1083 = sphi 0, %s1081
      %s1084 = sphi 0, %s1083
      %s1098 = sphi 0, %s1084
      %s1102 = sphi 0, %s1102
      %s1104 = sphi 0, %s1102
      %s1105 = sphi 0, %s1104
      %s1119 = sphi 0, %s1105
      %s1123 = sphi 0, %s1123
      %s1125 = sphi 0, %s1123
      %s1126 = sphi 0, %s1125
      %s1140 = sphi 0, %s1126
      %s1144 = sphi 0, %s1144
      %s1146 = sphi 0, %s1144
      %s1147 = sphi 0, %s1146
      %s1161 = sphi 0, %s1147
      %s1165 = sphi 0, %s1165
      %s1167 = sphi 0, %s1165
      %s1168 = sphi 0, %s1167
      %s1182 = sphi 0, %s1168
      %s1186 = sphi 0, %s1186
      %s1188 = sphi 0, %s1186
      %s1189 = sphi 0, %s1188
      %s1203 = sphi 0, %s1189
      %s1207 = sphi 0, %s1207
      %s1209 = sphi 0, %s1207
      %s1210 = sphi 0, %s1209
      %s1224 = sphi 0, %s1210
      %s1228 = sphi 0, %s1228
      %s1230 = sphi 0, %s1228
      %s1231 = sphi 0, %s1230
      %s1245 = sphi 0, %s1231
      %s1249 = sphi 0, %s1249
      %s1251 = sphi 0, %s1249
      %s1252 = sphi 0, %s1251
      %s1266 = sphi 0, %s1252
      %s1270 = sphi 0, %s1270
      %s1272 = sphi 0, %s1270
      %s1273 = sphi 0, %s1272
      %s1287 = sphi 0, %s1273
      %s1291 = sphi 0, %s1291
      %s1293 = sphi 0, %s1291
      %s1294 = sphi 0, %s1293
      %s1308 = sphi 0, %s1294
      %s1312 = sphi 0, %s1312
      %s1314 = sphi 0, %s1312
      %s1315 = sphi 0, %s1314
      %s1329 = sphi 0, %s1315
      %s1333 = sphi 0, %s1333
      %s1335 = sphi 0, %s1333
      %s1336 = sphi 0, %s1335
      %s1350 = sphi 0, %s1336
      %s1354 = sphi 0, %s1354
      %s1356 = sphi 0, %s1354
      %s1357 = sphi 0, %s1356
      %s1371 = sphi 0, %s1357
      %s1375 = sphi 0, %s1375
      %s1377 = sphi 0, %s1375
      %s1378 = sphi 0, %s1377
      %s1392 = sphi 0, %s1378
      %s1396 = sphi 0, %s1396
      %s1398 = sphi 0, %s1396
      %s1399 = sphi 0, %s1398
      %s1413 = sphi 0, %s1399
      %s1417 = sphi 0, %s1417
      %s1419 = sphi 0, %s1417
      %s1420 = sphi 0, %s1419
      %s1434 = sphi 0, %s1420
      %s1438 = sphi 0, %s1438
      %s1440 = sphi 0, %s1438
      %s1441 = sphi 0, %s1440
      %s1455 = sphi 0, %s1441
      %s1459 = sphi 0, %s1459
      %s1461 = sphi 0, %s1459
      %s1462 = sphi 0, %s1461
      %s1476 = sphi 0, %s1462
      %s1480 = sphi 0, %s1480
      %s1482 = sphi 0, %s1480
      %s1483 = sphi 0, %s1482
      %s1497 = sphi 0, %s1483
      %s1503 = sphi 0, %s1505
      %s1506 = sphi 0, %s1503
      %s1507 = sphi 0, %s1506
      %s1523 = sphi 0, %s1507
    $region4: #{tpu_custom_call.1} parent=1 // loop_header_branch
      %147 = sbr.rel (%p145) target = $region8
    $region5: #{tpu_custom_call.1} parent=1 // loop_body
      %s149 = ssub.s32 %s144, 1
      %s150 = ssub.s32 %s144, 2
      %s151 = sadd.s32 %s144, 1
      %s152 = ssub.s32 %s144, %s151
      %p153 = scmp.eq.s32.totalorder %s152, 0
      %s155 = sadd.s32 %s154, 1
      %s156 = scalar_select %p153, %s154, %s155
      %p159 = pneg %p153
      %p160 = scmp.eq.s32.totalorder %s144, 1
      %p161 = por %p159, %p160
      %p162 = scmp.ne.s32.totalorder %s154, %s157
      %p163 = scmp.eq.s32.totalorder %s144, 0
      %p164 = por %p162, %p163
      %p165 = scmp.ne.s32.totalorder %s154, %s157
      %p166 = scmp.eq.s32.totalorder %s149, 1
      %p167 = por %p165, %p166
      %p168 = scmp.ne.s32.totalorder %s157, %s158
      %p169 = scmp.eq.s32.totalorder %s149, 0
      %p170 = por %p168, %p169
      %p171 = scmp.ne.s32.totalorder %s157, %s158
      %p172 = scmp.eq.s32.totalorder %s150, 1
      %p173 = por %p171, %p172
      %p175 = scmp.ne.s32.totalorder %s158, %s174
      %p176 = scmp.eq.s32.totalorder %s150, 0
      %p177 = por %p175, %p176
      %s179 = sadd.s32 %s178, 1
      %p182 = scmp.eq.s32.totalorder %s144, 1
      %p183 = scmp.ne.s32.totalorder %s178, %s180
      %p184 = scmp.eq.s32.totalorder %s144, 0
      %p185 = por %p183, %p184
      %p186 = scmp.ne.s32.totalorder %s178, %s180
      %p187 = scmp.eq.s32.totalorder %s149, 1
      %p188 = por %p186, %p187
      %p189 = scmp.ne.s32.totalorder %s180, %s181
      %p190 = scmp.eq.s32.totalorder %s149, 0
      %p191 = por %p189, %p190
      %p192 = scmp.ne.s32.totalorder %s180, %s181
      %p193 = scmp.eq.s32.totalorder %s150, 1
      %p194 = por %p192, %p193
      %p196 = scmp.ne.s32.totalorder %s181, %s195
      %p197 = scmp.eq.s32.totalorder %s150, 0
      %p198 = por %p196, %p197
      %s200 = sadd.s32 %s199, 1
      %p203 = scmp.eq.s32.totalorder %s144, 1
      %p204 = scmp.ne.s32.totalorder %s199, %s201
      %p205 = scmp.eq.s32.totalorder %s144, 0
      %p206 = por %p204, %p205
      %p207 = scmp.ne.s32.totalorder %s199, %s201
      %p208 = scmp.eq.s32.totalorder %s149, 1
      %p209 = por %p207, %p208
      %p210 = scmp.ne.s32.totalorder %s201, %s202
      %p211 = scmp.eq.s32.totalorder %s149, 0
      %p212 = por %p210, %p211
      %p213 = scmp.ne.s32.totalorder %s201, %s202
      %p214 = scmp.eq.s32.totalorder %s150, 1
      %p215 = por %p213, %p214
      %p217 = scmp.ne.s32.totalorder %s202, %s216
      %p218 = scmp.eq.s32.totalorder %s150, 0
      %p219 = por %p217, %p218
      %s221 = sadd.s32 %s220, 1
      %p224 = scmp.eq.s32.totalorder %s144, 1
      %p225 = scmp.ne.s32.totalorder %s220, %s222
      %p226 = scmp.eq.s32.totalorder %s144, 0
      %p227 = por %p225, %p226
      %p228 = scmp.ne.s32.totalorder %s220, %s222
      %p229 = scmp.eq.s32.totalorder %s149, 1
      %p230 = por %p228, %p229
      %p231 = scmp.ne.s32.totalorder %s222, %s223
      %p232 = scmp.eq.s32.totalorder %s149, 0
      %p233 = por %p231, %p232
      %p234 = scmp.ne.s32.totalorder %s222, %s223
      %p235 = scmp.eq.s32.totalorder %s150, 1
      %p236 = por %p234, %p235
      %p238 = scmp.ne.s32.totalorder %s223, %s237
      %p239 = scmp.eq.s32.totalorder %s150, 0
      %p240 = por %p238, %p239
      %s242 = sadd.s32 %s241, 1
      %p245 = scmp.eq.s32.totalorder %s144, 1
      %p246 = scmp.ne.s32.totalorder %s241, %s243
      %p247 = scmp.eq.s32.totalorder %s144, 0
      %p248 = por %p246, %p247
      %p249 = scmp.ne.s32.totalorder %s241, %s243
      %p250 = scmp.eq.s32.totalorder %s149, 1
      %p251 = por %p249, %p250
      %p252 = scmp.ne.s32.totalorder %s243, %s244
      %p253 = scmp.eq.s32.totalorder %s149, 0
      %p254 = por %p252, %p253
      %p255 = scmp.ne.s32.totalorder %s243, %s244
      %p256 = scmp.eq.s32.totalorder %s150, 1
      %p257 = por %p255, %p256
      %p259 = scmp.ne.s32.totalorder %s244, %s258
      %p260 = scmp.eq.s32.totalorder %s150, 0
      %p261 = por %p259, %p260
      %s263 = sadd.s32 %s262, 1
      %p266 = scmp.eq.s32.totalorder %s144, 1
      %p267 = scmp.ne.s32.totalorder %s262, %s264
      %p268 = scmp.eq.s32.totalorder %s144, 0
      %p269 = por %p267, %p268
      %p270 = scmp.ne.s32.totalorder %s262, %s264
      %p271 = scmp.eq.s32.totalorder %s149, 1
      %p272 = por %p270, %p271
      %p273 = scmp.ne.s32.totalorder %s264, %s265
      %p274 = scmp.eq.s32.totalorder %s149, 0
      %p275 = por %p273, %p274
      %p276 = scmp.ne.s32.totalorder %s264, %s265
      %p277 = scmp.eq.s32.totalorder %s150, 1
      %p278 = por %p276, %p277
      %p280 = scmp.ne.s32.totalorder %s265, %s279
      %p281 = scmp.eq.s32.totalorder %s150, 0
      %p282 = por %p280, %p281
      %s284 = sadd.s32 %s283, 1
      %p287 = scmp.eq.s32.totalorder %s144, 1
      %p288 = scmp.ne.s32.totalorder %s283, %s285
      %p289 = scmp.eq.s32.totalorder %s144, 0
      %p290 = por %p288, %p289
      %p291 = scmp.ne.s32.totalorder %s283, %s285
      %p292 = scmp.eq.s32.totalorder %s149, 1
      %p293 = por %p291, %p292
      %p294 = scmp.ne.s32.totalorder %s285, %s286
      %p295 = scmp.eq.s32.totalorder %s149, 0
      %p296 = por %p294, %p295
      %p297 = scmp.ne.s32.totalorder %s285, %s286
      %p298 = scmp.eq.s32.totalorder %s150, 1
      %p299 = por %p297, %p298
      %p301 = scmp.ne.s32.totalorder %s286, %s300
      %p302 = scmp.eq.s32.totalorder %s150, 0
      %p303 = por %p301, %p302
      %s305 = sadd.s32 %s304, 1
      %p308 = scmp.eq.s32.totalorder %s144, 1
      %p309 = scmp.ne.s32.totalorder %s304, %s306
      %p310 = scmp.eq.s32.totalorder %s144, 0
      %p311 = por %p309, %p310
      %p312 = scmp.ne.s32.totalorder %s304, %s306
      %p313 = scmp.eq.s32.totalorder %s149, 1
      %p314 = por %p312, %p313
      %p315 = scmp.ne.s32.totalorder %s306, %s307
      %p316 = scmp.eq.s32.totalorder %s149, 0
      %p317 = por %p315, %p316
      %p318 = scmp.ne.s32.totalorder %s306, %s307
      %p319 = scmp.eq.s32.totalorder %s150, 1
      %p320 = por %p318, %p319
      %p322 = scmp.ne.s32.totalorder %s307, %s321
      %p323 = scmp.eq.s32.totalorder %s150, 0
      %p324 = por %p322, %p323
      %s326 = sadd.s32 %s325, 1
      %p329 = scmp.eq.s32.totalorder %s144, 1
      %p330 = scmp.ne.s32.totalorder %s325, %s327
      %p331 = scmp.eq.s32.totalorder %s144, 0
      %p332 = por %p330, %p331
      %p333 = scmp.ne.s32.totalorder %s325, %s327
      %p334 = scmp.eq.s32.totalorder %s149, 1
      %p335 = por %p333, %p334
      %p336 = scmp.ne.s32.totalorder %s327, %s328
      %p337 = scmp.eq.s32.totalorder %s149, 0
      %p338 = por %p336, %p337
      %p339 = scmp.ne.s32.totalorder %s327, %s328
      %p340 = scmp.eq.s32.totalorder %s150, 1
      %p341 = por %p339, %p340
      %p343 = scmp.ne.s32.totalorder %s328, %s342
      %p344 = scmp.eq.s32.totalorder %s150, 0
      %p345 = por %p343, %p344
      %s347 = sadd.s32 %s346, 1
      %p350 = scmp.eq.s32.totalorder %s144, 1
      %p351 = scmp.ne.s32.totalorder %s346, %s348
      %p352 = scmp.eq.s32.totalorder %s144, 0
      %p353 = por %p351, %p352
      %p354 = scmp.ne.s32.totalorder %s346, %s348
      %p355 = scmp.eq.s32.totalorder %s149, 1
      %p356 = por %p354, %p355
      %p357 = scmp.ne.s32.totalorder %s348, %s349
      %p358 = scmp.eq.s32.totalorder %s149, 0
      %p359 = por %p357, %p358
      %p360 = scmp.ne.s32.totalorder %s348, %s349
      %p361 = scmp.eq.s32.totalorder %s150, 1
      %p362 = por %p360, %p361
      %p364 = scmp.ne.s32.totalorder %s349, %s363
      %p365 = scmp.eq.s32.totalorder %s150, 0
      %p366 = por %p364, %p365
      %s368 = sadd.s32 %s367, 1
      %p371 = scmp.eq.s32.totalorder %s144, 1
      %p372 = scmp.ne.s32.totalorder %s367, %s369
      %p373 = scmp.eq.s32.totalorder %s144, 0
      %p374 = por %p372, %p373
      %p375 = scmp.ne.s32.totalorder %s367, %s369
      %p376 = scmp.eq.s32.totalorder %s149, 1
      %p377 = por %p375, %p376
      %p378 = scmp.ne.s32.totalorder %s369, %s370
      %p379 = scmp.eq.s32.totalorder %s149, 0
      %p380 = por %p378, %p379
      %p381 = scmp.ne.s32.totalorder %s369, %s370
      %p382 = scmp.eq.s32.totalorder %s150, 1
      %p383 = por %p381, %p382
      %p385 = scmp.ne.s32.totalorder %s370, %s384
      %p386 = scmp.eq.s32.totalorder %s150, 0
      %p387 = por %p385, %p386
      %s389 = sadd.s32 %s388, 1
      %p392 = scmp.eq.s32.totalorder %s144, 1
      %p393 = scmp.ne.s32.totalorder %s388, %s390
      %p394 = scmp.eq.s32.totalorder %s144, 0
      %p395 = por %p393, %p394
      %p396 = scmp.ne.s32.totalorder %s388, %s390
      %p397 = scmp.eq.s32.totalorder %s149, 1
      %p398 = por %p396, %p397
      %p399 = scmp.ne.s32.totalorder %s390, %s391
      %p400 = scmp.eq.s32.totalorder %s149, 0
      %p401 = por %p399, %p400
      %p402 = scmp.ne.s32.totalorder %s390, %s391
      %p403 = scmp.eq.s32.totalorder %s150, 1
      %p404 = por %p402, %p403
      %p406 = scmp.ne.s32.totalorder %s391, %s405
      %p407 = scmp.eq.s32.totalorder %s150, 0
      %p408 = por %p406, %p407
      %s410 = sadd.s32 %s409, 1
      %p413 = scmp.eq.s32.totalorder %s144, 1
      %p414 = scmp.ne.s32.totalorder %s409, %s411
      %p415 = scmp.eq.s32.totalorder %s144, 0
      %p416 = por %p414, %p415
      %p417 = scmp.ne.s32.totalorder %s409, %s411
      %p418 = scmp.eq.s32.totalorder %s149, 1
      %p419 = por %p417, %p418
      %p420 = scmp.ne.s32.totalorder %s411, %s412
      %p421 = scmp.eq.s32.totalorder %s149, 0
      %p422 = por %p420, %p421
      %p423 = scmp.ne.s32.totalorder %s411, %s412
      %p424 = scmp.eq.s32.totalorder %s150, 1
      %p425 = por %p423, %p424
      %p427 = scmp.ne.s32.totalorder %s412, %s426
      %p428 = scmp.eq.s32.totalorder %s150, 0
      %p429 = por %p427, %p428
      %s431 = sadd.s32 %s430, 1
      %p434 = scmp.eq.s32.totalorder %s144, 1
      %p435 = scmp.ne.s32.totalorder %s430, %s432
      %p436 = scmp.eq.s32.totalorder %s144, 0
      %p437 = por %p435, %p436
      %p438 = scmp.ne.s32.totalorder %s430, %s432
      %p439 = scmp.eq.s32.totalorder %s149, 1
      %p440 = por %p438, %p439
      %p441 = scmp.ne.s32.totalorder %s432, %s433
      %p442 = scmp.eq.s32.totalorder %s149, 0
      %p443 = por %p441, %p442
      %p444 = scmp.ne.s32.totalorder %s432, %s433
      %p445 = scmp.eq.s32.totalorder %s150, 1
      %p446 = por %p444, %p445
      %p448 = scmp.ne.s32.totalorder %s433, %s447
      %p449 = scmp.eq.s32.totalorder %s150, 0
      %p450 = por %p448, %p449
      %s452 = sadd.s32 %s451, 1
      %p455 = scmp.eq.s32.totalorder %s144, 1
      %p456 = scmp.ne.s32.totalorder %s451, %s453
      %p457 = scmp.eq.s32.totalorder %s144, 0
      %p458 = por %p456, %p457
      %p459 = scmp.ne.s32.totalorder %s451, %s453
      %p460 = scmp.eq.s32.totalorder %s149, 1
      %p461 = por %p459, %p460
      %p462 = scmp.ne.s32.totalorder %s453, %s454
      %p463 = scmp.eq.s32.totalorder %s149, 0
      %p464 = por %p462, %p463
      %p465 = scmp.ne.s32.totalorder %s453, %s454
      %p466 = scmp.eq.s32.totalorder %s150, 1
      %p467 = por %p465, %p466
      %p469 = scmp.ne.s32.totalorder %s454, %s468
      %p470 = scmp.eq.s32.totalorder %s150, 0
      %p471 = por %p469, %p470
      %s473 = sadd.s32 %s472, 1
      %p476 = scmp.eq.s32.totalorder %s144, 1
      %p477 = scmp.ne.s32.totalorder %s472, %s474
      %p478 = scmp.eq.s32.totalorder %s144, 0
      %p479 = por %p477, %p478
      %p480 = scmp.ne.s32.totalorder %s472, %s474
      %p481 = scmp.eq.s32.totalorder %s149, 1
      %p482 = por %p480, %p481
      %p483 = scmp.ne.s32.totalorder %s474, %s475
      %p484 = scmp.eq.s32.totalorder %s149, 0
      %p485 = por %p483, %p484
      %p486 = scmp.ne.s32.totalorder %s474, %s475
      %p487 = scmp.eq.s32.totalorder %s150, 1
      %p488 = por %p486, %p487
      %p490 = scmp.ne.s32.totalorder %s475, %s489
      %p491 = scmp.eq.s32.totalorder %s150, 0
      %p492 = por %p490, %p491
      %s494 = sadd.s32 %s493, 1
      %p497 = scmp.eq.s32.totalorder %s144, 1
      %p498 = scmp.ne.s32.totalorder %s493, %s495
      %p499 = scmp.eq.s32.totalorder %s144, 0
      %p500 = por %p498, %p499
      %p501 = scmp.ne.s32.totalorder %s493, %s495
      %p502 = scmp.eq.s32.totalorder %s149, 1
      %p503 = por %p501, %p502
      %p504 = scmp.ne.s32.totalorder %s495, %s496
      %p505 = scmp.eq.s32.totalorder %s149, 0
      %p506 = por %p504, %p505
      %p507 = scmp.ne.s32.totalorder %s495, %s496
      %p508 = scmp.eq.s32.totalorder %s150, 1
      %p509 = por %p507, %p508
      %p511 = scmp.ne.s32.totalorder %s496, %s510
      %p512 = scmp.eq.s32.totalorder %s150, 0
      %p513 = por %p511, %p512
      %s515 = sadd.s32 %s514, 1
      %p518 = scmp.eq.s32.totalorder %s144, 1
      %p519 = scmp.ne.s32.totalorder %s514, %s516
      %p520 = scmp.eq.s32.totalorder %s144, 0
      %p521 = por %p519, %p520
      %p522 = scmp.ne.s32.totalorder %s514, %s516
      %p523 = scmp.eq.s32.totalorder %s149, 1
      %p524 = por %p522, %p523
      %p525 = scmp.ne.s32.totalorder %s516, %s517
      %p526 = scmp.eq.s32.totalorder %s149, 0
      %p527 = por %p525, %p526
      %p528 = scmp.ne.s32.totalorder %s516, %s517
      %p529 = scmp.eq.s32.totalorder %s150, 1
      %p530 = por %p528, %p529
      %p532 = scmp.ne.s32.totalorder %s517, %s531
      %p533 = scmp.eq.s32.totalorder %s150, 0
      %p534 = por %p532, %p533
      %s536 = sadd.s32 %s535, 1
      %p539 = scmp.eq.s32.totalorder %s144, 1
      %p540 = scmp.ne.s32.totalorder %s535, %s537
      %p541 = scmp.eq.s32.totalorder %s144, 0
      %p542 = por %p540, %p541
      %p543 = scmp.ne.s32.totalorder %s535, %s537
      %p544 = scmp.eq.s32.totalorder %s149, 1
      %p545 = por %p543, %p544
      %p546 = scmp.ne.s32.totalorder %s537, %s538
      %p547 = scmp.eq.s32.totalorder %s149, 0
      %p548 = por %p546, %p547
      %p549 = scmp.ne.s32.totalorder %s537, %s538
      %p550 = scmp.eq.s32.totalorder %s150, 1
      %p551 = por %p549, %p550
      %p553 = scmp.ne.s32.totalorder %s538, %s552
      %p554 = scmp.eq.s32.totalorder %s150, 0
      %p555 = por %p553, %p554
      %s557 = sadd.s32 %s556, 1
      %p560 = scmp.eq.s32.totalorder %s144, 1
      %p561 = scmp.ne.s32.totalorder %s556, %s558
      %p562 = scmp.eq.s32.totalorder %s144, 0
      %p563 = por %p561, %p562
      %p564 = scmp.ne.s32.totalorder %s556, %s558
      %p565 = scmp.eq.s32.totalorder %s149, 1
      %p566 = por %p564, %p565
      %p567 = scmp.ne.s32.totalorder %s558, %s559
      %p568 = scmp.eq.s32.totalorder %s149, 0
      %p569 = por %p567, %p568
      %p570 = scmp.ne.s32.totalorder %s558, %s559
      %p571 = scmp.eq.s32.totalorder %s150, 1
      %p572 = por %p570, %p571
      %p574 = scmp.ne.s32.totalorder %s559, %s573
      %p575 = scmp.eq.s32.totalorder %s150, 0
      %p576 = por %p574, %p575
      %s578 = sadd.s32 %s577, 1
      %p581 = scmp.eq.s32.totalorder %s144, 1
      %p582 = scmp.ne.s32.totalorder %s577, %s579
      %p583 = scmp.eq.s32.totalorder %s144, 0
      %p584 = por %p582, %p583
      %p585 = scmp.ne.s32.totalorder %s577, %s579
      %p586 = scmp.eq.s32.totalorder %s149, 1
      %p587 = por %p585, %p586
      %p588 = scmp.ne.s32.totalorder %s579, %s580
      %p589 = scmp.eq.s32.totalorder %s149, 0
      %p590 = por %p588, %p589
      %p591 = scmp.ne.s32.totalorder %s579, %s580
      %p592 = scmp.eq.s32.totalorder %s150, 1
      %p593 = por %p591, %p592
      %p595 = scmp.ne.s32.totalorder %s580, %s594
      %p596 = scmp.eq.s32.totalorder %s150, 0
      %p597 = por %p595, %p596
      %s599 = sadd.s32 %s598, 1
      %p602 = scmp.eq.s32.totalorder %s144, 1
      %p603 = scmp.ne.s32.totalorder %s598, %s600
      %p604 = scmp.eq.s32.totalorder %s144, 0
      %p605 = por %p603, %p604
      %p606 = scmp.ne.s32.totalorder %s598, %s600
      %p607 = scmp.eq.s32.totalorder %s149, 1
      %p608 = por %p606, %p607
      %p609 = scmp.ne.s32.totalorder %s600, %s601
      %p610 = scmp.eq.s32.totalorder %s149, 0
      %p611 = por %p609, %p610
      %p612 = scmp.ne.s32.totalorder %s600, %s601
      %p613 = scmp.eq.s32.totalorder %s150, 1
      %p614 = por %p612, %p613
      %p616 = scmp.ne.s32.totalorder %s601, %s615
      %p617 = scmp.eq.s32.totalorder %s150, 0
      %p618 = por %p616, %p617
      %s620 = sadd.s32 %s619, 1
      %p623 = scmp.eq.s32.totalorder %s144, 1
      %p624 = scmp.ne.s32.totalorder %s619, %s621
      %p625 = scmp.eq.s32.totalorder %s144, 0
      %p626 = por %p624, %p625
      %p627 = scmp.ne.s32.totalorder %s619, %s621
      %p628 = scmp.eq.s32.totalorder %s149, 1
      %p629 = por %p627, %p628
      %p630 = scmp.ne.s32.totalorder %s621, %s622
      %p631 = scmp.eq.s32.totalorder %s149, 0
      %p632 = por %p630, %p631
      %p633 = scmp.ne.s32.totalorder %s621, %s622
      %p634 = scmp.eq.s32.totalorder %s150, 1
      %p635 = por %p633, %p634
      %p637 = scmp.ne.s32.totalorder %s622, %s636
      %p638 = scmp.eq.s32.totalorder %s150, 0
      %p639 = por %p637, %p638
      %s641 = sadd.s32 %s640, 1
      %p644 = scmp.eq.s32.totalorder %s144, 1
      %p645 = scmp.ne.s32.totalorder %s640, %s642
      %p646 = scmp.eq.s32.totalorder %s144, 0
      %p647 = por %p645, %p646
      %p648 = scmp.ne.s32.totalorder %s640, %s642
      %p649 = scmp.eq.s32.totalorder %s149, 1
      %p650 = por %p648, %p649
      %p651 = scmp.ne.s32.totalorder %s642, %s643
      %p652 = scmp.eq.s32.totalorder %s149, 0
      %p653 = por %p651, %p652
      %p654 = scmp.ne.s32.totalorder %s642, %s643
      %p655 = scmp.eq.s32.totalorder %s150, 1
      %p656 = por %p654, %p655
      %p658 = scmp.ne.s32.totalorder %s643, %s657
      %p659 = scmp.eq.s32.totalorder %s150, 0
      %p660 = por %p658, %p659
      %s662 = sadd.s32 %s661, 1
      %p665 = scmp.eq.s32.totalorder %s144, 1
      %p666 = scmp.ne.s32.totalorder %s661, %s663
      %p667 = scmp.eq.s32.totalorder %s144, 0
      %p668 = por %p666, %p667
      %p669 = scmp.ne.s32.totalorder %s661, %s663
      %p670 = scmp.eq.s32.totalorder %s149, 1
      %p671 = por %p669, %p670
      %p672 = scmp.ne.s32.totalorder %s663, %s664
      %p673 = scmp.eq.s32.totalorder %s149, 0
      %p674 = por %p672, %p673
      %p675 = scmp.ne.s32.totalorder %s663, %s664
      %p676 = scmp.eq.s32.totalorder %s150, 1
      %p677 = por %p675, %p676
      %p679 = scmp.ne.s32.totalorder %s664, %s678
      %p680 = scmp.eq.s32.totalorder %s150, 0
      %p681 = por %p679, %p680
      %s683 = sadd.s32 %s682, 1
      %p686 = scmp.eq.s32.totalorder %s144, 1
      %p687 = scmp.ne.s32.totalorder %s682, %s684
      %p688 = scmp.eq.s32.totalorder %s144, 0
      %p689 = por %p687, %p688
      %p690 = scmp.ne.s32.totalorder %s682, %s684
      %p691 = scmp.eq.s32.totalorder %s149, 1
      %p692 = por %p690, %p691
      %p693 = scmp.ne.s32.totalorder %s684, %s685
      %p694 = scmp.eq.s32.totalorder %s149, 0
      %p695 = por %p693, %p694
      %p696 = scmp.ne.s32.totalorder %s684, %s685
      %p697 = scmp.eq.s32.totalorder %s150, 1
      %p698 = por %p696, %p697
      %p700 = scmp.ne.s32.totalorder %s685, %s699
      %p701 = scmp.eq.s32.totalorder %s150, 0
      %p702 = por %p700, %p701
      %s704 = sadd.s32 %s703, 1
      %p707 = scmp.eq.s32.totalorder %s144, 1
      %p708 = scmp.ne.s32.totalorder %s703, %s705
      %p709 = scmp.eq.s32.totalorder %s144, 0
      %p710 = por %p708, %p709
      %p711 = scmp.ne.s32.totalorder %s703, %s705
      %p712 = scmp.eq.s32.totalorder %s149, 1
      %p713 = por %p711, %p712
      %p714 = scmp.ne.s32.totalorder %s705, %s706
      %p715 = scmp.eq.s32.totalorder %s149, 0
      %p716 = por %p714, %p715
      %p717 = scmp.ne.s32.totalorder %s705, %s706
      %p718 = scmp.eq.s32.totalorder %s150, 1
      %p719 = por %p717, %p718
      %p721 = scmp.ne.s32.totalorder %s706, %s720
      %p722 = scmp.eq.s32.totalorder %s150, 0
      %p723 = por %p721, %p722
      %s725 = sadd.s32 %s724, 1
      %p728 = scmp.eq.s32.totalorder %s144, 1
      %p729 = scmp.ne.s32.totalorder %s724, %s726
      %p730 = scmp.eq.s32.totalorder %s144, 0
      %p731 = por %p729, %p730
      %p732 = scmp.ne.s32.totalorder %s724, %s726
      %p733 = scmp.eq.s32.totalorder %s149, 1
      %p734 = por %p732, %p733
      %p735 = scmp.ne.s32.totalorder %s726, %s727
      %p736 = scmp.eq.s32.totalorder %s149, 0
      %p737 = por %p735, %p736
      %p738 = scmp.ne.s32.totalorder %s726, %s727
      %p739 = scmp.eq.s32.totalorder %s150, 1
      %p740 = por %p738, %p739
      %p742 = scmp.ne.s32.totalorder %s727, %s741
      %p743 = scmp.eq.s32.totalorder %s150, 0
      %p744 = por %p742, %p743
      %s746 = sadd.s32 %s745, 1
      %p749 = scmp.eq.s32.totalorder %s144, 1
      %p750 = scmp.ne.s32.totalorder %s745, %s747
      %p751 = scmp.eq.s32.totalorder %s144, 0
      %p752 = por %p750, %p751
      %p753 = scmp.ne.s32.totalorder %s745, %s747
      %p754 = scmp.eq.s32.totalorder %s149, 1
      %p755 = por %p753, %p754
      %p756 = scmp.ne.s32.totalorder %s747, %s748
      %p757 = scmp.eq.s32.totalorder %s149, 0
      %p758 = por %p756, %p757
      %p759 = scmp.ne.s32.totalorder %s747, %s748
      %p760 = scmp.eq.s32.totalorder %s150, 1
      %p761 = por %p759, %p760
      %p763 = scmp.ne.s32.totalorder %s748, %s762
      %p764 = scmp.eq.s32.totalorder %s150, 0
      %p765 = por %p763, %p764
      %s767 = sadd.s32 %s766, 1
      %p770 = scmp.eq.s32.totalorder %s144, 1
      %p771 = scmp.ne.s32.totalorder %s766, %s768
      %p772 = scmp.eq.s32.totalorder %s144, 0
      %p773 = por %p771, %p772
      %p774 = scmp.ne.s32.totalorder %s766, %s768
      %p775 = scmp.eq.s32.totalorder %s149, 1
      %p776 = por %p774, %p775
      %p777 = scmp.ne.s32.totalorder %s768, %s769
      %p778 = scmp.eq.s32.totalorder %s149, 0
      %p779 = por %p777, %p778
      %p780 = scmp.ne.s32.totalorder %s768, %s769
      %p781 = scmp.eq.s32.totalorder %s150, 1
      %p782 = por %p780, %p781
      %p784 = scmp.ne.s32.totalorder %s769, %s783
      %p785 = scmp.eq.s32.totalorder %s150, 0
      %p786 = por %p784, %p785
      %s788 = sadd.s32 %s787, 1
      %p791 = scmp.eq.s32.totalorder %s144, 1
      %p792 = scmp.ne.s32.totalorder %s787, %s789
      %p793 = scmp.eq.s32.totalorder %s144, 0
      %p794 = por %p792, %p793
      %p795 = scmp.ne.s32.totalorder %s787, %s789
      %p796 = scmp.eq.s32.totalorder %s149, 1
      %p797 = por %p795, %p796
      %p798 = scmp.ne.s32.totalorder %s789, %s790
      %p799 = scmp.eq.s32.totalorder %s149, 0
      %p800 = por %p798, %p799
      %p801 = scmp.ne.s32.totalorder %s789, %s790
      %p802 = scmp.eq.s32.totalorder %s150, 1
      %p803 = por %p801, %p802
      %p805 = scmp.ne.s32.totalorder %s790, %s804
      %p806 = scmp.eq.s32.totalorder %s150, 0
      %p807 = por %p805, %p806
      %s809 = sadd.s32 %s808, 1
      %p812 = scmp.eq.s32.totalorder %s144, 1
      %p813 = scmp.ne.s32.totalorder %s808, %s810
      %p814 = scmp.eq.s32.totalorder %s144, 0
      %p815 = por %p813, %p814
      %p816 = scmp.ne.s32.totalorder %s808, %s810
      %p817 = scmp.eq.s32.totalorder %s149, 1
      %p818 = por %p816, %p817
      %p819 = scmp.ne.s32.totalorder %s810, %s811
      %p820 = scmp.eq.s32.totalorder %s149, 0
      %p821 = por %p819, %p820
      %p822 = scmp.ne.s32.totalorder %s810, %s811
      %p823 = scmp.eq.s32.totalorder %s150, 1
      %p824 = por %p822, %p823
      %p826 = scmp.ne.s32.totalorder %s811, %s825
      %p827 = scmp.eq.s32.totalorder %s150, 0
      %p828 = por %p826, %p827
      %s830 = sadd.s32 %s829, 1
      %p833 = scmp.eq.s32.totalorder %s144, 1
      %p834 = scmp.ne.s32.totalorder %s829, %s831
      %p835 = scmp.eq.s32.totalorder %s144, 0
      %p836 = por %p834, %p835
      %p837 = scmp.ne.s32.totalorder %s829, %s831
      %p838 = scmp.eq.s32.totalorder %s149, 1
      %p839 = por %p837, %p838
      %p840 = scmp.ne.s32.totalorder %s831, %s832
      %p841 = scmp.eq.s32.totalorder %s149, 0
      %p842 = por %p840, %p841
      %p843 = scmp.ne.s32.totalorder %s831, %s832
      %p844 = scmp.eq.s32.totalorder %s150, 1
      %p845 = por %p843, %p844
      %p847 = scmp.ne.s32.totalorder %s832, %s846
      %p848 = scmp.eq.s32.totalorder %s150, 0
      %p849 = por %p847, %p848
      %s851 = sadd.s32 %s850, 1
      %p854 = scmp.eq.s32.totalorder %s144, 1
      %p855 = scmp.ne.s32.totalorder %s850, %s852
      %p856 = scmp.eq.s32.totalorder %s144, 0
      %p857 = por %p855, %p856
      %p858 = scmp.ne.s32.totalorder %s850, %s852
      %p859 = scmp.eq.s32.totalorder %s149, 1
      %p860 = por %p858, %p859
      %p861 = scmp.ne.s32.totalorder %s852, %s853
      %p862 = scmp.eq.s32.totalorder %s149, 0
      %p863 = por %p861, %p862
      %p864 = scmp.ne.s32.totalorder %s852, %s853
      %p865 = scmp.eq.s32.totalorder %s150, 1
      %p866 = por %p864, %p865
      %p868 = scmp.ne.s32.totalorder %s853, %s867
      %p869 = scmp.eq.s32.totalorder %s150, 0
      %p870 = por %p868, %p869
      %s872 = sadd.s32 %s871, 1
      %p875 = scmp.eq.s32.totalorder %s144, 1
      %p876 = scmp.ne.s32.totalorder %s871, %s873
      %p877 = scmp.eq.s32.totalorder %s144, 0
      %p878 = por %p876, %p877
      %p879 = scmp.ne.s32.totalorder %s871, %s873
      %p880 = scmp.eq.s32.totalorder %s149, 1
      %p881 = por %p879, %p880
      %p882 = scmp.ne.s32.totalorder %s873, %s874
      %p883 = scmp.eq.s32.totalorder %s149, 0
      %p884 = por %p882, %p883
      %p885 = scmp.ne.s32.totalorder %s873, %s874
      %p886 = scmp.eq.s32.totalorder %s150, 1
      %p887 = por %p885, %p886
      %p889 = scmp.ne.s32.totalorder %s874, %s888
      %p890 = scmp.eq.s32.totalorder %s150, 0
      %p891 = por %p889, %p890
      %s893 = sadd.s32 %s892, 1
      %p896 = scmp.eq.s32.totalorder %s144, 1
      %p897 = scmp.ne.s32.totalorder %s892, %s894
      %p898 = scmp.eq.s32.totalorder %s144, 0
      %p899 = por %p897, %p898
      %p900 = scmp.ne.s32.totalorder %s892, %s894
      %p901 = scmp.eq.s32.totalorder %s149, 1
      %p902 = por %p900, %p901
      %p903 = scmp.ne.s32.totalorder %s894, %s895
      %p904 = scmp.eq.s32.totalorder %s149, 0
      %p905 = por %p903, %p904
      %p906 = scmp.ne.s32.totalorder %s894, %s895
      %p907 = scmp.eq.s32.totalorder %s150, 1
      %p908 = por %p906, %p907
      %p910 = scmp.ne.s32.totalorder %s895, %s909
      %p911 = scmp.eq.s32.totalorder %s150, 0
      %p912 = por %p910, %p911
      %s914 = sadd.s32 %s913, 1
      %p917 = scmp.eq.s32.totalorder %s144, 1
      %p918 = scmp.ne.s32.totalorder %s913, %s915
      %p919 = scmp.eq.s32.totalorder %s144, 0
      %p920 = por %p918, %p919
      %p921 = scmp.ne.s32.totalorder %s913, %s915
      %p922 = scmp.eq.s32.totalorder %s149, 1
      %p923 = por %p921, %p922
      %p924 = scmp.ne.s32.totalorder %s915, %s916
      %p925 = scmp.eq.s32.totalorder %s149, 0
      %p926 = por %p924, %p925
      %p927 = scmp.ne.s32.totalorder %s915, %s916
      %p928 = scmp.eq.s32.totalorder %s150, 1
      %p929 = por %p927, %p928
      %p931 = scmp.ne.s32.totalorder %s916, %s930
      %p932 = scmp.eq.s32.totalorder %s150, 0
      %p933 = por %p931, %p932
      %s935 = sadd.s32 %s934, 1
      %p938 = scmp.eq.s32.totalorder %s144, 1
      %p939 = scmp.ne.s32.totalorder %s934, %s936
      %p940 = scmp.eq.s32.totalorder %s144, 0
      %p941 = por %p939, %p940
      %p942 = scmp.ne.s32.totalorder %s934, %s936
      %p943 = scmp.eq.s32.totalorder %s149, 1
      %p944 = por %p942, %p943
      %p945 = scmp.ne.s32.totalorder %s936, %s937
      %p946 = scmp.eq.s32.totalorder %s149, 0
      %p947 = por %p945, %p946
      %p948 = scmp.ne.s32.totalorder %s936, %s937
      %p949 = scmp.eq.s32.totalorder %s150, 1
      %p950 = por %p948, %p949
      %p952 = scmp.ne.s32.totalorder %s937, %s951
      %p953 = scmp.eq.s32.totalorder %s150, 0
      %p954 = por %p952, %p953
      %s956 = sadd.s32 %s955, 1
      %p959 = scmp.eq.s32.totalorder %s144, 1
      %p960 = scmp.ne.s32.totalorder %s955, %s957
      %p961 = scmp.eq.s32.totalorder %s144, 0
      %p962 = por %p960, %p961
      %p963 = scmp.ne.s32.totalorder %s955, %s957
      %p964 = scmp.eq.s32.totalorder %s149, 1
      %p965 = por %p963, %p964
      %p966 = scmp.ne.s32.totalorder %s957, %s958
      %p967 = scmp.eq.s32.totalorder %s149, 0
      %p968 = por %p966, %p967
      %p969 = scmp.ne.s32.totalorder %s957, %s958
      %p970 = scmp.eq.s32.totalorder %s150, 1
      %p971 = por %p969, %p970
      %p973 = scmp.ne.s32.totalorder %s958, %s972
      %p974 = scmp.eq.s32.totalorder %s150, 0
      %p975 = por %p973, %p974
      %s977 = sadd.s32 %s976, 1
      %p980 = scmp.eq.s32.totalorder %s144, 1
      %p981 = scmp.ne.s32.totalorder %s976, %s978
      %p982 = scmp.eq.s32.totalorder %s144, 0
      %p983 = por %p981, %p982
      %p984 = scmp.ne.s32.totalorder %s976, %s978
      %p985 = scmp.eq.s32.totalorder %s149, 1
      %p986 = por %p984, %p985
      %p987 = scmp.ne.s32.totalorder %s978, %s979
      %p988 = scmp.eq.s32.totalorder %s149, 0
      %p989 = por %p987, %p988
      %p990 = scmp.ne.s32.totalorder %s978, %s979
      %p991 = scmp.eq.s32.totalorder %s150, 1
      %p992 = por %p990, %p991
      %p994 = scmp.ne.s32.totalorder %s979, %s993
      %p995 = scmp.eq.s32.totalorder %s150, 0
      %p996 = por %p994, %p995
      %s998 = sadd.s32 %s997, 1
      %p1001 = scmp.eq.s32.totalorder %s144, 1
      %p1002 = scmp.ne.s32.totalorder %s997, %s999
      %p1003 = scmp.eq.s32.totalorder %s144, 0
      %p1004 = por %p1002, %p1003
      %p1005 = scmp.ne.s32.totalorder %s997, %s999
      %p1006 = scmp.eq.s32.totalorder %s149, 1
      %p1007 = por %p1005, %p1006
      %p1008 = scmp.ne.s32.totalorder %s999, %s1000
      %p1009 = scmp.eq.s32.totalorder %s149, 0
      %p1010 = por %p1008, %p1009
      %p1011 = scmp.ne.s32.totalorder %s999, %s1000
      %p1012 = scmp.eq.s32.totalorder %s150, 1
      %p1013 = por %p1011, %p1012
      %p1015 = scmp.ne.s32.totalorder %s1000, %s1014
      %p1016 = scmp.eq.s32.totalorder %s150, 0
      %p1017 = por %p1015, %p1016
      %s1019 = sadd.s32 %s1018, 1
      %p1022 = scmp.eq.s32.totalorder %s144, 1
      %p1023 = scmp.ne.s32.totalorder %s1018, %s1020
      %p1024 = scmp.eq.s32.totalorder %s144, 0
      %p1025 = por %p1023, %p1024
      %p1026 = scmp.ne.s32.totalorder %s1018, %s1020
      %p1027 = scmp.eq.s32.totalorder %s149, 1
      %p1028 = por %p1026, %p1027
      %p1029 = scmp.ne.s32.totalorder %s1020, %s1021
      %p1030 = scmp.eq.s32.totalorder %s149, 0
      %p1031 = por %p1029, %p1030
      %p1032 = scmp.ne.s32.totalorder %s1020, %s1021
      %p1033 = scmp.eq.s32.totalorder %s150, 1
      %p1034 = por %p1032, %p1033
      %p1036 = scmp.ne.s32.totalorder %s1021, %s1035
      %p1037 = scmp.eq.s32.totalorder %s150, 0
      %p1038 = por %p1036, %p1037
      %s1040 = sadd.s32 %s1039, 1
      %p1043 = scmp.eq.s32.totalorder %s144, 1
      %p1044 = scmp.ne.s32.totalorder %s1039, %s1041
      %p1045 = scmp.eq.s32.totalorder %s144, 0
      %p1046 = por %p1044, %p1045
      %p1047 = scmp.ne.s32.totalorder %s1039, %s1041
      %p1048 = scmp.eq.s32.totalorder %s149, 1
      %p1049 = por %p1047, %p1048
      %p1050 = scmp.ne.s32.totalorder %s1041, %s1042
      %p1051 = scmp.eq.s32.totalorder %s149, 0
      %p1052 = por %p1050, %p1051
      %p1053 = scmp.ne.s32.totalorder %s1041, %s1042
      %p1054 = scmp.eq.s32.totalorder %s150, 1
      %p1055 = por %p1053, %p1054
      %p1057 = scmp.ne.s32.totalorder %s1042, %s1056
      %p1058 = scmp.eq.s32.totalorder %s150, 0
      %p1059 = por %p1057, %p1058
      %s1061 = sadd.s32 %s1060, 1
      %p1064 = scmp.eq.s32.totalorder %s144, 1
      %p1065 = scmp.ne.s32.totalorder %s1060, %s1062
      %p1066 = scmp.eq.s32.totalorder %s144, 0
      %p1067 = por %p1065, %p1066
      %p1068 = scmp.ne.s32.totalorder %s1060, %s1062
      %p1069 = scmp.eq.s32.totalorder %s149, 1
      %p1070 = por %p1068, %p1069
      %p1071 = scmp.ne.s32.totalorder %s1062, %s1063
      %p1072 = scmp.eq.s32.totalorder %s149, 0
      %p1073 = por %p1071, %p1072
      %p1074 = scmp.ne.s32.totalorder %s1062, %s1063
      %p1075 = scmp.eq.s32.totalorder %s150, 1
      %p1076 = por %p1074, %p1075
      %p1078 = scmp.ne.s32.totalorder %s1063, %s1077
      %p1079 = scmp.eq.s32.totalorder %s150, 0
      %p1080 = por %p1078, %p1079
      %s1082 = sadd.s32 %s1081, 1
      %p1085 = scmp.eq.s32.totalorder %s144, 1
      %p1086 = scmp.ne.s32.totalorder %s1081, %s1083
      %p1087 = scmp.eq.s32.totalorder %s144, 0
      %p1088 = por %p1086, %p1087
      %p1089 = scmp.ne.s32.totalorder %s1081, %s1083
      %p1090 = scmp.eq.s32.totalorder %s149, 1
      %p1091 = por %p1089, %p1090
      %p1092 = scmp.ne.s32.totalorder %s1083, %s1084
      %p1093 = scmp.eq.s32.totalorder %s149, 0
      %p1094 = por %p1092, %p1093
      %p1095 = scmp.ne.s32.totalorder %s1083, %s1084
      %p1096 = scmp.eq.s32.totalorder %s150, 1
      %p1097 = por %p1095, %p1096
      %p1099 = scmp.ne.s32.totalorder %s1084, %s1098
      %p1100 = scmp.eq.s32.totalorder %s150, 0
      %p1101 = por %p1099, %p1100
      %s1103 = sadd.s32 %s1102, 1
      %p1106 = scmp.eq.s32.totalorder %s144, 1
      %p1107 = scmp.ne.s32.totalorder %s1102, %s1104
      %p1108 = scmp.eq.s32.totalorder %s144, 0
      %p1109 = por %p1107, %p1108
      %p1110 = scmp.ne.s32.totalorder %s1102, %s1104
      %p1111 = scmp.eq.s32.totalorder %s149, 1
      %p1112 = por %p1110, %p1111
      %p1113 = scmp.ne.s32.totalorder %s1104, %s1105
      %p1114 = scmp.eq.s32.totalorder %s149, 0
      %p1115 = por %p1113, %p1114
      %p1116 = scmp.ne.s32.totalorder %s1104, %s1105
      %p1117 = scmp.eq.s32.totalorder %s150, 1
      %p1118 = por %p1116, %p1117
      %p1120 = scmp.ne.s32.totalorder %s1105, %s1119
      %p1121 = scmp.eq.s32.totalorder %s150, 0
      %p1122 = por %p1120, %p1121
      %s1124 = sadd.s32 %s1123, 1
      %p1127 = scmp.eq.s32.totalorder %s144, 1
      %p1128 = scmp.ne.s32.totalorder %s1123, %s1125
      %p1129 = scmp.eq.s32.totalorder %s144, 0
      %p1130 = por %p1128, %p1129
      %p1131 = scmp.ne.s32.totalorder %s1123, %s1125
      %p1132 = scmp.eq.s32.totalorder %s149, 1
      %p1133 = por %p1131, %p1132
      %p1134 = scmp.ne.s32.totalorder %s1125, %s1126
      %p1135 = scmp.eq.s32.totalorder %s149, 0
      %p1136 = por %p1134, %p1135
      %p1137 = scmp.ne.s32.totalorder %s1125, %s1126
      %p1138 = scmp.eq.s32.totalorder %s150, 1
      %p1139 = por %p1137, %p1138
      %p1141 = scmp.ne.s32.totalorder %s1126, %s1140
      %p1142 = scmp.eq.s32.totalorder %s150, 0
      %p1143 = por %p1141, %p1142
      %s1145 = sadd.s32 %s1144, 1
      %p1148 = scmp.eq.s32.totalorder %s144, 1
      %p1149 = scmp.ne.s32.totalorder %s1144, %s1146
      %p1150 = scmp.eq.s32.totalorder %s144, 0
      %p1151 = por %p1149, %p1150
      %p1152 = scmp.ne.s32.totalorder %s1144, %s1146
      %p1153 = scmp.eq.s32.totalorder %s149, 1
      %p1154 = por %p1152, %p1153
      %p1155 = scmp.ne.s32.totalorder %s1146, %s1147
      %p1156 = scmp.eq.s32.totalorder %s149, 0
      %p1157 = por %p1155, %p1156
      %p1158 = scmp.ne.s32.totalorder %s1146, %s1147
      %p1159 = scmp.eq.s32.totalorder %s150, 1
      %p1160 = por %p1158, %p1159
      %p1162 = scmp.ne.s32.totalorder %s1147, %s1161
      %p1163 = scmp.eq.s32.totalorder %s150, 0
      %p1164 = por %p1162, %p1163
      %s1166 = sadd.s32 %s1165, 1
      %p1169 = scmp.eq.s32.totalorder %s144, 1
      %p1170 = scmp.ne.s32.totalorder %s1165, %s1167
      %p1171 = scmp.eq.s32.totalorder %s144, 0
      %p1172 = por %p1170, %p1171
      %p1173 = scmp.ne.s32.totalorder %s1165, %s1167
      %p1174 = scmp.eq.s32.totalorder %s149, 1
      %p1175 = por %p1173, %p1174
      %p1176 = scmp.ne.s32.totalorder %s1167, %s1168
      %p1177 = scmp.eq.s32.totalorder %s149, 0
      %p1178 = por %p1176, %p1177
      %p1179 = scmp.ne.s32.totalorder %s1167, %s1168
      %p1180 = scmp.eq.s32.totalorder %s150, 1
      %p1181 = por %p1179, %p1180
      %p1183 = scmp.ne.s32.totalorder %s1168, %s1182
      %p1184 = scmp.eq.s32.totalorder %s150, 0
      %p1185 = por %p1183, %p1184
      %s1187 = sadd.s32 %s1186, 1
      %p1190 = scmp.eq.s32.totalorder %s144, 1
      %p1191 = scmp.ne.s32.totalorder %s1186, %s1188
      %p1192 = scmp.eq.s32.totalorder %s144, 0
      %p1193 = por %p1191, %p1192
      %p1194 = scmp.ne.s32.totalorder %s1186, %s1188
      %p1195 = scmp.eq.s32.totalorder %s149, 1
      %p1196 = por %p1194, %p1195
      %p1197 = scmp.ne.s32.totalorder %s1188, %s1189
      %p1198 = scmp.eq.s32.totalorder %s149, 0
      %p1199 = por %p1197, %p1198
      %p1200 = scmp.ne.s32.totalorder %s1188, %s1189
      %p1201 = scmp.eq.s32.totalorder %s150, 1
      %p1202 = por %p1200, %p1201
      %p1204 = scmp.ne.s32.totalorder %s1189, %s1203
      %p1205 = scmp.eq.s32.totalorder %s150, 0
      %p1206 = por %p1204, %p1205
      %s1208 = sadd.s32 %s1207, 1
      %p1211 = scmp.eq.s32.totalorder %s144, 1
      %p1212 = scmp.ne.s32.totalorder %s1207, %s1209
      %p1213 = scmp.eq.s32.totalorder %s144, 0
      %p1214 = por %p1212, %p1213
      %p1215 = scmp.ne.s32.totalorder %s1207, %s1209
      %p1216 = scmp.eq.s32.totalorder %s149, 1
      %p1217 = por %p1215, %p1216
      %p1218 = scmp.ne.s32.totalorder %s1209, %s1210
      %p1219 = scmp.eq.s32.totalorder %s149, 0
      %p1220 = por %p1218, %p1219
      %p1221 = scmp.ne.s32.totalorder %s1209, %s1210
      %p1222 = scmp.eq.s32.totalorder %s150, 1
      %p1223 = por %p1221, %p1222
      %p1225 = scmp.ne.s32.totalorder %s1210, %s1224
      %p1226 = scmp.eq.s32.totalorder %s150, 0
      %p1227 = por %p1225, %p1226
      %s1229 = sadd.s32 %s1228, 1
      %p1232 = scmp.eq.s32.totalorder %s144, 1
      %p1233 = scmp.ne.s32.totalorder %s1228, %s1230
      %p1234 = scmp.eq.s32.totalorder %s144, 0
      %p1235 = por %p1233, %p1234
      %p1236 = scmp.ne.s32.totalorder %s1228, %s1230
      %p1237 = scmp.eq.s32.totalorder %s149, 1
      %p1238 = por %p1236, %p1237
      %p1239 = scmp.ne.s32.totalorder %s1230, %s1231
      %p1240 = scmp.eq.s32.totalorder %s149, 0
      %p1241 = por %p1239, %p1240
      %p1242 = scmp.ne.s32.totalorder %s1230, %s1231
      %p1243 = scmp.eq.s32.totalorder %s150, 1
      %p1244 = por %p1242, %p1243
      %p1246 = scmp.ne.s32.totalorder %s1231, %s1245
      %p1247 = scmp.eq.s32.totalorder %s150, 0
      %p1248 = por %p1246, %p1247
      %s1250 = sadd.s32 %s1249, 1
      %p1253 = scmp.eq.s32.totalorder %s144, 1
      %p1254 = scmp.ne.s32.totalorder %s1249, %s1251
      %p1255 = scmp.eq.s32.totalorder %s144, 0
      %p1256 = por %p1254, %p1255
      %p1257 = scmp.ne.s32.totalorder %s1249, %s1251
      %p1258 = scmp.eq.s32.totalorder %s149, 1
      %p1259 = por %p1257, %p1258
      %p1260 = scmp.ne.s32.totalorder %s1251, %s1252
      %p1261 = scmp.eq.s32.totalorder %s149, 0
      %p1262 = por %p1260, %p1261
      %p1263 = scmp.ne.s32.totalorder %s1251, %s1252
      %p1264 = scmp.eq.s32.totalorder %s150, 1
      %p1265 = por %p1263, %p1264
      %p1267 = scmp.ne.s32.totalorder %s1252, %s1266
      %p1268 = scmp.eq.s32.totalorder %s150, 0
      %p1269 = por %p1267, %p1268
      %s1271 = sadd.s32 %s1270, 1
      %p1274 = scmp.eq.s32.totalorder %s144, 1
      %p1275 = scmp.ne.s32.totalorder %s1270, %s1272
      %p1276 = scmp.eq.s32.totalorder %s144, 0
      %p1277 = por %p1275, %p1276
      %p1278 = scmp.ne.s32.totalorder %s1270, %s1272
      %p1279 = scmp.eq.s32.totalorder %s149, 1
      %p1280 = por %p1278, %p1279
      %p1281 = scmp.ne.s32.totalorder %s1272, %s1273
      %p1282 = scmp.eq.s32.totalorder %s149, 0
      %p1283 = por %p1281, %p1282
      %p1284 = scmp.ne.s32.totalorder %s1272, %s1273
      %p1285 = scmp.eq.s32.totalorder %s150, 1
      %p1286 = por %p1284, %p1285
      %p1288 = scmp.ne.s32.totalorder %s1273, %s1287
      %p1289 = scmp.eq.s32.totalorder %s150, 0
      %p1290 = por %p1288, %p1289
      %s1292 = sadd.s32 %s1291, 1
      %p1295 = scmp.eq.s32.totalorder %s144, 1
      %p1296 = scmp.ne.s32.totalorder %s1291, %s1293
      %p1297 = scmp.eq.s32.totalorder %s144, 0
      %p1298 = por %p1296, %p1297
      %p1299 = scmp.ne.s32.totalorder %s1291, %s1293
      %p1300 = scmp.eq.s32.totalorder %s149, 1
      %p1301 = por %p1299, %p1300
      %p1302 = scmp.ne.s32.totalorder %s1293, %s1294
      %p1303 = scmp.eq.s32.totalorder %s149, 0
      %p1304 = por %p1302, %p1303
      %p1305 = scmp.ne.s32.totalorder %s1293, %s1294
      %p1306 = scmp.eq.s32.totalorder %s150, 1
      %p1307 = por %p1305, %p1306
      %p1309 = scmp.ne.s32.totalorder %s1294, %s1308
      %p1310 = scmp.eq.s32.totalorder %s150, 0
      %p1311 = por %p1309, %p1310
      %s1313 = sadd.s32 %s1312, 1
      %p1316 = scmp.eq.s32.totalorder %s144, 1
      %p1317 = scmp.ne.s32.totalorder %s1312, %s1314
      %p1318 = scmp.eq.s32.totalorder %s144, 0
      %p1319 = por %p1317, %p1318
      %p1320 = scmp.ne.s32.totalorder %s1312, %s1314
      %p1321 = scmp.eq.s32.totalorder %s149, 1
      %p1322 = por %p1320, %p1321
      %p1323 = scmp.ne.s32.totalorder %s1314, %s1315
      %p1324 = scmp.eq.s32.totalorder %s149, 0
      %p1325 = por %p1323, %p1324
      %p1326 = scmp.ne.s32.totalorder %s1314, %s1315
      %p1327 = scmp.eq.s32.totalorder %s150, 1
      %p1328 = por %p1326, %p1327
      %p1330 = scmp.ne.s32.totalorder %s1315, %s1329
      %p1331 = scmp.eq.s32.totalorder %s150, 0
      %p1332 = por %p1330, %p1331
      %s1334 = sadd.s32 %s1333, 1
      %p1337 = scmp.eq.s32.totalorder %s144, 1
      %p1338 = scmp.ne.s32.totalorder %s1333, %s1335
      %p1339 = scmp.eq.s32.totalorder %s144, 0
      %p1340 = por %p1338, %p1339
      %p1341 = scmp.ne.s32.totalorder %s1333, %s1335
      %p1342 = scmp.eq.s32.totalorder %s149, 1
      %p1343 = por %p1341, %p1342
      %p1344 = scmp.ne.s32.totalorder %s1335, %s1336
      %p1345 = scmp.eq.s32.totalorder %s149, 0
      %p1346 = por %p1344, %p1345
      %p1347 = scmp.ne.s32.totalorder %s1335, %s1336
      %p1348 = scmp.eq.s32.totalorder %s150, 1
      %p1349 = por %p1347, %p1348
      %p1351 = scmp.ne.s32.totalorder %s1336, %s1350
      %p1352 = scmp.eq.s32.totalorder %s150, 0
      %p1353 = por %p1351, %p1352
      %s1355 = sadd.s32 %s1354, 1
      %p1358 = scmp.eq.s32.totalorder %s144, 1
      %p1359 = scmp.ne.s32.totalorder %s1354, %s1356
      %p1360 = scmp.eq.s32.totalorder %s144, 0
      %p1361 = por %p1359, %p1360
      %p1362 = scmp.ne.s32.totalorder %s1354, %s1356
      %p1363 = scmp.eq.s32.totalorder %s149, 1
      %p1364 = por %p1362, %p1363
      %p1365 = scmp.ne.s32.totalorder %s1356, %s1357
      %p1366 = scmp.eq.s32.totalorder %s149, 0
      %p1367 = por %p1365, %p1366
      %p1368 = scmp.ne.s32.totalorder %s1356, %s1357
      %p1369 = scmp.eq.s32.totalorder %s150, 1
      %p1370 = por %p1368, %p1369
      %p1372 = scmp.ne.s32.totalorder %s1357, %s1371
      %p1373 = scmp.eq.s32.totalorder %s150, 0
      %p1374 = por %p1372, %p1373
      %s1376 = sadd.s32 %s1375, 1
      %p1379 = scmp.eq.s32.totalorder %s144, 1
      %p1380 = scmp.ne.s32.totalorder %s1375, %s1377
      %p1381 = scmp.eq.s32.totalorder %s144, 0
      %p1382 = por %p1380, %p1381
      %p1383 = scmp.ne.s32.totalorder %s1375, %s1377
      %p1384 = scmp.eq.s32.totalorder %s149, 1
      %p1385 = por %p1383, %p1384
      %p1386 = scmp.ne.s32.totalorder %s1377, %s1378
      %p1387 = scmp.eq.s32.totalorder %s149, 0
      %p1388 = por %p1386, %p1387
      %p1389 = scmp.ne.s32.totalorder %s1377, %s1378
      %p1390 = scmp.eq.s32.totalorder %s150, 1
      %p1391 = por %p1389, %p1390
      %p1393 = scmp.ne.s32.totalorder %s1378, %s1392
      %p1394 = scmp.eq.s32.totalorder %s150, 0
      %p1395 = por %p1393, %p1394
      %s1397 = sadd.s32 %s1396, 1
      %p1400 = scmp.eq.s32.totalorder %s144, 1
      %p1401 = scmp.ne.s32.totalorder %s1396, %s1398
      %p1402 = scmp.eq.s32.totalorder %s144, 0
      %p1403 = por %p1401, %p1402
      %p1404 = scmp.ne.s32.totalorder %s1396, %s1398
      %p1405 = scmp.eq.s32.totalorder %s149, 1
      %p1406 = por %p1404, %p1405
      %p1407 = scmp.ne.s32.totalorder %s1398, %s1399
      %p1408 = scmp.eq.s32.totalorder %s149, 0
      %p1409 = por %p1407, %p1408
      %p1410 = scmp.ne.s32.totalorder %s1398, %s1399
      %p1411 = scmp.eq.s32.totalorder %s150, 1
      %p1412 = por %p1410, %p1411
      %p1414 = scmp.ne.s32.totalorder %s1399, %s1413
      %p1415 = scmp.eq.s32.totalorder %s150, 0
      %p1416 = por %p1414, %p1415
      %s1418 = sadd.s32 %s1417, 1
      %p1421 = scmp.eq.s32.totalorder %s144, 1
      %p1422 = scmp.ne.s32.totalorder %s1417, %s1419
      %p1423 = scmp.eq.s32.totalorder %s144, 0
      %p1424 = por %p1422, %p1423
      %p1425 = scmp.ne.s32.totalorder %s1417, %s1419
      %p1426 = scmp.eq.s32.totalorder %s149, 1
      %p1427 = por %p1425, %p1426
      %p1428 = scmp.ne.s32.totalorder %s1419, %s1420
      %p1429 = scmp.eq.s32.totalorder %s149, 0
      %p1430 = por %p1428, %p1429
      %p1431 = scmp.ne.s32.totalorder %s1419, %s1420
      %p1432 = scmp.eq.s32.totalorder %s150, 1
      %p1433 = por %p1431, %p1432
      %p1435 = scmp.ne.s32.totalorder %s1420, %s1434
      %p1436 = scmp.eq.s32.totalorder %s150, 0
      %p1437 = por %p1435, %p1436
      %s1439 = sadd.s32 %s1438, 1
      %p1442 = scmp.eq.s32.totalorder %s144, 1
      %p1443 = scmp.ne.s32.totalorder %s1438, %s1440
      %p1444 = scmp.eq.s32.totalorder %s144, 0
      %p1445 = por %p1443, %p1444
      %p1446 = scmp.ne.s32.totalorder %s1438, %s1440
      %p1447 = scmp.eq.s32.totalorder %s149, 1
      %p1448 = por %p1446, %p1447
      %p1449 = scmp.ne.s32.totalorder %s1440, %s1441
      %p1450 = scmp.eq.s32.totalorder %s149, 0
      %p1451 = por %p1449, %p1450
      %p1452 = scmp.ne.s32.totalorder %s1440, %s1441
      %p1453 = scmp.eq.s32.totalorder %s150, 1
      %p1454 = por %p1452, %p1453
      %p1456 = scmp.ne.s32.totalorder %s1441, %s1455
      %p1457 = scmp.eq.s32.totalorder %s150, 0
      %p1458 = por %p1456, %p1457
      %s1460 = sadd.s32 %s1459, 1
      %p1463 = scmp.eq.s32.totalorder %s144, 1
      %p1464 = scmp.ne.s32.totalorder %s1459, %s1461
      %p1465 = scmp.eq.s32.totalorder %s144, 0
      %p1466 = por %p1464, %p1465
      %p1467 = scmp.ne.s32.totalorder %s1459, %s1461
      %p1468 = scmp.eq.s32.totalorder %s149, 1
      %p1469 = por %p1467, %p1468
      %p1470 = scmp.ne.s32.totalorder %s1461, %s1462
      %p1471 = scmp.eq.s32.totalorder %s149, 0
      %p1472 = por %p1470, %p1471
      %p1473 = scmp.ne.s32.totalorder %s1461, %s1462
      %p1474 = scmp.eq.s32.totalorder %s150, 1
      %p1475 = por %p1473, %p1474
      %p1477 = scmp.ne.s32.totalorder %s1462, %s1476
      %p1478 = scmp.eq.s32.totalorder %s150, 0
      %p1479 = por %p1477, %p1478
      %s1481 = sadd.s32 %s1480, 1
      %p1484 = scmp.eq.s32.totalorder %s144, 1
      %p1485 = scmp.ne.s32.totalorder %s1480, %s1482
      %p1486 = scmp.eq.s32.totalorder %s144, 0
      %p1487 = por %p1485, %p1486
      %p1488 = scmp.ne.s32.totalorder %s1480, %s1482
      %p1489 = scmp.eq.s32.totalorder %s149, 1
      %p1490 = por %p1488, %p1489
      %p1491 = scmp.ne.s32.totalorder %s1482, %s1483
      %p1492 = scmp.eq.s32.totalorder %s149, 0
      %p1493 = por %p1491, %p1492
      %p1494 = scmp.ne.s32.totalorder %s1482, %s1483
      %p1495 = scmp.eq.s32.totalorder %s150, 1
      %p1496 = por %p1494, %p1495
      %p1498 = scmp.ne.s32.totalorder %s1483, %s1497
      %p1499 = scmp.eq.s32.totalorder %s150, 0
      %p1500 = por %p1498, %p1499
      %s1501 = ssub.s32 %s144, %s151
      %p1502 = scmp.eq.s32.totalorder %s1501, 0
      %s1504 = sadd.s32 %s1503, 1
      %s1505 = scalar_select %p1502, %s1503, %s1504
      %p1508 = pneg %p1502
      %p1509 = scmp.eq.s32.totalorder %s144, 1
      %p1510 = por %p1508, %p1509
      %p1511 = scmp.ne.s32.totalorder %s1503, %s1506
      %p1512 = scmp.eq.s32.totalorder %s144, 0
      %p1513 = por %p1511, %p1512
      %p1514 = scmp.ne.s32.totalorder %s1503, %s1506
      %p1515 = scmp.eq.s32.totalorder %s149, 1
      %p1516 = por %p1514, %p1515
      %p1517 = scmp.ne.s32.totalorder %s1506, %s1507
      %p1518 = scmp.eq.s32.totalorder %s149, 0
      %p1519 = por %p1517, %p1518
      %p1520 = scmp.ne.s32.totalorder %s1506, %s1507
      %p1521 = scmp.eq.s32.totalorder %s150, 1
      %p1522 = por %p1520, %p1521
      %p1524 = scmp.ne.s32.totalorder %s1507, %s1523
      %p1525 = scmp.eq.s32.totalorder %s150, 0
      %p1526 = por %p1524, %p1525
      %p1527 = scmp.le.s32.totalorder 1, %s144
      %p1528 = scmp.lt.s32.totalorder %s144, 3
      %p1529 = pnand %p1527, %p1528
      %p1530 = pneg %p1529
      // Predicated region
      $region9: #{tpu_custom_call.1} parent=5 // pred_check
        _
      $region10: #{tpu_custom_call.1} parent=5 // pred_check_branch
        %1532 = sbr.rel (%p1529) target = $region12
      $region11: #{tpu_custom_call.1} parent=5 // pred_region
        %s1533 = ssub.s32 %s144, 1
        // Predicated region
        $region13: #{tpu_custom_call.1} parent=11 // pred_check
          %p1534 = pneg %p191
        $region14: #{tpu_custom_call.1} parent=11 // pred_check_branch
          %1536 = sbr.rel (%p1534) target = $region16
        $region15: #{tpu_custom_call.1} parent=11 // pred_region
          _
        $region16: #{tpu_custom_call.1} parent=11 // pred_fallthru
          _
        // Predicated region
        $region17: #{tpu_custom_call.1} parent=11 // pred_check
          %p1537 = pneg %p212
        $region18: #{tpu_custom_call.1} parent=11 // pred_check_branch
          %1539 = sbr.rel (%p1537) target = $region20
        $region19: #{tpu_custom_call.1} parent=11 // pred_region
          _
        $region20: #{tpu_custom_call.1} parent=11 // pred_fallthru
          _
        // Predicated region
        $region21: #{tpu_custom_call.1} parent=11 // pred_check
          %p1540 = pneg %p233
        $region22: #{tpu_custom_call.1} parent=11 // pred_check_branch
          %1542 = sbr.rel (%p1540) target = $region24
        $region23: #{tpu_custom_call.1} parent=11 // pred_region
          _
        $region24: #{tpu_custom_call.1} parent=11 // pred_fallthru
          _
        // Predicated region
        $region25: #{tpu_custom_call.1} parent=11 // pred_check
          %p1543 = pneg %p254
        $region26: #{tpu_custom_call.1} parent=11 // pred_check_branch
          %1545 = sbr.rel (%p1543) target = $region28
        $region27: #{tpu_custom_call.1} parent=11 // pred_region
          _
        $region28: #{tpu_custom_call.1} parent=11 // pred_fallthru
          _
        // Predicated region
        $region29: #{tpu_custom_call.1} parent=11 // pred_check
          %p1546 = pneg %p275
        $region30: #{tpu_custom_call.1} parent=11 // pred_check_branch
          %1548 = sbr.rel (%p1546) target = $region32
        $region31: #{tpu_custom_call.1} parent=11 // pred_region
          _
        $region32: #{tpu_custom_call.1} parent=11 // pred_fallthru
          _
        // Predicated region
        $region33: #{tpu_custom_call.1} parent=11 // pred_check
          %p1549 = pneg %p296
        $region34: #{tpu_custom_call.1} parent=11 // pred_check_branch
          %1551 = sbr.rel (%p1549) target = $region36
        $region35: #{tpu_custom_call.1} parent=11 // pred_region
          _
        $region36: #{tpu_custom_call.1} parent=11 // pred_fallthru
          _
        // Predicated region
        $region37: #{tpu_custom_call.1} parent=11 // pred_check
          %p1552 = pneg %p317
        $region38: #{tpu_custom_call.1} parent=11 // pred_check_branch
          %1554 = sbr.rel (%p1552) target = $region40
        $region39: #{tpu_custom_call.1} parent=11 // pred_region
          _
        $region40: #{tpu_custom_call.1} parent=11 // pred_fallthru
          _
        // Predicated region
        $region41: #{tpu_custom_call.1} parent=11 // pred_check
          %p1555 = pneg %p338
        $region42: #{tpu_custom_call.1} parent=11 // pred_check_branch
          %1557 = sbr.rel (%p1555) target = $region44
        $region43: #{tpu_custom_call.1} parent=11 // pred_region
          _
        $region44: #{tpu_custom_call.1} parent=11 // pred_fallthru
          _
        // Predicated region
        $region45: #{tpu_custom_call.1} parent=11 // pred_check
          %p1558 = pneg %p359
        $region46: #{tpu_custom_call.1} parent=11 // pred_check_branch
          %1560 = sbr.rel (%p1558) target = $region48
        $region47: #{tpu_custom_call.1} parent=11 // pred_region
          _
        $region48: #{tpu_custom_call.1} parent=11 // pred_fallthru
          _
        // Predicated region
        $region49: #{tpu_custom_call.1} parent=11 // pred_check
          %p1561 = pneg %p380
        $region50: #{tpu_custom_call.1} parent=11 // pred_check_branch
          %1563 = sbr.rel (%p1561) target = $region52
        $region51: #{tpu_custom_call.1} parent=11 // pred_region
          _
        $region52: #{tpu_custom_call.1} parent=11 // pred_fallthru
          _
        // Predicated region
        $region53: #{tpu_custom_call.1} parent=11 // pred_check
          %p1564 = pneg %p401
        $region54: #{tpu_custom_call.1} parent=11 // pred_check_branch
          %1566 = sbr.rel (%p1564) target = $region56
        $region55: #{tpu_custom_call.1} parent=11 // pred_region
          _
        $region56: #{tpu_custom_call.1} parent=11 // pred_fallthru
          _
        // Predicated region
        $region57: #{tpu_custom_call.1} parent=11 // pred_check
          %p1567 = pneg %p422
        $region58: #{tpu_custom_call.1} parent=11 // pred_check_branch
          %1569 = sbr.rel (%p1567) target = $region60
        $region59: #{tpu_custom_call.1} parent=11 // pred_region
          _
        $region60: #{tpu_custom_call.1} parent=11 // pred_fallthru
          _
        // Predicated region
        $region61: #{tpu_custom_call.1} parent=11 // pred_check
          %p1570 = pneg %p443
        $region62: #{tpu_custom_call.1} parent=11 // pred_check_branch
          %1572 = sbr.rel (%p1570) target = $region64
        $region63: #{tpu_custom_call.1} parent=11 // pred_region
          _
        $region64: #{tpu_custom_call.1} parent=11 // pred_fallthru
          _
        // Predicated region
        $region65: #{tpu_custom_call.1} parent=11 // pred_check
          %p1573 = pneg %p464
        $region66: #{tpu_custom_call.1} parent=11 // pred_check_branch
          %1575 = sbr.rel (%p1573) target = $region68
        $region67: #{tpu_custom_call.1} parent=11 // pred_region
          _
        $region68: #{tpu_custom_call.1} parent=11 // pred_fallthru
          _
        // Predicated region
        $region69: #{tpu_custom_call.1} parent=11 // pred_check
          %p1576 = pneg %p485
        $region70: #{tpu_custom_call.1} parent=11 // pred_check_branch
          %1578 = sbr.rel (%p1576) target = $region72
        $region71: #{tpu_custom_call.1} parent=11 // pred_region
          _
        $region72: #{tpu_custom_call.1} parent=11 // pred_fallthru
          _
        // Predicated region
        $region73: #{tpu_custom_call.1} parent=11 // pred_check
          %p1579 = pneg %p506
        $region74: #{tpu_custom_call.1} parent=11 // pred_check_branch
          %1581 = sbr.rel (%p1579) target = $region76
        $region75: #{tpu_custom_call.1} parent=11 // pred_region
          _
        $region76: #{tpu_custom_call.1} parent=11 // pred_fallthru
          _
        // Predicated region
        $region77: #{tpu_custom_call.1} parent=11 // pred_check
          %p1582 = pneg %p527
        $region78: #{tpu_custom_call.1} parent=11 // pred_check_branch
          %1584 = sbr.rel (%p1582) target = $region80
        $region79: #{tpu_custom_call.1} parent=11 // pred_region
          _
        $region80: #{tpu_custom_call.1} parent=11 // pred_fallthru
          _
        // Predicated region
        $region81: #{tpu_custom_call.1} parent=11 // pred_check
          %p1585 = pneg %p548
        $region82: #{tpu_custom_call.1} parent=11 // pred_check_branch
          %1587 = sbr.rel (%p1585) target = $region84
        $region83: #{tpu_custom_call.1} parent=11 // pred_region
          _
        $region84: #{tpu_custom_call.1} parent=11 // pred_fallthru
          _
        // Predicated region
        $region85: #{tpu_custom_call.1} parent=11 // pred_check
          %p1588 = pneg %p569
        $region86: #{tpu_custom_call.1} parent=11 // pred_check_branch
          %1590 = sbr.rel (%p1588) target = $region88
        $region87: #{tpu_custom_call.1} parent=11 // pred_region
          _
        $region88: #{tpu_custom_call.1} parent=11 // pred_fallthru
          _
        // Predicated region
        $region89: #{tpu_custom_call.1} parent=11 // pred_check
          %p1591 = pneg %p590
        $region90: #{tpu_custom_call.1} parent=11 // pred_check_branch
          %1593 = sbr.rel (%p1591) target = $region92
        $region91: #{tpu_custom_call.1} parent=11 // pred_region
          _
        $region92: #{tpu_custom_call.1} parent=11 // pred_fallthru
          _
        // Predicated region
        $region93: #{tpu_custom_call.1} parent=11 // pred_check
          %p1594 = pneg %p611
        $region94: #{tpu_custom_call.1} parent=11 // pred_check_branch
          %1596 = sbr.rel (%p1594) target = $region96
        $region95: #{tpu_custom_call.1} parent=11 // pred_region
          _
        $region96: #{tpu_custom_call.1} parent=11 // pred_fallthru
          _
        // Predicated region
        $region97: #{tpu_custom_call.1} parent=11 // pred_check
          %p1597 = pneg %p632
        $region98: #{tpu_custom_call.1} parent=11 // pred_check_branch
          %1599 = sbr.rel (%p1597) target = $region100
        $region99: #{tpu_custom_call.1} parent=11 // pred_region
          _
        $region100: #{tpu_custom_call.1} parent=11 // pred_fallthru
          _
        // Predicated region
        $region101: #{tpu_custom_call.1} parent=11 // pred_check
          %p1600 = pneg %p653
        $region102: #{tpu_custom_call.1} parent=11 // pred_check_branch
          %1602 = sbr.rel (%p1600) target = $region104
        $region103: #{tpu_custom_call.1} parent=11 // pred_region
          _
        $region104: #{tpu_custom_call.1} parent=11 // pred_fallthru
          _
        // Predicated region
        $region105: #{tpu_custom_call.1} parent=11 // pred_check
          %p1603 = pneg %p674
        $region106: #{tpu_custom_call.1} parent=11 // pred_check_branch
          %1605 = sbr.rel (%p1603) target = $region108
        $region107: #{tpu_custom_call.1} parent=11 // pred_region
          _
        $region108: #{tpu_custom_call.1} parent=11 // pred_fallthru
          _
        // Predicated region
        $region109: #{tpu_custom_call.1} parent=11 // pred_check
          %p1606 = pneg %p695
        $region110: #{tpu_custom_call.1} parent=11 // pred_check_branch
          %1608 = sbr.rel (%p1606) target = $region112
        $region111: #{tpu_custom_call.1} parent=11 // pred_region
          _
        $region112: #{tpu_custom_call.1} parent=11 // pred_fallthru
          _
        // Predicated region
        $region113: #{tpu_custom_call.1} parent=11 // pred_check
          %p1609 = pneg %p716
        $region114: #{tpu_custom_call.1} parent=11 // pred_check_branch
          %1611 = sbr.rel (%p1609) target = $region116
        $region115: #{tpu_custom_call.1} parent=11 // pred_region
          _
        $region116: #{tpu_custom_call.1} parent=11 // pred_fallthru
          _
        // Predicated region
        $region117: #{tpu_custom_call.1} parent=11 // pred_check
          %p1612 = pneg %p737
        $region118: #{tpu_custom_call.1} parent=11 // pred_check_branch
          %1614 = sbr.rel (%p1612) target = $region120
        $region119: #{tpu_custom_call.1} parent=11 // pred_region
          _
        $region120: #{tpu_custom_call.1} parent=11 // pred_fallthru
          _
        // Predicated region
        $region121: #{tpu_custom_call.1} parent=11 // pred_check
          %p1615 = pneg %p758
        $region122: #{tpu_custom_call.1} parent=11 // pred_check_branch
          %1617 = sbr.rel (%p1615) target = $region124
        $region123: #{tpu_custom_call.1} parent=11 // pred_region
          _
        $region124: #{tpu_custom_call.1} parent=11 // pred_fallthru
          _
        // Predicated region
        $region125: #{tpu_custom_call.1} parent=11 // pred_check
          %p1618 = pneg %p779
        $region126: #{tpu_custom_call.1} parent=11 // pred_check_branch
          %1620 = sbr.rel (%p1618) target = $region128
        $region127: #{tpu_custom_call.1} parent=11 // pred_region
          _
        $region128: #{tpu_custom_call.1} parent=11 // pred_fallthru
          _
        // Predicated region
        $region129: #{tpu_custom_call.1} parent=11 // pred_check
          %p1621 = pneg %p800
        $region130: #{tpu_custom_call.1} parent=11 // pred_check_branch
          %1623 = sbr.rel (%p1621) target = $region132
        $region131: #{tpu_custom_call.1} parent=11 // pred_region
          _
        $region132: #{tpu_custom_call.1} parent=11 // pred_fallthru
          _
        // Predicated region
        $region133: #{tpu_custom_call.1} parent=11 // pred_check
          %p1624 = pneg %p821
        $region134: #{tpu_custom_call.1} parent=11 // pred_check_branch
          %1626 = sbr.rel (%p1624) target = $region136
        $region135: #{tpu_custom_call.1} parent=11 // pred_region
          _
        $region136: #{tpu_custom_call.1} parent=11 // pred_fallthru
          _
        // Predicated region
        $region137: #{tpu_custom_call.1} parent=11 // pred_check
          %p1627 = pneg %p842
        $region138: #{tpu_custom_call.1} parent=11 // pred_check_branch
          %1629 = sbr.rel (%p1627) target = $region140
        $region139: #{tpu_custom_call.1} parent=11 // pred_region
          _
        $region140: #{tpu_custom_call.1} parent=11 // pred_fallthru
          _
        // Predicated region
        $region141: #{tpu_custom_call.1} parent=11 // pred_check
          %p1630 = pneg %p863
        $region142: #{tpu_custom_call.1} parent=11 // pred_check_branch
          %1632 = sbr.rel (%p1630) target = $region144
        $region143: #{tpu_custom_call.1} parent=11 // pred_region
          _
        $region144: #{tpu_custom_call.1} parent=11 // pred_fallthru
          _
        // Predicated region
        $region145: #{tpu_custom_call.1} parent=11 // pred_check
          %p1633 = pneg %p884
        $region146: #{tpu_custom_call.1} parent=11 // pred_check_branch
          %1635 = sbr.rel (%p1633) target = $region148
        $region147: #{tpu_custom_call.1} parent=11 // pred_region
          _
        $region148: #{tpu_custom_call.1} parent=11 // pred_fallthru
          _
        // Predicated region
        $region149: #{tpu_custom_call.1} parent=11 // pred_check
          %p1636 = pneg %p905
        $region150: #{tpu_custom_call.1} parent=11 // pred_check_branch
          %1638 = sbr.rel (%p1636) target = $region152
        $region151: #{tpu_custom_call.1} parent=11 // pred_region
          _
        $region152: #{tpu_custom_call.1} parent=11 // pred_fallthru
          _
        // Predicated region
        $region153: #{tpu_custom_call.1} parent=11 // pred_check
          %p1639 = pneg %p926
        $region154: #{tpu_custom_call.1} parent=11 // pred_check_branch
          %1641 = sbr.rel (%p1639) target = $region156
        $region155: #{tpu_custom_call.1} parent=11 // pred_region
          _
        $region156: #{tpu_custom_call.1} parent=11 // pred_fallthru
          _
        // Predicated region
        $region157: #{tpu_custom_call.1} parent=11 // pred_check
          %p1642 = pneg %p947
        $region158: #{tpu_custom_call.1} parent=11 // pred_check_branch
          %1644 = sbr.rel (%p1642) target = $region160
        $region159: #{tpu_custom_call.1} parent=11 // pred_region
          _
        $region160: #{tpu_custom_call.1} parent=11 // pred_fallthru
          _
        // Predicated region
        $region161: #{tpu_custom_call.1} parent=11 // pred_check
          %p1645 = pneg %p968
        $region162: #{tpu_custom_call.1} parent=11 // pred_check_branch
          %1647 = sbr.rel (%p1645) target = $region164
        $region163: #{tpu_custom_call.1} parent=11 // pred_region
          _
        $region164: #{tpu_custom_call.1} parent=11 // pred_fallthru
          _
        // Predicated region
        $region165: #{tpu_custom_call.1} parent=11 // pred_check
          %p1648 = pneg %p989
        $region166: #{tpu_custom_call.1} parent=11 // pred_check_branch
          %1650 = sbr.rel (%p1648) target = $region168
        $region167: #{tpu_custom_call.1} parent=11 // pred_region
          _
        $region168: #{tpu_custom_call.1} parent=11 // pred_fallthru
          _
        // Predicated region
        $region169: #{tpu_custom_call.1} parent=11 // pred_check
          %p1651 = pneg %p1010
        $region170: #{tpu_custom_call.1} parent=11 // pred_check_branch
          %1653 = sbr.rel (%p1651) target = $region172
        $region171: #{tpu_custom_call.1} parent=11 // pred_region
          _
        $region172: #{tpu_custom_call.1} parent=11 // pred_fallthru
          _
        // Predicated region
        $region173: #{tpu_custom_call.1} parent=11 // pred_check
          %p1654 = pneg %p1031
        $region174: #{tpu_custom_call.1} parent=11 // pred_check_branch
          %1656 = sbr.rel (%p1654) target = $region176
        $region175: #{tpu_custom_call.1} parent=11 // pred_region
          _
        $region176: #{tpu_custom_call.1} parent=11 // pred_fallthru
          _
        // Predicated region
        $region177: #{tpu_custom_call.1} parent=11 // pred_check
          %p1657 = pneg %p1052
        $region178: #{tpu_custom_call.1} parent=11 // pred_check_branch
          %1659 = sbr.rel (%p1657) target = $region180
        $region179: #{tpu_custom_call.1} parent=11 // pred_region
          _
        $region180: #{tpu_custom_call.1} parent=11 // pred_fallthru
          _
        // Predicated region
        $region181: #{tpu_custom_call.1} parent=11 // pred_check
          %p1660 = pneg %p1073
        $region182: #{tpu_custom_call.1} parent=11 // pred_check_branch
          %1662 = sbr.rel (%p1660) target = $region184
        $region183: #{tpu_custom_call.1} parent=11 // pred_region
          _
        $region184: #{tpu_custom_call.1} parent=11 // pred_fallthru
          _
        // Predicated region
        $region185: #{tpu_custom_call.1} parent=11 // pred_check
          %p1663 = pneg %p1094
        $region186: #{tpu_custom_call.1} parent=11 // pred_check_branch
          %1665 = sbr.rel (%p1663) target = $region188
        $region187: #{tpu_custom_call.1} parent=11 // pred_region
          _
        $region188: #{tpu_custom_call.1} parent=11 // pred_fallthru
          _
        // Predicated region
        $region189: #{tpu_custom_call.1} parent=11 // pred_check
          %p1666 = pneg %p1115
        $region190: #{tpu_custom_call.1} parent=11 // pred_check_branch
          %1668 = sbr.rel (%p1666) target = $region192
        $region191: #{tpu_custom_call.1} parent=11 // pred_region
          _
        $region192: #{tpu_custom_call.1} parent=11 // pred_fallthru
          _
        // Predicated region
        $region193: #{tpu_custom_call.1} parent=11 // pred_check
          %p1669 = pneg %p1136
        $region194: #{tpu_custom_call.1} parent=11 // pred_check_branch
          %1671 = sbr.rel (%p1669) target = $region196
        $region195: #{tpu_custom_call.1} parent=11 // pred_region
          _
        $region196: #{tpu_custom_call.1} parent=11 // pred_fallthru
          _
        // Predicated region
        $region197: #{tpu_custom_call.1} parent=11 // pred_check
          %p1672 = pneg %p1157
        $region198: #{tpu_custom_call.1} parent=11 // pred_check_branch
          %1674 = sbr.rel (%p1672) target = $region200
        $region199: #{tpu_custom_call.1} parent=11 // pred_region
          _
        $region200: #{tpu_custom_call.1} parent=11 // pred_fallthru
          _
        // Predicated region
        $region201: #{tpu_custom_call.1} parent=11 // pred_check
          %p1675 = pneg %p1178
        $region202: #{tpu_custom_call.1} parent=11 // pred_check_branch
          %1677 = sbr.rel (%p1675) target = $region204
        $region203: #{tpu_custom_call.1} parent=11 // pred_region
          _
        $region204: #{tpu_custom_call.1} parent=11 // pred_fallthru
          _
        // Predicated region
        $region205: #{tpu_custom_call.1} parent=11 // pred_check
          %p1678 = pneg %p1199
        $region206: #{tpu_custom_call.1} parent=11 // pred_check_branch
          %1680 = sbr.rel (%p1678) target = $region208
        $region207: #{tpu_custom_call.1} parent=11 // pred_region
          _
        $region208: #{tpu_custom_call.1} parent=11 // pred_fallthru
          _
        // Predicated region
        $region209: #{tpu_custom_call.1} parent=11 // pred_check
          %p1681 = pneg %p1220
        $region210: #{tpu_custom_call.1} parent=11 // pred_check_branch
          %1683 = sbr.rel (%p1681) target = $region212
        $region211: #{tpu_custom_call.1} parent=11 // pred_region
          %1685 = vsyncadd [#allocation3], 0
          %s1687 = sshll.u32 %s101, 4
          %s1688 = int_to_ptr.hbm [resolvable:$true] %s1687
          %s1689 = sshll.u32 [#allocation2], 4
          %s1690 = int_to_ptr.vmem [resolvable:$true] %s1689
          %1692 = dma.hbm_to_vmem [thread:$0]  %s1688, 16, %s1690, [#allocation3]
        $region212: #{tpu_custom_call.1} parent=11 // pred_fallthru
          _
        // Predicated region
        $region213: #{tpu_custom_call.1} parent=11 // pred_check
          %p1693 = pneg %p1241
        $region214: #{tpu_custom_call.1} parent=11 // pred_check_branch
          %1695 = sbr.rel (%p1693) target = $region216
        $region215: #{tpu_custom_call.1} parent=11 // pred_region
          %1697 = vsyncadd [#allocation6], 0
          %s1699 = sshll.u32 %s103, 4
          %s1700 = int_to_ptr.hbm [resolvable:$true] %s1699
          %s1701 = sshll.u32 [#allocation5], 4
          %s1702 = int_to_ptr.vmem [resolvable:$true] %s1701
          %1704 = dma.hbm_to_vmem [thread:$0]  %s1700, 16, %s1702, [#allocation6]
        $region216: #{tpu_custom_call.1} parent=11 // pred_fallthru
          _
        // Predicated region
        $region217: #{tpu_custom_call.1} parent=11 // pred_check
          %p1705 = pneg %p1262
        $region218: #{tpu_custom_call.1} parent=11 // pred_check_branch
          %1707 = sbr.rel (%p1705) target = $region220
        $region219: #{tpu_custom_call.1} parent=11 // pred_region
          _
        $region220: #{tpu_custom_call.1} parent=11 // pred_fallthru
          _
        // Predicated region
        $region221: #{tpu_custom_call.1} parent=11 // pred_check
          %p1708 = pneg %p1283
        $region222: #{tpu_custom_call.1} parent=11 // pred_check_branch
          %1710 = sbr.rel (%p1708) target = $region224
        $region223: #{tpu_custom_call.1} parent=11 // pred_region
          %1712 = vsyncadd [#allocation6], 0
          %s1714 = sshll.u32 %s107, 4
          %s1715 = int_to_ptr.hbm [resolvable:$true] %s1714
          %s1716 = sshll.u32 [#allocation7], 4
          %s1717 = int_to_ptr.vmem [resolvable:$true] %s1716
          %1719 = dma.hbm_to_vmem [thread:$0]  %s1715, 16, %s1717, [#allocation6]
        $region224: #{tpu_custom_call.1} parent=11 // pred_fallthru
          _
        // Predicated region
        $region225: #{tpu_custom_call.1} parent=11 // pred_check
          %p1720 = pneg %p1304
        $region226: #{tpu_custom_call.1} parent=11 // pred_check_branch
          %1722 = sbr.rel (%p1720) target = $region228
        $region227: #{tpu_custom_call.1} parent=11 // pred_region
          %1724 = vsyncadd [#allocation9], 0
          %s1726 = sshll.u32 %s109, 4
          %s1727 = int_to_ptr.hbm [resolvable:$true] %s1726
          %s1728 = sshll.u32 [#allocation8], 4
          %s1729 = int_to_ptr.vmem [resolvable:$true] %s1728
          %1731 = dma.hbm_to_vmem [thread:$0]  %s1727, 16, %s1729, [#allocation9]
        $region228: #{tpu_custom_call.1} parent=11 // pred_fallthru
          _
        // Predicated region
        $region229: #{tpu_custom_call.1} parent=11 // pred_check
          %p1732 = pneg %p1325
        $region230: #{tpu_custom_call.1} parent=11 // pred_check_branch
          %1734 = sbr.rel (%p1732) target = $region232
        $region231: #{tpu_custom_call.1} parent=11 // pred_region
          %1736 = vsyncadd [#allocation9], 0
          %s1738 = sshll.u32 %s111, 4
          %s1739 = int_to_ptr.hbm [resolvable:$true] %s1738
          %s1740 = sshll.u32 [#allocation10], 4
          %s1741 = int_to_ptr.vmem [resolvable:$true] %s1740
          %1743 = dma.hbm_to_vmem [thread:$0]  %s1739, 16, %s1741, [#allocation9]
        $region232: #{tpu_custom_call.1} parent=11 // pred_fallthru
          _
        // Predicated region
        $region233: #{tpu_custom_call.1} parent=11 // pred_check
          %p1744 = pneg %p1346
        $region234: #{tpu_custom_call.1} parent=11 // pred_check_branch
          %1746 = sbr.rel (%p1744) target = $region236
        $region235: #{tpu_custom_call.1} parent=11 // pred_region
          _
        $region236: #{tpu_custom_call.1} parent=11 // pred_fallthru
          _
        // Predicated region
        $region237: #{tpu_custom_call.1} parent=11 // pred_check
          %p1747 = pneg %p1367
        $region238: #{tpu_custom_call.1} parent=11 // pred_check_branch
          %1749 = sbr.rel (%p1747) target = $region240
        $region239: #{tpu_custom_call.1} parent=11 // pred_region
          %1751 = vsyncadd [#allocation12], 0
          %s1753 = sshll.u32 %s115, 4
          %s1754 = int_to_ptr.hbm [resolvable:$true] %s1753
          %s1755 = sshll.u32 [#allocation11], 4
          %s1756 = int_to_ptr.vmem [resolvable:$true] %s1755
          %1758 = dma.hbm_to_vmem [thread:$0]  %s1754, 16, %s1756, [#allocation12]
        $region240: #{tpu_custom_call.1} parent=11 // pred_fallthru
          _
        // Predicated region
        $region241: #{tpu_custom_call.1} parent=11 // pred_check
          %p1759 = pneg %p1388
        $region242: #{tpu_custom_call.1} parent=11 // pred_check_branch
          %1761 = sbr.rel (%p1759) target = $region244
        $region243: #{tpu_custom_call.1} parent=11 // pred_region
          %1763 = vsyncadd [#allocation12], 0
          %s1765 = sshll.u32 %s117, 4
          %s1766 = int_to_ptr.hbm [resolvable:$true] %s1765
          %s1767 = sshll.u32 [#allocation13], 4
          %s1768 = int_to_ptr.vmem [resolvable:$true] %s1767
          %1770 = dma.hbm_to_vmem [thread:$0]  %s1766, 16, %s1768, [#allocation12]
        $region244: #{tpu_custom_call.1} parent=11 // pred_fallthru
          _
        // Predicated region
        $region245: #{tpu_custom_call.1} parent=11 // pred_check
          %p1771 = pneg %p1409
        $region246: #{tpu_custom_call.1} parent=11 // pred_check_branch
          %1773 = sbr.rel (%p1771) target = $region248
        $region247: #{tpu_custom_call.1} parent=11 // pred_region
          %1775 = vsyncadd [#allocation15], 0
          %s1777 = sshll.u32 %s119, 4
          %s1778 = int_to_ptr.hbm [resolvable:$true] %s1777
          %s1779 = sshll.u32 [#allocation14], 4
          %s1780 = int_to_ptr.vmem [resolvable:$true] %s1779
          %1782 = dma.hbm_to_vmem [thread:$0]  %s1778, 16, %s1780, [#allocation15]
        $region248: #{tpu_custom_call.1} parent=11 // pred_fallthru
          _
        // Predicated region
        $region249: #{tpu_custom_call.1} parent=11 // pred_check
          %p1783 = pneg %p1430
        $region250: #{tpu_custom_call.1} parent=11 // pred_check_branch
          %1785 = sbr.rel (%p1783) target = $region252
        $region251: #{tpu_custom_call.1} parent=11 // pred_region
          _
        $region252: #{tpu_custom_call.1} parent=11 // pred_fallthru
          _
        // Predicated region
        $region253: #{tpu_custom_call.1} parent=11 // pred_check
          %p1786 = pneg %p1451
        $region254: #{tpu_custom_call.1} parent=11 // pred_check_branch
          %1788 = sbr.rel (%p1786) target = $region256
        $region255: #{tpu_custom_call.1} parent=11 // pred_region
          %1790 = vsyncadd [#allocation15], 0
          %s1792 = sshll.u32 %s123, 4
          %s1793 = int_to_ptr.hbm [resolvable:$true] %s1792
          %s1794 = sshll.u32 [#allocation16], 4
          %s1795 = int_to_ptr.vmem [resolvable:$true] %s1794
          %1797 = dma.hbm_to_vmem [thread:$0]  %s1793, 16, %s1795, [#allocation15]
        $region256: #{tpu_custom_call.1} parent=11 // pred_fallthru
          _
        // Predicated region
        $region257: #{tpu_custom_call.1} parent=11 // pred_check
          %p1798 = pneg %p1472
        $region258: #{tpu_custom_call.1} parent=11 // pred_check_branch
          %1800 = sbr.rel (%p1798) target = $region260
        $region259: #{tpu_custom_call.1} parent=11 // pred_region
          %1802 = vsyncadd [#allocation18], 0
          %s1804 = sshll.u32 %s125, 4
          %s1805 = int_to_ptr.hbm [resolvable:$true] %s1804
          %s1806 = sshll.u32 [#allocation17], 4
          %s1807 = int_to_ptr.vmem [resolvable:$true] %s1806
          %1809 = dma.hbm_to_vmem [thread:$0]  %s1805, 16, %s1807, [#allocation18]
        $region260: #{tpu_custom_call.1} parent=11 // pred_fallthru
          _
        // Predicated region
        $region261: #{tpu_custom_call.1} parent=11 // pred_check
          %p1810 = pneg %p1493
        $region262: #{tpu_custom_call.1} parent=11 // pred_check_branch
          %1812 = sbr.rel (%p1810) target = $region264
        $region263: #{tpu_custom_call.1} parent=11 // pred_region
          %1814 = vsyncadd [#allocation18], 0
          %s1816 = sshll.u32 %s127, 4
          %s1817 = int_to_ptr.hbm [resolvable:$true] %s1816
          %s1818 = sshll.u32 [#allocation19], 4
          %s1819 = int_to_ptr.vmem [resolvable:$true] %s1818
          %1821 = dma.hbm_to_vmem [thread:$0]  %s1817, 16, %s1819, [#allocation18]
        $region264: #{tpu_custom_call.1} parent=11 // pred_fallthru
          _
      $region12: #{tpu_custom_call.1} parent=5 // pred_fallthru
        _
      %p1822 = scmp.lt.s32.totalorder %s144, 2
      // Predicated region
      $region265: #{tpu_custom_call.1} parent=5 // pred_check
        %p1823 = pneg %p1822
      $region266: #{tpu_custom_call.1} parent=5 // pred_check_branch
        %1825 = sbr.rel (%p1823) target = $region268
      $region267: #{tpu_custom_call.1} parent=5 // pred_region
        // Predicated region
        $region269: #{tpu_custom_call.1} parent=267 // pred_check
          %p1826 = pneg %p164
        $region270: #{tpu_custom_call.1} parent=267 // pred_check_branch
          %1828 = sbr.rel (%p1826) target = $region272
        $region271: #{tpu_custom_call.1} parent=267 // pred_region
          %p1829 = scmp.lt.s32.totalorder %s144, 1
          %s1830 = scalar_select %p1829, %s144, 1
          %s1831 = smul.addr %s1830, 4
          %s1832 = smul.addr %s1831, 8
          %s1833 = scalar_lea.vmem %s1, %s1832
        $region272: #{tpu_custom_call.1} parent=267 // pred_fallthru
          _
      $region268: #{tpu_custom_call.1} parent=5 // pred_fallthru
        _
      %p1834 = scmp.le.s32.totalorder 1, %s144
      %p1835 = scmp.lt.s32.totalorder %s144, 3
      %p1836 = pnand %p1834, %p1835
      %p1837 = pneg %p1836
      // Predicated region
      $region273: #{tpu_custom_call.1} parent=5 // pred_check
        _
      $region274: #{tpu_custom_call.1} parent=5 // pred_check_branch
        %1839 = sbr.rel (%p1836) target = $region276
      $region275: #{tpu_custom_call.1} parent=5 // pred_region
        %s1840 = ssub.s32 %s144, 1
        // Predicated region
        $region277: #{tpu_custom_call.1} parent=275 // pred_check
          %p1841 = pneg %p1220
        $region278: #{tpu_custom_call.1} parent=275 // pred_check_branch
          %1843 = sbr.rel (%p1841) target = $region280
        $region279: #{tpu_custom_call.1} parent=275 // pred_region
          %1845 = dma.done [#allocation3], 16
        $region280: #{tpu_custom_call.1} parent=275 // pred_fallthru
          _
        // Predicated region
        $region281: #{tpu_custom_call.1} parent=275 // pred_check
          %p1846 = pneg %p1241
        $region282: #{tpu_custom_call.1} parent=275 // pred_check_branch
          %1848 = sbr.rel (%p1846) target = $region284
        $region283: #{tpu_custom_call.1} parent=275 // pred_region
          %1850 = dma.done [#allocation6], 16
        $region284: #{tpu_custom_call.1} parent=275 // pred_fallthru
          _
        // Predicated region
        $region285: #{tpu_custom_call.1} parent=275 // pred_check
          %p1851 = pneg %p1283
        $region286: #{tpu_custom_call.1} parent=275 // pred_check_branch
          %1853 = sbr.rel (%p1851) target = $region288
        $region287: #{tpu_custom_call.1} parent=275 // pred_region
          %1855 = dma.done [#allocation6], 16
        $region288: #{tpu_custom_call.1} parent=275 // pred_fallthru
          _
        // Predicated region
        $region289: #{tpu_custom_call.1} parent=275 // pred_check
          %p1856 = pneg %p1304
        $region290: #{tpu_custom_call.1} parent=275 // pred_check_branch
          %1858 = sbr.rel (%p1856) target = $region292
        $region291: #{tpu_custom_call.1} parent=275 // pred_region
          %1860 = dma.done [#allocation9], 16
        $region292: #{tpu_custom_call.1} parent=275 // pred_fallthru
          _
        // Predicated region
        $region293: #{tpu_custom_call.1} parent=275 // pred_check
          %p1861 = pneg %p1325
        $region294: #{tpu_custom_call.1} parent=275 // pred_check_branch
          %1863 = sbr.rel (%p1861) target = $region296
        $region295: #{tpu_custom_call.1} parent=275 // pred_region
          %1865 = dma.done [#allocation9], 16
        $region296: #{tpu_custom_call.1} parent=275 // pred_fallthru
          _
        // Predicated region
        $region297: #{tpu_custom_call.1} parent=275 // pred_check
          %p1866 = pneg %p1367
        $region298: #{tpu_custom_call.1} parent=275 // pred_check_branch
          %1868 = sbr.rel (%p1866) target = $region300
        $region299: #{tpu_custom_call.1} parent=275 // pred_region
          %1870 = dma.done [#allocation12], 16
        $region300: #{tpu_custom_call.1} parent=275 // pred_fallthru
          _
        // Predicated region
        $region301: #{tpu_custom_call.1} parent=275 // pred_check
          %p1871 = pneg %p1388
        $region302: #{tpu_custom_call.1} parent=275 // pred_check_branch
          %1873 = sbr.rel (%p1871) target = $region304
        $region303: #{tpu_custom_call.1} parent=275 // pred_region
          %1875 = dma.done [#allocation12], 16
        $region304: #{tpu_custom_call.1} parent=275 // pred_fallthru
          _
        // Predicated region
        $region305: #{tpu_custom_call.1} parent=275 // pred_check
          %p1876 = pneg %p1409
        $region306: #{tpu_custom_call.1} parent=275 // pred_check_branch
          %1878 = sbr.rel (%p1876) target = $region308
        $region307: #{tpu_custom_call.1} parent=275 // pred_region
          %1880 = dma.done [#allocation15], 16
        $region308: #{tpu_custom_call.1} parent=275 // pred_fallthru
          _
        // Predicated region
        $region309: #{tpu_custom_call.1} parent=275 // pred_check
          %p1881 = pneg %p1451
        $region310: #{tpu_custom_call.1} parent=275 // pred_check_branch
          %1883 = sbr.rel (%p1881) target = $region312
        $region311: #{tpu_custom_call.1} parent=275 // pred_region
          %1885 = dma.done [#allocation15], 16
        $region312: #{tpu_custom_call.1} parent=275 // pred_fallthru
          _
        // Predicated region
        $region313: #{tpu_custom_call.1} parent=275 // pred_check
          %p1886 = pneg %p1472
        $region314: #{tpu_custom_call.1} parent=275 // pred_check_branch
          %1888 = sbr.rel (%p1886) target = $region316
        $region315: #{tpu_custom_call.1} parent=275 // pred_region
          %1890 = dma.done [#allocation18], 16
        $region316: #{tpu_custom_call.1} parent=275 // pred_fallthru
          _
        // Predicated region
        $region317: #{tpu_custom_call.1} parent=275 // pred_check
          %p1891 = pneg %p1493
        $region318: #{tpu_custom_call.1} parent=275 // pred_check_branch
          %1893 = sbr.rel (%p1891) target = $region320
        $region319: #{tpu_custom_call.1} parent=275 // pred_region
          %1895 = dma.done [#allocation18], 16
        $region320: #{tpu_custom_call.1} parent=275 // pred_fallthru
          _
        %p1896 = scmp.lt.s32.totalorder %s149, 1
        %s1897 = scalar_select %p1896, %s149, 1
        %s1898 = smul.addr %s1897, 4
        %s1899 = smul.addr %s1898, 8
        %s1900 = scalar_lea.vmem %s1, %s1899
        %p1901 = pneg %p170
        %p1902 = pneg %p167
        %p1903 = pneg %p191
        %p1904 = pneg %p188
        %p1905 = pneg %p212
        %p1906 = pneg %p209
        %p1907 = pneg %p233
        %p1908 = pneg %p230
        %p1909 = pneg %p254
        %p1910 = pneg %p251
        %p1911 = pneg %p275
        %p1912 = pneg %p272
        %p1913 = pneg %p296
        %p1914 = pneg %p293
        %p1915 = pneg %p317
        %p1916 = pneg %p314
        %p1917 = pneg %p338
        %p1918 = pneg %p335
        %p1919 = pneg %p359
        %p1920 = pneg %p356
        %p1921 = pneg %p380
        %p1922 = pneg %p377
        %p1923 = pneg %p401
        %p1924 = pneg %p398
        %p1925 = pneg %p422
        %p1926 = pneg %p419
        %p1927 = pneg %p443
        %p1928 = pneg %p440
        %p1929 = pneg %p464
        %p1930 = pneg %p461
        %p1931 = pneg %p485
        %p1932 = pneg %p482
        %p1933 = pneg %p506
        %p1934 = pneg %p503
        %p1935 = pneg %p527
        %p1936 = pneg %p524
        %p1937 = pneg %p548
        %p1938 = pneg %p545
        %p1939 = pneg %p569
        %p1940 = pneg %p566
        %p1941 = pneg %p590
        %p1942 = pneg %p587
        %p1943 = pneg %p611
        %p1944 = pneg %p608
        %p1945 = pneg %p632
        %p1946 = pneg %p629
        %p1947 = pneg %p653
        %p1948 = pneg %p650
        %p1949 = pneg %p674
        %p1950 = pneg %p671
        %p1951 = pneg %p695
        %p1952 = pneg %p692
        %p1953 = pneg %p716
        %p1954 = pneg %p713
        %p1955 = pneg %p737
        %p1956 = pneg %p734
        %p1957 = pneg %p758
        %p1958 = pneg %p755
        %p1959 = pneg %p779
        %p1960 = pneg %p776
        %p1961 = pneg %p800
        %p1962 = pneg %p797
        %p1963 = pneg %p821
        %p1964 = pneg %p818
        %p1965 = pneg %p842
        %p1966 = pneg %p839
        %p1967 = pneg %p863
        %p1968 = pneg %p860
        %p1969 = pneg %p884
        %p1970 = pneg %p881
        %p1971 = pneg %p905
        %p1972 = pneg %p902
        %p1973 = pneg %p926
        %p1974 = pneg %p923
        %p1975 = pneg %p947
        %p1976 = pneg %p944
        %p1977 = pneg %p968
        %p1978 = pneg %p965
        %p1979 = pneg %p989
        %p1980 = pneg %p986
        %p1981 = pneg %p1010
        %p1982 = pneg %p1007
        %p1983 = pneg %p1031
        %p1984 = pneg %p1028
        %p1985 = pneg %p1052
        %p1986 = pneg %p1049
        %p1987 = pneg %p1073
        %p1988 = pneg %p1070
        %p1989 = pneg %p1094
        %p1990 = pneg %p1091
        %p1991 = pneg %p1115
        %p1992 = pneg %p1112
        %p1993 = pneg %p1136
        %p1994 = pneg %p1133
        %p1995 = pneg %p1157
        %p1996 = pneg %p1154
        %p1997 = pneg %p1178
        %p1998 = pneg %p1175
        %p1999 = pneg %p1199
        %p2000 = pneg %p1196
        %p2001 = pneg %p1220
        %p2002 = pneg %p1217
        %p2003 = pneg %p1241
        %p2004 = pneg %p1238
        %p2005 = pneg %p1262
        %p2006 = pneg %p1259
        %p2007 = pneg %p1283
        %p2008 = pneg %p1280
        %p2009 = pneg %p1304
        %p2010 = pneg %p1301
        %p2011 = pneg %p1325
        %p2012 = pneg %p1322
        %p2013 = pneg %p1346
        %p2014 = pneg %p1343
        %p2015 = pneg %p1367
        %p2016 = pneg %p1364
        %p2017 = pneg %p1388
        %p2018 = pneg %p1385
        %p2019 = pneg %p1409
        %p2020 = pneg %p1406
        %p2021 = pneg %p1430
        %p2022 = pneg %p1427
        %p2023 = pneg %p1451
        %p2024 = pneg %p1448
        %p2025 = pneg %p1472
        %p2026 = pneg %p1469
        %p2027 = pneg %p1493
        %p2028 = pneg %p1490
        %p2029 = pneg %p1519
        %p2030 = pneg %p1516
        %s2031 = sand.u32 %s1506, 1
        %s2032 = scalar_lea.sflag [#allocation4], %s2031
        %s2033 = sand.u32 %s1506, 1
        %s2034 = smul.addr %s2033, 8
        %s2035 = scalar_lea.vmem [#allocation20], %s2034
        %p2036 = scmp.lt.s32.totalorder %s149, 1
        %s2037 = scalar_select %p2036, %s149, 1
        %s2038 = smul.addr %s2037, 4
        %s2039 = smul.addr %s2038, 8
        %s2040 = scalar_lea.vmem %s1, %s2039
        %v2041 = vld [vmem:[%s2040] sm:$0xff]
        %v2042 = vld [vmem:[%s2040 + $0x8] sm:$0xff]
        %v2043 = vld [vmem:[%s2040 + $0x10] sm:$0xff]
        %v2044 = vld [vmem:[%s2040 + $0x18] sm:$0xff]
        %vm2049 = vcmask 1040384
        %v2050 = vrot.slane %v2041, 7
        %v2051 = vrot.slane %v2042, 7
        %v2052 = vsel %vm2049, %v2050, %v2051
        %v2053 = vrot.slane %v2043, 7
        %v2054 = vsel %vm2049, %v2051, %v2053
        %v2055 = vrot.slane %v2044, 7
        %v2056 = vsel %vm2049, %v2053, %v2055
        %v2061 = vsel %vm2049, 0.0, %v2050
        %vm2062 = vcmask 1046528
        %v2063 = vrot.slane %v2041, 1
        %v2064 = vrot.slane %v2042, 1
        %v2065 = vsel %vm2062, %v2063, %v2064
        %v2066 = vrot.slane %v2043, 1
        %v2067 = vsel %vm2062, %v2064, %v2066
        %v2068 = vrot.slane %v2044, 1
        %v2069 = vsel %vm2062, %v2066, %v2068
        %v2071 = vsel %vm2062, %v2068, 0.0
        %2072 = vrot.lane.b32.xlu0 %v2041, 80
        %v2073 = vpop.permute.xlu0 %2072
        %2074 = vrot.lane.b32.xlu0 %v2042, 80
        %v2075 = vpop.permute.xlu0 %2074
        %2076 = vrot.lane.b32.xlu0 %v2043, 80
        %v2077 = vpop.permute.xlu0 %2076
        %2078 = vrot.lane.b32.xlu0 %v2044, 80
        %v2079 = vpop.permute.xlu0 %2078
        %2085 = vrot.lane.b32.xlu0 %v2065, 32
        %v2086 = vpop.permute.xlu0 %2085
        %2087 = vrot.lane.b32.xlu0 %v2067, 32
        %v2088 = vpop.permute.xlu0 %2087
        %2089 = vrot.lane.b32.xlu0 %v2069, 32
        %v2090 = vpop.permute.xlu0 %2089
        %2091 = vrot.lane.b32.xlu0 %v2071, 32
        %v2092 = vpop.permute.xlu0 %2091
        %vm2097 = vcmask 654336
        %v2098 = vsel %vm2097, %v2061, %v2073
        %v2099 = vsel %vm2097, %v2052, %v2075
        %v2100 = vsel %vm2097, %v2054, %v2077
        %v2101 = vsel %vm2097, %v2056, %v2079
        %vm2102 = vcmask 261120
        %v2103 = vsel %vm2102, %v2073, %v2086
        %v2104 = vsel %vm2102, %v2075, %v2088
        %v2105 = vsel %vm2102, %v2077, %v2090
        %v2106 = vsel %vm2102, %v2079, %v2092
        %v2107 = vld [vmem:[%s13] sm:$0xff]
        %v2108 = vld [vmem:[%s13 + $0x8] sm:$0xff]
        %v2109 = vld [vmem:[%s13 + $0x10] sm:$0xff]
        %v2110 = vld [vmem:[%s13 + $0x18] sm:$0xff]
        %v2111 = vld [vmem:[%s13 + $0x20] sm:$0xff]
        %v2112 = vld [vmem:[%s13 + $0x28] sm:$0xff]
        %v2113 = vld [vmem:[%s13 + $0x30] sm:$0xff]
        %v2114 = vld [vmem:[%s13 + $0x38] sm:$0xff]
        %v2115 = vld [vmem:[%s13 + $0x40] sm:$0xff]
        %v2116 = vld [vmem:[%s13 + $0x48] sm:$0xff]
        %v2117 = vld [vmem:[%s13 + $0x50] sm:$0xff]
        %v2118 = vld [vmem:[%s13 + $0x58] sm:$0xff]
        %v2119 = vld [vmem:[%s13 + $0x60] sm:$0xff]
        %v2120 = vld [vmem:[%s13 + $0x68] sm:$0xff]
        %v2121 = vld [vmem:[%s13 + $0x70] sm:$0xff]
        %v2122 = vld [vmem:[%s13 + $0x78] sm:$0xff]
        %v2123 = vld [vmem:[%s13 + $0x80] sm:$0xff]
        %v2124 = vld [vmem:[%s13 + $0x88] sm:$0xff]
        %v2125 = vld [vmem:[%s13 + $0x90] sm:$0xff]
        %v2126 = vld [vmem:[%s13 + $0x98] sm:$0xff]
        %v2127 = vld [vmem:[%s13 + $0xa0] sm:$0xff]
        %v2128 = vld [vmem:[%s13 + $0xa8] sm:$0xff]
        %v2129 = vld [vmem:[%s13 + $0xb0] sm:$0xff]
        %v2130 = vld [vmem:[%s13 + $0xb8] sm:$0xff]
        %v2131 = vld [vmem:[%s13 + $0xc0] sm:$0xff]
        %v2132 = vld [vmem:[%s13 + $0xc8] sm:$0xff]
        %v2133 = vld [vmem:[%s13 + $0xd0] sm:$0xff]
        %v2134 = vld [vmem:[%s13 + $0xd8] sm:$0xff]
        %v2135 = vld [vmem:[%s13 + $0xe0] sm:$0xff]
        %v2136 = vld [vmem:[%s13 + $0xe8] sm:$0xff]
        %v2137 = vld [vmem:[%s15] sm:$0x1]
        %v2139 = vperm.slane %v2137, 0
        %vm2141 = vcmask 916480
        %v2143 = vsel %vm2141, %v2103, 0
        %v2146 = vsel %vm2141, %v2104, 0
        %v2149 = vsel %vm2141, %v2105, 0
        %v2152 = vsel %vm2141, %v2106, 0
        %2154 = vmatpush.msra.mxu0 %v2122
        %2155 = vmatpush.msra.mxu0 %v2121
        %2156 = vmatpush.msra.mxu0 %v2120
        %2157 = vmatpush.msra.mxu0 %v2119
        %2158 = vmatpush.msra.mxu0 %v2118
        %2159 = vmatpush.msra.mxu0 %v2117
        %2160 = vmatpush.msra.mxu0 %v2116
        %2161 = vmatpush.msra.mxu0 %v2115
        %2162 = vmatpush.msra.mxu0 %v2114
        %2163 = vmatpush.msra.mxu0 %v2113
        %2164 = vmatpush.msra.mxu0 %v2112
        %2165 = vmatpush.msra.mxu0 %v2111
        %2166 = vmatpush.msra.mxu0 %v2110
        %2167 = vmatpush.msra.mxu0 %v2109
        %2168 = vmatpush.msra.mxu0 %v2108
        %2169 = vmatpush.msra.mxu0 %v2107
        %2170 = vmatmul.f32.gmra.mxu0 %v2098
        %v2171 = vpop.f32.mrf.mxu0
        %v2172 = vadd.f32 %v2139, %v2171
        %2173 = vmatmul.f32.gmra.mxu0 %v2099
        %v2174 = vpop.f32.mrf.mxu0
        %v2175 = vadd.f32 %v2139, %v2174
        %2176 = vmatmul.f32.gmra.mxu0 %v2100
        %v2177 = vpop.f32.mrf.mxu0
        %v2178 = vadd.f32 %v2139, %v2177
        %2179 = vmatmul.f32.gmra.mxu0 %v2101
        %v2180 = vpop.f32.mrf.mxu0
        %v2181 = vadd.f32 %v2139, %v2180
        %2182 = vdwg.mxu0
        %2183 = vmatpush.msra.mxu0 0.0
        %2184 = vmatpush.msra.mxu0 0.0
        %2185 = vmatpush.msra.mxu0 %v2136
        %2186 = vmatpush.msra.mxu0 %v2135
        %2187 = vmatpush.msra.mxu0 %v2134
        %2188 = vmatpush.msra.mxu0 %v2133
        %2189 = vmatpush.msra.mxu0 %v2132
        %2190 = vmatpush.msra.mxu0 %v2131
        %2191 = vmatpush.msra.mxu0 %v2130
        %2192 = vmatpush.msra.mxu0 %v2129
        %2193 = vmatpush.msra.mxu0 %v2128
        %2194 = vmatpush.msra.mxu0 %v2127
        %2195 = vmatpush.msra.mxu0 %v2126
        %2196 = vmatpush.msra.mxu0 %v2125
        %2197 = vmatpush.msra.mxu0 %v2124
        %2198 = vmatpush.msra.mxu0 %v2123
        %2199 = vmatmul.f32.gmra.mxu0 %v2143
        %v2200 = vpop.f32.mrf.mxu0
        %v2201 = vadd.f32 %v2172, %v2200
        %2202 = vmatmul.f32.gmra.mxu0 %v2146
        %v2203 = vpop.f32.mrf.mxu0
        %v2204 = vadd.f32 %v2175, %v2203
        %2205 = vmatmul.f32.gmra.mxu0 %v2149
        %v2206 = vpop.f32.mrf.mxu0
        %v2207 = vadd.f32 %v2178, %v2206
        %2208 = vmatmul.f32.gmra.mxu0 %v2152
        %v2209 = vpop.f32.mrf.mxu0
        %v2210 = vadd.f32 %v2181, %v2209
        %2211 = vdwg.mxu0
        %v2216 = vrot.slane %v2201, 7
        %v2217 = vrot.slane %v2204, 7
        %v2218 = vsel %vm2049, %v2216, %v2217
        %v2219 = vrot.slane %v2207, 7
        %v2220 = vsel %vm2049, %v2217, %v2219
        %v2221 = vrot.slane %v2210, 7
        %v2222 = vsel %vm2049, %v2219, %v2221
        %v2227 = vsel %vm2049, 0.0, %v2216
        %v2228 = vrot.slane %v2201, 1
        %v2229 = vrot.slane %v2204, 1
        %v2230 = vsel %vm2062, %v2228, %v2229
        %v2231 = vrot.slane %v2207, 1
        %v2232 = vsel %vm2062, %v2229, %v2231
        %v2233 = vrot.slane %v2210, 1
        %v2234 = vsel %vm2062, %v2231, %v2233
        %v2236 = vsel %vm2062, %v2233, 0.0
        %2237 = vrot.lane.b32.xlu0 %v2201, 16
        %v2238 = vpop.permute.xlu0 %2237
        %2239 = vrot.lane.b32.xlu0 %v2204, 16
        %v2240 = vpop.permute.xlu0 %2239
        %2241 = vrot.lane.b32.xlu0 %v2207, 16
        %v2242 = vpop.permute.xlu0 %2241
        %2243 = vrot.lane.b32.xlu0 %v2210, 16
        %v2244 = vpop.permute.xlu0 %2243
        %2250 = vrot.lane.b32.xlu0 %v2230, 32
        %v2251 = vpop.permute.xlu0 %2250
        %2252 = vrot.lane.b32.xlu0 %v2232, 32
        %v2253 = vpop.permute.xlu0 %2252
        %2254 = vrot.lane.b32.xlu0 %v2234, 32
        %v2255 = vpop.permute.xlu0 %2254
        %2256 = vrot.lane.b32.xlu0 %v2236, 32
        %v2257 = vpop.permute.xlu0 %2256
        %vm2262 = vcmask 130048
        %v2263 = vsel %vm2262, %v2227, %v2238
        %v2264 = vsel %vm2262, %v2218, %v2240
        %v2265 = vsel %vm2262, %v2220, %v2242
        %v2266 = vsel %vm2262, %v2222, %v2244
        %v2267 = vsel %vm2102, %v2263, %v2251
        %v2268 = vsel %vm2102, %v2264, %v2253
        %v2269 = vsel %vm2102, %v2265, %v2255
        %v2270 = vsel %vm2102, %v2266, %v2257
        %v2271 = vld [vmem:[%s17] sm:$0xff]
        %v2272 = vld [vmem:[%s17 + $0x8] sm:$0xff]
        %v2273 = vld [vmem:[%s17 + $0x10] sm:$0xff]
        %v2274 = vld [vmem:[%s17 + $0x18] sm:$0xff]
        %v2275 = vld [vmem:[%s17 + $0x20] sm:$0xff]
        %v2276 = vld [vmem:[%s17 + $0x28] sm:$0xff]
        %v2277 = vld [vmem:[%s19] sm:$0x1]
        %v2279 = vperm.slane %v2277, 0
        %vm2281 = vcmask 392192
        %v2283 = vsel %vm2281, %v2267, 0
        %v2286 = vsel %vm2281, %v2268, 0
        %v2289 = vsel %vm2281, %v2269, 0
        %v2292 = vsel %vm2281, %v2270, 0
        %2294 = vmatpush.msra.mxu0 0.0
        %2295 = vmatpush.msra.mxu0 0.0
        %2296 = vmatpush.msra.mxu0 0.0
        %2297 = vmatpush.msra.mxu0 0.0
        %2298 = vmatpush.msra.mxu0 0.0
        %2299 = vmatpush.msra.mxu0 0.0
        %2300 = vmatpush.msra.mxu0 0.0
        %2301 = vmatpush.msra.mxu0 0.0
        %2302 = vmatpush.msra.mxu0 0.0
        %2303 = vmatpush.msra.mxu0 0.0
        %2304 = vmatpush.msra.mxu0 %v2276
        %2305 = vmatpush.msra.mxu0 %v2275
        %2306 = vmatpush.msra.mxu0 %v2274
        %2307 = vmatpush.msra.mxu0 %v2273
        %2308 = vmatpush.msra.mxu0 %v2272
        %2309 = vmatpush.msra.mxu0 %v2271
        %2310 = vmatmul.f32.gmra.mxu0 %v2283
        %v2311 = vpop.f32.mrf.mxu0
        %v2312 = vadd.f32 %v2279, %v2311
        %2313 = vmatmul.f32.gmra.mxu0 %v2286
        %v2314 = vpop.f32.mrf.mxu0
        %v2315 = vadd.f32 %v2279, %v2314
        %2316 = vmatmul.f32.gmra.mxu0 %v2289
        %v2317 = vpop.f32.mrf.mxu0
        %v2318 = vadd.f32 %v2279, %v2317
        %2319 = vmatmul.f32.gmra.mxu0 %v2292
        %v2320 = vpop.f32.mrf.mxu0
        %v2321 = vadd.f32 %v2279, %v2320
        %2322 = vdwg.mxu0
        %v2323 = vsel %vm2262, %v2312, 0.0
        %v2324 = vsel %vm2262, %v2315, 0.0
        %v2325 = vadd.f32 %v2323, %v2324
        %v2326 = vsel %vm2262, %v2318, 0.0
        %v2327 = vadd.f32 %v2325, %v2326
        %v2328 = vsel %vm2262, %v2321, 0.0
        %v2329 = vadd.f32 %v2327, %v2328
        %v2330 = vrot.slane %v2329, 4
        %v2331 = vadd.f32 %v2329, %v2330
        %v2332 = vrot.slane %v2331, 2
        %v2333 = vadd.f32 %v2331, %v2332
        %v2334 = vrot.slane %v2333, 1
        %v2335 = vadd.f32 %v2333, %v2334
        %v2336 = vld [vmem:[%s3] sm:$0xff]
        %v2337 = vld [vmem:[%s3 + $0x8] sm:$0xff]
        %v2339 = vsel %vm2262, %v2335, 0
        %2341 = vmatpush.msra.mxu0 0.0
        %2342 = vmatpush.msra.mxu0 0.0
        %2343 = vmatpush.msra.mxu0 0.0
        %2344 = vmatpush.msra.mxu0 0.0
        %2345 = vmatpush.msra.mxu0 0.0
        %2346 = vmatpush.msra.mxu0 0.0
        %2347 = vmatpush.msra.mxu0 0.0
        %2348 = vmatpush.msra.mxu0 0.0
        %2349 = vmatpush.msra.mxu0 0.0
        %2350 = vmatpush.msra.mxu0 0.0
        %2351 = vmatpush.msra.mxu0 0.0
        %2352 = vmatpush.msra.mxu0 0.0
        %2353 = vmatpush.msra.mxu0 0.0
        %2354 = vmatpush.msra.mxu0 0.0
        %2355 = vmatpush.msra.mxu0 %v2337
        %2356 = vmatpush.msra.mxu0 %v2336
        %2357 = vmatmul.f32.gmra.mxu0 %v2339
        %v2358 = vpop.f32.mrf.mxu0
        %v2359 = vadd.f32 0.0, %v2358
        %2360 = vdwg.mxu0
        %v2361 = vperm.slane %v2359, 0
        %v2362 = vsub.f32 %v2312, %v2361
        %v2363 = vsub.f32 %v2315, %v2361
        %v2364 = vsub.f32 %v2318, %v2361
        %v2365 = vsub.f32 %v2321, %v2361
        %v2366 = vmul.f32 %v2362, %v2362
        %v2367 = vmul.f32 %v2363, %v2363
        %v2368 = vmul.f32 %v2364, %v2364
        %v2369 = vmul.f32 %v2365, %v2365
        %v2370 = vsel %vm2262, %v2366, 0.0
        %v2371 = vsel %vm2262, %v2367, 0.0
        %v2372 = vadd.f32 %v2370, %v2371
        %v2373 = vsel %vm2262, %v2368, 0.0
        %v2374 = vadd.f32 %v2372, %v2373
        %v2375 = vsel %vm2262, %v2369, 0.0
        %v2376 = vadd.f32 %v2374, %v2375
        %v2377 = vrot.slane %v2376, 4
        %v2378 = vadd.f32 %v2376, %v2377
        %v2379 = vrot.slane %v2378, 2
        %v2380 = vadd.f32 %v2378, %v2379
        %v2381 = vrot.slane %v2380, 1
        %v2382 = vadd.f32 %v2380, %v2381
        %v2384 = vsel %vm2262, %v2382, 0
        %2386 = vmatpush.msra.mxu0 0.0
        %2387 = vmatpush.msra.mxu0 0.0
        %2388 = vmatpush.msra.mxu0 0.0
        %2389 = vmatpush.msra.mxu0 0.0
        %2390 = vmatpush.msra.mxu0 0.0
        %2391 = vmatpush.msra.mxu0 0.0
        %2392 = vmatpush.msra.mxu0 0.0
        %2393 = vmatpush.msra.mxu0 0.0
        %2394 = vmatpush.msra.mxu0 0.0
        %2395 = vmatpush.msra.mxu0 0.0
        %2396 = vmatpush.msra.mxu0 0.0
        %2397 = vmatpush.msra.mxu0 0.0
        %2398 = vmatpush.msra.mxu0 0.0
        %2399 = vmatpush.msra.mxu0 0.0
        %2400 = vmatpush.msra.mxu0 %v2337
        %2401 = vmatpush.msra.mxu0 %v2336
        %2402 = vmatmul.f32.gmra.mxu0 %v2384
        %v2403 = vpop.f32.mrf.mxu0
        %v2404 = vadd.f32 1e-05, %v2403
        %2405 = vdwg.mxu0
        %v2406 = vrsqrt.pop %v2404
        %v2407 = vmul.f32 %v2406, %v2404
        %v2408 = vmul.f32 %v2407, %v2406
        %v2409 = vmul.f32 0.5, %v2408
        %v2410 = vsub.f32 1.5, %v2409
        %v2411 = vmul.f32 %v2406, %v2410
        %vm2412 = vweird.f32 %v2404
        %vm2413 = vweird.f32 %v2406
        %vm2414 = vmor %vm2412, %vm2413
        %v2415 = vsel %vm2414, %v2406, %v2411
        %v2416 = vperm.slane %v2415, 0
        %v2417 = vmul.f32 %v2362, %v2416
        %v2418 = vmul.f32 %v2363, %v2416
        %v2419 = vmul.f32 %v2364, %v2416
        %v2420 = vmul.f32 %v2365, %v2416
        %v2421 = vld [vmem:[%s21] sm:$0x1]
        %v2423 = vperm.slane %v2421, 0
        %v2425 = vmul.f32 %v2417, %v2423
        %v2426 = vmul.f32 %v2418, %v2423
        %v2427 = vmul.f32 %v2419, %v2423
        %v2428 = vmul.f32 %v2420, %v2423
        %v2429 = vld [vmem:[%s23] sm:$0x1]
        %v2431 = vperm.slane %v2429, 0
        %v2433 = vadd.f32 %v2425, %v2431
        %v2434 = vadd.f32 %v2426, %v2431
        %v2435 = vadd.f32 %v2427, %v2431
        %v2436 = vadd.f32 %v2428, %v2431
        %v2437 = vmax.f32 %v2433, 0.0
        %v2438 = vmax.f32 %v2434, 0.0
        %v2439 = vmax.f32 %v2435, 0.0
        %v2440 = vmax.f32 %v2436, 0.0
        %v2445 = vrot.slane %v2437, 7
        %v2446 = vrot.slane %v2438, 7
        %v2447 = vsel %vm2049, %v2445, %v2446
        %v2448 = vrot.slane %v2439, 7
        %v2449 = vsel %vm2049, %v2446, %v2448
        %v2450 = vrot.slane %v2440, 7
        %v2451 = vsel %vm2049, %v2448, %v2450
        %v2456 = vsel %vm2049, 0.0, %v2445
        %v2457 = vrot.slane %v2437, 1
        %v2458 = vrot.slane %v2438, 1
        %v2459 = vsel %vm2062, %v2457, %v2458
        %v2460 = vrot.slane %v2439, 1
        %v2461 = vsel %vm2062, %v2458, %v2460
        %v2462 = vrot.slane %v2440, 1
        %v2463 = vsel %vm2062, %v2460, %v2462
        %v2465 = vsel %vm2062, %v2462, 0.0
        %2466 = vrot.lane.b32.xlu0 %v2437, 16
        %v2467 = vpop.permute.xlu0 %2466
        %2468 = vrot.lane.b32.xlu0 %v2438, 16
        %v2469 = vpop.permute.xlu0 %2468
        %2470 = vrot.lane.b32.xlu0 %v2439, 16
        %v2471 = vpop.permute.xlu0 %2470
        %2472 = vrot.lane.b32.xlu0 %v2440, 16
        %v2473 = vpop.permute.xlu0 %2472
        %2479 = vrot.lane.b32.xlu0 %v2459, 32
        %v2480 = vpop.permute.xlu0 %2479
        %2481 = vrot.lane.b32.xlu0 %v2461, 32
        %v2482 = vpop.permute.xlu0 %2481
        %2483 = vrot.lane.b32.xlu0 %v2463, 32
        %v2484 = vpop.permute.xlu0 %2483
        %2485 = vrot.lane.b32.xlu0 %v2465, 32
        %v2486 = vpop.permute.xlu0 %2485
        %v2491 = vsel %vm2262, %v2456, %v2467
        %v2492 = vsel %vm2262, %v2447, %v2469
        %v2493 = vsel %vm2262, %v2449, %v2471
        %v2494 = vsel %vm2262, %v2451, %v2473
        %v2495 = vsel %vm2102, %v2491, %v2480
        %v2496 = vsel %vm2102, %v2492, %v2482
        %v2497 = vsel %vm2102, %v2493, %v2484
        %v2498 = vsel %vm2102, %v2494, %v2486
        %v2499 = vld [vmem:[%s25] sm:$0xff]
        %v2500 = vld [vmem:[%s25 + $0x8] sm:$0xff]
        %v2501 = vld [vmem:[%s25 + $0x10] sm:$0xff]
        %v2502 = vld [vmem:[%s25 + $0x18] sm:$0xff]
        %v2503 = vld [vmem:[%s25 + $0x20] sm:$0xff]
        %v2504 = vld [vmem:[%s25 + $0x28] sm:$0xff]
        %v2505 = vld [vmem:[%s27] sm:$0x1]
        %v2507 = vperm.slane %v2505, 0
        %v2510 = vsel %vm2281, %v2495, 0
        %v2513 = vsel %vm2281, %v2496, 0
        %v2516 = vsel %vm2281, %v2497, 0
        %v2519 = vsel %vm2281, %v2498, 0
        %2521 = vmatpush.msra.mxu0 0.0
        %2522 = vmatpush.msra.mxu0 0.0
        %2523 = vmatpush.msra.mxu0 0.0
        %2524 = vmatpush.msra.mxu0 0.0
        %2525 = vmatpush.msra.mxu0 0.0
        %2526 = vmatpush.msra.mxu0 0.0
        %2527 = vmatpush.msra.mxu0 0.0
        %2528 = vmatpush.msra.mxu0 0.0
        %2529 = vmatpush.msra.mxu0 0.0
        %2530 = vmatpush.msra.mxu0 0.0
        %2531 = vmatpush.msra.mxu0 %v2504
        %2532 = vmatpush.msra.mxu0 %v2503
        %2533 = vmatpush.msra.mxu0 %v2502
        %2534 = vmatpush.msra.mxu0 %v2501
        %2535 = vmatpush.msra.mxu0 %v2500
        %2536 = vmatpush.msra.mxu0 %v2499
        %2537 = vmatmul.f32.gmra.mxu0 %v2510
        %v2538 = vpop.f32.mrf.mxu0
        %v2539 = vadd.f32 %v2507, %v2538
        %2540 = vmatmul.f32.gmra.mxu0 %v2513
        %v2541 = vpop.f32.mrf.mxu0
        %v2542 = vadd.f32 %v2507, %v2541
        %2543 = vmatmul.f32.gmra.mxu0 %v2516
        %v2544 = vpop.f32.mrf.mxu0
        %v2545 = vadd.f32 %v2507, %v2544
        %2546 = vmatmul.f32.gmra.mxu0 %v2519
        %v2547 = vpop.f32.mrf.mxu0
        %v2548 = vadd.f32 %v2507, %v2547
        %2549 = vdwg.mxu0
        %v2550 = vsel %vm2262, %v2539, 0.0
        %v2551 = vsel %vm2262, %v2542, 0.0
        %v2552 = vadd.f32 %v2550, %v2551
        %v2553 = vsel %vm2262, %v2545, 0.0
        %v2554 = vadd.f32 %v2552, %v2553
        %v2555 = vsel %vm2262, %v2548, 0.0
        %v2556 = vadd.f32 %v2554, %v2555
        %v2557 = vrot.slane %v2556, 4
        %v2558 = vadd.f32 %v2556, %v2557
        %v2559 = vrot.slane %v2558, 2
        %v2560 = vadd.f32 %v2558, %v2559
        %v2561 = vrot.slane %v2560, 1
        %v2562 = vadd.f32 %v2560, %v2561
        %v2564 = vsel %vm2262, %v2562, 0
        %2566 = vmatpush.msra.mxu0 0.0
        %2567 = vmatpush.msra.mxu0 0.0
        %2568 = vmatpush.msra.mxu0 0.0
        %2569 = vmatpush.msra.mxu0 0.0
        %2570 = vmatpush.msra.mxu0 0.0
        %2571 = vmatpush.msra.mxu0 0.0
        %2572 = vmatpush.msra.mxu0 0.0
        %2573 = vmatpush.msra.mxu0 0.0
        %2574 = vmatpush.msra.mxu0 0.0
        %2575 = vmatpush.msra.mxu0 0.0
        %2576 = vmatpush.msra.mxu0 0.0
        %2577 = vmatpush.msra.mxu0 0.0
        %2578 = vmatpush.msra.mxu0 0.0
        %2579 = vmatpush.msra.mxu0 0.0
        %2580 = vmatpush.msra.mxu0 %v2337
        %2581 = vmatpush.msra.mxu0 %v2336
        %2582 = vmatmul.f32.gmra.mxu0 %v2564
        %v2583 = vpop.f32.mrf.mxu0
        %v2584 = vadd.f32 0.0, %v2583
        %2585 = vdwg.mxu0
        %v2586 = vperm.slane %v2584, 0
        %v2587 = vsub.f32 %v2539, %v2586
        %v2588 = vsub.f32 %v2542, %v2586
        %v2589 = vsub.f32 %v2545, %v2586
        %v2590 = vsub.f32 %v2548, %v2586
        %v2591 = vmul.f32 %v2587, %v2587
        %v2592 = vmul.f32 %v2588, %v2588
        %v2593 = vmul.f32 %v2589, %v2589
        %v2594 = vmul.f32 %v2590, %v2590
        %v2595 = vsel %vm2262, %v2591, 0.0
        %v2596 = vsel %vm2262, %v2592, 0.0
        %v2597 = vadd.f32 %v2595, %v2596
        %v2598 = vsel %vm2262, %v2593, 0.0
        %v2599 = vadd.f32 %v2597, %v2598
        %v2600 = vsel %vm2262, %v2594, 0.0
        %v2601 = vadd.f32 %v2599, %v2600
        %v2602 = vrot.slane %v2601, 4
        %v2603 = vadd.f32 %v2601, %v2602
        %v2604 = vrot.slane %v2603, 2
        %v2605 = vadd.f32 %v2603, %v2604
        %v2606 = vrot.slane %v2605, 1
        %v2607 = vadd.f32 %v2605, %v2606
        %v2609 = vsel %vm2262, %v2607, 0
        %2611 = vmatpush.msra.mxu0 0.0
        %2612 = vmatpush.msra.mxu0 0.0
        %2613 = vmatpush.msra.mxu0 0.0
        %2614 = vmatpush.msra.mxu0 0.0
        %2615 = vmatpush.msra.mxu0 0.0
        %2616 = vmatpush.msra.mxu0 0.0
        %2617 = vmatpush.msra.mxu0 0.0
        %2618 = vmatpush.msra.mxu0 0.0
        %2619 = vmatpush.msra.mxu0 0.0
        %2620 = vmatpush.msra.mxu0 0.0
        %2621 = vmatpush.msra.mxu0 0.0
        %2622 = vmatpush.msra.mxu0 0.0
        %2623 = vmatpush.msra.mxu0 0.0
        %2624 = vmatpush.msra.mxu0 0.0
        %2625 = vmatpush.msra.mxu0 %v2337
        %2626 = vmatpush.msra.mxu0 %v2336
        %2627 = vmatmul.f32.gmra.mxu0 %v2609
        %v2628 = vpop.f32.mrf.mxu0
        %v2629 = vadd.f32 1e-05, %v2628
        %2630 = vdwg.mxu0
        %v2631 = vrsqrt.pop %v2629
        %v2632 = vmul.f32 %v2631, %v2629
        %v2633 = vmul.f32 %v2632, %v2631
        %v2634 = vmul.f32 0.5, %v2633
        %v2635 = vsub.f32 1.5, %v2634
        %v2636 = vmul.f32 %v2631, %v2635
        %vm2637 = vweird.f32 %v2629
        %vm2638 = vweird.f32 %v2631
        %vm2639 = vmor %vm2637, %vm2638
        %v2640 = vsel %vm2639, %v2631, %v2636
        %v2641 = vperm.slane %v2640, 0
        %v2642 = vmul.f32 %v2587, %v2641
        %v2643 = vmul.f32 %v2588, %v2641
        %v2644 = vmul.f32 %v2589, %v2641
        %v2645 = vmul.f32 %v2590, %v2641
        %v2646 = vld [vmem:[%s29] sm:$0x1]
        %v2648 = vperm.slane %v2646, 0
        %v2650 = vmul.f32 %v2642, %v2648
        %v2651 = vmul.f32 %v2643, %v2648
        %v2652 = vmul.f32 %v2644, %v2648
        %v2653 = vmul.f32 %v2645, %v2648
        %v2654 = vld [vmem:[%s31] sm:$0x1]
        %v2656 = vperm.slane %v2654, 0
        %v2658 = vadd.f32 %v2650, %v2656
        %v2659 = vadd.f32 %v2651, %v2656
        %v2660 = vadd.f32 %v2652, %v2656
        %v2661 = vadd.f32 %v2653, %v2656
        %v2662 = vadd.f32 %v2658, %v2201
        %v2663 = vadd.f32 %v2659, %v2204
        %v2664 = vadd.f32 %v2660, %v2207
        %v2665 = vadd.f32 %v2661, %v2210
        %v2666 = vmax.f32 %v2662, 0.0
        %v2667 = vmax.f32 %v2663, 0.0
        %v2668 = vmax.f32 %v2664, 0.0
        %v2669 = vmax.f32 %v2665, 0.0
        %v2674 = vrot.slane %v2666, 7
        %v2675 = vrot.slane %v2667, 7
        %v2676 = vsel %vm2049, %v2674, %v2675
        %v2677 = vrot.slane %v2668, 7
        %v2678 = vsel %vm2049, %v2675, %v2677
        %v2679 = vrot.slane %v2669, 7
        %v2680 = vsel %vm2049, %v2677, %v2679
        %v2685 = vsel %vm2049, 0.0, %v2674
        %v2686 = vrot.slane %v2666, 1
        %v2687 = vrot.slane %v2667, 1
        %v2688 = vsel %vm2062, %v2686, %v2687
        %v2689 = vrot.slane %v2668, 1
        %v2690 = vsel %vm2062, %v2687, %v2689
        %v2691 = vrot.slane %v2669, 1
        %v2692 = vsel %vm2062, %v2689, %v2691
        %v2694 = vsel %vm2062, %v2691, 0.0
        %2695 = vrot.lane.b32.xlu0 %v2666, 16
        %v2696 = vpop.permute.xlu0 %2695
        %2697 = vrot.lane.b32.xlu0 %v2667, 16
        %v2698 = vpop.permute.xlu0 %2697
        %2699 = vrot.lane.b32.xlu0 %v2668, 16
        %v2700 = vpop.permute.xlu0 %2699
        %2701 = vrot.lane.b32.xlu0 %v2669, 16
        %v2702 = vpop.permute.xlu0 %2701
        %2708 = vrot.lane.b32.xlu0 %v2688, 32
        %v2709 = vpop.permute.xlu0 %2708
        %2710 = vrot.lane.b32.xlu0 %v2690, 32
        %v2711 = vpop.permute.xlu0 %2710
        %2712 = vrot.lane.b32.xlu0 %v2692, 32
        %v2713 = vpop.permute.xlu0 %2712
        %2714 = vrot.lane.b32.xlu0 %v2694, 32
        %v2715 = vpop.permute.xlu0 %2714
        %v2720 = vsel %vm2262, %v2685, %v2696
        %v2721 = vsel %vm2262, %v2676, %v2698
        %v2722 = vsel %vm2262, %v2678, %v2700
        %v2723 = vsel %vm2262, %v2680, %v2702
        %v2724 = vsel %vm2102, %v2720, %v2709
        %v2725 = vsel %vm2102, %v2721, %v2711
        %v2726 = vsel %vm2102, %v2722, %v2713
        %v2727 = vsel %vm2102, %v2723, %v2715
        %v2728 = vld [vmem:[%s33] sm:$0xff]
        %v2729 = vld [vmem:[%s33 + $0x8] sm:$0xff]
        %v2730 = vld [vmem:[%s33 + $0x10] sm:$0xff]
        %v2731 = vld [vmem:[%s33 + $0x18] sm:$0xff]
        %v2732 = vld [vmem:[%s33 + $0x20] sm:$0xff]
        %v2733 = vld [vmem:[%s33 + $0x28] sm:$0xff]
        %v2734 = vld [vmem:[%s35] sm:$0x1]
        %v2736 = vperm.slane %v2734, 0
        %v2739 = vsel %vm2281, %v2724, 0
        %v2742 = vsel %vm2281, %v2725, 0
        %v2745 = vsel %vm2281, %v2726, 0
        %v2748 = vsel %vm2281, %v2727, 0
        %2750 = vmatpush.msra.mxu0 0.0
        %2751 = vmatpush.msra.mxu0 0.0
        %2752 = vmatpush.msra.mxu0 0.0
        %2753 = vmatpush.msra.mxu0 0.0
        %2754 = vmatpush.msra.mxu0 0.0
        %2755 = vmatpush.msra.mxu0 0.0
        %2756 = vmatpush.msra.mxu0 0.0
        %2757 = vmatpush.msra.mxu0 0.0
        %2758 = vmatpush.msra.mxu0 0.0
        %2759 = vmatpush.msra.mxu0 0.0
        %2760 = vmatpush.msra.mxu0 %v2733
        %2761 = vmatpush.msra.mxu0 %v2732
        %2762 = vmatpush.msra.mxu0 %v2731
        %2763 = vmatpush.msra.mxu0 %v2730
        %2764 = vmatpush.msra.mxu0 %v2729
        %2765 = vmatpush.msra.mxu0 %v2728
        %2766 = vmatmul.f32.gmra.mxu0 %v2739
        %v2767 = vpop.f32.mrf.mxu0
        %v2768 = vadd.f32 %v2736, %v2767
        %2769 = vmatmul.f32.gmra.mxu0 %v2742
        %v2770 = vpop.f32.mrf.mxu0
        %v2771 = vadd.f32 %v2736, %v2770
        %2772 = vmatmul.f32.gmra.mxu0 %v2745
        %v2773 = vpop.f32.mrf.mxu0
        %v2774 = vadd.f32 %v2736, %v2773
        %2775 = vmatmul.f32.gmra.mxu0 %v2748
        %v2776 = vpop.f32.mrf.mxu0
        %v2777 = vadd.f32 %v2736, %v2776
        %2778 = vdwg.mxu0
        %v2779 = vsel %vm2262, %v2768, 0.0
        %v2780 = vsel %vm2262, %v2771, 0.0
        %v2781 = vadd.f32 %v2779, %v2780
        %v2782 = vsel %vm2262, %v2774, 0.0
        %v2783 = vadd.f32 %v2781, %v2782
        %v2784 = vsel %vm2262, %v2777, 0.0
        %v2785 = vadd.f32 %v2783, %v2784
        %v2786 = vrot.slane %v2785, 4
        %v2787 = vadd.f32 %v2785, %v2786
        %v2788 = vrot.slane %v2787, 2
        %v2789 = vadd.f32 %v2787, %v2788
        %v2790 = vrot.slane %v2789, 1
        %v2791 = vadd.f32 %v2789, %v2790
        %v2793 = vsel %vm2262, %v2791, 0
        %2795 = vmatpush.msra.mxu0 0.0
        %2796 = vmatpush.msra.mxu0 0.0
        %2797 = vmatpush.msra.mxu0 0.0
        %2798 = vmatpush.msra.mxu0 0.0
        %2799 = vmatpush.msra.mxu0 0.0
        %2800 = vmatpush.msra.mxu0 0.0
        %2801 = vmatpush.msra.mxu0 0.0
        %2802 = vmatpush.msra.mxu0 0.0
        %2803 = vmatpush.msra.mxu0 0.0
        %2804 = vmatpush.msra.mxu0 0.0
        %2805 = vmatpush.msra.mxu0 0.0
        %2806 = vmatpush.msra.mxu0 0.0
        %2807 = vmatpush.msra.mxu0 0.0
        %2808 = vmatpush.msra.mxu0 0.0
        %2809 = vmatpush.msra.mxu0 %v2337
        %2810 = vmatpush.msra.mxu0 %v2336
        %2811 = vmatmul.f32.gmra.mxu0 %v2793
        %v2812 = vpop.f32.mrf.mxu0
        %v2813 = vadd.f32 0.0, %v2812
        %2814 = vdwg.mxu0
        %v2815 = vperm.slane %v2813, 0
        %v2816 = vsub.f32 %v2768, %v2815
        %v2817 = vsub.f32 %v2771, %v2815
        %v2818 = vsub.f32 %v2774, %v2815
        %v2819 = vsub.f32 %v2777, %v2815
        %v2820 = vmul.f32 %v2816, %v2816
        %v2821 = vmul.f32 %v2817, %v2817
        %v2822 = vmul.f32 %v2818, %v2818
        %v2823 = vmul.f32 %v2819, %v2819
        %v2824 = vsel %vm2262, %v2820, 0.0
        %v2825 = vsel %vm2262, %v2821, 0.0
        %v2826 = vadd.f32 %v2824, %v2825
        %v2827 = vsel %vm2262, %v2822, 0.0
        %v2828 = vadd.f32 %v2826, %v2827
        %v2829 = vsel %vm2262, %v2823, 0.0
        %v2830 = vadd.f32 %v2828, %v2829
        %v2831 = vrot.slane %v2830, 4
        %v2832 = vadd.f32 %v2830, %v2831
        %v2833 = vrot.slane %v2832, 2
        %v2834 = vadd.f32 %v2832, %v2833
        %v2835 = vrot.slane %v2834, 1
        %v2836 = vadd.f32 %v2834, %v2835
        %v2838 = vsel %vm2262, %v2836, 0
        %2840 = vmatpush.msra.mxu0 0.0
        %2841 = vmatpush.msra.mxu0 0.0
        %2842 = vmatpush.msra.mxu0 0.0
        %2843 = vmatpush.msra.mxu0 0.0
        %2844 = vmatpush.msra.mxu0 0.0
        %2845 = vmatpush.msra.mxu0 0.0
        %2846 = vmatpush.msra.mxu0 0.0
        %2847 = vmatpush.msra.mxu0 0.0
        %2848 = vmatpush.msra.mxu0 0.0
        %2849 = vmatpush.msra.mxu0 0.0
        %2850 = vmatpush.msra.mxu0 0.0
        %2851 = vmatpush.msra.mxu0 0.0
        %2852 = vmatpush.msra.mxu0 0.0
        %2853 = vmatpush.msra.mxu0 0.0
        %2854 = vmatpush.msra.mxu0 %v2337
        %2855 = vmatpush.msra.mxu0 %v2336
        %2856 = vmatmul.f32.gmra.mxu0 %v2838
        %v2857 = vpop.f32.mrf.mxu0
        %v2858 = vadd.f32 1e-05, %v2857
        %2859 = vdwg.mxu0
        %v2860 = vrsqrt.pop %v2858
        %v2861 = vmul.f32 %v2860, %v2858
        %v2862 = vmul.f32 %v2861, %v2860
        %v2863 = vmul.f32 0.5, %v2862
        %v2864 = vsub.f32 1.5, %v2863
        %v2865 = vmul.f32 %v2860, %v2864
        %vm2866 = vweird.f32 %v2858
        %vm2867 = vweird.f32 %v2860
        %vm2868 = vmor %vm2866, %vm2867
        %v2869 = vsel %vm2868, %v2860, %v2865
        %v2870 = vperm.slane %v2869, 0
        %v2871 = vmul.f32 %v2816, %v2870
        %v2872 = vmul.f32 %v2817, %v2870
        %v2873 = vmul.f32 %v2818, %v2870
        %v2874 = vmul.f32 %v2819, %v2870
        %v2875 = vld [vmem:[%s37] sm:$0x1]
        %v2877 = vperm.slane %v2875, 0
        %v2879 = vmul.f32 %v2871, %v2877
        %v2880 = vmul.f32 %v2872, %v2877
        %v2881 = vmul.f32 %v2873, %v2877
        %v2882 = vmul.f32 %v2874, %v2877
        %v2883 = vld [vmem:[%s39] sm:$0x1]
        %v2885 = vperm.slane %v2883, 0
        %v2887 = vadd.f32 %v2879, %v2885
        %v2888 = vadd.f32 %v2880, %v2885
        %v2889 = vadd.f32 %v2881, %v2885
        %v2890 = vadd.f32 %v2882, %v2885
        %v2891 = vmax.f32 %v2887, 0.0
        %v2892 = vmax.f32 %v2888, 0.0
        %v2893 = vmax.f32 %v2889, 0.0
        %v2894 = vmax.f32 %v2890, 0.0
        %v2899 = vrot.slane %v2891, 7
        %v2900 = vrot.slane %v2892, 7
        %v2901 = vsel %vm2049, %v2899, %v2900
        %v2902 = vrot.slane %v2893, 7
        %v2903 = vsel %vm2049, %v2900, %v2902
        %v2904 = vrot.slane %v2894, 7
        %v2905 = vsel %vm2049, %v2902, %v2904
        %v2910 = vsel %vm2049, 0.0, %v2899
        %v2911 = vrot.slane %v2891, 1
        %v2912 = vrot.slane %v2892, 1
        %v2913 = vsel %vm2062, %v2911, %v2912
        %v2914 = vrot.slane %v2893, 1
        %v2915 = vsel %vm2062, %v2912, %v2914
        %v2916 = vrot.slane %v2894, 1
        %v2917 = vsel %vm2062, %v2914, %v2916
        %v2919 = vsel %vm2062, %v2916, 0.0
        %2920 = vrot.lane.b32.xlu0 %v2891, 16
        %v2921 = vpop.permute.xlu0 %2920
        %2922 = vrot.lane.b32.xlu0 %v2892, 16
        %v2923 = vpop.permute.xlu0 %2922
        %2924 = vrot.lane.b32.xlu0 %v2893, 16
        %v2925 = vpop.permute.xlu0 %2924
        %2926 = vrot.lane.b32.xlu0 %v2894, 16
        %v2927 = vpop.permute.xlu0 %2926
        %2933 = vrot.lane.b32.xlu0 %v2913, 32
        %v2934 = vpop.permute.xlu0 %2933
        %2935 = vrot.lane.b32.xlu0 %v2915, 32
        %v2936 = vpop.permute.xlu0 %2935
        %2937 = vrot.lane.b32.xlu0 %v2917, 32
        %v2938 = vpop.permute.xlu0 %2937
        %2939 = vrot.lane.b32.xlu0 %v2919, 32
        %v2940 = vpop.permute.xlu0 %2939
        %v2945 = vsel %vm2262, %v2910, %v2921
        %v2946 = vsel %vm2262, %v2901, %v2923
        %v2947 = vsel %vm2262, %v2903, %v2925
        %v2948 = vsel %vm2262, %v2905, %v2927
        %v2949 = vsel %vm2102, %v2945, %v2934
        %v2950 = vsel %vm2102, %v2946, %v2936
        %v2951 = vsel %vm2102, %v2947, %v2938
        %v2952 = vsel %vm2102, %v2948, %v2940
        %v2953 = vld [vmem:[%s41] sm:$0xff]
        %v2954 = vld [vmem:[%s41 + $0x8] sm:$0xff]
        %v2955 = vld [vmem:[%s41 + $0x10] sm:$0xff]
        %v2956 = vld [vmem:[%s41 + $0x18] sm:$0xff]
        %v2957 = vld [vmem:[%s41 + $0x20] sm:$0xff]
        %v2958 = vld [vmem:[%s41 + $0x28] sm:$0xff]
        %v2959 = vld [vmem:[%s43] sm:$0x1]
        %v2961 = vperm.slane %v2959, 0
        %v2964 = vsel %vm2281, %v2949, 0
        %v2967 = vsel %vm2281, %v2950, 0
        %v2970 = vsel %vm2281, %v2951, 0
        %v2973 = vsel %vm2281, %v2952, 0
        %2975 = vmatpush.msra.mxu0 0.0
        %2976 = vmatpush.msra.mxu0 0.0
        %2977 = vmatpush.msra.mxu0 0.0
        %2978 = vmatpush.msra.mxu0 0.0
        %2979 = vmatpush.msra.mxu0 0.0
        %2980 = vmatpush.msra.mxu0 0.0
        %2981 = vmatpush.msra.mxu0 0.0
        %2982 = vmatpush.msra.mxu0 0.0
        %2983 = vmatpush.msra.mxu0 0.0
        %2984 = vmatpush.msra.mxu0 0.0
        %2985 = vmatpush.msra.mxu0 %v2958
        %2986 = vmatpush.msra.mxu0 %v2957
        %2987 = vmatpush.msra.mxu0 %v2956
        %2988 = vmatpush.msra.mxu0 %v2955
        %2989 = vmatpush.msra.mxu0 %v2954
        %2990 = vmatpush.msra.mxu0 %v2953
        %2991 = vmatmul.f32.gmra.mxu0 %v2964
        %v2992 = vpop.f32.mrf.mxu0
        %v2993 = vadd.f32 %v2961, %v2992
        %2994 = vmatmul.f32.gmra.mxu0 %v2967
        %v2995 = vpop.f32.mrf.mxu0
        %v2996 = vadd.f32 %v2961, %v2995
        %2997 = vmatmul.f32.gmra.mxu0 %v2970
        %v2998 = vpop.f32.mrf.mxu0
        %v2999 = vadd.f32 %v2961, %v2998
        %3000 = vmatmul.f32.gmra.mxu0 %v2973
        %v3001 = vpop.f32.mrf.mxu0
        %v3002 = vadd.f32 %v2961, %v3001
        %3003 = vdwg.mxu0
        %v3004 = vsel %vm2262, %v2993, 0.0
        %v3005 = vsel %vm2262, %v2996, 0.0
        %v3006 = vadd.f32 %v3004, %v3005
        %v3007 = vsel %vm2262, %v2999, 0.0
        %v3008 = vadd.f32 %v3006, %v3007
        %v3009 = vsel %vm2262, %v3002, 0.0
        %v3010 = vadd.f32 %v3008, %v3009
        %v3011 = vrot.slane %v3010, 4
        %v3012 = vadd.f32 %v3010, %v3011
        %v3013 = vrot.slane %v3012, 2
        %v3014 = vadd.f32 %v3012, %v3013
        %v3015 = vrot.slane %v3014, 1
        %v3016 = vadd.f32 %v3014, %v3015
        %v3018 = vsel %vm2262, %v3016, 0
        %3020 = vmatpush.msra.mxu0 0.0
        %3021 = vmatpush.msra.mxu0 0.0
        %3022 = vmatpush.msra.mxu0 0.0
        %3023 = vmatpush.msra.mxu0 0.0
        %3024 = vmatpush.msra.mxu0 0.0
        %3025 = vmatpush.msra.mxu0 0.0
        %3026 = vmatpush.msra.mxu0 0.0
        %3027 = vmatpush.msra.mxu0 0.0
        %3028 = vmatpush.msra.mxu0 0.0
        %3029 = vmatpush.msra.mxu0 0.0
        %3030 = vmatpush.msra.mxu0 0.0
        %3031 = vmatpush.msra.mxu0 0.0
        %3032 = vmatpush.msra.mxu0 0.0
        %3033 = vmatpush.msra.mxu0 0.0
        %3034 = vmatpush.msra.mxu0 %v2337
        %3035 = vmatpush.msra.mxu0 %v2336
        %3036 = vmatmul.f32.gmra.mxu0 %v3018
        %v3037 = vpop.f32.mrf.mxu0
        %v3038 = vadd.f32 0.0, %v3037
        %3039 = vdwg.mxu0
        %v3040 = vperm.slane %v3038, 0
        %v3041 = vsub.f32 %v2993, %v3040
        %v3042 = vsub.f32 %v2996, %v3040
        %v3043 = vsub.f32 %v2999, %v3040
        %v3044 = vsub.f32 %v3002, %v3040
        %v3045 = vmul.f32 %v3041, %v3041
        %v3046 = vmul.f32 %v3042, %v3042
        %v3047 = vmul.f32 %v3043, %v3043
        %v3048 = vmul.f32 %v3044, %v3044
        %v3049 = vsel %vm2262, %v3045, 0.0
        %v3050 = vsel %vm2262, %v3046, 0.0
        %v3051 = vadd.f32 %v3049, %v3050
        %v3052 = vsel %vm2262, %v3047, 0.0
        %v3053 = vadd.f32 %v3051, %v3052
        %v3054 = vsel %vm2262, %v3048, 0.0
        %v3055 = vadd.f32 %v3053, %v3054
        %v3056 = vrot.slane %v3055, 4
        %v3057 = vadd.f32 %v3055, %v3056
        %v3058 = vrot.slane %v3057, 2
        %v3059 = vadd.f32 %v3057, %v3058
        %v3060 = vrot.slane %v3059, 1
        %v3061 = vadd.f32 %v3059, %v3060
        %v3063 = vsel %vm2262, %v3061, 0
        %3065 = vmatpush.msra.mxu0 0.0
        %3066 = vmatpush.msra.mxu0 0.0
        %3067 = vmatpush.msra.mxu0 0.0
        %3068 = vmatpush.msra.mxu0 0.0
        %3069 = vmatpush.msra.mxu0 0.0
        %3070 = vmatpush.msra.mxu0 0.0
        %3071 = vmatpush.msra.mxu0 0.0
        %3072 = vmatpush.msra.mxu0 0.0
        %3073 = vmatpush.msra.mxu0 0.0
        %3074 = vmatpush.msra.mxu0 0.0
        %3075 = vmatpush.msra.mxu0 0.0
        %3076 = vmatpush.msra.mxu0 0.0
        %3077 = vmatpush.msra.mxu0 0.0
        %3078 = vmatpush.msra.mxu0 0.0
        %3079 = vmatpush.msra.mxu0 %v2337
        %3080 = vmatpush.msra.mxu0 %v2336
        %3081 = vmatmul.f32.gmra.mxu0 %v3063
        %v3082 = vpop.f32.mrf.mxu0
        %v3083 = vadd.f32 1e-05, %v3082
        %3084 = vdwg.mxu0
        %v3085 = vrsqrt.pop %v3083
        %v3086 = vmul.f32 %v3085, %v3083
        %v3087 = vmul.f32 %v3086, %v3085
        %v3088 = vmul.f32 0.5, %v3087
        %v3089 = vsub.f32 1.5, %v3088
        %v3090 = vmul.f32 %v3085, %v3089
        %vm3091 = vweird.f32 %v3083
        %vm3092 = vweird.f32 %v3085
        %vm3093 = vmor %vm3091, %vm3092
        %v3094 = vsel %vm3093, %v3085, %v3090
        %v3095 = vperm.slane %v3094, 0
        %v3096 = vmul.f32 %v3041, %v3095
        %v3097 = vmul.f32 %v3042, %v3095
        %v3098 = vmul.f32 %v3043, %v3095
        %v3099 = vmul.f32 %v3044, %v3095
        %v3100 = vld [vmem:[%s45] sm:$0x1]
        %v3102 = vperm.slane %v3100, 0
        %v3104 = vmul.f32 %v3096, %v3102
        %v3105 = vmul.f32 %v3097, %v3102
        %v3106 = vmul.f32 %v3098, %v3102
        %v3107 = vmul.f32 %v3099, %v3102
        %v3108 = vld [vmem:[%s47] sm:$0x1]
        %v3110 = vperm.slane %v3108, 0
        %v3112 = vadd.f32 %v3104, %v3110
        %v3113 = vadd.f32 %v3105, %v3110
        %v3114 = vadd.f32 %v3106, %v3110
        %v3115 = vadd.f32 %v3107, %v3110
        %v3116 = vadd.f32 %v3112, %v2666
        %v3117 = vadd.f32 %v3113, %v2667
        %v3118 = vadd.f32 %v3114, %v2668
        %v3119 = vadd.f32 %v3115, %v2669
        %v3120 = vmax.f32 %v3116, 0.0
        %v3121 = vmax.f32 %v3117, 0.0
        %v3122 = vmax.f32 %v3118, 0.0
        %v3123 = vmax.f32 %v3119, 0.0
        %v3124 = vld [vmem:[%s9] sm:$0xff]
        %v3125 = vld [vmem:[%s9 + $0x8] sm:$0xff]
        %v3130 = vrot.slane %v3120, 7
        %v3131 = vrot.slane %v3121, 7
        %v3132 = vsel %vm2049, %v3130, %v3131
        %v3133 = vrot.slane %v3122, 7
        %v3134 = vsel %vm2049, %v3131, %v3133
        %v3135 = vrot.slane %v3123, 7
        %v3136 = vsel %vm2049, %v3133, %v3135
        %v3141 = vsel %vm2049, 0.0, %v3130
        %v3142 = vrot.slane %v3120, 1
        %v3143 = vrot.slane %v3121, 1
        %v3144 = vsel %vm2062, %v3142, %v3143
        %v3145 = vrot.slane %v3122, 1
        %v3146 = vsel %vm2062, %v3143, %v3145
        %v3147 = vrot.slane %v3123, 1
        %v3148 = vsel %vm2062, %v3145, %v3147
        %v3150 = vsel %vm2062, %v3147, 0.0
        %3151 = vrot.lane.b32.xlu0 %v3120, 16
        %v3152 = vpop.permute.xlu0 %3151
        %3153 = vrot.lane.b32.xlu0 %v3121, 16
        %v3154 = vpop.permute.xlu0 %3153
        %3155 = vrot.lane.b32.xlu0 %v3122, 16
        %v3156 = vpop.permute.xlu0 %3155
        %3157 = vrot.lane.b32.xlu0 %v3123, 16
        %v3158 = vpop.permute.xlu0 %3157
        %3164 = vrot.lane.b32.xlu0 %v3144, 32
        %v3165 = vpop.permute.xlu0 %3164
        %3166 = vrot.lane.b32.xlu0 %v3146, 32
        %v3167 = vpop.permute.xlu0 %3166
        %3168 = vrot.lane.b32.xlu0 %v3148, 32
        %v3169 = vpop.permute.xlu0 %3168
        %3170 = vrot.lane.b32.xlu0 %v3150, 32
        %v3171 = vpop.permute.xlu0 %3170
        %v3176 = vsel %vm2262, %v3141, %v3152
        %v3177 = vsel %vm2262, %v3132, %v3154
        %v3178 = vsel %vm2262, %v3134, %v3156
        %v3179 = vsel %vm2262, %v3136, %v3158
        %v3180 = vsel %vm2102, %v3176, %v3165
        %v3181 = vsel %vm2102, %v3177, %v3167
        %v3182 = vsel %vm2102, %v3178, %v3169
        %v3183 = vsel %vm2102, %v3179, %v3171
        %v3185 = vsel %vm2102, %v3124, 0
        %v3188 = vsel %vm2102, %v3125, 0
        %3190 = vmatpush.msra.mxu0 0.0
        %3191 = vmatpush.msra.mxu0 0.0
        %3192 = vmatpush.msra.mxu0 0.0
        %3193 = vmatpush.msra.mxu0 0.0
        %3194 = vmatpush.msra.mxu0 0.0
        %3195 = vmatpush.msra.mxu0 0.0
        %3196 = vmatpush.msra.mxu0 0.0
        %3197 = vmatpush.msra.mxu0 0.0
        %3198 = vmatpush.msra.mxu0 0.0
        %3199 = vmatpush.msra.mxu0 0.0
        %3200 = vmatpush.msra.mxu0 0.0
        %3201 = vmatpush.msra.mxu0 0.0
        %3202 = vmatpush.msra.mxu0 %v3183
        %3203 = vmatpush.msra.mxu0 %v3182
        %3204 = vmatpush.msra.mxu0 %v3181
        %3205 = vmatpush.msra.mxu0 %v3180
        %3206 = vmatmul.f32.gmra.mxu0 %v3185
        %v3207 = vpop.f32.mrf.mxu0
        %v3208 = vadd.f32 0.0, %v3207
        %3209 = vmatmul.f32.gmra.mxu0 %v3188
        %v3210 = vpop.f32.mrf.mxu0
        %v3211 = vadd.f32 0.0, %v3210
        %3212 = vdwg.mxu0
        %v3213 = vld [vmem:[%s49] sm:$0xff]
        %v3214 = vld [vmem:[%s49 + $0x8] sm:$0xff]
        %v3215 = vld [vmem:[%s49 + $0x10] sm:$0xff]
        %v3216 = vld [vmem:[%s49 + $0x18] sm:$0xff]
        %v3217 = vld [vmem:[%s49 + $0x20] sm:$0xff]
        %v3218 = vld [vmem:[%s49 + $0x28] sm:$0xff]
        %v3219 = vld [vmem:[%s51] sm:$0x1]
        %v3221 = vperm.slane %v3219, 0
        %v3224 = vsel %vm2281, %v3208, 0
        %v3227 = vsel %vm2281, %v3211, 0
        %3229 = vmatpush.msra.mxu0 0.0
        %3230 = vmatpush.msra.mxu0 0.0
        %3231 = vmatpush.msra.mxu0 0.0
        %3232 = vmatpush.msra.mxu0 0.0
        %3233 = vmatpush.msra.mxu0 0.0
        %3234 = vmatpush.msra.mxu0 0.0
        %3235 = vmatpush.msra.mxu0 0.0
        %3236 = vmatpush.msra.mxu0 0.0
        %3237 = vmatpush.msra.mxu0 0.0
        %3238 = vmatpush.msra.mxu0 0.0
        %3239 = vmatpush.msra.mxu0 %v3218
        %3240 = vmatpush.msra.mxu0 %v3217
        %3241 = vmatpush.msra.mxu0 %v3216
        %3242 = vmatpush.msra.mxu0 %v3215
        %3243 = vmatpush.msra.mxu0 %v3214
        %3244 = vmatpush.msra.mxu0 %v3213
        %3245 = vmatmul.f32.gmra.mxu0 %v3224
        %v3246 = vpop.f32.mrf.mxu0
        %v3247 = vadd.f32 %v3221, %v3246
        %3248 = vmatmul.f32.gmra.mxu0 %v3227
        %v3249 = vpop.f32.mrf.mxu0
        %v3250 = vadd.f32 %v3221, %v3249
        %3251 = vdwg.mxu0
        %v3252 = vsel %vm2102, %v3247, 0.0
        %v3253 = vsel %vm2102, %v3250, 0.0
        %v3254 = vadd.f32 %v3252, %v3253
        %v3255 = vrot.slane %v3254, 4
        %v3256 = vadd.f32 %v3254, %v3255
        %v3257 = vrot.slane %v3256, 2
        %v3258 = vadd.f32 %v3256, %v3257
        %v3259 = vrot.slane %v3258, 1
        %v3260 = vadd.f32 %v3258, %v3259
        %v3261 = vld [vmem:[%s5] sm:$0xff]
        %v3262 = vld [vmem:[%s5 + $0x8] sm:$0xff]
        %v3263 = vld [vmem:[%s5 + $0x10] sm:$0xff]
        %v3264 = vld [vmem:[%s5 + $0x18] sm:$0xff]
        %v3266 = vsel %vm2102, %v3260, 0
        %3268 = vmatpush.msra.mxu0 0.0
        %3269 = vmatpush.msra.mxu0 0.0
        %3270 = vmatpush.msra.mxu0 0.0
        %3271 = vmatpush.msra.mxu0 0.0
        %3272 = vmatpush.msra.mxu0 0.0
        %3273 = vmatpush.msra.mxu0 0.0
        %3274 = vmatpush.msra.mxu0 0.0
        %3275 = vmatpush.msra.mxu0 0.0
        %3276 = vmatpush.msra.mxu0 0.0
        %3277 = vmatpush.msra.mxu0 0.0
        %3278 = vmatpush.msra.mxu0 0.0
        %3279 = vmatpush.msra.mxu0 0.0
        %3280 = vmatpush.msra.mxu0 %v3264
        %3281 = vmatpush.msra.mxu0 %v3263
        %3282 = vmatpush.msra.mxu0 %v3262
        %3283 = vmatpush.msra.mxu0 %v3261
        %3284 = vmatmul.f32.gmra.mxu0 %v3266
        %v3285 = vpop.f32.mrf.mxu0
        %v3286 = vadd.f32 0.0, %v3285
        %3287 = vdwg.mxu0
        %v3288 = vperm.slane %v3286, 0
        %v3289 = vsub.f32 %v3247, %v3288
        %v3290 = vsub.f32 %v3250, %v3288
        %v3291 = vmul.f32 %v3289, %v3289
        %v3292 = vmul.f32 %v3290, %v3290
        %v3293 = vsel %vm2102, %v3291, 0.0
        %v3294 = vsel %vm2102, %v3292, 0.0
        %v3295 = vadd.f32 %v3293, %v3294
        %v3296 = vrot.slane %v3295, 4
        %v3297 = vadd.f32 %v3295, %v3296
        %v3298 = vrot.slane %v3297, 2
        %v3299 = vadd.f32 %v3297, %v3298
        %v3300 = vrot.slane %v3299, 1
        %v3301 = vadd.f32 %v3299, %v3300
        %v3303 = vsel %vm2102, %v3301, 0
        %3305 = vmatpush.msra.mxu0 0.0
        %3306 = vmatpush.msra.mxu0 0.0
        %3307 = vmatpush.msra.mxu0 0.0
        %3308 = vmatpush.msra.mxu0 0.0
        %3309 = vmatpush.msra.mxu0 0.0
        %3310 = vmatpush.msra.mxu0 0.0
        %3311 = vmatpush.msra.mxu0 0.0
        %3312 = vmatpush.msra.mxu0 0.0
        %3313 = vmatpush.msra.mxu0 0.0
        %3314 = vmatpush.msra.mxu0 0.0
        %3315 = vmatpush.msra.mxu0 0.0
        %3316 = vmatpush.msra.mxu0 0.0
        %3317 = vmatpush.msra.mxu0 %v3264
        %3318 = vmatpush.msra.mxu0 %v3263
        %3319 = vmatpush.msra.mxu0 %v3262
        %3320 = vmatpush.msra.mxu0 %v3261
        %3321 = vmatmul.f32.gmra.mxu0 %v3303
        %v3322 = vpop.f32.mrf.mxu0
        %v3323 = vadd.f32 1e-05, %v3322
        %3324 = vdwg.mxu0
        %v3325 = vrsqrt.pop %v3323
        %v3326 = vmul.f32 %v3325, %v3323
        %v3327 = vmul.f32 %v3326, %v3325
        %v3328 = vmul.f32 0.5, %v3327
        %v3329 = vsub.f32 1.5, %v3328
        %v3330 = vmul.f32 %v3325, %v3329
        %vm3331 = vweird.f32 %v3323
        %vm3332 = vweird.f32 %v3325
        %vm3333 = vmor %vm3331, %vm3332
        %v3334 = vsel %vm3333, %v3325, %v3330
        %v3335 = vperm.slane %v3334, 0
        %v3336 = vmul.f32 %v3289, %v3335
        %v3337 = vmul.f32 %v3290, %v3335
        %v3338 = vld [vmem:[%s53] sm:$0x1]
        %v3340 = vperm.slane %v3338, 0
        %v3342 = vmul.f32 %v3336, %v3340
        %v3343 = vmul.f32 %v3337, %v3340
        %v3344 = vld [vmem:[%s55] sm:$0x1]
        %v3346 = vperm.slane %v3344, 0
        %v3348 = vadd.f32 %v3342, %v3346
        %v3349 = vadd.f32 %v3343, %v3346
        %v3350 = vmax.f32 %v3348, 0.0
        %v3351 = vmax.f32 %v3349, 0.0
        %v3354 = vrot.slane %v3350, 7
        %v3355 = vrot.slane %v3351, 7
        %v3356 = vsel %vm2049, %v3354, %v3355
        %v3359 = vsel %vm2049, 0.0, %v3354
        %v3360 = vrot.slane %v3350, 1
        %v3361 = vrot.slane %v3351, 1
        %v3362 = vsel %vm2062, %v3360, %v3361
        %v3364 = vsel %vm2062, %v3361, 0.0
        %3365 = vrot.lane.b32.xlu0 %v3350, 32
        %v3366 = vpop.permute.xlu0 %3365
        %3367 = vrot.lane.b32.xlu0 %v3351, 32
        %v3368 = vpop.permute.xlu0 %3367
        %3372 = vrot.lane.b32.xlu0 %v3362, 64
        %v3373 = vpop.permute.xlu0 %3372
        %3374 = vrot.lane.b32.xlu0 %v3364, 64
        %v3375 = vpop.permute.xlu0 %3374
        %v3378 = vsel %vm2102, %v3359, %v3366
        %v3379 = vsel %vm2102, %v3356, %v3368
        %vm3380 = vcmask 523264
        %v3381 = vsel %vm3380, %v3378, %v3373
        %v3382 = vsel %vm3380, %v3379, %v3375
        %v3383 = vld [vmem:[%s57] sm:$0xff]
        %v3384 = vld [vmem:[%s57 + $0x8] sm:$0xff]
        %v3385 = vld [vmem:[%s57 + $0x10] sm:$0xff]
        %v3386 = vld [vmem:[%s57 + $0x18] sm:$0xff]
        %v3387 = vld [vmem:[%s57 + $0x20] sm:$0xff]
        %v3388 = vld [vmem:[%s57 + $0x28] sm:$0xff]
        %v3389 = vld [vmem:[%s57 + $0x30] sm:$0xff]
        %v3390 = vld [vmem:[%s57 + $0x38] sm:$0xff]
        %v3391 = vld [vmem:[%s57 + $0x40] sm:$0xff]
        %v3392 = vld [vmem:[%s57 + $0x48] sm:$0xff]
        %v3393 = vld [vmem:[%s57 + $0x50] sm:$0xff]
        %v3394 = vld [vmem:[%s57 + $0x58] sm:$0xff]
        %v3395 = vld [vmem:[%s59] sm:$0x1]
        %v3397 = vperm.slane %v3395, 0
        %vm3399 = vcmask 785408
        %v3401 = vsel %vm3399, %v3381, 0
        %v3404 = vsel %vm3399, %v3382, 0
        %3406 = vmatpush.msra.mxu0 0.0
        %3407 = vmatpush.msra.mxu0 0.0
        %3408 = vmatpush.msra.mxu0 0.0
        %3409 = vmatpush.msra.mxu0 0.0
        %3410 = vmatpush.msra.mxu0 %v3394
        %3411 = vmatpush.msra.mxu0 %v3393
        %3412 = vmatpush.msra.mxu0 %v3392
        %3413 = vmatpush.msra.mxu0 %v3391
        %3414 = vmatpush.msra.mxu0 %v3390
        %3415 = vmatpush.msra.mxu0 %v3389
        %3416 = vmatpush.msra.mxu0 %v3388
        %3417 = vmatpush.msra.mxu0 %v3387
        %3418 = vmatpush.msra.mxu0 %v3386
        %3419 = vmatpush.msra.mxu0 %v3385
        %3420 = vmatpush.msra.mxu0 %v3384
        %3421 = vmatpush.msra.mxu0 %v3383
        %3422 = vmatmul.f32.gmra.mxu0 %v3401
        %v3423 = vpop.f32.mrf.mxu0
        %v3424 = vadd.f32 %v3397, %v3423
        %3425 = vmatmul.f32.gmra.mxu0 %v3404
        %v3426 = vpop.f32.mrf.mxu0
        %v3427 = vadd.f32 %v3397, %v3426
        %3428 = vdwg.mxu0
        %v3429 = vsel %vm2102, %v3424, 0.0
        %v3430 = vsel %vm2102, %v3427, 0.0
        %v3431 = vadd.f32 %v3429, %v3430
        %v3432 = vrot.slane %v3431, 4
        %v3433 = vadd.f32 %v3431, %v3432
        %v3434 = vrot.slane %v3433, 2
        %v3435 = vadd.f32 %v3433, %v3434
        %v3436 = vrot.slane %v3435, 1
        %v3437 = vadd.f32 %v3435, %v3436
        %v3439 = vsel %vm2102, %v3437, 0
        %3441 = vmatpush.msra.mxu0 0.0
        %3442 = vmatpush.msra.mxu0 0.0
        %3443 = vmatpush.msra.mxu0 0.0
        %3444 = vmatpush.msra.mxu0 0.0
        %3445 = vmatpush.msra.mxu0 0.0
        %3446 = vmatpush.msra.mxu0 0.0
        %3447 = vmatpush.msra.mxu0 0.0
        %3448 = vmatpush.msra.mxu0 0.0
        %3449 = vmatpush.msra.mxu0 0.0
        %3450 = vmatpush.msra.mxu0 0.0
        %3451 = vmatpush.msra.mxu0 0.0
        %3452 = vmatpush.msra.mxu0 0.0
        %3453 = vmatpush.msra.mxu0 %v3264
        %3454 = vmatpush.msra.mxu0 %v3263
        %3455 = vmatpush.msra.mxu0 %v3262
        %3456 = vmatpush.msra.mxu0 %v3261
        %3457 = vmatmul.f32.gmra.mxu0 %v3439
        %v3458 = vpop.f32.mrf.mxu0
        %v3459 = vadd.f32 0.0, %v3458
        %3460 = vdwg.mxu0
        %v3461 = vperm.slane %v3459, 0
        %v3462 = vsub.f32 %v3424, %v3461
        %v3463 = vsub.f32 %v3427, %v3461
        %v3464 = vmul.f32 %v3462, %v3462
        %v3465 = vmul.f32 %v3463, %v3463
        %v3466 = vsel %vm2102, %v3464, 0.0
        %v3467 = vsel %vm2102, %v3465, 0.0
        %v3468 = vadd.f32 %v3466, %v3467
        %v3469 = vrot.slane %v3468, 4
        %v3470 = vadd.f32 %v3468, %v3469
        %v3471 = vrot.slane %v3470, 2
        %v3472 = vadd.f32 %v3470, %v3471
        %v3473 = vrot.slane %v3472, 1
        %v3474 = vadd.f32 %v3472, %v3473
        %v3476 = vsel %vm2102, %v3474, 0
        %3478 = vmatpush.msra.mxu0 0.0
        %3479 = vmatpush.msra.mxu0 0.0
        %3480 = vmatpush.msra.mxu0 0.0
        %3481 = vmatpush.msra.mxu0 0.0
        %3482 = vmatpush.msra.mxu0 0.0
        %3483 = vmatpush.msra.mxu0 0.0
        %3484 = vmatpush.msra.mxu0 0.0
        %3485 = vmatpush.msra.mxu0 0.0
        %3486 = vmatpush.msra.mxu0 0.0
        %3487 = vmatpush.msra.mxu0 0.0
        %3488 = vmatpush.msra.mxu0 0.0
        %3489 = vmatpush.msra.mxu0 0.0
        %3490 = vmatpush.msra.mxu0 %v3264
        %3491 = vmatpush.msra.mxu0 %v3263
        %3492 = vmatpush.msra.mxu0 %v3262
        %3493 = vmatpush.msra.mxu0 %v3261
        %3494 = vmatmul.f32.gmra.mxu0 %v3476
        %v3495 = vpop.f32.mrf.mxu0
        %v3496 = vadd.f32 1e-05, %v3495
        %3497 = vdwg.mxu0
        %v3498 = vrsqrt.pop %v3496
        %v3499 = vmul.f32 %v3498, %v3496
        %v3500 = vmul.f32 %v3499, %v3498
        %v3501 = vmul.f32 0.5, %v3500
        %v3502 = vsub.f32 1.5, %v3501
        %v3503 = vmul.f32 %v3498, %v3502
        %vm3504 = vweird.f32 %v3496
        %vm3505 = vweird.f32 %v3498
        %vm3506 = vmor %vm3504, %vm3505
        %v3507 = vsel %vm3506, %v3498, %v3503
        %v3508 = vperm.slane %v3507, 0
        %v3509 = vmul.f32 %v3462, %v3508
        %v3510 = vmul.f32 %v3463, %v3508
        %v3511 = vld [vmem:[%s61] sm:$0x1]
        %v3513 = vperm.slane %v3511, 0
        %v3515 = vmul.f32 %v3509, %v3513
        %v3516 = vmul.f32 %v3510, %v3513
        %v3517 = vld [vmem:[%s63] sm:$0x1]
        %v3519 = vperm.slane %v3517, 0
        %v3521 = vadd.f32 %v3515, %v3519
        %v3522 = vadd.f32 %v3516, %v3519
        %v3523 = vmax.f32 %v3521, 0.0
        %v3524 = vmax.f32 %v3522, 0.0
        %v3527 = vrot.slane %v3523, 7
        %v3528 = vrot.slane %v3524, 7
        %v3529 = vsel %vm2049, %v3527, %v3528
        %v3532 = vsel %vm2049, 0.0, %v3527
        %v3533 = vrot.slane %v3523, 1
        %v3534 = vrot.slane %v3524, 1
        %v3535 = vsel %vm2062, %v3533, %v3534
        %v3537 = vsel %vm2062, %v3534, 0.0
        %3538 = vrot.lane.b32.xlu0 %v3523, 32
        %v3539 = vpop.permute.xlu0 %3538
        %3540 = vrot.lane.b32.xlu0 %v3524, 32
        %v3541 = vpop.permute.xlu0 %3540
        %3545 = vrot.lane.b32.xlu0 %v3535, 64
        %v3546 = vpop.permute.xlu0 %3545
        %3547 = vrot.lane.b32.xlu0 %v3537, 64
        %v3548 = vpop.permute.xlu0 %3547
        %v3551 = vsel %vm2102, %v3532, %v3539
        %v3552 = vsel %vm2102, %v3529, %v3541
        %v3553 = vsel %vm3380, %v3551, %v3546
        %v3554 = vsel %vm3380, %v3552, %v3548
        %v3555 = vld [vmem:[%s65] sm:$0xff]
        %v3556 = vld [vmem:[%s65 + $0x8] sm:$0xff]
        %v3557 = vld [vmem:[%s65 + $0x10] sm:$0xff]
        %v3558 = vld [vmem:[%s65 + $0x18] sm:$0xff]
        %v3559 = vld [vmem:[%s65 + $0x20] sm:$0xff]
        %v3560 = vld [vmem:[%s65 + $0x28] sm:$0xff]
        %v3561 = vld [vmem:[%s65 + $0x30] sm:$0xff]
        %v3562 = vld [vmem:[%s65 + $0x38] sm:$0xff]
        %v3563 = vld [vmem:[%s65 + $0x40] sm:$0xff]
        %v3564 = vld [vmem:[%s65 + $0x48] sm:$0xff]
        %v3565 = vld [vmem:[%s65 + $0x50] sm:$0xff]
        %v3566 = vld [vmem:[%s65 + $0x58] sm:$0xff]
        %v3567 = vld [vmem:[%s67] sm:$0x1]
        %v3569 = vperm.slane %v3567, 0
        %v3572 = vsel %vm3399, %v3553, 0
        %v3575 = vsel %vm3399, %v3554, 0
        %3577 = vmatpush.msra.mxu0 0.0
        %3578 = vmatpush.msra.mxu0 0.0
        %3579 = vmatpush.msra.mxu0 0.0
        %3580 = vmatpush.msra.mxu0 0.0
        %3581 = vmatpush.msra.mxu0 %v3566
        %3582 = vmatpush.msra.mxu0 %v3565
        %3583 = vmatpush.msra.mxu0 %v3564
        %3584 = vmatpush.msra.mxu0 %v3563
        %3585 = vmatpush.msra.mxu0 %v3562
        %3586 = vmatpush.msra.mxu0 %v3561
        %3587 = vmatpush.msra.mxu0 %v3560
        %3588 = vmatpush.msra.mxu0 %v3559
        %3589 = vmatpush.msra.mxu0 %v3558
        %3590 = vmatpush.msra.mxu0 %v3557
        %3591 = vmatpush.msra.mxu0 %v3556
        %3592 = vmatpush.msra.mxu0 %v3555
        %3593 = vmatmul.f32.gmra.mxu0 %v3572
        %v3594 = vpop.f32.mrf.mxu0
        %v3595 = vadd.f32 %v3569, %v3594
        %3596 = vmatmul.f32.gmra.mxu0 %v3575
        %v3597 = vpop.f32.mrf.mxu0
        %v3598 = vadd.f32 %v3569, %v3597
        %3599 = vdwg.mxu0
        %v3600 = vsel %vm2102, %v3595, 0.0
        %v3601 = vsel %vm2102, %v3598, 0.0
        %v3602 = vadd.f32 %v3600, %v3601
        %v3603 = vrot.slane %v3602, 4
        %v3604 = vadd.f32 %v3602, %v3603
        %v3605 = vrot.slane %v3604, 2
        %v3606 = vadd.f32 %v3604, %v3605
        %v3607 = vrot.slane %v3606, 1
        %v3608 = vadd.f32 %v3606, %v3607
        %v3610 = vsel %vm2102, %v3608, 0
        %3612 = vmatpush.msra.mxu0 0.0
        %3613 = vmatpush.msra.mxu0 0.0
        %3614 = vmatpush.msra.mxu0 0.0
        %3615 = vmatpush.msra.mxu0 0.0
        %3616 = vmatpush.msra.mxu0 0.0
        %3617 = vmatpush.msra.mxu0 0.0
        %3618 = vmatpush.msra.mxu0 0.0
        %3619 = vmatpush.msra.mxu0 0.0
        %3620 = vmatpush.msra.mxu0 0.0
        %3621 = vmatpush.msra.mxu0 0.0
        %3622 = vmatpush.msra.mxu0 0.0
        %3623 = vmatpush.msra.mxu0 0.0
        %3624 = vmatpush.msra.mxu0 %v3264
        %3625 = vmatpush.msra.mxu0 %v3263
        %3626 = vmatpush.msra.mxu0 %v3262
        %3627 = vmatpush.msra.mxu0 %v3261
        %3628 = vmatmul.f32.gmra.mxu0 %v3610
        %v3629 = vpop.f32.mrf.mxu0
        %v3630 = vadd.f32 0.0, %v3629
        %3631 = vdwg.mxu0
        %v3632 = vperm.slane %v3630, 0
        %v3633 = vsub.f32 %v3595, %v3632
        %v3634 = vsub.f32 %v3598, %v3632
        %v3635 = vmul.f32 %v3633, %v3633
        %v3636 = vmul.f32 %v3634, %v3634
        %v3637 = vsel %vm2102, %v3635, 0.0
        %v3638 = vsel %vm2102, %v3636, 0.0
        %v3639 = vadd.f32 %v3637, %v3638
        %v3640 = vrot.slane %v3639, 4
        %v3641 = vadd.f32 %v3639, %v3640
        %v3642 = vrot.slane %v3641, 2
        %v3643 = vadd.f32 %v3641, %v3642
        %v3644 = vrot.slane %v3643, 1
        %v3645 = vadd.f32 %v3643, %v3644
        %v3647 = vsel %vm2102, %v3645, 0
        %3649 = vmatpush.msra.mxu0 0.0
        %3650 = vmatpush.msra.mxu0 0.0
        %3651 = vmatpush.msra.mxu0 0.0
        %3652 = vmatpush.msra.mxu0 0.0
        %3653 = vmatpush.msra.mxu0 0.0
        %3654 = vmatpush.msra.mxu0 0.0
        %3655 = vmatpush.msra.mxu0 0.0
        %3656 = vmatpush.msra.mxu0 0.0
        %3657 = vmatpush.msra.mxu0 0.0
        %3658 = vmatpush.msra.mxu0 0.0
        %3659 = vmatpush.msra.mxu0 0.0
        %3660 = vmatpush.msra.mxu0 0.0
        %3661 = vmatpush.msra.mxu0 %v3264
        %3662 = vmatpush.msra.mxu0 %v3263
        %3663 = vmatpush.msra.mxu0 %v3262
        %3664 = vmatpush.msra.mxu0 %v3261
        %3665 = vmatmul.f32.gmra.mxu0 %v3647
        %v3666 = vpop.f32.mrf.mxu0
        %v3667 = vadd.f32 1e-05, %v3666
        %3668 = vdwg.mxu0
        %v3669 = vrsqrt.pop %v3667
        %v3670 = vmul.f32 %v3669, %v3667
        %v3671 = vmul.f32 %v3670, %v3669
        %v3672 = vmul.f32 0.5, %v3671
        %v3673 = vsub.f32 1.5, %v3672
        %v3674 = vmul.f32 %v3669, %v3673
        %vm3675 = vweird.f32 %v3667
        %vm3676 = vweird.f32 %v3669
        %vm3677 = vmor %vm3675, %vm3676
        %v3678 = vsel %vm3677, %v3669, %v3674
        %v3679 = vperm.slane %v3678, 0
        %v3680 = vmul.f32 %v3633, %v3679
        %v3681 = vmul.f32 %v3634, %v3679
        %v3682 = vld [vmem:[%s69] sm:$0x1]
        %v3684 = vperm.slane %v3682, 0
        %v3686 = vmul.f32 %v3680, %v3684
        %v3687 = vmul.f32 %v3681, %v3684
        %v3688 = vld [vmem:[%s71] sm:$0x1]
        %v3690 = vperm.slane %v3688, 0
        %v3692 = vadd.f32 %v3686, %v3690
        %v3693 = vadd.f32 %v3687, %v3690
        %v3694 = vadd.f32 %v3692, %v3350
        %v3695 = vadd.f32 %v3693, %v3351
        %v3696 = vmax.f32 %v3694, 0.0
        %v3697 = vmax.f32 %v3695, 0.0
        %v3700 = vrot.slane %v3696, 7
        %v3701 = vrot.slane %v3697, 7
        %v3702 = vsel %vm2049, %v3700, %v3701
        %v3705 = vsel %vm2049, 0.0, %v3700
        %v3706 = vrot.slane %v3696, 1
        %v3707 = vrot.slane %v3697, 1
        %v3708 = vsel %vm2062, %v3706, %v3707
        %v3710 = vsel %vm2062, %v3707, 0.0
        %3711 = vrot.lane.b32.xlu0 %v3696, 32
        %v3712 = vpop.permute.xlu0 %3711
        %3713 = vrot.lane.b32.xlu0 %v3697, 32
        %v3714 = vpop.permute.xlu0 %3713
        %3718 = vrot.lane.b32.xlu0 %v3708, 64
        %v3719 = vpop.permute.xlu0 %3718
        %3720 = vrot.lane.b32.xlu0 %v3710, 64
        %v3721 = vpop.permute.xlu0 %3720
        %v3724 = vsel %vm2102, %v3705, %v3712
        %v3725 = vsel %vm2102, %v3702, %v3714
        %v3726 = vsel %vm3380, %v3724, %v3719
        %v3727 = vsel %vm3380, %v3725, %v3721
        %v3728 = vld [vmem:[%s73] sm:$0xff]
        %v3729 = vld [vmem:[%s73 + $0x8] sm:$0xff]
        %v3730 = vld [vmem:[%s73 + $0x10] sm:$0xff]
        %v3731 = vld [vmem:[%s73 + $0x18] sm:$0xff]
        %v3732 = vld [vmem:[%s73 + $0x20] sm:$0xff]
        %v3733 = vld [vmem:[%s73 + $0x28] sm:$0xff]
        %v3734 = vld [vmem:[%s73 + $0x30] sm:$0xff]
        %v3735 = vld [vmem:[%s73 + $0x38] sm:$0xff]
        %v3736 = vld [vmem:[%s73 + $0x40] sm:$0xff]
        %v3737 = vld [vmem:[%s73 + $0x48] sm:$0xff]
        %v3738 = vld [vmem:[%s73 + $0x50] sm:$0xff]
        %v3739 = vld [vmem:[%s73 + $0x58] sm:$0xff]
        %v3740 = vld [vmem:[%s75] sm:$0x1]
        %v3742 = vperm.slane %v3740, 0
        %v3745 = vsel %vm3399, %v3726, 0
        %v3748 = vsel %vm3399, %v3727, 0
        %3750 = vmatpush.msra.mxu0 0.0
        %3751 = vmatpush.msra.mxu0 0.0
        %3752 = vmatpush.msra.mxu0 0.0
        %3753 = vmatpush.msra.mxu0 0.0
        %3754 = vmatpush.msra.mxu0 %v3739
        %3755 = vmatpush.msra.mxu0 %v3738
        %3756 = vmatpush.msra.mxu0 %v3737
        %3757 = vmatpush.msra.mxu0 %v3736
        %3758 = vmatpush.msra.mxu0 %v3735
        %3759 = vmatpush.msra.mxu0 %v3734
        %3760 = vmatpush.msra.mxu0 %v3733
        %3761 = vmatpush.msra.mxu0 %v3732
        %3762 = vmatpush.msra.mxu0 %v3731
        %3763 = vmatpush.msra.mxu0 %v3730
        %3764 = vmatpush.msra.mxu0 %v3729
        %3765 = vmatpush.msra.mxu0 %v3728
        %3766 = vmatmul.f32.gmra.mxu0 %v3745
        %v3767 = vpop.f32.mrf.mxu0
        %v3768 = vadd.f32 %v3742, %v3767
        %3769 = vmatmul.f32.gmra.mxu0 %v3748
        %v3770 = vpop.f32.mrf.mxu0
        %v3771 = vadd.f32 %v3742, %v3770
        %3772 = vdwg.mxu0
        %v3773 = vsel %vm2102, %v3768, 0.0
        %v3774 = vsel %vm2102, %v3771, 0.0
        %v3775 = vadd.f32 %v3773, %v3774
        %v3776 = vrot.slane %v3775, 4
        %v3777 = vadd.f32 %v3775, %v3776
        %v3778 = vrot.slane %v3777, 2
        %v3779 = vadd.f32 %v3777, %v3778
        %v3780 = vrot.slane %v3779, 1
        %v3781 = vadd.f32 %v3779, %v3780
        %v3783 = vsel %vm2102, %v3781, 0
        %3785 = vmatpush.msra.mxu0 0.0
        %3786 = vmatpush.msra.mxu0 0.0
        %3787 = vmatpush.msra.mxu0 0.0
        %3788 = vmatpush.msra.mxu0 0.0
        %3789 = vmatpush.msra.mxu0 0.0
        %3790 = vmatpush.msra.mxu0 0.0
        %3791 = vmatpush.msra.mxu0 0.0
        %3792 = vmatpush.msra.mxu0 0.0
        %3793 = vmatpush.msra.mxu0 0.0
        %3794 = vmatpush.msra.mxu0 0.0
        %3795 = vmatpush.msra.mxu0 0.0
        %3796 = vmatpush.msra.mxu0 0.0
        %3797 = vmatpush.msra.mxu0 %v3264
        %3798 = vmatpush.msra.mxu0 %v3263
        %3799 = vmatpush.msra.mxu0 %v3262
        %3800 = vmatpush.msra.mxu0 %v3261
        %3801 = vmatmul.f32.gmra.mxu0 %v3783
        %v3802 = vpop.f32.mrf.mxu0
        %v3803 = vadd.f32 0.0, %v3802
        %3804 = vdwg.mxu0
        %v3805 = vperm.slane %v3803, 0
        %v3806 = vsub.f32 %v3768, %v3805
        %v3807 = vsub.f32 %v3771, %v3805
        %v3808 = vmul.f32 %v3806, %v3806
        %v3809 = vmul.f32 %v3807, %v3807
        %v3810 = vsel %vm2102, %v3808, 0.0
        %v3811 = vsel %vm2102, %v3809, 0.0
        %v3812 = vadd.f32 %v3810, %v3811
        %v3813 = vrot.slane %v3812, 4
        %v3814 = vadd.f32 %v3812, %v3813
        %v3815 = vrot.slane %v3814, 2
        %v3816 = vadd.f32 %v3814, %v3815
        %v3817 = vrot.slane %v3816, 1
        %v3818 = vadd.f32 %v3816, %v3817
        %v3820 = vsel %vm2102, %v3818, 0
        %3822 = vmatpush.msra.mxu0 0.0
        %3823 = vmatpush.msra.mxu0 0.0
        %3824 = vmatpush.msra.mxu0 0.0
        %3825 = vmatpush.msra.mxu0 0.0
        %3826 = vmatpush.msra.mxu0 0.0
        %3827 = vmatpush.msra.mxu0 0.0
        %3828 = vmatpush.msra.mxu0 0.0
        %3829 = vmatpush.msra.mxu0 0.0
        %3830 = vmatpush.msra.mxu0 0.0
        %3831 = vmatpush.msra.mxu0 0.0
        %3832 = vmatpush.msra.mxu0 0.0
        %3833 = vmatpush.msra.mxu0 0.0
        %3834 = vmatpush.msra.mxu0 %v3264
        %3835 = vmatpush.msra.mxu0 %v3263
        %3836 = vmatpush.msra.mxu0 %v3262
        %3837 = vmatpush.msra.mxu0 %v3261
        %3838 = vmatmul.f32.gmra.mxu0 %v3820
        %v3839 = vpop.f32.mrf.mxu0
        %v3840 = vadd.f32 1e-05, %v3839
        %3841 = vdwg.mxu0
        %v3842 = vrsqrt.pop %v3840
        %v3843 = vmul.f32 %v3842, %v3840
        %v3844 = vmul.f32 %v3843, %v3842
        %v3845 = vmul.f32 0.5, %v3844
        %v3846 = vsub.f32 1.5, %v3845
        %v3847 = vmul.f32 %v3842, %v3846
        %vm3848 = vweird.f32 %v3840
        %vm3849 = vweird.f32 %v3842
        %vm3850 = vmor %vm3848, %vm3849
        %v3851 = vsel %vm3850, %v3842, %v3847
        %v3852 = vperm.slane %v3851, 0
        %v3853 = vmul.f32 %v3806, %v3852
        %v3854 = vmul.f32 %v3807, %v3852
        %v3855 = vld [vmem:[%s77] sm:$0x1]
        %v3857 = vperm.slane %v3855, 0
        %v3859 = vmul.f32 %v3853, %v3857
        %v3860 = vmul.f32 %v3854, %v3857
        %v3861 = vld [vmem:[%s79] sm:$0x1]
        %v3863 = vperm.slane %v3861, 0
        %v3865 = vadd.f32 %v3859, %v3863
        %v3866 = vadd.f32 %v3860, %v3863
        %v3867 = vmax.f32 %v3865, 0.0
        %v3868 = vmax.f32 %v3866, 0.0
        %v3871 = vrot.slane %v3867, 7
        %v3872 = vrot.slane %v3868, 7
        %v3873 = vsel %vm2049, %v3871, %v3872
        %v3876 = vsel %vm2049, 0.0, %v3871
        %v3877 = vrot.slane %v3867, 1
        %v3878 = vrot.slane %v3868, 1
        %v3879 = vsel %vm2062, %v3877, %v3878
        %v3881 = vsel %vm2062, %v3878, 0.0
        %3882 = vrot.lane.b32.xlu0 %v3867, 32
        %v3883 = vpop.permute.xlu0 %3882
        %3884 = vrot.lane.b32.xlu0 %v3868, 32
        %v3885 = vpop.permute.xlu0 %3884
        %3889 = vrot.lane.b32.xlu0 %v3879, 64
        %v3890 = vpop.permute.xlu0 %3889
        %3891 = vrot.lane.b32.xlu0 %v3881, 64
        %v3892 = vpop.permute.xlu0 %3891
        %v3895 = vsel %vm2102, %v3876, %v3883
        %v3896 = vsel %vm2102, %v3873, %v3885
        %v3897 = vsel %vm3380, %v3895, %v3890
        %v3898 = vsel %vm3380, %v3896, %v3892
        %v3899 = vld [vmem:[%s81] sm:$0xff]
        %v3900 = vld [vmem:[%s81 + $0x8] sm:$0xff]
        %v3901 = vld [vmem:[%s81 + $0x10] sm:$0xff]
        %v3902 = vld [vmem:[%s81 + $0x18] sm:$0xff]
        %v3903 = vld [vmem:[%s81 + $0x20] sm:$0xff]
        %v3904 = vld [vmem:[%s81 + $0x28] sm:$0xff]
        %v3905 = vld [vmem:[%s81 + $0x30] sm:$0xff]
        %v3906 = vld [vmem:[%s81 + $0x38] sm:$0xff]
        %v3907 = vld [vmem:[%s81 + $0x40] sm:$0xff]
        %v3908 = vld [vmem:[%s81 + $0x48] sm:$0xff]
        %v3909 = vld [vmem:[%s81 + $0x50] sm:$0xff]
        %v3910 = vld [vmem:[%s81 + $0x58] sm:$0xff]
        %v3911 = vld [vmem:[%s83] sm:$0x1]
        %v3913 = vperm.slane %v3911, 0
        %v3916 = vsel %vm3399, %v3897, 0
        %v3919 = vsel %vm3399, %v3898, 0
        %3921 = vmatpush.msra.mxu0 0.0
        %3922 = vmatpush.msra.mxu0 0.0
        %3923 = vmatpush.msra.mxu0 0.0
        %3924 = vmatpush.msra.mxu0 0.0
        %3925 = vmatpush.msra.mxu0 %v3910
        %3926 = vmatpush.msra.mxu0 %v3909
        %3927 = vmatpush.msra.mxu0 %v3908
        %3928 = vmatpush.msra.mxu0 %v3907
        %3929 = vmatpush.msra.mxu0 %v3906
        %3930 = vmatpush.msra.mxu0 %v3905
        %3931 = vmatpush.msra.mxu0 %v3904
        %3932 = vmatpush.msra.mxu0 %v3903
        %3933 = vmatpush.msra.mxu0 %v3902
        %3934 = vmatpush.msra.mxu0 %v3901
        %3935 = vmatpush.msra.mxu0 %v3900
        %3936 = vmatpush.msra.mxu0 %v3899
        %3937 = vmatmul.f32.gmra.mxu0 %v3916
        %v3938 = vpop.f32.mrf.mxu0
        %v3939 = vadd.f32 %v3913, %v3938
        %3940 = vmatmul.f32.gmra.mxu0 %v3919
        %v3941 = vpop.f32.mrf.mxu0
        %v3942 = vadd.f32 %v3913, %v3941
        %3943 = vdwg.mxu0
        %v3944 = vsel %vm2102, %v3939, 0.0
        %v3945 = vsel %vm2102, %v3942, 0.0
        %v3946 = vadd.f32 %v3944, %v3945
        %v3947 = vrot.slane %v3946, 4
        %v3948 = vadd.f32 %v3946, %v3947
        %v3949 = vrot.slane %v3948, 2
        %v3950 = vadd.f32 %v3948, %v3949
        %v3951 = vrot.slane %v3950, 1
        %v3952 = vadd.f32 %v3950, %v3951
        %v3954 = vsel %vm2102, %v3952, 0
        %3956 = vmatpush.msra.mxu0 0.0
        %3957 = vmatpush.msra.mxu0 0.0
        %3958 = vmatpush.msra.mxu0 0.0
        %3959 = vmatpush.msra.mxu0 0.0
        %3960 = vmatpush.msra.mxu0 0.0
        %3961 = vmatpush.msra.mxu0 0.0
        %3962 = vmatpush.msra.mxu0 0.0
        %3963 = vmatpush.msra.mxu0 0.0
        %3964 = vmatpush.msra.mxu0 0.0
        %3965 = vmatpush.msra.mxu0 0.0
        %3966 = vmatpush.msra.mxu0 0.0
        %3967 = vmatpush.msra.mxu0 0.0
        %3968 = vmatpush.msra.mxu0 %v3264
        %3969 = vmatpush.msra.mxu0 %v3263
        %3970 = vmatpush.msra.mxu0 %v3262
        %3971 = vmatpush.msra.mxu0 %v3261
        %3972 = vmatmul.f32.gmra.mxu0 %v3954
        %v3973 = vpop.f32.mrf.mxu0
        %v3974 = vadd.f32 0.0, %v3973
        %3975 = vdwg.mxu0
        %v3976 = vperm.slane %v3974, 0
        %v3977 = vsub.f32 %v3939, %v3976
        %v3978 = vsub.f32 %v3942, %v3976
        %v3979 = vmul.f32 %v3977, %v3977
        %v3980 = vmul.f32 %v3978, %v3978
        %v3981 = vsel %vm2102, %v3979, 0.0
        %v3982 = vsel %vm2102, %v3980, 0.0
        %v3983 = vadd.f32 %v3981, %v3982
        %v3984 = vrot.slane %v3983, 4
        %v3985 = vadd.f32 %v3983, %v3984
        %v3986 = vrot.slane %v3985, 2
        %v3987 = vadd.f32 %v3985, %v3986
        %v3988 = vrot.slane %v3987, 1
        %v3989 = vadd.f32 %v3987, %v3988
        %v3991 = vsel %vm2102, %v3989, 0
        %3993 = vmatpush.msra.mxu0 0.0
        %3994 = vmatpush.msra.mxu0 0.0
        %3995 = vmatpush.msra.mxu0 0.0
        %3996 = vmatpush.msra.mxu0 0.0
        %3997 = vmatpush.msra.mxu0 0.0
        %3998 = vmatpush.msra.mxu0 0.0
        %3999 = vmatpush.msra.mxu0 0.0
        %4000 = vmatpush.msra.mxu0 0.0
        %4001 = vmatpush.msra.mxu0 0.0
        %4002 = vmatpush.msra.mxu0 0.0
        %4003 = vmatpush.msra.mxu0 0.0
        %4004 = vmatpush.msra.mxu0 0.0
        %4005 = vmatpush.msra.mxu0 %v3264
        %4006 = vmatpush.msra.mxu0 %v3263
        %4007 = vmatpush.msra.mxu0 %v3262
        %4008 = vmatpush.msra.mxu0 %v3261
        %4009 = vmatmul.f32.gmra.mxu0 %v3991
        %v4010 = vpop.f32.mrf.mxu0
        %v4011 = vadd.f32 1e-05, %v4010
        %4012 = vdwg.mxu0
        %v4013 = vrsqrt.pop %v4011
        %v4014 = vmul.f32 %v4013, %v4011
        %v4015 = vmul.f32 %v4014, %v4013
        %v4016 = vmul.f32 0.5, %v4015
        %v4017 = vsub.f32 1.5, %v4016
        %v4018 = vmul.f32 %v4013, %v4017
        %vm4019 = vweird.f32 %v4011
        %vm4020 = vweird.f32 %v4013
        %vm4021 = vmor %vm4019, %vm4020
        %v4022 = vsel %vm4021, %v4013, %v4018
        %v4023 = vperm.slane %v4022, 0
        %v4024 = vmul.f32 %v3977, %v4023
        %v4025 = vmul.f32 %v3978, %v4023
        %v4026 = vld [vmem:[%s85] sm:$0x1]
        %v4028 = vperm.slane %v4026, 0
        %v4030 = vmul.f32 %v4024, %v4028
        %v4031 = vmul.f32 %v4025, %v4028
        %v4032 = vld [vmem:[%s87] sm:$0x1]
        %v4034 = vperm.slane %v4032, 0
        %v4036 = vadd.f32 %v4030, %v4034
        %v4037 = vadd.f32 %v4031, %v4034
        %v4038 = vadd.f32 %v4036, %v3696
        %v4039 = vadd.f32 %v4037, %v3697
        %v4040 = vmax.f32 %v4038, 0.0
        %v4041 = vmax.f32 %v4039, 0.0
        %v4042 = vld [vmem:[%s11] sm:$0xff]
        %v4045 = vrot.slane %v4040, 7
        %v4046 = vrot.slane %v4041, 7
        %v4047 = vsel %vm2049, %v4045, %v4046
        %v4050 = vsel %vm2049, 0.0, %v4045
        %v4051 = vrot.slane %v4040, 1
        %v4052 = vrot.slane %v4041, 1
        %v4053 = vsel %vm2062, %v4051, %v4052
        %v4055 = vsel %vm2062, %v4052, 0.0
        %4056 = vrot.lane.b32.xlu0 %v4040, 32
        %v4057 = vpop.permute.xlu0 %4056
        %4058 = vrot.lane.b32.xlu0 %v4041, 32
        %v4059 = vpop.permute.xlu0 %4058
        %4063 = vrot.lane.b32.xlu0 %v4053, 64
        %v4064 = vpop.permute.xlu0 %4063
        %4065 = vrot.lane.b32.xlu0 %v4055, 64
        %v4066 = vpop.permute.xlu0 %4065
        %v4069 = vsel %vm2102, %v4050, %v4057
        %v4070 = vsel %vm2102, %v4047, %v4059
        %v4071 = vsel %vm3380, %v4069, %v4064
        %v4072 = vsel %vm3380, %v4070, %v4066
        %v4074 = vsel %vm2262, %v4042, 0
        %4076 = vmatpush.msra.mxu0 0.0
        %4077 = vmatpush.msra.mxu0 0.0
        %4078 = vmatpush.msra.mxu0 0.0
        %4079 = vmatpush.msra.mxu0 0.0
        %4080 = vmatpush.msra.mxu0 0.0
        %4081 = vmatpush.msra.mxu0 0.0
        %4082 = vmatpush.msra.mxu0 0.0
        %4083 = vmatpush.msra.mxu0 0.0
        %4084 = vmatpush.msra.mxu0 0.0
        %4085 = vmatpush.msra.mxu0 0.0
        %4086 = vmatpush.msra.mxu0 0.0
        %4087 = vmatpush.msra.mxu0 0.0
        %4088 = vmatpush.msra.mxu0 0.0
        %4089 = vmatpush.msra.mxu0 0.0
        %4090 = vmatpush.msra.mxu0 %v4072
        %4091 = vmatpush.msra.mxu0 %v4071
        %4092 = vmatmul.f32.gmra.mxu0 %v4074
        %v4093 = vpop.f32.mrf.mxu0
        %v4094 = vadd.f32 0.0, %v4093
        %4095 = vdwg.mxu0
        %v4096 = vld [vmem:[%s89] sm:$0xff]
        %v4097 = vld [vmem:[%s89 + $0x8] sm:$0xff]
        %v4098 = vld [vmem:[%s89 + $0x10] sm:$0xff]
        %v4099 = vld [vmem:[%s89 + $0x18] sm:$0xff]
        %v4100 = vld [vmem:[%s89 + $0x20] sm:$0xff]
        %v4101 = vld [vmem:[%s89 + $0x28] sm:$0xff]
        %v4102 = vld [vmem:[%s89 + $0x30] sm:$0xff]
        %v4103 = vld [vmem:[%s89 + $0x38] sm:$0xff]
        %v4104 = vld [vmem:[%s89 + $0x40] sm:$0xff]
        %v4105 = vld [vmem:[%s89 + $0x48] sm:$0xff]
        %v4106 = vld [vmem:[%s89 + $0x50] sm:$0xff]
        %v4107 = vld [vmem:[%s89 + $0x58] sm:$0xff]
        %v4108 = vld [vmem:[%s91] sm:$0x1]
        %v4110 = vperm.slane %v4108, 0
        %v4113 = vsel %vm3399, %v4094, 0
        %4115 = vmatpush.msra.mxu0 0.0
        %4116 = vmatpush.msra.mxu0 0.0
        %4117 = vmatpush.msra.mxu0 0.0
        %4118 = vmatpush.msra.mxu0 0.0
        %4119 = vmatpush.msra.mxu0 %v4107
        %4120 = vmatpush.msra.mxu0 %v4106
        %4121 = vmatpush.msra.mxu0 %v4105
        %4122 = vmatpush.msra.mxu0 %v4104
        %4123 = vmatpush.msra.mxu0 %v4103
        %4124 = vmatpush.msra.mxu0 %v4102
        %4125 = vmatpush.msra.mxu0 %v4101
        %4126 = vmatpush.msra.mxu0 %v4100
        %4127 = vmatpush.msra.mxu0 %v4099
        %4128 = vmatpush.msra.mxu0 %v4098
        %4129 = vmatpush.msra.mxu0 %v4097
        %4130 = vmatpush.msra.mxu0 %v4096
        %4131 = vmatmul.f32.gmra.mxu0 %v4113
        %v4132 = vpop.f32.mrf.mxu0
        %v4133 = vadd.f32 %v4110, %v4132
        %4134 = vdwg.mxu0
        %v4135 = vsel %vm3380, %v4133, 0.0
        %v4136 = vrot.slane %v4135, 4
        %v4137 = vadd.f32 %v4135, %v4136
        %v4138 = vrot.slane %v4137, 2
        %v4139 = vadd.f32 %v4137, %v4138
        %v4140 = vrot.slane %v4139, 1
        %v4141 = vadd.f32 %v4139, %v4140
        %v4142 = vld [vmem:[%s7] sm:$0xff]
        %v4143 = vld [vmem:[%s7 + $0x8] sm:$0xff]
        %v4144 = vld [vmem:[%s7 + $0x10] sm:$0xff]
        %v4145 = vld [vmem:[%s7 + $0x18] sm:$0xff]
        %v4146 = vld [vmem:[%s7 + $0x20] sm:$0xff]
        %v4147 = vld [vmem:[%s7 + $0x28] sm:$0xff]
        %v4148 = vld [vmem:[%s7 + $0x30] sm:$0xff]
        %v4149 = vld [vmem:[%s7 + $0x38] sm:$0xff]
        %v4151 = vsel %vm3380, %v4141, 0
        %4153 = vmatpush.msra.mxu0 0.0
        %4154 = vmatpush.msra.mxu0 0.0
        %4155 = vmatpush.msra.mxu0 0.0
        %4156 = vmatpush.msra.mxu0 0.0
        %4157 = vmatpush.msra.mxu0 0.0
        %4158 = vmatpush.msra.mxu0 0.0
        %4159 = vmatpush.msra.mxu0 0.0
        %4160 = vmatpush.msra.mxu0 0.0
        %4161 = vmatpush.msra.mxu0 %v4149
        %4162 = vmatpush.msra.mxu0 %v4148
        %4163 = vmatpush.msra.mxu0 %v4147
        %4164 = vmatpush.msra.mxu0 %v4146
        %4165 = vmatpush.msra.mxu0 %v4145
        %4166 = vmatpush.msra.mxu0 %v4144
        %4167 = vmatpush.msra.mxu0 %v4143
        %4168 = vmatpush.msra.mxu0 %v4142
        %4169 = vmatmul.f32.gmra.mxu0 %v4151
        %v4170 = vpop.f32.mrf.mxu0
        %v4171 = vadd.f32 0.0, %v4170
        %4172 = vdwg.mxu0
        %v4173 = vperm.slane %v4171, 0
        %v4174 = vsub.f32 %v4133, %v4173
        %v4175 = vmul.f32 %v4174, %v4174
        %v4176 = vsel %vm3380, %v4175, 0.0
        %v4177 = vrot.slane %v4176, 4
        %v4178 = vadd.f32 %v4176, %v4177
        %v4179 = vrot.slane %v4178, 2
        %v4180 = vadd.f32 %v4178, %v4179
        %v4181 = vrot.slane %v4180, 1
        %v4182 = vadd.f32 %v4180, %v4181
        %v4184 = vsel %vm3380, %v4182, 0
        %4186 = vmatpush.msra.mxu0 0.0
        %4187 = vmatpush.msra.mxu0 0.0
        %4188 = vmatpush.msra.mxu0 0.0
        %4189 = vmatpush.msra.mxu0 0.0
        %4190 = vmatpush.msra.mxu0 0.0
        %4191 = vmatpush.msra.mxu0 0.0
        %4192 = vmatpush.msra.mxu0 0.0
        %4193 = vmatpush.msra.mxu0 0.0
        %4194 = vmatpush.msra.mxu0 %v4149
        %4195 = vmatpush.msra.mxu0 %v4148
        %4196 = vmatpush.msra.mxu0 %v4147
        %4197 = vmatpush.msra.mxu0 %v4146
        %4198 = vmatpush.msra.mxu0 %v4145
        %4199 = vmatpush.msra.mxu0 %v4144
        %4200 = vmatpush.msra.mxu0 %v4143
        %4201 = vmatpush.msra.mxu0 %v4142
        %4202 = vmatmul.f32.gmra.mxu0 %v4184
        %v4203 = vpop.f32.mrf.mxu0
        %v4204 = vadd.f32 1e-05, %v4203
        %4205 = vdwg.mxu0
        %v4206 = vrsqrt.pop %v4204
        %v4207 = vmul.f32 %v4206, %v4204
        %v4208 = vmul.f32 %v4207, %v4206
        %v4209 = vmul.f32 0.5, %v4208
        %v4210 = vsub.f32 1.5, %v4209
        %v4211 = vmul.f32 %v4206, %v4210
        %vm4212 = vweird.f32 %v4204
        %vm4213 = vweird.f32 %v4206
        %vm4214 = vmor %vm4212, %vm4213
        %v4215 = vsel %vm4214, %v4206, %v4211
        %v4216 = vperm.slane %v4215, 0
        %v4217 = vmul.f32 %v4174, %v4216
        %v4218 = vld [vmem:[%s93] sm:$0x1]
        %v4220 = vperm.slane %v4218, 0
        %v4222 = vmul.f32 %v4217, %v4220
        %v4223 = vld [vmem:[%s95] sm:$0x1]
        %v4225 = vperm.slane %v4223, 0
        %v4227 = vadd.f32 %v4222, %v4225
        %v4228 = vmax.f32 %v4227, 0.0
        %v4230 = vrot.slane %v4228, 7
        %v4232 = vsel %vm2049, 0.0, %v4230
        %v4233 = vrot.slane %v4228, 1
        %v4235 = vsel %vm2062, %v4233, 0.0
        %4236 = vrot.lane.b32.xlu0 %v4228, 64
        %v4237 = vpop.permute.xlu0 %4236
        %v4239 = vsel %vm3380, %v4232, %v4237
        %v4240 = vld [vmem:[%s97] sm:$0xff]
        %v4241 = vld [vmem:[%s97 + $0x8] sm:$0xff]
        %v4242 = vld [vmem:[%s97 + $0x10] sm:$0xff]
        %v4243 = vld [vmem:[%s97 + $0x18] sm:$0xff]
        %v4244 = vld [vmem:[%s97 + $0x20] sm:$0xff]
        %v4245 = vld [vmem:[%s97 + $0x28] sm:$0xff]
        %v4246 = vld [vmem:[%s97 + $0x30] sm:$0xff]
        %v4247 = vld [vmem:[%s97 + $0x38] sm:$0xff]
        %v4248 = vld [vmem:[%s97 + $0x40] sm:$0xff]
        %v4249 = vld [vmem:[%s97 + $0x48] sm:$0xff]
        %v4250 = vld [vmem:[%s97 + $0x50] sm:$0xff]
        %v4251 = vld [vmem:[%s97 + $0x58] sm:$0xff]
        %v4252 = vld [vmem:[%s97 + $0x60] sm:$0xff]
        %v4253 = vld [vmem:[%s97 + $0x68] sm:$0xff]
        %v4254 = vld [vmem:[%s97 + $0x70] sm:$0xff]
        %v4255 = vld [vmem:[%s97 + $0x78] sm:$0xff]
        %v4256 = vld [vmem:[%s97 + $0x80] sm:$0xff]
        %v4257 = vld [vmem:[%s97 + $0x88] sm:$0xff]
        %v4258 = vld [vmem:[%s97 + $0x90] sm:$0xff]
        %v4259 = vld [vmem:[%s97 + $0x98] sm:$0xff]
        %v4260 = vld [vmem:[%s97 + $0xa0] sm:$0xff]
        %v4261 = vld [vmem:[%s97 + $0xa8] sm:$0xff]
        %v4262 = vld [vmem:[%s97 + $0xb0] sm:$0xff]
        %v4263 = vld [vmem:[%s97 + $0xb8] sm:$0xff]
        %v4264 = vld [vmem:[%s99] sm:$0x1]
        %v4266 = vperm.slane %v4264, 0
        %v4269 = vsel %vm3380, %v4235, 0
        %4271 = vmatpush.msra.mxu0 %v4255
        %4272 = vmatpush.msra.mxu0 %v4254
        %4273 = vmatpush.msra.mxu0 %v4253
        %4274 = vmatpush.msra.mxu0 %v4252
        %4275 = vmatpush.msra.mxu0 %v4251
        %4276 = vmatpush.msra.mxu0 %v4250
        %4277 = vmatpush.msra.mxu0 %v4249
        %4278 = vmatpush.msra.mxu0 %v4248
        %4279 = vmatpush.msra.mxu0 %v4247
        %4280 = vmatpush.msra.mxu0 %v4246
        %4281 = vmatpush.msra.mxu0 %v4245
        %4282 = vmatpush.msra.mxu0 %v4244
        %4283 = vmatpush.msra.mxu0 %v4243
        %4284 = vmatpush.msra.mxu0 %v4242
        %4285 = vmatpush.msra.mxu0 %v4241
        %4286 = vmatpush.msra.mxu0 %v4240
        %4287 = vmatmul.f32.gmra.mxu0 %v4239
        %v4288 = vpop.f32.mrf.mxu0
        %v4289 = vadd.f32 %v4266, %v4288
        %4290 = vdwg.mxu0
        %4291 = vmatpush.msra.mxu0 0.0
        %4292 = vmatpush.msra.mxu0 0.0
        %4293 = vmatpush.msra.mxu0 0.0
        %4294 = vmatpush.msra.mxu0 0.0
        %4295 = vmatpush.msra.mxu0 0.0
        %4296 = vmatpush.msra.mxu0 0.0
        %4297 = vmatpush.msra.mxu0 0.0
        %4298 = vmatpush.msra.mxu0 0.0
        %4299 = vmatpush.msra.mxu0 %v4263
        %4300 = vmatpush.msra.mxu0 %v4262
        %4301 = vmatpush.msra.mxu0 %v4261
        %4302 = vmatpush.msra.mxu0 %v4260
        %4303 = vmatpush.msra.mxu0 %v4259
        %4304 = vmatpush.msra.mxu0 %v4258
        %4305 = vmatpush.msra.mxu0 %v4257
        %4306 = vmatpush.msra.mxu0 %v4256
        %4307 = vmatmul.f32.gmra.mxu0 %v4269
        %v4308 = vpop.f32.mrf.mxu0
        %v4309 = vadd.f32 %v4289, %v4308
        %4310 = vdwg.mxu0
        %v4311 = vsel %vm3380, %v4309, 0.0
        %v4312 = vrot.slane %v4311, 4
        %v4313 = vadd.f32 %v4311, %v4312
        %v4314 = vrot.slane %v4313, 2
        %v4315 = vadd.f32 %v4313, %v4314
        %v4316 = vrot.slane %v4315, 1
        %v4317 = vadd.f32 %v4315, %v4316
        %v4319 = vsel %vm3380, %v4317, 0
        %4321 = vmatpush.msra.mxu0 0.0
        %4322 = vmatpush.msra.mxu0 0.0
        %4323 = vmatpush.msra.mxu0 0.0
        %4324 = vmatpush.msra.mxu0 0.0
        %4325 = vmatpush.msra.mxu0 0.0
        %4326 = vmatpush.msra.mxu0 0.0
        %4327 = vmatpush.msra.mxu0 0.0
        %4328 = vmatpush.msra.mxu0 0.0
        %4329 = vmatpush.msra.mxu0 %v4149
        %4330 = vmatpush.msra.mxu0 %v4148
        %4331 = vmatpush.msra.mxu0 %v4147
        %4332 = vmatpush.msra.mxu0 %v4146
        %4333 = vmatpush.msra.mxu0 %v4145
        %4334 = vmatpush.msra.mxu0 %v4144
        %4335 = vmatpush.msra.mxu0 %v4143
        %4336 = vmatpush.msra.mxu0 %v4142
        %4337 = vmatmul.f32.gmra.mxu0 %v4319
        %v4338 = vpop.f32.mrf.mxu0
        %v4339 = vadd.f32 0.0, %v4338
        %4340 = vdwg.mxu0
        %v4341 = vperm.slane %v4339, 0
        %v4342 = vsub.f32 %v4309, %v4341
        %v4343 = vmul.f32 %v4342, %v4342
        %v4344 = vsel %vm3380, %v4343, 0.0
        %v4345 = vrot.slane %v4344, 4
        %v4346 = vadd.f32 %v4344, %v4345
        %v4347 = vrot.slane %v4346, 2
        %v4348 = vadd.f32 %v4346, %v4347
        %v4349 = vrot.slane %v4348, 1
        %v4350 = vadd.f32 %v4348, %v4349
        %v4352 = vsel %vm3380, %v4350, 0
        %4354 = vmatpush.msra.mxu0 0.0
        %4355 = vmatpush.msra.mxu0 0.0
        %4356 = vmatpush.msra.mxu0 0.0
        %4357 = vmatpush.msra.mxu0 0.0
        %4358 = vmatpush.msra.mxu0 0.0
        %4359 = vmatpush.msra.mxu0 0.0
        %4360 = vmatpush.msra.mxu0 0.0
        %4361 = vmatpush.msra.mxu0 0.0
        %4362 = vmatpush.msra.mxu0 %v4149
        %4363 = vmatpush.msra.mxu0 %v4148
        %4364 = vmatpush.msra.mxu0 %v4147
        %4365 = vmatpush.msra.mxu0 %v4146
        %4366 = vmatpush.msra.mxu0 %v4145
        %4367 = vmatpush.msra.mxu0 %v4144
        %4368 = vmatpush.msra.mxu0 %v4143
        %4369 = vmatpush.msra.mxu0 %v4142
        %4370 = vmatmul.f32.gmra.mxu0 %v4352
        %v4371 = vpop.f32.mrf.mxu0
        %v4372 = vadd.f32 1e-05, %v4371
        %4373 = vdwg.mxu0
        %v4374 = vrsqrt.pop %v4372
        %v4375 = vmul.f32 %v4374, %v4372
        %v4376 = vmul.f32 %v4375, %v4374
        %v4377 = vmul.f32 0.5, %v4376
        %v4378 = vsub.f32 1.5, %v4377
        %v4379 = vmul.f32 %v4374, %v4378
        %vm4380 = vweird.f32 %v4372
        %vm4381 = vweird.f32 %v4374
        %vm4382 = vmor %vm4380, %vm4381
        %v4383 = vsel %vm4382, %v4374, %v4379
        %v4384 = vperm.slane %v4383, 0
        %v4385 = vmul.f32 %v4342, %v4384
        %v4386 = vld [vmem:[#allocation2] sm:$0x1]
        %v4388 = vperm.slane %v4386, 0
        %v4390 = vmul.f32 %v4385, %v4388
        %v4391 = vld [vmem:[#allocation5] sm:$0x1]
        %v4393 = vperm.slane %v4391, 0
        %v4395 = vadd.f32 %v4390, %v4393
        %v4396 = vmax.f32 %v4395, 0.0
        %v4398 = vrot.slane %v4396, 7
        %v4400 = vsel %vm2049, 0.0, %v4398
        %v4401 = vrot.slane %v4396, 1
        %v4403 = vsel %vm2062, %v4401, 0.0
        %4404 = vrot.lane.b32.xlu0 %v4396, 64
        %v4405 = vpop.permute.xlu0 %4404
        %v4407 = vsel %vm3380, %v4400, %v4405
        %v4408 = vld [vmem:[%s105] sm:$0xff]
        %v4409 = vld [vmem:[%s105 + $0x8] sm:$0xff]
        %v4410 = vld [vmem:[%s105 + $0x10] sm:$0xff]
        %v4411 = vld [vmem:[%s105 + $0x18] sm:$0xff]
        %v4412 = vld [vmem:[%s105 + $0x20] sm:$0xff]
        %v4413 = vld [vmem:[%s105 + $0x28] sm:$0xff]
        %v4414 = vld [vmem:[%s105 + $0x30] sm:$0xff]
        %v4415 = vld [vmem:[%s105 + $0x38] sm:$0xff]
        %v4416 = vld [vmem:[%s105 + $0x40] sm:$0xff]
        %v4417 = vld [vmem:[%s105 + $0x48] sm:$0xff]
        %v4418 = vld [vmem:[%s105 + $0x50] sm:$0xff]
        %v4419 = vld [vmem:[%s105 + $0x58] sm:$0xff]
        %v4420 = vld [vmem:[%s105 + $0x60] sm:$0xff]
        %v4421 = vld [vmem:[%s105 + $0x68] sm:$0xff]
        %v4422 = vld [vmem:[%s105 + $0x70] sm:$0xff]
        %v4423 = vld [vmem:[%s105 + $0x78] sm:$0xff]
        %v4424 = vld [vmem:[%s105 + $0x80] sm:$0xff]
        %v4425 = vld [vmem:[%s105 + $0x88] sm:$0xff]
        %v4426 = vld [vmem:[%s105 + $0x90] sm:$0xff]
        %v4427 = vld [vmem:[%s105 + $0x98] sm:$0xff]
        %v4428 = vld [vmem:[%s105 + $0xa0] sm:$0xff]
        %v4429 = vld [vmem:[%s105 + $0xa8] sm:$0xff]
        %v4430 = vld [vmem:[%s105 + $0xb0] sm:$0xff]
        %v4431 = vld [vmem:[%s105 + $0xb8] sm:$0xff]
        %v4432 = vld [vmem:[#allocation7] sm:$0x1]
        %v4434 = vperm.slane %v4432, 0
        %v4437 = vsel %vm3380, %v4403, 0
        %4439 = vmatpush.msra.mxu0 %v4423
        %4440 = vmatpush.msra.mxu0 %v4422
        %4441 = vmatpush.msra.mxu0 %v4421
        %4442 = vmatpush.msra.mxu0 %v4420
        %4443 = vmatpush.msra.mxu0 %v4419
        %4444 = vmatpush.msra.mxu0 %v4418
        %4445 = vmatpush.msra.mxu0 %v4417
        %4446 = vmatpush.msra.mxu0 %v4416
        %4447 = vmatpush.msra.mxu0 %v4415
        %4448 = vmatpush.msra.mxu0 %v4414
        %4449 = vmatpush.msra.mxu0 %v4413
        %4450 = vmatpush.msra.mxu0 %v4412
        %4451 = vmatpush.msra.mxu0 %v4411
        %4452 = vmatpush.msra.mxu0 %v4410
        %4453 = vmatpush.msra.mxu0 %v4409
        %4454 = vmatpush.msra.mxu0 %v4408
        %4455 = vmatmul.f32.gmra.mxu0 %v4407
        %v4456 = vpop.f32.mrf.mxu0
        %v4457 = vadd.f32 %v4434, %v4456
        %4458 = vdwg.mxu0
        %4459 = vmatpush.msra.mxu0 0.0
        %4460 = vmatpush.msra.mxu0 0.0
        %4461 = vmatpush.msra.mxu0 0.0
        %4462 = vmatpush.msra.mxu0 0.0
        %4463 = vmatpush.msra.mxu0 0.0
        %4464 = vmatpush.msra.mxu0 0.0
        %4465 = vmatpush.msra.mxu0 0.0
        %4466 = vmatpush.msra.mxu0 0.0
        %4467 = vmatpush.msra.mxu0 %v4431
        %4468 = vmatpush.msra.mxu0 %v4430
        %4469 = vmatpush.msra.mxu0 %v4429
        %4470 = vmatpush.msra.mxu0 %v4428
        %4471 = vmatpush.msra.mxu0 %v4427
        %4472 = vmatpush.msra.mxu0 %v4426
        %4473 = vmatpush.msra.mxu0 %v4425
        %4474 = vmatpush.msra.mxu0 %v4424
        %4475 = vmatmul.f32.gmra.mxu0 %v4437
        %v4476 = vpop.f32.mrf.mxu0
        %v4477 = vadd.f32 %v4457, %v4476
        %4478 = vdwg.mxu0
        %v4479 = vsel %vm3380, %v4477, 0.0
        %v4480 = vrot.slane %v4479, 4
        %v4481 = vadd.f32 %v4479, %v4480
        %v4482 = vrot.slane %v4481, 2
        %v4483 = vadd.f32 %v4481, %v4482
        %v4484 = vrot.slane %v4483, 1
        %v4485 = vadd.f32 %v4483, %v4484
        %v4487 = vsel %vm3380, %v4485, 0
        %4489 = vmatpush.msra.mxu0 0.0
        %4490 = vmatpush.msra.mxu0 0.0
        %4491 = vmatpush.msra.mxu0 0.0
        %4492 = vmatpush.msra.mxu0 0.0
        %4493 = vmatpush.msra.mxu0 0.0
        %4494 = vmatpush.msra.mxu0 0.0
        %4495 = vmatpush.msra.mxu0 0.0
        %4496 = vmatpush.msra.mxu0 0.0
        %4497 = vmatpush.msra.mxu0 %v4149
        %4498 = vmatpush.msra.mxu0 %v4148
        %4499 = vmatpush.msra.mxu0 %v4147
        %4500 = vmatpush.msra.mxu0 %v4146
        %4501 = vmatpush.msra.mxu0 %v4145
        %4502 = vmatpush.msra.mxu0 %v4144
        %4503 = vmatpush.msra.mxu0 %v4143
        %4504 = vmatpush.msra.mxu0 %v4142
        %4505 = vmatmul.f32.gmra.mxu0 %v4487
        %v4506 = vpop.f32.mrf.mxu0
        %v4507 = vadd.f32 0.0, %v4506
        %4508 = vdwg.mxu0
        %v4509 = vperm.slane %v4507, 0
        %v4510 = vsub.f32 %v4477, %v4509
        %v4511 = vmul.f32 %v4510, %v4510
        %v4512 = vsel %vm3380, %v4511, 0.0
        %v4513 = vrot.slane %v4512, 4
        %v4514 = vadd.f32 %v4512, %v4513
        %v4515 = vrot.slane %v4514, 2
        %v4516 = vadd.f32 %v4514, %v4515
        %v4517 = vrot.slane %v4516, 1
        %v4518 = vadd.f32 %v4516, %v4517
        %v4520 = vsel %vm3380, %v4518, 0
        %4522 = vmatpush.msra.mxu0 0.0
        %4523 = vmatpush.msra.mxu0 0.0
        %4524 = vmatpush.msra.mxu0 0.0
        %4525 = vmatpush.msra.mxu0 0.0
        %4526 = vmatpush.msra.mxu0 0.0
        %4527 = vmatpush.msra.mxu0 0.0
        %4528 = vmatpush.msra.mxu0 0.0
        %4529 = vmatpush.msra.mxu0 0.0
        %4530 = vmatpush.msra.mxu0 %v4149
        %4531 = vmatpush.msra.mxu0 %v4148
        %4532 = vmatpush.msra.mxu0 %v4147
        %4533 = vmatpush.msra.mxu0 %v4146
        %4534 = vmatpush.msra.mxu0 %v4145
        %4535 = vmatpush.msra.mxu0 %v4144
        %4536 = vmatpush.msra.mxu0 %v4143
        %4537 = vmatpush.msra.mxu0 %v4142
        %4538 = vmatmul.f32.gmra.mxu0 %v4520
        %v4539 = vpop.f32.mrf.mxu0
        %v4540 = vadd.f32 1e-05, %v4539
        %4541 = vdwg.mxu0
        %v4542 = vrsqrt.pop %v4540
        %v4543 = vmul.f32 %v4542, %v4540
        %v4544 = vmul.f32 %v4543, %v4542
        %v4545 = vmul.f32 0.5, %v4544
        %v4546 = vsub.f32 1.5, %v4545
        %v4547 = vmul.f32 %v4542, %v4546
        %vm4548 = vweird.f32 %v4540
        %vm4549 = vweird.f32 %v4542
        %vm4550 = vmor %vm4548, %vm4549
        %v4551 = vsel %vm4550, %v4542, %v4547
        %v4552 = vperm.slane %v4551, 0
        %v4553 = vmul.f32 %v4510, %v4552
        %v4554 = vld [vmem:[#allocation8] sm:$0x1]
        %v4556 = vperm.slane %v4554, 0
        %v4558 = vmul.f32 %v4553, %v4556
        %v4559 = vld [vmem:[#allocation10] sm:$0x1]
        %v4561 = vperm.slane %v4559, 0
        %v4563 = vadd.f32 %v4558, %v4561
        %v4564 = vadd.f32 %v4563, %v4228
        %v4565 = vmax.f32 %v4564, 0.0
        %v4567 = vrot.slane %v4565, 7
        %v4569 = vsel %vm2049, 0.0, %v4567
        %v4570 = vrot.slane %v4565, 1
        %v4572 = vsel %vm2062, %v4570, 0.0
        %4573 = vrot.lane.b32.xlu0 %v4565, 64
        %v4574 = vpop.permute.xlu0 %4573
        %v4576 = vsel %vm3380, %v4569, %v4574
        %v4577 = vld [vmem:[%s113] sm:$0xff]
        %v4578 = vld [vmem:[%s113 + $0x8] sm:$0xff]
        %v4579 = vld [vmem:[%s113 + $0x10] sm:$0xff]
        %v4580 = vld [vmem:[%s113 + $0x18] sm:$0xff]
        %v4581 = vld [vmem:[%s113 + $0x20] sm:$0xff]
        %v4582 = vld [vmem:[%s113 + $0x28] sm:$0xff]
        %v4583 = vld [vmem:[%s113 + $0x30] sm:$0xff]
        %v4584 = vld [vmem:[%s113 + $0x38] sm:$0xff]
        %v4585 = vld [vmem:[%s113 + $0x40] sm:$0xff]
        %v4586 = vld [vmem:[%s113 + $0x48] sm:$0xff]
        %v4587 = vld [vmem:[%s113 + $0x50] sm:$0xff]
        %v4588 = vld [vmem:[%s113 + $0x58] sm:$0xff]
        %v4589 = vld [vmem:[%s113 + $0x60] sm:$0xff]
        %v4590 = vld [vmem:[%s113 + $0x68] sm:$0xff]
        %v4591 = vld [vmem:[%s113 + $0x70] sm:$0xff]
        %v4592 = vld [vmem:[%s113 + $0x78] sm:$0xff]
        %v4593 = vld [vmem:[%s113 + $0x80] sm:$0xff]
        %v4594 = vld [vmem:[%s113 + $0x88] sm:$0xff]
        %v4595 = vld [vmem:[%s113 + $0x90] sm:$0xff]
        %v4596 = vld [vmem:[%s113 + $0x98] sm:$0xff]
        %v4597 = vld [vmem:[%s113 + $0xa0] sm:$0xff]
        %v4598 = vld [vmem:[%s113 + $0xa8] sm:$0xff]
        %v4599 = vld [vmem:[%s113 + $0xb0] sm:$0xff]
        %v4600 = vld [vmem:[%s113 + $0xb8] sm:$0xff]
        %v4601 = vld [vmem:[#allocation11] sm:$0x1]
        %v4603 = vperm.slane %v4601, 0
        %v4606 = vsel %vm3380, %v4572, 0
        %4608 = vmatpush.msra.mxu0 %v4592
        %4609 = vmatpush.msra.mxu0 %v4591
        %4610 = vmatpush.msra.mxu0 %v4590
        %4611 = vmatpush.msra.mxu0 %v4589
        %4612 = vmatpush.msra.mxu0 %v4588
        %4613 = vmatpush.msra.mxu0 %v4587
        %4614 = vmatpush.msra.mxu0 %v4586
        %4615 = vmatpush.msra.mxu0 %v4585
        %4616 = vmatpush.msra.mxu0 %v4584
        %4617 = vmatpush.msra.mxu0 %v4583
        %4618 = vmatpush.msra.mxu0 %v4582
        %4619 = vmatpush.msra.mxu0 %v4581
        %4620 = vmatpush.msra.mxu0 %v4580
        %4621 = vmatpush.msra.mxu0 %v4579
        %4622 = vmatpush.msra.mxu0 %v4578
        %4623 = vmatpush.msra.mxu0 %v4577
        %4624 = vmatmul.f32.gmra.mxu0 %v4576
        %v4625 = vpop.f32.mrf.mxu0
        %v4626 = vadd.f32 %v4603, %v4625
        %4627 = vdwg.mxu0
        %4628 = vmatpush.msra.mxu0 0.0
        %4629 = vmatpush.msra.mxu0 0.0
        %4630 = vmatpush.msra.mxu0 0.0
        %4631 = vmatpush.msra.mxu0 0.0
        %4632 = vmatpush.msra.mxu0 0.0
        %4633 = vmatpush.msra.mxu0 0.0
        %4634 = vmatpush.msra.mxu0 0.0
        %4635 = vmatpush.msra.mxu0 0.0
        %4636 = vmatpush.msra.mxu0 %v4600
        %4637 = vmatpush.msra.mxu0 %v4599
        %4638 = vmatpush.msra.mxu0 %v4598
        %4639 = vmatpush.msra.mxu0 %v4597
        %4640 = vmatpush.msra.mxu0 %v4596
        %4641 = vmatpush.msra.mxu0 %v4595
        %4642 = vmatpush.msra.mxu0 %v4594
        %4643 = vmatpush.msra.mxu0 %v4593
        %4644 = vmatmul.f32.gmra.mxu0 %v4606
        %v4645 = vpop.f32.mrf.mxu0
        %v4646 = vadd.f32 %v4626, %v4645
        %4647 = vdwg.mxu0
        %v4648 = vsel %vm3380, %v4646, 0.0
        %v4649 = vrot.slane %v4648, 4
        %v4650 = vadd.f32 %v4648, %v4649
        %v4651 = vrot.slane %v4650, 2
        %v4652 = vadd.f32 %v4650, %v4651
        %v4653 = vrot.slane %v4652, 1
        %v4654 = vadd.f32 %v4652, %v4653
        %v4656 = vsel %vm3380, %v4654, 0
        %4658 = vmatpush.msra.mxu0 0.0
        %4659 = vmatpush.msra.mxu0 0.0
        %4660 = vmatpush.msra.mxu0 0.0
        %4661 = vmatpush.msra.mxu0 0.0
        %4662 = vmatpush.msra.mxu0 0.0
        %4663 = vmatpush.msra.mxu0 0.0
        %4664 = vmatpush.msra.mxu0 0.0
        %4665 = vmatpush.msra.mxu0 0.0
        %4666 = vmatpush.msra.mxu0 %v4149
        %4667 = vmatpush.msra.mxu0 %v4148
        %4668 = vmatpush.msra.mxu0 %v4147
        %4669 = vmatpush.msra.mxu0 %v4146
        %4670 = vmatpush.msra.mxu0 %v4145
        %4671 = vmatpush.msra.mxu0 %v4144
        %4672 = vmatpush.msra.mxu0 %v4143
        %4673 = vmatpush.msra.mxu0 %v4142
        %4674 = vmatmul.f32.gmra.mxu0 %v4656
        %v4675 = vpop.f32.mrf.mxu0
        %v4676 = vadd.f32 0.0, %v4675
        %4677 = vdwg.mxu0
        %v4678 = vperm.slane %v4676, 0
        %v4679 = vsub.f32 %v4646, %v4678
        %v4680 = vmul.f32 %v4679, %v4679
        %v4681 = vsel %vm3380, %v4680, 0.0
        %v4682 = vrot.slane %v4681, 4
        %v4683 = vadd.f32 %v4681, %v4682
        %v4684 = vrot.slane %v4683, 2
        %v4685 = vadd.f32 %v4683, %v4684
        %v4686 = vrot.slane %v4685, 1
        %v4687 = vadd.f32 %v4685, %v4686
        %v4689 = vsel %vm3380, %v4687, 0
        %4691 = vmatpush.msra.mxu0 0.0
        %4692 = vmatpush.msra.mxu0 0.0
        %4693 = vmatpush.msra.mxu0 0.0
        %4694 = vmatpush.msra.mxu0 0.0
        %4695 = vmatpush.msra.mxu0 0.0
        %4696 = vmatpush.msra.mxu0 0.0
        %4697 = vmatpush.msra.mxu0 0.0
        %4698 = vmatpush.msra.mxu0 0.0
        %4699 = vmatpush.msra.mxu0 %v4149
        %4700 = vmatpush.msra.mxu0 %v4148
        %4701 = vmatpush.msra.mxu0 %v4147
        %4702 = vmatpush.msra.mxu0 %v4146
        %4703 = vmatpush.msra.mxu0 %v4145
        %4704 = vmatpush.msra.mxu0 %v4144
        %4705 = vmatpush.msra.mxu0 %v4143
        %4706 = vmatpush.msra.mxu0 %v4142
        %4707 = vmatmul.f32.gmra.mxu0 %v4689
        %v4708 = vpop.f32.mrf.mxu0
        %v4709 = vadd.f32 1e-05, %v4708
        %4710 = vdwg.mxu0
        %v4711 = vrsqrt.pop %v4709
        %v4712 = vmul.f32 %v4711, %v4709
        %v4713 = vmul.f32 %v4712, %v4711
        %v4714 = vmul.f32 0.5, %v4713
        %v4715 = vsub.f32 1.5, %v4714
        %v4716 = vmul.f32 %v4711, %v4715
        %vm4717 = vweird.f32 %v4709
        %vm4718 = vweird.f32 %v4711
        %vm4719 = vmor %vm4717, %vm4718
        %v4720 = vsel %vm4719, %v4711, %v4716
        %v4721 = vperm.slane %v4720, 0
        %v4722 = vmul.f32 %v4679, %v4721
        %v4723 = vld [vmem:[#allocation13] sm:$0x1]
        %v4725 = vperm.slane %v4723, 0
        %v4727 = vmul.f32 %v4722, %v4725
        %v4728 = vld [vmem:[#allocation14] sm:$0x1]
        %v4730 = vperm.slane %v4728, 0
        %v4732 = vadd.f32 %v4727, %v4730
        %v4733 = vmax.f32 %v4732, 0.0
        %v4735 = vrot.slane %v4733, 7
        %v4737 = vsel %vm2049, 0.0, %v4735
        %v4738 = vrot.slane %v4733, 1
        %v4740 = vsel %vm2062, %v4738, 0.0
        %4741 = vrot.lane.b32.xlu0 %v4733, 64
        %v4742 = vpop.permute.xlu0 %4741
        %v4744 = vsel %vm3380, %v4737, %v4742
        %v4745 = vld [vmem:[%s121] sm:$0xff]
        %v4746 = vld [vmem:[%s121 + $0x8] sm:$0xff]
        %v4747 = vld [vmem:[%s121 + $0x10] sm:$0xff]
        %v4748 = vld [vmem:[%s121 + $0x18] sm:$0xff]
        %v4749 = vld [vmem:[%s121 + $0x20] sm:$0xff]
        %v4750 = vld [vmem:[%s121 + $0x28] sm:$0xff]
        %v4751 = vld [vmem:[%s121 + $0x30] sm:$0xff]
        %v4752 = vld [vmem:[%s121 + $0x38] sm:$0xff]
        %v4753 = vld [vmem:[%s121 + $0x40] sm:$0xff]
        %v4754 = vld [vmem:[%s121 + $0x48] sm:$0xff]
        %v4755 = vld [vmem:[%s121 + $0x50] sm:$0xff]
        %v4756 = vld [vmem:[%s121 + $0x58] sm:$0xff]
        %v4757 = vld [vmem:[%s121 + $0x60] sm:$0xff]
        %v4758 = vld [vmem:[%s121 + $0x68] sm:$0xff]
        %v4759 = vld [vmem:[%s121 + $0x70] sm:$0xff]
        %v4760 = vld [vmem:[%s121 + $0x78] sm:$0xff]
        %v4761 = vld [vmem:[%s121 + $0x80] sm:$0xff]
        %v4762 = vld [vmem:[%s121 + $0x88] sm:$0xff]
        %v4763 = vld [vmem:[%s121 + $0x90] sm:$0xff]
        %v4764 = vld [vmem:[%s121 + $0x98] sm:$0xff]
        %v4765 = vld [vmem:[%s121 + $0xa0] sm:$0xff]
        %v4766 = vld [vmem:[%s121 + $0xa8] sm:$0xff]
        %v4767 = vld [vmem:[%s121 + $0xb0] sm:$0xff]
        %v4768 = vld [vmem:[%s121 + $0xb8] sm:$0xff]
        %v4769 = vld [vmem:[#allocation16] sm:$0x1]
        %v4771 = vperm.slane %v4769, 0
        %v4774 = vsel %vm3380, %v4740, 0
        %4776 = vmatpush.msra.mxu0 %v4760
        %4777 = vmatpush.msra.mxu0 %v4759
        %4778 = vmatpush.msra.mxu0 %v4758
        %4779 = vmatpush.msra.mxu0 %v4757
        %4780 = vmatpush.msra.mxu0 %v4756
        %4781 = vmatpush.msra.mxu0 %v4755
        %4782 = vmatpush.msra.mxu0 %v4754
        %4783 = vmatpush.msra.mxu0 %v4753
        %4784 = vmatpush.msra.mxu0 %v4752
        %4785 = vmatpush.msra.mxu0 %v4751
        %4786 = vmatpush.msra.mxu0 %v4750
        %4787 = vmatpush.msra.mxu0 %v4749
        %4788 = vmatpush.msra.mxu0 %v4748
        %4789 = vmatpush.msra.mxu0 %v4747
        %4790 = vmatpush.msra.mxu0 %v4746
        %4791 = vmatpush.msra.mxu0 %v4745
        %4792 = vmatmul.f32.gmra.mxu0 %v4744
        %v4793 = vpop.f32.mrf.mxu0
        %v4794 = vadd.f32 %v4771, %v4793
        %4795 = vdwg.mxu0
        %4796 = vmatpush.msra.mxu0 0.0
        %4797 = vmatpush.msra.mxu0 0.0
        %4798 = vmatpush.msra.mxu0 0.0
        %4799 = vmatpush.msra.mxu0 0.0
        %4800 = vmatpush.msra.mxu0 0.0
        %4801 = vmatpush.msra.mxu0 0.0
        %4802 = vmatpush.msra.mxu0 0.0
        %4803 = vmatpush.msra.mxu0 0.0
        %4804 = vmatpush.msra.mxu0 %v4768
        %4805 = vmatpush.msra.mxu0 %v4767
        %4806 = vmatpush.msra.mxu0 %v4766
        %4807 = vmatpush.msra.mxu0 %v4765
        %4808 = vmatpush.msra.mxu0 %v4764
        %4809 = vmatpush.msra.mxu0 %v4763
        %4810 = vmatpush.msra.mxu0 %v4762
        %4811 = vmatpush.msra.mxu0 %v4761
        %4812 = vmatmul.f32.gmra.mxu0 %v4774
        %v4813 = vpop.f32.mrf.mxu0
        %v4814 = vadd.f32 %v4794, %v4813
        %4815 = vdwg.mxu0
        %v4816 = vsel %vm3380, %v4814, 0.0
        %v4817 = vrot.slane %v4816, 4
        %v4818 = vadd.f32 %v4816, %v4817
        %v4819 = vrot.slane %v4818, 2
        %v4820 = vadd.f32 %v4818, %v4819
        %v4821 = vrot.slane %v4820, 1
        %v4822 = vadd.f32 %v4820, %v4821
        %v4824 = vsel %vm3380, %v4822, 0
        %4826 = vmatpush.msra.mxu0 0.0
        %4827 = vmatpush.msra.mxu0 0.0
        %4828 = vmatpush.msra.mxu0 0.0
        %4829 = vmatpush.msra.mxu0 0.0
        %4830 = vmatpush.msra.mxu0 0.0
        %4831 = vmatpush.msra.mxu0 0.0
        %4832 = vmatpush.msra.mxu0 0.0
        %4833 = vmatpush.msra.mxu0 0.0
        %4834 = vmatpush.msra.mxu0 %v4149
        %4835 = vmatpush.msra.mxu0 %v4148
        %4836 = vmatpush.msra.mxu0 %v4147
        %4837 = vmatpush.msra.mxu0 %v4146
        %4838 = vmatpush.msra.mxu0 %v4145
        %4839 = vmatpush.msra.mxu0 %v4144
        %4840 = vmatpush.msra.mxu0 %v4143
        %4841 = vmatpush.msra.mxu0 %v4142
        %4842 = vmatmul.f32.gmra.mxu0 %v4824
        %v4843 = vpop.f32.mrf.mxu0
        %v4844 = vadd.f32 0.0, %v4843
        %4845 = vdwg.mxu0
        %v4846 = vperm.slane %v4844, 0
        %v4847 = vsub.f32 %v4814, %v4846
        %v4848 = vmul.f32 %v4847, %v4847
        %v4849 = vsel %vm3380, %v4848, 0.0
        %v4850 = vrot.slane %v4849, 4
        %v4851 = vadd.f32 %v4849, %v4850
        %v4852 = vrot.slane %v4851, 2
        %v4853 = vadd.f32 %v4851, %v4852
        %v4854 = vrot.slane %v4853, 1
        %v4855 = vadd.f32 %v4853, %v4854
        %v4857 = vsel %vm3380, %v4855, 0
        %4859 = vmatpush.msra.mxu0 0.0
        %4860 = vmatpush.msra.mxu0 0.0
        %4861 = vmatpush.msra.mxu0 0.0
        %4862 = vmatpush.msra.mxu0 0.0
        %4863 = vmatpush.msra.mxu0 0.0
        %4864 = vmatpush.msra.mxu0 0.0
        %4865 = vmatpush.msra.mxu0 0.0
        %4866 = vmatpush.msra.mxu0 0.0
        %4867 = vmatpush.msra.mxu0 %v4149
        %4868 = vmatpush.msra.mxu0 %v4148
        %4869 = vmatpush.msra.mxu0 %v4147
        %4870 = vmatpush.msra.mxu0 %v4146
        %4871 = vmatpush.msra.mxu0 %v4145
        %4872 = vmatpush.msra.mxu0 %v4144
        %4873 = vmatpush.msra.mxu0 %v4143
        %4874 = vmatpush.msra.mxu0 %v4142
        %4875 = vmatmul.f32.gmra.mxu0 %v4857
        %v4876 = vpop.f32.mrf.mxu0
        %v4877 = vadd.f32 1e-05, %v4876
        %4878 = vdwg.mxu0
        %v4879 = vrsqrt.pop %v4877
        %v4880 = vmul.f32 %v4879, %v4877
        %v4881 = vmul.f32 %v4880, %v4879
        %v4882 = vmul.f32 0.5, %v4881
        %v4883 = vsub.f32 1.5, %v4882
        %v4884 = vmul.f32 %v4879, %v4883
        %vm4885 = vweird.f32 %v4877
        %vm4886 = vweird.f32 %v4879
        %vm4887 = vmor %vm4885, %vm4886
        %v4888 = vsel %vm4887, %v4879, %v4884
        %v4889 = vperm.slane %v4888, 0
        %v4890 = vmul.f32 %v4847, %v4889
        %v4891 = vld [vmem:[#allocation17] sm:$0x1]
        %v4893 = vperm.slane %v4891, 0
        %v4895 = vmul.f32 %v4890, %v4893
        %v4896 = vld [vmem:[#allocation19] sm:$0x1]
        %v4898 = vperm.slane %v4896, 0
        %v4900 = vadd.f32 %v4895, %v4898
        %v4901 = vadd.f32 %v4900, %v4565
        %v4902 = vmax.f32 %v4901, 0.0
        %4903 = vst.msk [vmem:[%s2035] sm:$0xff] %vm3380, %v4902
        %s4904 = sand.u32 %s1506, 1
        %s4905 = scalar_lea.sflag [#allocation4], %s4904
        %s4906 = sand.u32 %s1506, 1
        %s4907 = smul.addr %s4906, 8
        %s4908 = scalar_lea.vmem [#allocation20], %s4907
        // Predicated region
        $region321: #{tpu_custom_call.1} parent=275 // pred_check
          %p4909 = pneg %p1516
        $region322: #{tpu_custom_call.1} parent=275 // pred_check_branch
          %4911 = sbr.rel (%p4909) target = $region324
        $region323: #{tpu_custom_call.1} parent=275 // pred_region
          %4913 = vsyncadd %s4905, 0
          %s4914 = smul.addr %s149, 8
          %s4915 = scalar_lea.hbm %s129, %s4914
          %s4917 = sshll.u32 %s4908, 4
          %s4918 = int_to_ptr.vmem [resolvable:$true] %s4917
          %s4919 = sshll.u32 %s4915, 4
          %s4920 = int_to_ptr.hbm [resolvable:$true] %s4919
          %4922 = dma.vmem_to_hbm [thread:$0]  %s4918, 128, %s4920, %s4905
        $region324: #{tpu_custom_call.1} parent=275 // pred_fallthru
          _
      $region276: #{tpu_custom_call.1} parent=5 // pred_fallthru
        _
      %p4923 = scmp.le.s32.totalorder 2, %s144
      // Predicated region
      $region325: #{tpu_custom_call.1} parent=5 // pred_check
        %p4924 = pneg %p4923
      $region326: #{tpu_custom_call.1} parent=5 // pred_check_branch
        %4926 = sbr.rel (%p4924) target = $region328
      $region327: #{tpu_custom_call.1} parent=5 // pred_region
        %s4927 = ssub.s32 %s144, 2
        // Predicated region
        $region329: #{tpu_custom_call.1} parent=327 // pred_check
          %p4928 = pneg %p1522
        $region330: #{tpu_custom_call.1} parent=327 // pred_check_branch
          %4930 = sbr.rel (%p4928) target = $region332
        $region331: #{tpu_custom_call.1} parent=327 // pred_region
          %s4931 = sand.u32 %s1507, 1
          %s4932 = scalar_lea.sflag [#allocation4], %s4931
          %s4933 = sand.u32 %s1507, 1
          %s4934 = smul.addr %s4933, 8
          %s4935 = scalar_lea.vmem [#allocation20], %s4934
          %4937 = dma.done %s4932, 128
        $region332: #{tpu_custom_call.1} parent=327 // pred_fallthru
          _
      $region328: #{tpu_custom_call.1} parent=5 // pred_fallthru
        _
    $region6: #{tpu_custom_call.1} parent=1 // loop_footer
      %s148 = sadd.s32 1, %s144
    $region7: #{tpu_custom_call.1} parent=1 // loop_footer_branch
      %143 = sbr.rel target = $region3
    $region8: #{tpu_custom_call.1} parent=1 // loop_exit
      _
    %4938 = vsyncpa [#allocation3], 1
    %s4939 = scalar_lea.sflag [#allocation3], 1
    %4940 = vsyncpa %s4939, 1
    %4941 = vsyncpa [#allocation6], 1
    %4942 = vsyncpa [#allocation9], 1
    %4943 = vsyncpa [#allocation12], 1
    %4944 = vsyncpa [#allocation15], 1
    %4945 = vsyncpa [#allocation18], 1
    %4946 = vsyncpa [#allocation4], 1
    %s4947 = scalar_lea.sflag [#allocation4], 1
    %4948 = vsyncpa %s4947, 1

</llo_original>
